<compile_context>
chip_gen: v7x
topology: tpu7x:2x2x1
jax: 0.10.0
libtpu: 0.0.40
codegen_flags: <defaults>
</compile_context>

<pallas_src>
import jax
import jax.numpy as jnp
from jax.experimental import pallas as pl
from jax.experimental.pallas import tpu as pltpu


# ----------------------------- Pallas kernels ------------------------------

def _conv_relu_pool_kernel(p_ref, w_ref, b_ref, o_ref, z_ref):
    # p_ref: (N*4*M, K) bf16 im2col patches, rows ordered [n][q][m] where q is
    #        the 2x2 pool-window offset and m the pooled spatial position.
    # w_ref: (K, Cout) bf16 flattened conv weight   b_ref: (1, Cout) f32
    # o_ref: (N, M, Cout) bf16 pooled activations
    # z_ref: (N*4*M, Cout) f32 VMEM scratch (keeps vreg pressure low; pooling
    #        reads 88x64 slices instead of holding the full 704x64 live).
    nb, m, _ = o_ref.shape
    z_ref[...] = jnp.maximum(
        jnp.dot(p_ref[...], w_ref[...], preferred_element_type=jnp.float32)
        + b_ref[...], 0.0)                                  # conv + bias + ReLU
    for n in range(nb):                                     # static unroll, N=2
        base = n * 4 * m
        g01 = jnp.maximum(z_ref[pl.ds(base + 0 * m, m), :],
                          z_ref[pl.ds(base + 1 * m, m), :])
        g23 = jnp.maximum(z_ref[pl.ds(base + 2 * m, m), :],
                          z_ref[pl.ds(base + 3 * m, m), :])
        o_ref[n] = jnp.maximum(g01, g23).astype(o_ref.dtype)   # 2x2 max-pool


def _mlp_kernel(x_ref, w1_ref, b1_ref, w2_ref, o_ref):
    # One grid step per hidden half; grid = (nh,) marked "parallel" so v7x's
    # two TensorCores each stream half of fc1_w. Full-depth K: no accumulator.
    # x_ref : (N, 5632) bf16     w1_ref: (5632, th) bf16
    # b1_ref: (1, th) f32        w2_ref: (th, A) f32
    # o_ref : (N, A) f32 partial FC2 output for this hidden block
    h = jnp.dot(x_ref[...], w1_ref[...], preferred_element_type=jnp.float32)
    h = jnp.maximum(h + b1_ref[...], 0.0)                   # Linear1 + ReLU
    # TODO(synk): nn.Dropout(0.5) is stochastic in training mode; modeled here
    # as eval-mode identity.
    o_ref[...] = jnp.dot(h, w2_ref[...],
                         preferred_element_type=jnp.float32).astype(o_ref.dtype)


# ------------------------------ glue / wrappers -----------------------------

def _im2col_pool_patches(x_nhwc, kh=3, kw=3, pool=2):
    """Build (N, pool*pool*PH*PW, kh*kw*C) patches so Conv+ReLU+MaxPool fuse."""
    N, H, W, C = x_nhwc.shape
    OH, OW = H - kh + 1, W - kw + 1
    PH, PW = OH // pool, OW // pool
    groups = []
    for di in range(pool):
        for dj in range(pool):
            taps = []
            for r in range(kh):
                for c in range(kw):
                    sl = x_nhwc[:, di + r: di + r + pool * PH: pool,
                                   dj + c: dj + c + pool * PW: pool, :]
                    taps.append(sl)                         # (N, PH, PW, C)
            g = jnp.concatenate(taps, axis=-1)              # (N, PH, PW, kh*kw*C)
            groups.append(g.reshape(N, PH * PW, kh * kw * C))
    patches = jnp.stack(groups, axis=1)                     # (N, 4, M, K)
    return patches.reshape(N, pool * pool * PH * PW, kh * kw * C), PH, PW


def conv_relu_pool(patches2d, w_flat, b, n_batch, m):
    QM, K = patches2d.shape
    assert QM == n_batch * 4 * m
    Cout = w_flat.shape[1]
    return pl.pallas_call(
        _conv_relu_pool_kernel,
        out_shape=jax.ShapeDtypeStruct((n_batch, m, Cout), jnp.bfloat16),
        grid_spec=pltpu.PrefetchScalarGridSpec(
            num_scalar_prefetch=0,
            grid=(1,),                                      # single step: ~100 KiB total
            in_specs=[
                pl.BlockSpec((QM, K), lambda i: (0, 0)),
                pl.BlockSpec((K, Cout), lambda i: (0, 0)),
                pl.BlockSpec((1, Cout), lambda i: (0, 0)),
            ],
            out_specs=pl.BlockSpec((n_batch, m, Cout), lambda i: (0, 0, 0)),
            scratch_shapes=[pltpu.VMEM((QM, Cout), jnp.float32)],
        ),
        compiler_params=pltpu.CompilerParams(
            dimension_semantics=("arbitrary",)),
    )(patches2d, w_flat, b)


def mlp_head(x_flat, w1, b1, w2, *, th=512):
    # x_flat: (N, 5632) bf16   w1: (5632, 1024) bf16 (row-permuted at prep)
    # b1: (1, 1024) f32        w2: (1024, A) f32
    # Returns per-hidden-block FC2 partials of shape (nh, N, A).
    N, K1 = x_flat.shape
    H = w1.shape[1]
    A = w2.shape[1]
    assert H % th == 0
    nh = H // th
    return pl.pallas_call(
        _mlp_kernel,
        out_shape=jax.ShapeDtypeStruct((nh, N, A), jnp.float32),
        grid_spec=pltpu.PrefetchScalarGridSpec(
            num_scalar_prefetch=0,
            grid=(nh,),
            in_specs=[
                pl.BlockSpec((N, K1), lambda h: (0, 0)),    # full-K activations
                pl.BlockSpec((K1, th), lambda h: (0, h)),   # 5.5 MiB bf16 tile
                pl.BlockSpec((1, th), lambda h: (0, h)),
                pl.BlockSpec((th, A), lambda h: (h, 0)),
            ],
            out_specs=pl.BlockSpec((None, N, A), lambda h: (h, 0, 0)),
        ),
        compiler_params=pltpu.CompilerParams(
            # Hidden axis parallel: v7x megacore streams half of fc1_w per TC;
            # on v5e/v6e it is just two sequential steps with no extra traffic.
            dimension_semantics=("parallel",),
            # ~11-12 MiB actually used; 32 MiB raises v5e's 16 MiB scoped
            # default and stays well under v7x's 64 MiB physical VMEM.
            vmem_limit_bytes=32 * 1024 * 1024),
    )(x_flat, w1, b1, w2)


def value_net_forward(x_nchw, kp):
    # Accepts NCHW (PyTorch); conv kernel consumes NHWC-derived im2col patches.
    x_nhwc = jnp.transpose(x_nchw, (0, 2, 3, 1)).astype(jnp.float32)
    patches, PH, PW = _im2col_pool_patches(x_nhwc)          # (N, 4*M, K) f32
    N, QM, K = patches.shape
    M = PH * PW
    patches2d = patches.reshape(N * QM, K).astype(jnp.bfloat16)
    pooled = conv_relu_pool(patches2d, kp["conv_w"], kp["conv_b"], N, M)
    Cout = pooled.shape[-1]
    # Free contiguous collapse; column order (m*Cout + c) matches the
    # row-permuted fc1_w prepared in prepare_params().
    flat = pooled.reshape(N, M * Cout)                      # (N, 5632) bf16
    partials = mlp_head(flat, kp["fc1_w"], kp["fc1_b"], kp["fc2_w"])
    return jnp.sum(partials, axis=0) + kp["fc2_b"]          # (N, A)


# ------------------------- deterministic parameters -------------------------

def init_params(key, in_channels=4, cout=64, hw=(24, 18), hidden=1024,
                output_dim=8):
    k1, k2, k3 = jax.random.split(key, 3)
    conv_w = 0.05 * jax.random.normal(k1, (3, 3, in_channels, cout), jnp.float32)
    conv_b = jnp.linspace(-0.01, 0.01, cout, dtype=jnp.float32)
    flat_dim = cout * ((hw[0] - 2) // 2) * ((hw[1] - 2) // 2)   # 64*11*8 = 5632
    fc1_w = 0.02 * jax.random.normal(k2, (flat_dim, hidden), jnp.float32)
    fc1_b = jnp.linspace(-0.01, 0.01, hidden, dtype=jnp.float32)
    fc2_w = 0.02 * jax.random.normal(k3, (hidden, output_dim), jnp.float32)
    fc2_b = jnp.linspace(-0.01, 0.01, output_dim, dtype=jnp.float32)
    return dict(conv_w=conv_w, conv_b=conv_b, fc1_w=fc1_w, fc1_b=fc1_b,
                fc2_w=fc2_w, fc2_b=fc2_b)


def prepare_params(params):
    """One-time param prep: flatten conv weight (bf16), permute fc1_w rows from
    PyTorch NCHW-flatten order (c*M + m) to the kernel's (m*Cout + c) order,
    and cast the big fc1_w to bf16 (f32 accumulation keeps accuracy)."""
    conv_w = params["conv_w"]                               # (3,3,Cin,Cout) HWIO
    cout = conv_w.shape[-1]
    H = params["fc1_w"].shape[1]
    M = params["fc1_w"].shape[0] // cout                    # PH*PW = 88
    w1 = (params["fc1_w"].reshape(cout, M, H)
          .transpose(1, 0, 2).reshape(M * cout, H)).astype(jnp.bfloat16)
    return dict(
        conv_w=conv_w.reshape(-1, cout).astype(jnp.bfloat16),   # (9*Cin, Cout)
        conv_b=params["conv_b"].reshape(1, cout).astype(jnp.float32),
        fc1_w=w1,                                           # (5632, 1024) bf16
        fc1_b=params["fc1_b"].reshape(1, H).astype(jnp.float32),
        fc2_w=params["fc2_w"],                              # (1024, A) f32
        fc2_b=params["fc2_b"],                              # (A,) f32
    )


# ------------------------------ plain-JAX ref -------------------------------

def value_net_reference(x_nchw, params):
    x = jnp.transpose(x_nchw, (0, 2, 3, 1)).astype(jnp.float32)
    z = jax.lax.conv_general_dilated(
        x, params["conv_w"], window_strides=(1, 1), padding="VALID",
        dimension_numbers=("NHWC", "HWIO", "NHWC"))
    z = jax.nn.relu(z + params["conv_b"])
    z = jax.lax.reduce_window(z, -jnp.inf, jax.lax.max,
                              (1, 2, 2, 1), (1, 2, 2, 1), "VALID")
    N, PH, PW, C = z.shape
    flat = jnp.transpose(z, (0, 3, 1, 2)).reshape(N, C * PH * PW)
    h = jax.nn.relu(flat @ params["fc1_w"] + params["fc1_b"])
    return h @ params["fc2_w"] + params["fc2_b"]


if __name__ == "__main__":
    key = jax.random.PRNGKey(0)
    pkey, xkey = jax.random.split(key)
    params = init_params(pkey)
    kparams = prepare_params(params)                        # one-time prep
    x = jax.random.normal(xkey, (2, 4, 24, 18), jnp.float32)  # NCHW input
    out = jax.jit(value_net_forward)(x, kparams)
    out = jax.block_until_ready(out)
    assert out.shape == (2, 8), out.shape
    ref = value_net_reference(x, params)
    assert jnp.allclose(out, ref, rtol=2e-2, atol=2e-2), (
        "max abs err = %f" % float(jnp.max(jnp.abs(out - ref))))
    print("KERNEL_OK")
</pallas_src>

<mosaic_0001>
module attributes {stable_mosaic.version = 11 : i64} {
  func.func @_conv_relu_pool_kernel(%arg0: i32, %arg1: memref<704x36xbf16, #tpu.memory_space<vmem>>, %arg2: memref<36x64xbf16, #tpu.memory_space<vmem>>, %arg3: memref<1x64xf32, #tpu.memory_space<vmem>>, %arg4: memref<2x88x64xbf16, #tpu.memory_space<vmem>>, %arg5: memref<704x64xf32, #tpu.memory_space<vmem>>) attributes {dimension_semantics = [#tpu.dimension_semantics<arbitrary>], iteration_bounds = array<i64: 1>, scalar_prefetch = 0 : i64, scratch_operands = 1 : i64, tpu.core_type = #tpu.core_type<tc>, window_params = [{pipeline_mode = #tpu.pipeline_mode<synchronous>, transform_indices = @transform_0, window_bounds = array<i64: 704, 36>}, {pipeline_mode = #tpu.pipeline_mode<synchronous>, transform_indices = @transform_1, window_bounds = array<i64: 36, 64>}, {pipeline_mode = #tpu.pipeline_mode<synchronous>, transform_indices = @transform_2, window_bounds = array<i64: 1, 64>}, {pipeline_mode = #tpu.pipeline_mode<synchronous>, transform_indices = @transform_3, window_bounds = array<i64: 2, 88, 64>}]} {
    %c0 = arith.constant 0 : index
    %c0_0 = arith.constant 0 : index
    %0 = vector.load %arg1[%c0, %c0_0] : memref<704x36xbf16, #tpu.memory_space<vmem>>, vector<704x36xbf16>
    %c0_1 = arith.constant 0 : index
    %c0_2 = arith.constant 0 : index
    %1 = vector.load %arg2[%c0_1, %c0_2] : memref<36x64xbf16, #tpu.memory_space<vmem>>, vector<36x64xbf16>
    %cst = arith.constant dense<0.000000e+00> : vector<704x64xf32>
    %2 = tpu.matmul %0, %1, %cst {dimension_numbers = #tpu.dot_dimension_numbers<[1], [0], [0], [1], [0, 0, 1, 1], [], []>} : vector<704x36xbf16>, vector<36x64xbf16>, vector<704x64xf32> -> vector<704x64xf32>
    %c0_3 = arith.constant 0 : index
    %c0_4 = arith.constant 0 : index
    %3 = vector.load %arg3[%c0_3, %c0_4] : memref<1x64xf32, #tpu.memory_space<vmem>>, vector<1x64xf32>
    %4 = vector.broadcast %3 : vector<1x64xf32> to vector<704x64xf32>
    %5 = arith.addf %2, %4 : vector<704x64xf32>
    %cst_5 = arith.constant 0.000000e+00 : f32
    %6 = vector.broadcast %cst_5 : f32 to vector<704x64xf32>
    %7 = arith.maximumf %5, %6 : vector<704x64xf32>
    %c0_6 = arith.constant 0 : index
    %c0_7 = arith.constant 0 : index
    %8 = vector.load %arg5[%c0_6, %c0_7] : memref<704x64xf32, #tpu.memory_space<vmem>>, vector<704x64xf32>
    tpu.vector_store %arg5[%c0_6, %c0_7], %7 {strides = array<i32>} : memref<704x64xf32, #tpu.memory_space<vmem>>, vector<704x64xf32>,
    %c0_8 = arith.constant 0 : index
    %c0_9 = arith.constant 0 : index
    %9 = vector.load %arg5[%c0_8, %c0_9] : memref<704x64xf32, #tpu.memory_space<vmem>>, vector<88x64xf32>
    %c88 = arith.constant 88 : index
    %c0_10 = arith.constant 0 : index
    %10 = vector.load %arg5[%c88, %c0_10] : memref<704x64xf32, #tpu.memory_space<vmem>>, vector<88x64xf32>
    %11 = arith.maximumf %9, %10 : vector<88x64xf32>
    %c176 = arith.constant 176 : index
    %c0_11 = arith.constant 0 : index
    %12 = vector.load %arg5[%c176, %c0_11] : memref<704x64xf32, #tpu.memory_space<vmem>>, vector<88x64xf32>
    %c264 = arith.constant 264 : index
    %c0_12 = arith.constant 0 : index
    %13 = vector.load %arg5[%c264, %c0_12] : memref<704x64xf32, #tpu.memory_space<vmem>>, vector<88x64xf32>
    %14 = arith.maximumf %12, %13 : vector<88x64xf32>
    %15 = arith.maximumf %11, %14 : vector<88x64xf32>
    %16 = arith.truncf %15 : vector<88x64xf32> to vector<88x64xbf16>
    %c0_13 = arith.constant 0 : index
    %c0_14 = arith.constant 0 : index
    %c0_15 = arith.constant 0 : index
    %17 = vector.load %arg4[%c0_13, %c0_14, %c0_15] : memref<2x88x64xbf16, #tpu.memory_space<vmem>>, vector<1x88x64xbf16>
    %18 = vector.shape_cast %17 : vector<1x88x64xbf16> to vector<88x64xbf16>
    %19 = vector.shape_cast %16 : vector<88x64xbf16> to vector<1x88x64xbf16>
    tpu.vector_store %arg4[%c0_13, %c0_14, %c0_15], %19 {strides = array<i32>} : memref<2x88x64xbf16, #tpu.memory_space<vmem>>, vector<1x88x64xbf16>,
    %c352 = arith.constant 352 : index
    %c0_16 = arith.constant 0 : index
    %20 = vector.load %arg5[%c352, %c0_16] : memref<704x64xf32, #tpu.memory_space<vmem>>, vector<88x64xf32>
    %c440 = arith.constant 440 : index
    %c0_17 = arith.constant 0 : index
    %21 = vector.load %arg5[%c440, %c0_17] : memref<704x64xf32, #tpu.memory_space<vmem>>, vector<88x64xf32>
    %22 = arith.maximumf %20, %21 : vector<88x64xf32>
    %c528 = arith.constant 528 : index
    %c0_18 = arith.constant 0 : index
    %23 = vector.load %arg5[%c528, %c0_18] : memref<704x64xf32, #tpu.memory_space<vmem>>, vector<88x64xf32>
    %c616 = arith.constant 616 : index
    %c0_19 = arith.constant 0 : index
    %24 = vector.load %arg5[%c616, %c0_19] : memref<704x64xf32, #tpu.memory_space<vmem>>, vector<88x64xf32>
    %25 = arith.maximumf %23, %24 : vector<88x64xf32>
    %26 = arith.maximumf %22, %25 : vector<88x64xf32>
    %27 = arith.truncf %26 : vector<88x64xf32> to vector<88x64xbf16>
    %c1 = arith.constant 1 : index
    %c0_20 = arith.constant 0 : index
    %c0_21 = arith.constant 0 : index
    %28 = vector.load %arg4[%c1, %c0_20, %c0_21] : memref<2x88x64xbf16, #tpu.memory_space<vmem>>, vector<1x88x64xbf16>
    %29 = vector.shape_cast %28 : vector<1x88x64xbf16> to vector<88x64xbf16>
    %30 = vector.shape_cast %27 : vector<88x64xbf16> to vector<1x88x64xbf16>
    tpu.vector_store %arg4[%c1, %c0_20, %c0_21], %30 {strides = array<i32>} : memref<2x88x64xbf16, #tpu.memory_space<vmem>>, vector<1x88x64xbf16>,
    return
  }
  func.func @transform_0(%arg0: i32) -> (i32, i32) {
    %c0_i32 = arith.constant 0 : i32
    %c0_i32_0 = arith.constant 0 : i32
    %c0_i32_1 = arith.constant 0 : i32
    return %c0_i32, %c0_i32_0 : i32, i32
  }
  func.func @transform_1(%arg0: i32) -> (i32, i32) {
    %c0_i32 = arith.constant 0 : i32
    %c0_i32_0 = arith.constant 0 : i32
    %c0_i32_1 = arith.constant 0 : i32
    return %c0_i32, %c0_i32_0 : i32, i32
  }
  func.func @transform_2(%arg0: i32) -> (i32, i32) {
    %c0_i32 = arith.constant 0 : i32
    %c0_i32_0 = arith.constant 0 : i32
    %c0_i32_1 = arith.constant 0 : i32
    return %c0_i32, %c0_i32_0 : i32, i32
  }
  func.func @transform_3(%arg0: i32) -> (i32, i32, i32) {
    %c0_i32 = arith.constant 0 : i32
    %c0_i32_0 = arith.constant 0 : i32
    %c0_i32_1 = arith.constant 0 : i32
    %c0_i32_2 = arith.constant 0 : i32
    return %c0_i32, %c0_i32_0, %c0_i32_1 : i32, i32, i32
  }
}

module attributes {stable_mosaic.version = 11 : i64} {
  func.func @_mlp_kernel(%arg0: i32, %arg1: memref<2x5632xbf16, #tpu.memory_space<vmem>>, %arg2: memref<5632x512xbf16, #tpu.memory_space<vmem>>, %arg3: memref<1x512xf32, #tpu.memory_space<vmem>>, %arg4: memref<512x8xf32, #tpu.memory_space<vmem>>, %arg5: memref<1x2x8xf32, #tpu.memory_space<vmem>>) attributes {dimension_semantics = [#tpu.dimension_semantics<parallel>], iteration_bounds = array<i64: 2>, scalar_prefetch = 0 : i64, scratch_operands = 0 : i64, tpu.core_type = #tpu.core_type<tc>, window_params = [{pipeline_mode = #tpu.pipeline_mode<synchronous>, transform_indices = @transform_0, window_bounds = array<i64: 2, 5632>}, {transform_indices = @transform_1, window_bounds = array<i64: 5632, 512>}, {transform_indices = @transform_2, window_bounds = array<i64: 1, 512>}, {transform_indices = @transform_3, window_bounds = array<i64: 512, 8>}, {transform_indices = @transform_4, window_bounds = array<i64: 1, 2, 8>}]} {
    %c0 = arith.constant 0 : index
    %c0_0 = arith.constant 0 : index
    %0 = vector.load %arg1[%c0, %c0_0] : memref<2x5632xbf16, #tpu.memory_space<vmem>>, vector<2x5632xbf16>
    %c0_1 = arith.constant 0 : index
    %c0_2 = arith.constant 0 : index
    %1 = vector.load %arg2[%c0_1, %c0_2] : memref<5632x512xbf16, #tpu.memory_space<vmem>>, vector<5632x512xbf16>
    %cst = arith.constant dense<0.000000e+00> : vector<2x512xf32>
    %2 = tpu.matmul %0, %1, %cst {dimension_numbers = #tpu.dot_dimension_numbers<[1], [0], [0], [1], [0, 0, 1, 1], [], []>} : vector<2x5632xbf16>, vector<5632x512xbf16>, vector<2x512xf32> -> vector<2x512xf32>
    %c0_3 = arith.constant 0 : index
    %c0_4 = arith.constant 0 : index
    %3 = vector.load %arg3[%c0_3, %c0_4] : memref<1x512xf32, #tpu.memory_space<vmem>>, vector<1x512xf32>
    %4 = vector.broadcast %3 : vector<1x512xf32> to vector<2x512xf32>
    %5 = arith.addf %2, %4 : vector<2x512xf32>
    %cst_5 = arith.constant 0.000000e+00 : f32
    %6 = vector.broadcast %cst_5 : f32 to vector<2x512xf32>
    %7 = arith.maximumf %5, %6 : vector<2x512xf32>
    %c0_6 = arith.constant 0 : index
    %c0_7 = arith.constant 0 : index
    %8 = vector.load %arg4[%c0_6, %c0_7] : memref<512x8xf32, #tpu.memory_space<vmem>>, vector<512x8xf32>
    %cst_8 = arith.constant dense<0.000000e+00> : vector<2x8xf32>
    %9 = tpu.matmul %7, %8, %cst_8 {dimension_numbers = #tpu.dot_dimension_numbers<[1], [0], [0], [1], [0, 0, 1, 1], [], []>} : vector<2x512xf32>, vector<512x8xf32>, vector<2x8xf32> -> vector<2x8xf32>
    %c0_9 = arith.constant 0 : index
    %c0_10 = arith.constant 0 : index
    %c0_11 = arith.constant 0 : index
    %10 = vector.load %arg5[%c0_9, %c0_10, %c0_11] : memref<1x2x8xf32, #tpu.memory_space<vmem>>, vector<1x2x8xf32>
    %11 = vector.shape_cast %10 : vector<1x2x8xf32> to vector<2x8xf32>
    %12 = vector.shape_cast %9 : vector<2x8xf32> to vector<1x2x8xf32>
    tpu.vector_store %arg5[%c0_9, %c0_10, %c0_11], %12 {strides = array<i32>} : memref<1x2x8xf32, #tpu.memory_space<vmem>>, vector<1x2x8xf32>,
    return
  }
  func.func @transform_0(%arg0: i32) -> (i32, i32) {
    %c0_i32 = arith.constant 0 : i32
    %c0_i32_0 = arith.constant 0 : i32
    %c0_i32_1 = arith.constant 0 : i32
    return %c0_i32, %c0_i32_0 : i32, i32
  }
  func.func @transform_1(%arg0: i32) -> (i32, i32) {
    %c0_i32 = arith.constant 0 : i32
    %c0_i32_0 = arith.constant 0 : i32
    return %c0_i32, %arg0 : i32, i32
  }
  func.func @transform_2(%arg0: i32) -> (i32, i32) {
    %c0_i32 = arith.constant 0 : i32
    %c0_i32_0 = arith.constant 0 : i32
    return %c0_i32, %arg0 : i32, i32
  }
  func.func @transform_3(%arg0: i32) -> (i32, i32) {
    %c0_i32 = arith.constant 0 : i32
    %c0_i32_0 = arith.constant 0 : i32
    return %arg0, %c0_i32 : i32, i32
  }
  func.func @transform_4(%arg0: i32) -> (i32, i32, i32) {
    %c0_i32 = arith.constant 0 : i32
    %c0_i32_0 = arith.constant 0 : i32
    %c0_i32_1 = arith.constant 0 : i32
    return %arg0, %c0_i32, %c0_i32_0 : i32, i32, i32
  }
}

</mosaic_0001>

<llo_original>
// kernel: value_net_forward.2
$region0: #{value_net_forward.2}
  #allocation0 [shape = 'u32[]', space=smem, size = 0x4, offset = 0x4, fixed_abs, tag = 'smem constant byte address 0x4 - core index']
  #allocation1 [shape = 'u32[144,128]{1,0:T(1,128)}', space=vmem, size = 0x12000, scoped, tag = 'internal scratch']
  #allocation2 [shape = 'f32[704,64]{1,0:T(8,128)}', space=vmem, size = 0x58000, scoped, tag = 'scratch operand']
  %s0 = inlined_call_operand.vmem [shape: bf16[704,36], index: 0, kind: input, shape index: {}]
  %s1 = inlined_call_operand.hbm [shape: bf16[36,64], index: 1, kind: input, shape index: {}]
  %s2 = inlined_call_operand.hbm [shape: f32[1,64], index: 2, kind: input, shape index: {}]
  %s3 = inlined_call_operand.vmem [shape: bf16[2,88,64], index: 3, kind: output, shape index: {}]
  %s4 = sld [smem:[#allocation0]]
  $region30: #{value_net_forward.2} parent=0
    _
  %s6 = ssub.s32 1, %s4
  %s7 = scalar_select 0, %s6, %s4
  $region1: #{value_net_forward.2} parent=0
    #allocation3 [shape = 'u8[10240]{0}', space=vmem, size = 0x2800, scoped, tag = 'input window, operand 1, single buffered']
    #allocation4 [shape = 's32[1]{0}', space=sflag, size = 0x4, scoped, tag = 'scoped memory for value_net_forward.2']
    #allocation5 [shape = 'u8[512]{0}', space=vmem, size = 0x400, scoped, tag = 'input window, operand 2, single buffered']
    #allocation6 [shape = 's32[1]{0}', space=sflag, size = 0x4, scoped, tag = 'scoped memory for value_net_forward.2']
    %8 = vsyncpa [#allocation4], 0
    %9 = vsyncpa [#allocation6], 0
    // Predicated region
    $region2: #{value_net_forward.2} parent=1 // pred_check
      _
    $region3: #{value_net_forward.2} parent=1 // pred_check_branch
      %11 = sbr.rel (0) target = $region5
    $region4: #{value_net_forward.2} parent=1 // pred_region
      _
    $region5: #{value_net_forward.2} parent=1 // pred_fallthru
      _
    // Predicated region
    $region6: #{value_net_forward.2} parent=1 // pred_check
      _
    $region7: #{value_net_forward.2} parent=1 // pred_check_branch
      %13 = sbr.rel (0) target = $region9
    $region8: #{value_net_forward.2} parent=1 // pred_region
      %s15 = ssub.s32 320, 320
      %16 = vsyncadd [#allocation4], %s15
      %s17 = sshll.u32 [#allocation3], 4
      %s18 = int_to_ptr.vmem [resolvable:$true] %s17
      %23 = dma.hbm_to_vmem [thread:$0]  %s1, 320, %s18, [#allocation4], 64, 64, 4
    $region9: #{value_net_forward.2} parent=1 // pred_fallthru
      _
    // Predicated region
    $region10: #{value_net_forward.2} parent=1 // pred_check
      _
    $region11: #{value_net_forward.2} parent=1 // pred_check_branch
      %25 = sbr.rel (0) target = $region13
    $region12: #{value_net_forward.2} parent=1 // pred_region
      %s27 = ssub.s32 16, 16
      %28 = vsyncadd [#allocation6], %s27
      %s30 = sshll.u32 [#allocation5], 4
      %s31 = int_to_ptr.vmem [resolvable:$true] %s30
      %33 = dma.hbm_to_vmem [thread:$0]  %s2, 16, %s31, [#allocation6]
    $region13: #{value_net_forward.2} parent=1 // pred_fallthru
      _
    // Predicated region
    $region14: #{value_net_forward.2} parent=1 // pred_check
      _
    $region15: #{value_net_forward.2} parent=1 // pred_check_branch
      %35 = sbr.rel (0) target = $region17
    $region16: #{value_net_forward.2} parent=1 // pred_region
      %36 = dma.done [#allocation4], 320
    $region17: #{value_net_forward.2} parent=1 // pred_fallthru
      _
    // Predicated region
    $region18: #{value_net_forward.2} parent=1 // pred_check
      _
    $region19: #{value_net_forward.2} parent=1 // pred_check_branch
      %38 = sbr.rel (0) target = $region21
    $region20: #{value_net_forward.2} parent=1 // pred_region
      %39 = dma.done [#allocation6], 16
    $region21: #{value_net_forward.2} parent=1 // pred_fallthru
      _
    %v41 = vld [vmem:[%s0] sm:$0xf]
    %v42 = vld [vmem:[%s0 + $0x4] sm:$0xf]
    %v43 = vld [vmem:[%s0 + $0x8] sm:$0xf]
    %v44 = vld [vmem:[%s0 + $0xc] sm:$0xf]
    %v45 = vld [vmem:[%s0 + $0x10] sm:$0xf]
    %v46 = vld [vmem:[%s0 + $0x14] sm:$0xf]
    %v47 = vld [vmem:[%s0 + $0x18] sm:$0xf]
    %v48 = vld [vmem:[%s0 + $0x1c] sm:$0xf]
    %v49 = vld [vmem:[%s0 + $0x20] sm:$0xf]
    %v50 = vld [vmem:[%s0 + $0x24] sm:$0xf]
    %v51 = vld [vmem:[%s0 + $0x28] sm:$0xf]
    %v52 = vld [vmem:[%s0 + $0x2c] sm:$0xf]
    %v53 = vld [vmem:[%s0 + $0x30] sm:$0xf]
    %v54 = vld [vmem:[%s0 + $0x34] sm:$0xf]
    %v55 = vld [vmem:[%s0 + $0x38] sm:$0xf]
    %v56 = vld [vmem:[%s0 + $0x3c] sm:$0xf]
    %v57 = vld [vmem:[%s0 + $0x40] sm:$0xf]
    %v58 = vld [vmem:[%s0 + $0x44] sm:$0xf]
    %v59 = vld [vmem:[%s0 + $0x48] sm:$0xf]
    %v60 = vld [vmem:[%s0 + $0x4c] sm:$0xf]
    %v61 = vld [vmem:[%s0 + $0x50] sm:$0xf]
    %v62 = vld [vmem:[%s0 + $0x54] sm:$0xf]
    %v63 = vld [vmem:[%s0 + $0x58] sm:$0xf]
    %v64 = vld [vmem:[%s0 + $0x5c] sm:$0xf]
    %v65 = vld [vmem:[%s0 + $0x60] sm:$0xf]
    %v66 = vld [vmem:[%s0 + $0x64] sm:$0xf]
    %v67 = vld [vmem:[%s0 + $0x68] sm:$0xf]
    %v68 = vld [vmem:[%s0 + $0x6c] sm:$0xf]
    %v69 = vld [vmem:[%s0 + $0x70] sm:$0xf]
    %v70 = vld [vmem:[%s0 + $0x74] sm:$0xf]
    %v71 = vld [vmem:[%s0 + $0x78] sm:$0xf]
    %v72 = vld [vmem:[%s0 + $0x7c] sm:$0xf]
    %v73 = vld [vmem:[%s0 + $0x80] sm:$0xf]
    %v74 = vld [vmem:[%s0 + $0x84] sm:$0xf]
    %v75 = vld [vmem:[%s0 + $0x88] sm:$0xf]
    %v76 = vld [vmem:[%s0 + $0x8c] sm:$0xf]
    %v77 = vld [vmem:[%s0 + $0x90] sm:$0xf]
    %v78 = vld [vmem:[%s0 + $0x94] sm:$0xf]
    %v79 = vld [vmem:[%s0 + $0x98] sm:$0xf]
    %v80 = vld [vmem:[%s0 + $0x9c] sm:$0xf]
    %v81 = vld [vmem:[%s0 + $0xa0] sm:$0xf]
    %v82 = vld [vmem:[%s0 + $0xa4] sm:$0xf]
    %v83 = vld [vmem:[%s0 + $0xa8] sm:$0xf]
    %v84 = vld [vmem:[%s0 + $0xac] sm:$0xf]
    %v85 = vld [vmem:[%s0 + $0xb0] sm:$0xf]
    %v86 = vld [vmem:[%s0 + $0xb4] sm:$0xf]
    %v87 = vld [vmem:[%s0 + $0xb8] sm:$0xf]
    %v88 = vld [vmem:[%s0 + $0xbc] sm:$0xf]
    %v89 = vld [vmem:[%s0 + $0xc0] sm:$0xf]
    %v90 = vld [vmem:[%s0 + $0xc4] sm:$0xf]
    %v91 = vld [vmem:[%s0 + $0xc8] sm:$0xf]
    %v92 = vld [vmem:[%s0 + $0xcc] sm:$0xf]
    %v93 = vld [vmem:[%s0 + $0xd0] sm:$0xf]
    %v94 = vld [vmem:[%s0 + $0xd4] sm:$0xf]
    %v95 = vld [vmem:[%s0 + $0xd8] sm:$0xf]
    %v96 = vld [vmem:[%s0 + $0xdc] sm:$0xf]
    %v97 = vld [vmem:[%s0 + $0xe0] sm:$0xf]
    %v98 = vld [vmem:[%s0 + $0xe4] sm:$0xf]
    %v99 = vld [vmem:[%s0 + $0xe8] sm:$0xf]
    %v100 = vld [vmem:[%s0 + $0xec] sm:$0xf]
    %v101 = vld [vmem:[%s0 + $0xf0] sm:$0xf]
    %v102 = vld [vmem:[%s0 + $0xf4] sm:$0xf]
    %v103 = vld [vmem:[%s0 + $0xf8] sm:$0xf]
    %v104 = vld [vmem:[%s0 + $0xfc] sm:$0xf]
    %v105 = vld [vmem:[%s0 + $0x100] sm:$0xf]
    %v106 = vld [vmem:[%s0 + $0x104] sm:$0xf]
    %v107 = vld [vmem:[%s0 + $0x108] sm:$0xf]
    %v108 = vld [vmem:[%s0 + $0x10c] sm:$0xf]
    %v109 = vld [vmem:[%s0 + $0x110] sm:$0xf]
    %v110 = vld [vmem:[%s0 + $0x114] sm:$0xf]
    %v111 = vld [vmem:[%s0 + $0x118] sm:$0xf]
    %v112 = vld [vmem:[%s0 + $0x11c] sm:$0xf]
    %v113 = vld [vmem:[%s0 + $0x120] sm:$0xf]
    %v114 = vld [vmem:[%s0 + $0x124] sm:$0xf]
    %v115 = vld [vmem:[%s0 + $0x128] sm:$0xf]
    %v116 = vld [vmem:[%s0 + $0x12c] sm:$0xf]
    %v117 = vld [vmem:[%s0 + $0x130] sm:$0xf]
    %v118 = vld [vmem:[%s0 + $0x134] sm:$0xf]
    %v119 = vld [vmem:[%s0 + $0x138] sm:$0xf]
    %v120 = vld [vmem:[%s0 + $0x13c] sm:$0xf]
    %v121 = vld [vmem:[%s0 + $0x140] sm:$0xf]
    %v122 = vld [vmem:[%s0 + $0x144] sm:$0xf]
    %v123 = vld [vmem:[%s0 + $0x148] sm:$0xf]
    %v124 = vld [vmem:[%s0 + $0x14c] sm:$0xf]
    %v125 = vld [vmem:[%s0 + $0x150] sm:$0xf]
    %v126 = vld [vmem:[%s0 + $0x154] sm:$0xf]
    %v127 = vld [vmem:[%s0 + $0x158] sm:$0xf]
    %v128 = vld [vmem:[%s0 + $0x15c] sm:$0xf]
    %v129 = vld [vmem:[#allocation3] sm:$0xf]
    %v130 = vld [vmem:[#allocation3 + $0x4] sm:$0xf]
    %v131 = vld [vmem:[#allocation3 + $0x8] sm:$0xf]
    %v132 = vld [vmem:[#allocation3 + $0xc] sm:$0xf]
    %v133 = vld [vmem:[#allocation3 + $0x10] sm:$0x3]
    %v134 = vld [vmem:[#allocation5] sm:$0x1]
    %v136 = vlaneseq
    %v137 = vshrl.u32 %v136, 7
    %v138 = vsub.s32 0, %v137
    %v139 = vrot.slane %v134, %v138
    %v229 = vunpack.c.l.b16 %v41
    %v230 = vunpack.c.l.b16 %v42
    %v231 = vunpack.c.l.b16 %v43
    %v232 = vunpack.c.l.b16 %v44
    %v233 = vunpack.c.l.b16 %v45
    %v234 = vunpack.c.l.b16 %v46
    %v235 = vunpack.c.l.b16 %v47
    %v236 = vunpack.c.l.b16 %v48
    %v237 = vunpack.c.l.b16 %v49
    %v238 = vunpack.c.l.b16 %v50
    %v239 = vunpack.c.l.b16 %v51
    %v240 = vunpack.c.l.b16 %v52
    %v241 = vunpack.c.l.b16 %v53
    %v242 = vunpack.c.l.b16 %v54
    %v243 = vunpack.c.l.b16 %v55
    %v244 = vunpack.c.l.b16 %v56
    %v245 = vunpack.c.l.b16 %v57
    %v246 = vunpack.c.l.b16 %v58
    %v247 = vunpack.c.l.b16 %v59
    %v248 = vunpack.c.l.b16 %v60
    %v249 = vunpack.c.l.b16 %v61
    %v250 = vunpack.c.l.b16 %v62
    %v251 = vunpack.c.l.b16 %v63
    %v252 = vunpack.c.l.b16 %v64
    %v253 = vunpack.c.l.b16 %v65
    %v254 = vunpack.c.l.b16 %v66
    %v255 = vunpack.c.l.b16 %v67
    %v256 = vunpack.c.l.b16 %v68
    %v257 = vunpack.c.l.b16 %v69
    %v258 = vunpack.c.l.b16 %v70
    %v259 = vunpack.c.l.b16 %v71
    %v260 = vunpack.c.l.b16 %v72
    %v261 = vunpack.c.l.b16 %v73
    %v262 = vunpack.c.l.b16 %v74
    %v263 = vunpack.c.l.b16 %v75
    %v264 = vunpack.c.l.b16 %v76
    %v265 = vunpack.c.l.b16 %v77
    %v266 = vunpack.c.l.b16 %v78
    %v267 = vunpack.c.l.b16 %v79
    %v268 = vunpack.c.l.b16 %v80
    %v269 = vunpack.c.l.b16 %v81
    %v270 = vunpack.c.l.b16 %v82
    %v271 = vunpack.c.l.b16 %v83
    %v272 = vunpack.c.l.b16 %v84
    %v273 = vunpack.c.l.b16 %v85
    %v274 = vunpack.c.l.b16 %v86
    %v275 = vunpack.c.l.b16 %v87
    %v276 = vunpack.c.l.b16 %v88
    %v277 = vunpack.c.l.b16 %v89
    %v278 = vunpack.c.l.b16 %v90
    %v279 = vunpack.c.l.b16 %v91
    %v280 = vunpack.c.l.b16 %v92
    %v281 = vunpack.c.l.b16 %v93
    %v282 = vunpack.c.l.b16 %v94
    %v283 = vunpack.c.l.b16 %v95
    %v284 = vunpack.c.l.b16 %v96
    %v285 = vunpack.c.l.b16 %v97
    %v286 = vunpack.c.l.b16 %v98
    %v287 = vunpack.c.l.b16 %v99
    %v288 = vunpack.c.l.b16 %v100
    %v289 = vunpack.c.l.b16 %v101
    %v290 = vunpack.c.l.b16 %v102
    %v291 = vunpack.c.l.b16 %v103
    %v292 = vunpack.c.l.b16 %v104
    %v293 = vunpack.c.l.b16 %v105
    %v294 = vunpack.c.l.b16 %v106
    %v295 = vunpack.c.l.b16 %v107
    %v296 = vunpack.c.l.b16 %v108
    %v297 = vunpack.c.l.b16 %v109
    %v298 = vunpack.c.l.b16 %v110
    %v299 = vunpack.c.l.b16 %v111
    %v300 = vunpack.c.l.b16 %v112
    %v301 = vunpack.c.l.b16 %v113
    %v302 = vunpack.c.l.b16 %v114
    %v303 = vunpack.c.l.b16 %v115
    %v304 = vunpack.c.l.b16 %v116
    %v305 = vunpack.c.l.b16 %v117
    %v306 = vunpack.c.l.b16 %v118
    %v307 = vunpack.c.l.b16 %v119
    %v308 = vunpack.c.l.b16 %v120
    %v309 = vunpack.c.l.b16 %v121
    %v310 = vunpack.c.l.b16 %v122
    %v311 = vunpack.c.l.b16 %v123
    %v312 = vunpack.c.l.b16 %v124
    %v313 = vunpack.c.l.b16 %v125
    %v314 = vunpack.c.l.b16 %v126
    %v315 = vunpack.c.l.b16 %v127
    %v316 = vunpack.c.l.b16 %v128
    %v317 = vpack.c.b16 %v230, %v229
    %v318 = vpack.c.b16 %v232, %v231
    %v319 = vpack.c.b16 %v234, %v233
    %v320 = vpack.c.b16 %v236, %v235
    %v321 = vpack.c.b16 %v238, %v237
    %v322 = vpack.c.b16 %v240, %v239
    %v323 = vpack.c.b16 %v242, %v241
    %v324 = vpack.c.b16 %v244, %v243
    %v325 = vpack.c.b16 %v246, %v245
    %v326 = vpack.c.b16 %v248, %v247
    %v327 = vpack.c.b16 %v250, %v249
    %v328 = vpack.c.b16 %v252, %v251
    %v329 = vpack.c.b16 %v254, %v253
    %v330 = vpack.c.b16 %v256, %v255
    %v331 = vpack.c.b16 %v258, %v257
    %v332 = vpack.c.b16 %v260, %v259
    %v333 = vpack.c.b16 %v262, %v261
    %v334 = vpack.c.b16 %v264, %v263
    %v335 = vpack.c.b16 %v266, %v265
    %v336 = vpack.c.b16 %v268, %v267
    %v337 = vpack.c.b16 %v270, %v269
    %v338 = vpack.c.b16 %v272, %v271
    %v339 = vpack.c.b16 %v274, %v273
    %v340 = vpack.c.b16 %v276, %v275
    %v341 = vpack.c.b16 %v278, %v277
    %v342 = vpack.c.b16 %v280, %v279
    %v343 = vpack.c.b16 %v282, %v281
    %v344 = vpack.c.b16 %v284, %v283
    %v345 = vpack.c.b16 %v286, %v285
    %v346 = vpack.c.b16 %v288, %v287
    %v347 = vpack.c.b16 %v290, %v289
    %v348 = vpack.c.b16 %v292, %v291
    %v349 = vpack.c.b16 %v294, %v293
    %v350 = vpack.c.b16 %v296, %v295
    %v351 = vpack.c.b16 %v298, %v297
    %v352 = vpack.c.b16 %v300, %v299
    %v353 = vpack.c.b16 %v302, %v301
    %v354 = vpack.c.b16 %v304, %v303
    %v355 = vpack.c.b16 %v306, %v305
    %v356 = vpack.c.b16 %v308, %v307
    %v357 = vpack.c.b16 %v310, %v309
    %v358 = vpack.c.b16 %v312, %v311
    %v359 = vpack.c.b16 %v314, %v313
    %v360 = vpack.c.b16 %v316, %v315
    %v366 = vunpack.c.l.b16 %v129
    %v367 = vunpack.c.l.b16 %v130
    %v368 = vunpack.c.l.b16 %v131
    %v369 = vunpack.c.l.b16 %v132
    %v370 = vunpack.c.l.b16 %v133
    %v371 = vpack.c.b16 %v367, %v366
    %v372 = vpack.c.b16 %v369, %v368
    %v373 = vpack.c.b16 %v370, %v370
    %vm376 = vcmask 293888
    %v378 = vsel %vm376, %v317, 0
    %v381 = vsel %vm376, %v318, 0
    %v384 = vsel %vm376, %v319, 0
    %v387 = vsel %vm376, %v320, 0
    %v390 = vsel %vm376, %v321, 0
    %v393 = vsel %vm376, %v322, 0
    %v396 = vsel %vm376, %v323, 0
    %v399 = vsel %vm376, %v324, 0
    %v402 = vsel %vm376, %v325, 0
    %v405 = vsel %vm376, %v326, 0
    %v408 = vsel %vm376, %v327, 0
    %v411 = vsel %vm376, %v328, 0
    %v414 = vsel %vm376, %v329, 0
    %v417 = vsel %vm376, %v330, 0
    %v420 = vsel %vm376, %v331, 0
    %v423 = vsel %vm376, %v332, 0
    %v426 = vsel %vm376, %v333, 0
    %v429 = vsel %vm376, %v334, 0
    %v432 = vsel %vm376, %v335, 0
    %v435 = vsel %vm376, %v336, 0
    %v438 = vsel %vm376, %v337, 0
    %v441 = vsel %vm376, %v338, 0
    %v444 = vsel %vm376, %v339, 0
    %v447 = vsel %vm376, %v340, 0
    %v450 = vsel %vm376, %v341, 0
    %v453 = vsel %vm376, %v342, 0
    %v456 = vsel %vm376, %v343, 0
    %v459 = vsel %vm376, %v344, 0
    %v462 = vsel %vm376, %v345, 0
    %v465 = vsel %vm376, %v346, 0
    %v468 = vsel %vm376, %v347, 0
    %v471 = vsel %vm376, %v348, 0
    %v474 = vsel %vm376, %v349, 0
    %v477 = vsel %vm376, %v350, 0
    %v480 = vsel %vm376, %v351, 0
    %v483 = vsel %vm376, %v352, 0
    %v486 = vsel %vm376, %v353, 0
    %v489 = vsel %vm376, %v354, 0
    %v492 = vsel %vm376, %v355, 0
    %v495 = vsel %vm376, %v356, 0
    %v498 = vsel %vm376, %v357, 0
    %v501 = vsel %vm376, %v358, 0
    %v504 = vsel %vm376, %v359, 0
    %v507 = vsel %vm376, %v360, 0
    %vm509 = vcmask 1041408
    %v511 = vsel %vm509, %v373, 0
    %513 = vmatprep.subr.bf16.mxu0 0
    %514 = vmatpush1.bf16.msra.mxu0 %v371
    %515 = vmatprep.subr.bf16.mxu0 0
    %516 = vmatpush1.bf16.msra.mxu0 %v372
    %517 = vmatprep.subr.bf16.mxu0 0
    %518 = vmatpush1.bf16.msra.mxu0 %v511
    %519 = vmatprep.subr.bf16.mxu0 0
    %520 = vmatpush1.bf16.msra.mxu0 0
    %521 = vmatprep.subr.bf16.mxu0 0
    %522 = vmatpush1.bf16.msra.mxu0 0
    %523 = vmatprep.subr.bf16.mxu0 0
    %524 = vmatpush1.bf16.msra.mxu0 0
    %525 = vmatprep.subr.bf16.mxu0 0
    %526 = vmatpush1.bf16.msra.mxu0 0
    %527 = vmatprep.subr.bf16.mxu0 0
    %528 = vmatpush1.bf16.msra.mxu0 0
    %529 = vmatprep.subr.bf16.mxu0 0
    %530 = vmatpush1.bf16.msra.mxu0 0
    %531 = vmatprep.subr.bf16.mxu0 0
    %532 = vmatpush1.bf16.msra.mxu0 0
    %533 = vmatprep.subr.bf16.mxu0 0
    %534 = vmatpush1.bf16.msra.mxu0 0
    %535 = vmatprep.subr.bf16.mxu0 0
    %536 = vmatpush1.bf16.msra.mxu0 0
    %537 = vmatprep.subr.bf16.mxu0 0
    %538 = vmatpush1.bf16.msra.mxu0 0
    %539 = vmatprep.subr.bf16.mxu0 0
    %540 = vmatpush1.bf16.msra.mxu0 0
    %541 = vmatprep.subr.bf16.mxu0 0
    %542 = vmatpush1.bf16.msra.mxu0 0
    %543 = vmatprep.subr.bf16.mxu0 0
    %544 = vmatpush1.bf16.msra.mxu0 0
    %545 = vmatprep.mubr.bf16.mxu0 0
    %546 = vmatmul.mubr.bf16.gmra.mrb[0].mxu0 %v378
    %v547 = vpop.f32.mrb[0].mxu0
    %v548 = vadd.f32 %v139, %v547
    %v549 = vpop.f32.mrb[0].mxu0
    %v550 = vpop.f32.mrb[0].mxu0
    %v551 = vadd.f32 %v139, %v550
    %v552 = vpop.f32.mrb[0].mxu0
    %553 = vmatprep.mubr.bf16.mxu0 0
    %554 = vmatmul.mubr.bf16.gmra.mrb[0].mxu0 %v381
    %v555 = vpop.f32.mrb[0].mxu0
    %v556 = vadd.f32 %v139, %v555
    %v557 = vpop.f32.mrb[0].mxu0
    %v558 = vpop.f32.mrb[0].mxu0
    %v559 = vadd.f32 %v139, %v558
    %v560 = vpop.f32.mrb[0].mxu0
    %561 = vmatprep.mubr.bf16.mxu0 0
    %562 = vmatmul.mubr.bf16.gmra.mrb[0].mxu0 %v384
    %v563 = vpop.f32.mrb[0].mxu0
    %v564 = vadd.f32 %v139, %v563
    %v565 = vpop.f32.mrb[0].mxu0
    %v566 = vpop.f32.mrb[0].mxu0
    %v567 = vadd.f32 %v139, %v566
    %v568 = vpop.f32.mrb[0].mxu0
    %569 = vmatprep.mubr.bf16.mxu0 0
    %570 = vmatmul.mubr.bf16.gmra.mrb[0].mxu0 %v387
    %v571 = vpop.f32.mrb[0].mxu0
    %v572 = vadd.f32 %v139, %v571
    %v573 = vpop.f32.mrb[0].mxu0
    %v574 = vpop.f32.mrb[0].mxu0
    %v575 = vadd.f32 %v139, %v574
    %v576 = vpop.f32.mrb[0].mxu0
    %577 = vmatprep.mubr.bf16.mxu0 0
    %578 = vmatmul.mubr.bf16.gmra.mrb[0].mxu0 %v390
    %v579 = vpop.f32.mrb[0].mxu0
    %v580 = vadd.f32 %v139, %v579
    %v581 = vpop.f32.mrb[0].mxu0
    %v582 = vpop.f32.mrb[0].mxu0
    %v583 = vadd.f32 %v139, %v582
    %v584 = vpop.f32.mrb[0].mxu0
    %585 = vmatprep.mubr.bf16.mxu0 0
    %586 = vmatmul.mubr.bf16.gmra.mrb[0].mxu0 %v393
    %v587 = vpop.f32.mrb[0].mxu0
    %v588 = vadd.f32 %v139, %v587
    %v589 = vpop.f32.mrb[0].mxu0
    %v590 = vpop.f32.mrb[0].mxu0
    %v591 = vadd.f32 %v139, %v590
    %v592 = vpop.f32.mrb[0].mxu0
    %593 = vmatprep.mubr.bf16.mxu0 0
    %594 = vmatmul.mubr.bf16.gmra.mrb[0].mxu0 %v396
    %v595 = vpop.f32.mrb[0].mxu0
    %v596 = vadd.f32 %v139, %v595
    %v597 = vpop.f32.mrb[0].mxu0
    %v598 = vpop.f32.mrb[0].mxu0
    %v599 = vadd.f32 %v139, %v598
    %v600 = vpop.f32.mrb[0].mxu0
    %601 = vmatprep.mubr.bf16.mxu0 0
    %602 = vmatmul.mubr.bf16.gmra.mrb[0].mxu0 %v399
    %v603 = vpop.f32.mrb[0].mxu0
    %v604 = vadd.f32 %v139, %v603
    %v605 = vpop.f32.mrb[0].mxu0
    %v606 = vpop.f32.mrb[0].mxu0
    %v607 = vadd.f32 %v139, %v606
    %v608 = vpop.f32.mrb[0].mxu0
    %609 = vmatprep.mubr.bf16.mxu0 0
    %610 = vmatmul.mubr.bf16.gmra.mrb[0].mxu0 %v402
    %v611 = vpop.f32.mrb[0].mxu0
    %v612 = vadd.f32 %v139, %v611
    %v613 = vpop.f32.mrb[0].mxu0
    %v614 = vpop.f32.mrb[0].mxu0
    %v615 = vadd.f32 %v139, %v614
    %v616 = vpop.f32.mrb[0].mxu0
    %617 = vmatprep.mubr.bf16.mxu0 0
    %618 = vmatmul.mubr.bf16.gmra.mrb[0].mxu0 %v405
    %v619 = vpop.f32.mrb[0].mxu0
    %v620 = vadd.f32 %v139, %v619
    %v621 = vpop.f32.mrb[0].mxu0
    %v622 = vpop.f32.mrb[0].mxu0
    %v623 = vadd.f32 %v139, %v622
    %v624 = vpop.f32.mrb[0].mxu0
    %625 = vmatprep.mubr.bf16.mxu0 0
    %626 = vmatmul.mubr.bf16.gmra.mrb[0].mxu0 %v408
    %v627 = vpop.f32.mrb[0].mxu0
    %v628 = vadd.f32 %v139, %v627
    %v629 = vpop.f32.mrb[0].mxu0
    %v630 = vpop.f32.mrb[0].mxu0
    %v631 = vadd.f32 %v139, %v630
    %v632 = vpop.f32.mrb[0].mxu0
    %633 = vmatprep.mubr.bf16.mxu0 0
    %634 = vmatmul.mubr.bf16.gmra.mrb[0].mxu0 %v411
    %v635 = vpop.f32.mrb[0].mxu0
    %v636 = vadd.f32 %v139, %v635
    %v637 = vpop.f32.mrb[0].mxu0
    %v638 = vpop.f32.mrb[0].mxu0
    %v639 = vadd.f32 %v139, %v638
    %v640 = vpop.f32.mrb[0].mxu0
    %641 = vmatprep.mubr.bf16.mxu0 0
    %642 = vmatmul.mubr.bf16.gmra.mrb[0].mxu0 %v414
    %v643 = vpop.f32.mrb[0].mxu0
    %v644 = vadd.f32 %v139, %v643
    %v645 = vpop.f32.mrb[0].mxu0
    %v646 = vpop.f32.mrb[0].mxu0
    %v647 = vadd.f32 %v139, %v646
    %v648 = vpop.f32.mrb[0].mxu0
    %649 = vmatprep.mubr.bf16.mxu0 0
    %650 = vmatmul.mubr.bf16.gmra.mrb[0].mxu0 %v417
    %v651 = vpop.f32.mrb[0].mxu0
    %v652 = vadd.f32 %v139, %v651
    %v653 = vpop.f32.mrb[0].mxu0
    %v654 = vpop.f32.mrb[0].mxu0
    %v655 = vadd.f32 %v139, %v654
    %v656 = vpop.f32.mrb[0].mxu0
    %657 = vmatprep.mubr.bf16.mxu0 0
    %658 = vmatmul.mubr.bf16.gmra.mrb[0].mxu0 %v420
    %v659 = vpop.f32.mrb[0].mxu0
    %v660 = vadd.f32 %v139, %v659
    %v661 = vpop.f32.mrb[0].mxu0
    %v662 = vpop.f32.mrb[0].mxu0
    %v663 = vadd.f32 %v139, %v662
    %v664 = vpop.f32.mrb[0].mxu0
    %665 = vmatprep.mubr.bf16.mxu0 0
    %666 = vmatmul.mubr.bf16.gmra.mrb[0].mxu0 %v423
    %v667 = vpop.f32.mrb[0].mxu0
    %v668 = vadd.f32 %v139, %v667
    %v669 = vpop.f32.mrb[0].mxu0
    %v670 = vpop.f32.mrb[0].mxu0
    %v671 = vadd.f32 %v139, %v670
    %v672 = vpop.f32.mrb[0].mxu0
    %673 = vmatprep.mubr.bf16.mxu0 0
    %674 = vmatmul.mubr.bf16.gmra.mrb[0].mxu0 %v426
    %v675 = vpop.f32.mrb[0].mxu0
    %v676 = vadd.f32 %v139, %v675
    %v677 = vpop.f32.mrb[0].mxu0
    %v678 = vpop.f32.mrb[0].mxu0
    %v679 = vadd.f32 %v139, %v678
    %v680 = vpop.f32.mrb[0].mxu0
    %681 = vmatprep.mubr.bf16.mxu0 0
    %682 = vmatmul.mubr.bf16.gmra.mrb[0].mxu0 %v429
    %v683 = vpop.f32.mrb[0].mxu0
    %v684 = vadd.f32 %v139, %v683
    %v685 = vpop.f32.mrb[0].mxu0
    %v686 = vpop.f32.mrb[0].mxu0
    %v687 = vadd.f32 %v139, %v686
    %v688 = vpop.f32.mrb[0].mxu0
    %689 = vmatprep.mubr.bf16.mxu0 0
    %690 = vmatmul.mubr.bf16.gmra.mrb[0].mxu0 %v432
    %v691 = vpop.f32.mrb[0].mxu0
    %v692 = vadd.f32 %v139, %v691
    %v693 = vpop.f32.mrb[0].mxu0
    %v694 = vpop.f32.mrb[0].mxu0
    %v695 = vadd.f32 %v139, %v694
    %v696 = vpop.f32.mrb[0].mxu0
    %697 = vmatprep.mubr.bf16.mxu0 0
    %698 = vmatmul.mubr.bf16.gmra.mrb[0].mxu0 %v435
    %v699 = vpop.f32.mrb[0].mxu0
    %v700 = vadd.f32 %v139, %v699
    %v701 = vpop.f32.mrb[0].mxu0
    %v702 = vpop.f32.mrb[0].mxu0
    %v703 = vadd.f32 %v139, %v702
    %v704 = vpop.f32.mrb[0].mxu0
    %705 = vmatprep.mubr.bf16.mxu0 0
    %706 = vmatmul.mubr.bf16.gmra.mrb[0].mxu0 %v438
    %v707 = vpop.f32.mrb[0].mxu0
    %v708 = vadd.f32 %v139, %v707
    %v709 = vpop.f32.mrb[0].mxu0
    %v710 = vpop.f32.mrb[0].mxu0
    %v711 = vadd.f32 %v139, %v710
    %v712 = vpop.f32.mrb[0].mxu0
    %713 = vmatprep.mubr.bf16.mxu0 0
    %714 = vmatmul.mubr.bf16.gmra.mrb[0].mxu0 %v441
    %v715 = vpop.f32.mrb[0].mxu0
    %v716 = vadd.f32 %v139, %v715
    %v717 = vpop.f32.mrb[0].mxu0
    %v718 = vpop.f32.mrb[0].mxu0
    %v719 = vadd.f32 %v139, %v718
    %v720 = vpop.f32.mrb[0].mxu0
    %721 = vmatprep.mubr.bf16.mxu0 0
    %722 = vmatmul.mubr.bf16.gmra.mrb[0].mxu0 %v444
    %v723 = vpop.f32.mrb[0].mxu0
    %v724 = vadd.f32 %v139, %v723
    %v725 = vpop.f32.mrb[0].mxu0
    %v726 = vpop.f32.mrb[0].mxu0
    %v727 = vadd.f32 %v139, %v726
    %v728 = vpop.f32.mrb[0].mxu0
    %729 = vmatprep.mubr.bf16.mxu0 0
    %730 = vmatmul.mubr.bf16.gmra.mrb[0].mxu0 %v447
    %v731 = vpop.f32.mrb[0].mxu0
    %v732 = vadd.f32 %v139, %v731
    %v733 = vpop.f32.mrb[0].mxu0
    %v734 = vpop.f32.mrb[0].mxu0
    %v735 = vadd.f32 %v139, %v734
    %v736 = vpop.f32.mrb[0].mxu0
    %737 = vmatprep.mubr.bf16.mxu0 0
    %738 = vmatmul.mubr.bf16.gmra.mrb[0].mxu0 %v450
    %v739 = vpop.f32.mrb[0].mxu0
    %v740 = vadd.f32 %v139, %v739
    %v741 = vpop.f32.mrb[0].mxu0
    %v742 = vpop.f32.mrb[0].mxu0
    %v743 = vadd.f32 %v139, %v742
    %v744 = vpop.f32.mrb[0].mxu0
    %745 = vmatprep.mubr.bf16.mxu0 0
    %746 = vmatmul.mubr.bf16.gmra.mrb[0].mxu0 %v453
    %v747 = vpop.f32.mrb[0].mxu0
    %v748 = vadd.f32 %v139, %v747
    %v749 = vpop.f32.mrb[0].mxu0
    %v750 = vpop.f32.mrb[0].mxu0
    %v751 = vadd.f32 %v139, %v750
    %v752 = vpop.f32.mrb[0].mxu0
    %753 = vmatprep.mubr.bf16.mxu0 0
    %754 = vmatmul.mubr.bf16.gmra.mrb[0].mxu0 %v456
    %v755 = vpop.f32.mrb[0].mxu0
    %v756 = vadd.f32 %v139, %v755
    %v757 = vpop.f32.mrb[0].mxu0
    %v758 = vpop.f32.mrb[0].mxu0
    %v759 = vadd.f32 %v139, %v758
    %v760 = vpop.f32.mrb[0].mxu0
    %761 = vmatprep.mubr.bf16.mxu0 0
    %762 = vmatmul.mubr.bf16.gmra.mrb[0].mxu0 %v459
    %v763 = vpop.f32.mrb[0].mxu0
    %v764 = vadd.f32 %v139, %v763
    %v765 = vpop.f32.mrb[0].mxu0
    %v766 = vpop.f32.mrb[0].mxu0
    %v767 = vadd.f32 %v139, %v766
    %v768 = vpop.f32.mrb[0].mxu0
    %769 = vmatprep.mubr.bf16.mxu0 0
    %770 = vmatmul.mubr.bf16.gmra.mrb[0].mxu0 %v462
    %v771 = vpop.f32.mrb[0].mxu0
    %v772 = vadd.f32 %v139, %v771
    %v773 = vpop.f32.mrb[0].mxu0
    %v774 = vpop.f32.mrb[0].mxu0
    %v775 = vadd.f32 %v139, %v774
    %v776 = vpop.f32.mrb[0].mxu0
    %777 = vmatprep.mubr.bf16.mxu0 0
    %778 = vmatmul.mubr.bf16.gmra.mrb[0].mxu0 %v465
    %v779 = vpop.f32.mrb[0].mxu0
    %v780 = vadd.f32 %v139, %v779
    %v781 = vpop.f32.mrb[0].mxu0
    %v782 = vpop.f32.mrb[0].mxu0
    %v783 = vadd.f32 %v139, %v782
    %v784 = vpop.f32.mrb[0].mxu0
    %785 = vmatprep.mubr.bf16.mxu0 0
    %786 = vmatmul.mubr.bf16.gmra.mrb[0].mxu0 %v468
    %v787 = vpop.f32.mrb[0].mxu0
    %v788 = vadd.f32 %v139, %v787
    %v789 = vpop.f32.mrb[0].mxu0
    %v790 = vpop.f32.mrb[0].mxu0
    %v791 = vadd.f32 %v139, %v790
    %v792 = vpop.f32.mrb[0].mxu0
    %793 = vmatprep.mubr.bf16.mxu0 0
    %794 = vmatmul.mubr.bf16.gmra.mrb[0].mxu0 %v471
    %v795 = vpop.f32.mrb[0].mxu0
    %v796 = vadd.f32 %v139, %v795
    %v797 = vpop.f32.mrb[0].mxu0
    %v798 = vpop.f32.mrb[0].mxu0
    %v799 = vadd.f32 %v139, %v798
    %v800 = vpop.f32.mrb[0].mxu0
    %801 = vmatprep.mubr.bf16.mxu0 0
    %802 = vmatmul.mubr.bf16.gmra.mrb[0].mxu0 %v474
    %v803 = vpop.f32.mrb[0].mxu0
    %v804 = vadd.f32 %v139, %v803
    %v805 = vpop.f32.mrb[0].mxu0
    %v806 = vpop.f32.mrb[0].mxu0
    %v807 = vadd.f32 %v139, %v806
    %v808 = vpop.f32.mrb[0].mxu0
    %809 = vmatprep.mubr.bf16.mxu0 0
    %810 = vmatmul.mubr.bf16.gmra.mrb[0].mxu0 %v477
    %v811 = vpop.f32.mrb[0].mxu0
    %v812 = vadd.f32 %v139, %v811
    %v813 = vpop.f32.mrb[0].mxu0
    %v814 = vpop.f32.mrb[0].mxu0
    %v815 = vadd.f32 %v139, %v814
    %v816 = vpop.f32.mrb[0].mxu0
    %817 = vmatprep.mubr.bf16.mxu0 0
    %818 = vmatmul.mubr.bf16.gmra.mrb[0].mxu0 %v480
    %v819 = vpop.f32.mrb[0].mxu0
    %v820 = vadd.f32 %v139, %v819
    %v821 = vpop.f32.mrb[0].mxu0
    %v822 = vpop.f32.mrb[0].mxu0
    %v823 = vadd.f32 %v139, %v822
    %v824 = vpop.f32.mrb[0].mxu0
    %825 = vmatprep.mubr.bf16.mxu0 0
    %826 = vmatmul.mubr.bf16.gmra.mrb[0].mxu0 %v483
    %v827 = vpop.f32.mrb[0].mxu0
    %v828 = vadd.f32 %v139, %v827
    %v829 = vpop.f32.mrb[0].mxu0
    %v830 = vpop.f32.mrb[0].mxu0
    %v831 = vadd.f32 %v139, %v830
    %v832 = vpop.f32.mrb[0].mxu0
    %833 = vmatprep.mubr.bf16.mxu0 0
    %834 = vmatmul.mubr.bf16.gmra.mrb[0].mxu0 %v486
    %v835 = vpop.f32.mrb[0].mxu0
    %v836 = vadd.f32 %v139, %v835
    %v837 = vpop.f32.mrb[0].mxu0
    %v838 = vpop.f32.mrb[0].mxu0
    %v839 = vadd.f32 %v139, %v838
    %v840 = vpop.f32.mrb[0].mxu0
    %841 = vmatprep.mubr.bf16.mxu0 0
    %842 = vmatmul.mubr.bf16.gmra.mrb[0].mxu0 %v489
    %v843 = vpop.f32.mrb[0].mxu0
    %v844 = vadd.f32 %v139, %v843
    %v845 = vpop.f32.mrb[0].mxu0
    %v846 = vpop.f32.mrb[0].mxu0
    %v847 = vadd.f32 %v139, %v846
    %v848 = vpop.f32.mrb[0].mxu0
    %849 = vmatprep.mubr.bf16.mxu0 0
    %850 = vmatmul.mubr.bf16.gmra.mrb[0].mxu0 %v492
    %v851 = vpop.f32.mrb[0].mxu0
    %v852 = vadd.f32 %v139, %v851
    %v853 = vpop.f32.mrb[0].mxu0
    %v854 = vpop.f32.mrb[0].mxu0
    %v855 = vadd.f32 %v139, %v854
    %v856 = vpop.f32.mrb[0].mxu0
    %857 = vmatprep.mubr.bf16.mxu0 0
    %858 = vmatmul.mubr.bf16.gmra.mrb[0].mxu0 %v495
    %v859 = vpop.f32.mrb[0].mxu0
    %v860 = vadd.f32 %v139, %v859
    %v861 = vpop.f32.mrb[0].mxu0
    %v862 = vpop.f32.mrb[0].mxu0
    %v863 = vadd.f32 %v139, %v862
    %v864 = vpop.f32.mrb[0].mxu0
    %865 = vmatprep.mubr.bf16.mxu0 0
    %866 = vmatmul.mubr.bf16.gmra.mrb[0].mxu0 %v498
    %v867 = vpop.f32.mrb[0].mxu0
    %v868 = vadd.f32 %v139, %v867
    %v869 = vpop.f32.mrb[0].mxu0
    %v870 = vpop.f32.mrb[0].mxu0
    %v871 = vadd.f32 %v139, %v870
    %v872 = vpop.f32.mrb[0].mxu0
    %873 = vmatprep.mubr.bf16.mxu0 0
    %874 = vmatmul.mubr.bf16.gmra.mrb[0].mxu0 %v501
    %v875 = vpop.f32.mrb[0].mxu0
    %v876 = vadd.f32 %v139, %v875
    %v877 = vpop.f32.mrb[0].mxu0
    %v878 = vpop.f32.mrb[0].mxu0
    %v879 = vadd.f32 %v139, %v878
    %v880 = vpop.f32.mrb[0].mxu0
    %881 = vmatprep.mubr.bf16.mxu0 0
    %882 = vmatmul.mubr.bf16.gmra.mrb[0].mxu0 %v504
    %v883 = vpop.f32.mrb[0].mxu0
    %v884 = vadd.f32 %v139, %v883
    %v885 = vpop.f32.mrb[0].mxu0
    %v886 = vpop.f32.mrb[0].mxu0
    %v887 = vadd.f32 %v139, %v886
    %v888 = vpop.f32.mrb[0].mxu0
    %889 = vmatprep.mubr.bf16.mxu0 0
    %890 = vmatmul.mubr.bf16.gmra.mrb[0].mxu0 %v507
    %v891 = vpop.f32.mrb[0].mxu0
    %v892 = vadd.f32 %v139, %v891
    %v893 = vpop.f32.mrb[0].mxu0
    %v894 = vpop.f32.mrb[0].mxu0
    %v895 = vadd.f32 %v139, %v894
    %v896 = vpop.f32.mrb[0].mxu0
    %897 = vdwg.mxu0
    %v898 = vmax.f32 %v548, 0.0
    %v899 = vmax.f32 %v551, 0.0
    %v900 = vmax.f32 %v556, 0.0
    %v901 = vmax.f32 %v559, 0.0
    %v902 = vmax.f32 %v564, 0.0
    %v903 = vmax.f32 %v567, 0.0
    %v904 = vmax.f32 %v572, 0.0
    %v905 = vmax.f32 %v575, 0.0
    %v906 = vmax.f32 %v580, 0.0
    %v907 = vmax.f32 %v583, 0.0
    %v908 = vmax.f32 %v588, 0.0
    %v909 = vmax.f32 %v591, 0.0
    %v910 = vmax.f32 %v596, 0.0
    %v911 = vmax.f32 %v599, 0.0
    %v912 = vmax.f32 %v604, 0.0
    %v913 = vmax.f32 %v607, 0.0
    %v914 = vmax.f32 %v612, 0.0
    %v915 = vmax.f32 %v615, 0.0
    %v916 = vmax.f32 %v620, 0.0
    %v917 = vmax.f32 %v623, 0.0
    %v918 = vmax.f32 %v628, 0.0
    %v919 = vmax.f32 %v631, 0.0
    %v920 = vmax.f32 %v636, 0.0
    %v921 = vmax.f32 %v639, 0.0
    %v922 = vmax.f32 %v644, 0.0
    %v923 = vmax.f32 %v647, 0.0
    %v924 = vmax.f32 %v652, 0.0
    %v925 = vmax.f32 %v655, 0.0
    %v926 = vmax.f32 %v660, 0.0
    %v927 = vmax.f32 %v663, 0.0
    %v928 = vmax.f32 %v668, 0.0
    %v929 = vmax.f32 %v671, 0.0
    %v930 = vmax.f32 %v676, 0.0
    %v931 = vmax.f32 %v679, 0.0
    %v932 = vmax.f32 %v684, 0.0
    %v933 = vmax.f32 %v687, 0.0
    %v934 = vmax.f32 %v692, 0.0
    %v935 = vmax.f32 %v695, 0.0
    %v936 = vmax.f32 %v700, 0.0
    %v937 = vmax.f32 %v703, 0.0
    %v938 = vmax.f32 %v708, 0.0
    %v939 = vmax.f32 %v711, 0.0
    %v940 = vmax.f32 %v716, 0.0
    %v941 = vmax.f32 %v719, 0.0
    %v942 = vmax.f32 %v724, 0.0
    %v943 = vmax.f32 %v727, 0.0
    %v944 = vmax.f32 %v732, 0.0
    %v945 = vmax.f32 %v735, 0.0
    %v946 = vmax.f32 %v740, 0.0
    %v947 = vmax.f32 %v743, 0.0
    %v948 = vmax.f32 %v748, 0.0
    %v949 = vmax.f32 %v751, 0.0
    %v950 = vmax.f32 %v756, 0.0
    %v951 = vmax.f32 %v759, 0.0
    %v952 = vmax.f32 %v764, 0.0
    %v953 = vmax.f32 %v767, 0.0
    %v954 = vmax.f32 %v772, 0.0
    %v955 = vmax.f32 %v775, 0.0
    %v956 = vmax.f32 %v780, 0.0
    %v957 = vmax.f32 %v783, 0.0
    %v958 = vmax.f32 %v788, 0.0
    %v959 = vmax.f32 %v791, 0.0
    %v960 = vmax.f32 %v796, 0.0
    %v961 = vmax.f32 %v799, 0.0
    %v962 = vmax.f32 %v804, 0.0
    %v963 = vmax.f32 %v807, 0.0
    %v964 = vmax.f32 %v812, 0.0
    %v965 = vmax.f32 %v815, 0.0
    %v966 = vmax.f32 %v820, 0.0
    %v967 = vmax.f32 %v823, 0.0
    %v968 = vmax.f32 %v828, 0.0
    %v969 = vmax.f32 %v831, 0.0
    %v970 = vmax.f32 %v836, 0.0
    %v971 = vmax.f32 %v839, 0.0
    %v972 = vmax.f32 %v844, 0.0
    %v973 = vmax.f32 %v847, 0.0
    %v974 = vmax.f32 %v852, 0.0
    %v975 = vmax.f32 %v855, 0.0
    %v976 = vmax.f32 %v860, 0.0
    %v977 = vmax.f32 %v863, 0.0
    %v978 = vmax.f32 %v868, 0.0
    %v979 = vmax.f32 %v871, 0.0
    %v980 = vmax.f32 %v876, 0.0
    %v981 = vmax.f32 %v879, 0.0
    %v982 = vmax.f32 %v884, 0.0
    %v983 = vmax.f32 %v887, 0.0
    %v984 = vmax.f32 %v892, 0.0
    %v985 = vmax.f32 %v895, 0.0
    %vm986 = vcmask 523264
    %987 = vst.msk [vmem:[#allocation2] sm:$0xff] %vm986, %v898
    %988 = vst.msk [vmem:[#allocation2 + $0x8] sm:$0xff] %vm986, %v899
    %989 = vst.msk [vmem:[#allocation2 + $0x10] sm:$0xff] %vm986, %v900
    %990 = vst.msk [vmem:[#allocation2 + $0x18] sm:$0xff] %vm986, %v901
    %991 = vst.msk [vmem:[#allocation2 + $0x20] sm:$0xff] %vm986, %v902
    %992 = vst.msk [vmem:[#allocation2 + $0x28] sm:$0xff] %vm986, %v903
    %993 = vst.msk [vmem:[#allocation2 + $0x30] sm:$0xff] %vm986, %v904
    %994 = vst.msk [vmem:[#allocation2 + $0x38] sm:$0xff] %vm986, %v905
    %995 = vst.msk [vmem:[#allocation2 + $0x40] sm:$0xff] %vm986, %v906
    %996 = vst.msk [vmem:[#allocation2 + $0x48] sm:$0xff] %vm986, %v907
    %997 = vst.msk [vmem:[#allocation2 + $0x50] sm:$0xff] %vm986, %v908
    %998 = vst.msk [vmem:[#allocation2 + $0x58] sm:$0xff] %vm986, %v909
    %999 = vst.msk [vmem:[#allocation2 + $0x60] sm:$0xff] %vm986, %v910
    %1000 = vst.msk [vmem:[#allocation2 + $0x68] sm:$0xff] %vm986, %v911
    %1001 = vst.msk [vmem:[#allocation2 + $0x70] sm:$0xff] %vm986, %v912
    %1002 = vst.msk [vmem:[#allocation2 + $0x78] sm:$0xff] %vm986, %v913
    %1003 = vst.msk [vmem:[#allocation2 + $0x80] sm:$0xff] %vm986, %v914
    %1004 = vst.msk [vmem:[#allocation2 + $0x88] sm:$0xff] %vm986, %v915
    %1005 = vst.msk [vmem:[#allocation2 + $0x90] sm:$0xff] %vm986, %v916
    %1006 = vst.msk [vmem:[#allocation2 + $0x98] sm:$0xff] %vm986, %v917
    %1007 = vst.msk [vmem:[#allocation2 + $0xa0] sm:$0xff] %vm986, %v918
    %1008 = vst.msk [vmem:[#allocation2 + $0xa8] sm:$0xff] %vm986, %v919
    %1009 = vst.msk [vmem:[#allocation2 + $0xb0] sm:$0xff] %vm986, %v920
    %1010 = vst.msk [vmem:[#allocation2 + $0xb8] sm:$0xff] %vm986, %v921
    %1011 = vst.msk [vmem:[#allocation2 + $0xc0] sm:$0xff] %vm986, %v922
    %1012 = vst.msk [vmem:[#allocation2 + $0xc8] sm:$0xff] %vm986, %v923
    %1013 = vst.msk [vmem:[#allocation2 + $0xd0] sm:$0xff] %vm986, %v924
    %1014 = vst.msk [vmem:[#allocation2 + $0xd8] sm:$0xff] %vm986, %v925
    %1015 = vst.msk [vmem:[#allocation2 + $0xe0] sm:$0xff] %vm986, %v926
    %1016 = vst.msk [vmem:[#allocation2 + $0xe8] sm:$0xff] %vm986, %v927
    %1017 = vst.msk [vmem:[#allocation2 + $0xf0] sm:$0xff] %vm986, %v928
    %1018 = vst.msk [vmem:[#allocation2 + $0xf8] sm:$0xff] %vm986, %v929
    %1019 = vst.msk [vmem:[#allocation2 + $0x100] sm:$0xff] %vm986, %v930
    %1020 = vst.msk [vmem:[#allocation2 + $0x108] sm:$0xff] %vm986, %v931
    %1021 = vst.msk [vmem:[#allocation2 + $0x110] sm:$0xff] %vm986, %v932
    %1022 = vst.msk [vmem:[#allocation2 + $0x118] sm:$0xff] %vm986, %v933
    %1023 = vst.msk [vmem:[#allocation2 + $0x120] sm:$0xff] %vm986, %v934
    %1024 = vst.msk [vmem:[#allocation2 + $0x128] sm:$0xff] %vm986, %v935
    %1025 = vst.msk [vmem:[#allocation2 + $0x130] sm:$0xff] %vm986, %v936
    %1026 = vst.msk [vmem:[#allocation2 + $0x138] sm:$0xff] %vm986, %v937
    %1027 = vst.msk [vmem:[#allocation2 + $0x140] sm:$0xff] %vm986, %v938
    %1028 = vst.msk [vmem:[#allocation2 + $0x148] sm:$0xff] %vm986, %v939
    %1029 = vst.msk [vmem:[#allocation2 + $0x150] sm:$0xff] %vm986, %v940
    %1030 = vst.msk [vmem:[#allocation2 + $0x158] sm:$0xff] %vm986, %v941
    %1031 = vst.msk [vmem:[#allocation2 + $0x160] sm:$0xff] %vm986, %v942
    %1032 = vst.msk [vmem:[#allocation2 + $0x168] sm:$0xff] %vm986, %v943
    %1033 = vst.msk [vmem:[#allocation2 + $0x170] sm:$0xff] %vm986, %v944
    %1034 = vst.msk [vmem:[#allocation2 + $0x178] sm:$0xff] %vm986, %v945
    %1035 = vst.msk [vmem:[#allocation2 + $0x180] sm:$0xff] %vm986, %v946
    %1036 = vst.msk [vmem:[#allocation2 + $0x188] sm:$0xff] %vm986, %v947
    %1037 = vst.msk [vmem:[#allocation2 + $0x190] sm:$0xff] %vm986, %v948
    %1038 = vst.msk [vmem:[#allocation2 + $0x198] sm:$0xff] %vm986, %v949
    %1039 = vst.msk [vmem:[#allocation2 + $0x1a0] sm:$0xff] %vm986, %v950
    %1040 = vst.msk [vmem:[#allocation2 + $0x1a8] sm:$0xff] %vm986, %v951
    %1041 = vst.msk [vmem:[#allocation2 + $0x1b0] sm:$0xff] %vm986, %v952
    %1042 = vst.msk [vmem:[#allocation2 + $0x1b8] sm:$0xff] %vm986, %v953
    %1043 = vst.msk [vmem:[#allocation2 + $0x1c0] sm:$0xff] %vm986, %v954
    %1044 = vst.msk [vmem:[#allocation2 + $0x1c8] sm:$0xff] %vm986, %v955
    %1045 = vst.msk [vmem:[#allocation2 + $0x1d0] sm:$0xff] %vm986, %v956
    %1046 = vst.msk [vmem:[#allocation2 + $0x1d8] sm:$0xff] %vm986, %v957
    %1047 = vst.msk [vmem:[#allocation2 + $0x1e0] sm:$0xff] %vm986, %v958
    %1048 = vst.msk [vmem:[#allocation2 + $0x1e8] sm:$0xff] %vm986, %v959
    %1049 = vst.msk [vmem:[#allocation2 + $0x1f0] sm:$0xff] %vm986, %v960
    %1050 = vst.msk [vmem:[#allocation2 + $0x1f8] sm:$0xff] %vm986, %v961
    %1051 = vst.msk [vmem:[#allocation2 + $0x200] sm:$0xff] %vm986, %v962
    %1052 = vst.msk [vmem:[#allocation2 + $0x208] sm:$0xff] %vm986, %v963
    %1053 = vst.msk [vmem:[#allocation2 + $0x210] sm:$0xff] %vm986, %v964
    %1054 = vst.msk [vmem:[#allocation2 + $0x218] sm:$0xff] %vm986, %v965
    %1055 = vst.msk [vmem:[#allocation2 + $0x220] sm:$0xff] %vm986, %v966
    %1056 = vst.msk [vmem:[#allocation2 + $0x228] sm:$0xff] %vm986, %v967
    %1057 = vst.msk [vmem:[#allocation2 + $0x230] sm:$0xff] %vm986, %v968
    %1058 = vst.msk [vmem:[#allocation2 + $0x238] sm:$0xff] %vm986, %v969
    %1059 = vst.msk [vmem:[#allocation2 + $0x240] sm:$0xff] %vm986, %v970
    %1060 = vst.msk [vmem:[#allocation2 + $0x248] sm:$0xff] %vm986, %v971
    %1061 = vst.msk [vmem:[#allocation2 + $0x250] sm:$0xff] %vm986, %v972
    %1062 = vst.msk [vmem:[#allocation2 + $0x258] sm:$0xff] %vm986, %v973
    %1063 = vst.msk [vmem:[#allocation2 + $0x260] sm:$0xff] %vm986, %v974
    %1064 = vst.msk [vmem:[#allocation2 + $0x268] sm:$0xff] %vm986, %v975
    %1065 = vst.msk [vmem:[#allocation2 + $0x270] sm:$0xff] %vm986, %v976
    %1066 = vst.msk [vmem:[#allocation2 + $0x278] sm:$0xff] %vm986, %v977
    %1067 = vst.msk [vmem:[#allocation2 + $0x280] sm:$0xff] %vm986, %v978
    %1068 = vst.msk [vmem:[#allocation2 + $0x288] sm:$0xff] %vm986, %v979
    %1069 = vst.msk [vmem:[#allocation2 + $0x290] sm:$0xff] %vm986, %v980
    %1070 = vst.msk [vmem:[#allocation2 + $0x298] sm:$0xff] %vm986, %v981
    %1071 = vst.msk [vmem:[#allocation2 + $0x2a0] sm:$0xff] %vm986, %v982
    %1072 = vst.msk [vmem:[#allocation2 + $0x2a8] sm:$0xff] %vm986, %v983
    %1073 = vst.msk [vmem:[#allocation2 + $0x2b0] sm:$0xff] %vm986, %v984
    %1074 = vst.msk [vmem:[#allocation2 + $0x2b8] sm:$0xff] %vm986, %v985
    %v1075 = vld [vmem:[#allocation2] sm:$0xff]
    %v1076 = vld [vmem:[#allocation2 + $0x8] sm:$0xff]
    %v1077 = vld [vmem:[#allocation2 + $0x10] sm:$0xff]
    %v1078 = vld [vmem:[#allocation2 + $0x18] sm:$0xff]
    %v1079 = vld [vmem:[#allocation2 + $0x20] sm:$0xff]
    %v1080 = vld [vmem:[#allocation2 + $0x28] sm:$0xff]
    %v1081 = vld [vmem:[#allocation2 + $0x30] sm:$0xff]
    %v1082 = vld [vmem:[#allocation2 + $0x38] sm:$0xff]
    %v1083 = vld [vmem:[#allocation2 + $0x40] sm:$0xff]
    %v1084 = vld [vmem:[#allocation2 + $0x48] sm:$0xff]
    %v1085 = vld [vmem:[#allocation2 + $0x50] sm:$0xff]
    %v1086 = vld [vmem:[#allocation2 + $0x58] sm:$0xff]
    %v1087 = vld [vmem:[#allocation2 + $0x60] sm:$0xff]
    %v1088 = vld [vmem:[#allocation2 + $0x68] sm:$0xff]
    %v1089 = vld [vmem:[#allocation2 + $0x70] sm:$0xff]
    %v1090 = vld [vmem:[#allocation2 + $0x78] sm:$0xff]
    %v1091 = vld [vmem:[#allocation2 + $0x80] sm:$0xff]
    %v1092 = vld [vmem:[#allocation2 + $0x88] sm:$0xff]
    %v1093 = vld [vmem:[#allocation2 + $0x90] sm:$0xff]
    %v1094 = vld [vmem:[#allocation2 + $0x98] sm:$0xff]
    %v1095 = vld [vmem:[#allocation2 + $0xa0] sm:$0xff]
    %v1096 = vld [vmem:[#allocation2 + $0xa8] sm:$0xff]
    %v1097 = vmax.f32 %v1075, %v1086
    %v1098 = vmax.f32 %v1076, %v1087
    %v1099 = vmax.f32 %v1077, %v1088
    %v1100 = vmax.f32 %v1078, %v1089
    %v1101 = vmax.f32 %v1079, %v1090
    %v1102 = vmax.f32 %v1080, %v1091
    %v1103 = vmax.f32 %v1081, %v1092
    %v1104 = vmax.f32 %v1082, %v1093
    %v1105 = vmax.f32 %v1083, %v1094
    %v1106 = vmax.f32 %v1084, %v1095
    %v1107 = vmax.f32 %v1085, %v1096
    %v1108 = vld [vmem:[#allocation2 + $0xb0] sm:$0xff]
    %v1109 = vld [vmem:[#allocation2 + $0xb8] sm:$0xff]
    %v1110 = vld [vmem:[#allocation2 + $0xc0] sm:$0xff]
    %v1111 = vld [vmem:[#allocation2 + $0xc8] sm:$0xff]
    %v1112 = vld [vmem:[#allocation2 + $0xd0] sm:$0xff]
    %v1113 = vld [vmem:[#allocation2 + $0xd8] sm:$0xff]
    %v1114 = vld [vmem:[#allocation2 + $0xe0] sm:$0xff]
    %v1115 = vld [vmem:[#allocation2 + $0xe8] sm:$0xff]
    %v1116 = vld [vmem:[#allocation2 + $0xf0] sm:$0xff]
    %v1117 = vld [vmem:[#allocation2 + $0xf8] sm:$0xff]
    %v1118 = vld [vmem:[#allocation2 + $0x100] sm:$0xff]
    %v1119 = vld [vmem:[#allocation2 + $0x108] sm:$0xff]
    %v1120 = vld [vmem:[#allocation2 + $0x110] sm:$0xff]
    %v1121 = vld [vmem:[#allocation2 + $0x118] sm:$0xff]
    %v1122 = vld [vmem:[#allocation2 + $0x120] sm:$0xff]
    %v1123 = vld [vmem:[#allocation2 + $0x128] sm:$0xff]
    %v1124 = vld [vmem:[#allocation2 + $0x130] sm:$0xff]
    %v1125 = vld [vmem:[#allocation2 + $0x138] sm:$0xff]
    %v1126 = vld [vmem:[#allocation2 + $0x140] sm:$0xff]
    %v1127 = vld [vmem:[#allocation2 + $0x148] sm:$0xff]
    %v1128 = vld [vmem:[#allocation2 + $0x150] sm:$0xff]
    %v1129 = vld [vmem:[#allocation2 + $0x158] sm:$0xff]
    %v1130 = vmax.f32 %v1108, %v1119
    %v1131 = vmax.f32 %v1109, %v1120
    %v1132 = vmax.f32 %v1110, %v1121
    %v1133 = vmax.f32 %v1111, %v1122
    %v1134 = vmax.f32 %v1112, %v1123
    %v1135 = vmax.f32 %v1113, %v1124
    %v1136 = vmax.f32 %v1114, %v1125
    %v1137 = vmax.f32 %v1115, %v1126
    %v1138 = vmax.f32 %v1116, %v1127
    %v1139 = vmax.f32 %v1117, %v1128
    %v1140 = vmax.f32 %v1118, %v1129
    %v1141 = vmax.f32 %v1097, %v1130
    %v1142 = vmax.f32 %v1098, %v1131
    %v1143 = vmax.f32 %v1099, %v1132
    %v1144 = vmax.f32 %v1100, %v1133
    %v1145 = vmax.f32 %v1101, %v1134
    %v1146 = vmax.f32 %v1102, %v1135
    %v1147 = vmax.f32 %v1103, %v1136
    %v1148 = vmax.f32 %v1104, %v1137
    %v1149 = vmax.f32 %v1105, %v1138
    %v1150 = vmax.f32 %v1106, %v1139
    %v1151 = vmax.f32 %v1107, %v1140
    %v1152 = vpack.c.bf16 %v1142, %v1141
    %v1153 = vpack.c.bf16 %v1144, %v1143
    %v1154 = vpack.c.bf16 %v1146, %v1145
    %v1155 = vpack.c.bf16 %v1148, %v1147
    %v1156 = vpack.c.bf16 %v1150, %v1149
    %v1157 = vpack.c.bf16 %v1151, %v1151
    %v1164 = vunpack.c.l.b16 %v1152
    %v1165 = vunpack.c.h.b16 %v1152
    %v1166 = vunpack.c.l.b16 %v1153
    %v1167 = vunpack.c.h.b16 %v1153
    %v1168 = vunpack.c.l.b16 %v1154
    %v1169 = vunpack.c.h.b16 %v1154
    %v1170 = vunpack.c.l.b16 %v1155
    %v1171 = vunpack.c.h.b16 %v1155
    %v1172 = vunpack.c.l.b16 %v1156
    %v1173 = vunpack.c.h.b16 %v1156
    %v1174 = vunpack.c.l.b16 %v1157
    %v1175 = vpack.c.b16 %v1164, %v1164
    %v1176 = vpack.c.b16 %v1165, %v1165
    %v1177 = vpack.c.b16 %v1166, %v1166
    %v1178 = vpack.c.b16 %v1167, %v1167
    %v1179 = vpack.c.b16 %v1168, %v1168
    %v1180 = vpack.c.b16 %v1169, %v1169
    %v1181 = vpack.c.b16 %v1170, %v1170
    %v1182 = vpack.c.b16 %v1171, %v1171
    %v1183 = vpack.c.b16 %v1172, %v1172
    %v1184 = vpack.c.b16 %v1173, %v1173
    %v1185 = vpack.c.b16 %v1174, %v1174
    %vm1197 = vcmask 519168
    %1198 = vst.msk [vmem:[%s3] sm:$0xf] %vm1197, %v1175
    %1199 = vst.msk [vmem:[%s3 + $0x4] sm:$0xf] %vm1197, %v1176
    %1200 = vst.msk [vmem:[%s3 + $0x8] sm:$0xf] %vm1197, %v1177
    %1201 = vst.msk [vmem:[%s3 + $0xc] sm:$0xf] %vm1197, %v1178
    %1202 = vst.msk [vmem:[%s3 + $0x10] sm:$0xf] %vm1197, %v1179
    %1203 = vst.msk [vmem:[%s3 + $0x14] sm:$0xf] %vm1197, %v1180
    %1204 = vst.msk [vmem:[%s3 + $0x18] sm:$0xf] %vm1197, %v1181
    %1205 = vst.msk [vmem:[%s3 + $0x1c] sm:$0xf] %vm1197, %v1182
    %1206 = vst.msk [vmem:[%s3 + $0x20] sm:$0xf] %vm1197, %v1183
    %1207 = vst.msk [vmem:[%s3 + $0x24] sm:$0xf] %vm1197, %v1184
    %1208 = vst.msk [vmem:[%s3 + $0x28] sm:$0xf] %vm1197, %v1185
    %v1209 = vld [vmem:[#allocation2 + $0x160] sm:$0xff]
    %v1210 = vld [vmem:[#allocation2 + $0x168] sm:$0xff]
    %v1211 = vld [vmem:[#allocation2 + $0x170] sm:$0xff]
    %v1212 = vld [vmem:[#allocation2 + $0x178] sm:$0xff]
    %v1213 = vld [vmem:[#allocation2 + $0x180] sm:$0xff]
    %v1214 = vld [vmem:[#allocation2 + $0x188] sm:$0xff]
    %v1215 = vld [vmem:[#allocation2 + $0x190] sm:$0xff]
    %v1216 = vld [vmem:[#allocation2 + $0x198] sm:$0xff]
    %v1217 = vld [vmem:[#allocation2 + $0x1a0] sm:$0xff]
    %v1218 = vld [vmem:[#allocation2 + $0x1a8] sm:$0xff]
    %v1219 = vld [vmem:[#allocation2 + $0x1b0] sm:$0xff]
    %v1220 = vld [vmem:[#allocation2 + $0x1b8] sm:$0xff]
    %v1221 = vld [vmem:[#allocation2 + $0x1c0] sm:$0xff]
    %v1222 = vld [vmem:[#allocation2 + $0x1c8] sm:$0xff]
    %v1223 = vld [vmem:[#allocation2 + $0x1d0] sm:$0xff]
    %v1224 = vld [vmem:[#allocation2 + $0x1d8] sm:$0xff]
    %v1225 = vld [vmem:[#allocation2 + $0x1e0] sm:$0xff]
    %v1226 = vld [vmem:[#allocation2 + $0x1e8] sm:$0xff]
    %v1227 = vld [vmem:[#allocation2 + $0x1f0] sm:$0xff]
    %v1228 = vld [vmem:[#allocation2 + $0x1f8] sm:$0xff]
    %v1229 = vld [vmem:[#allocation2 + $0x200] sm:$0xff]
    %v1230 = vld [vmem:[#allocation2 + $0x208] sm:$0xff]
    %v1231 = vmax.f32 %v1209, %v1220
    %v1232 = vmax.f32 %v1210, %v1221
    %v1233 = vmax.f32 %v1211, %v1222
    %v1234 = vmax.f32 %v1212, %v1223
    %v1235 = vmax.f32 %v1213, %v1224
    %v1236 = vmax.f32 %v1214, %v1225
    %v1237 = vmax.f32 %v1215, %v1226
    %v1238 = vmax.f32 %v1216, %v1227
    %v1239 = vmax.f32 %v1217, %v1228
    %v1240 = vmax.f32 %v1218, %v1229
    %v1241 = vmax.f32 %v1219, %v1230
    %v1242 = vld [vmem:[#allocation2 + $0x210] sm:$0xff]
    %v1243 = vld [vmem:[#allocation2 + $0x218] sm:$0xff]
    %v1244 = vld [vmem:[#allocation2 + $0x220] sm:$0xff]
    %v1245 = vld [vmem:[#allocation2 + $0x228] sm:$0xff]
    %v1246 = vld [vmem:[#allocation2 + $0x230] sm:$0xff]
    %v1247 = vld [vmem:[#allocation2 + $0x238] sm:$0xff]
    %v1248 = vld [vmem:[#allocation2 + $0x240] sm:$0xff]
    %v1249 = vld [vmem:[#allocation2 + $0x248] sm:$0xff]
    %v1250 = vld [vmem:[#allocation2 + $0x250] sm:$0xff]
    %v1251 = vld [vmem:[#allocation2 + $0x258] sm:$0xff]
    %v1252 = vld [vmem:[#allocation2 + $0x260] sm:$0xff]
    %v1253 = vld [vmem:[#allocation2 + $0x268] sm:$0xff]
    %v1254 = vld [vmem:[#allocation2 + $0x270] sm:$0xff]
    %v1255 = vld [vmem:[#allocation2 + $0x278] sm:$0xff]
    %v1256 = vld [vmem:[#allocation2 + $0x280] sm:$0xff]
    %v1257 = vld [vmem:[#allocation2 + $0x288] sm:$0xff]
    %v1258 = vld [vmem:[#allocation2 + $0x290] sm:$0xff]
    %v1259 = vld [vmem:[#allocation2 + $0x298] sm:$0xff]
    %v1260 = vld [vmem:[#allocation2 + $0x2a0] sm:$0xff]
    %v1261 = vld [vmem:[#allocation2 + $0x2a8] sm:$0xff]
    %v1262 = vld [vmem:[#allocation2 + $0x2b0] sm:$0xff]
    %v1263 = vld [vmem:[#allocation2 + $0x2b8] sm:$0xff]
    %v1264 = vmax.f32 %v1242, %v1253
    %v1265 = vmax.f32 %v1243, %v1254
    %v1266 = vmax.f32 %v1244, %v1255
    %v1267 = vmax.f32 %v1245, %v1256
    %v1268 = vmax.f32 %v1246, %v1257
    %v1269 = vmax.f32 %v1247, %v1258
    %v1270 = vmax.f32 %v1248, %v1259
    %v1271 = vmax.f32 %v1249, %v1260
    %v1272 = vmax.f32 %v1250, %v1261
    %v1273 = vmax.f32 %v1251, %v1262
    %v1274 = vmax.f32 %v1252, %v1263
    %v1275 = vmax.f32 %v1231, %v1264
    %v1276 = vmax.f32 %v1232, %v1265
    %v1277 = vmax.f32 %v1233, %v1266
    %v1278 = vmax.f32 %v1234, %v1267
    %v1279 = vmax.f32 %v1235, %v1268
    %v1280 = vmax.f32 %v1236, %v1269
    %v1281 = vmax.f32 %v1237, %v1270
    %v1282 = vmax.f32 %v1238, %v1271
    %v1283 = vmax.f32 %v1239, %v1272
    %v1284 = vmax.f32 %v1240, %v1273
    %v1285 = vmax.f32 %v1241, %v1274
    %v1286 = vpack.c.bf16 %v1276, %v1275
    %v1287 = vpack.c.bf16 %v1278, %v1277
    %v1288 = vpack.c.bf16 %v1280, %v1279
    %v1289 = vpack.c.bf16 %v1282, %v1281
    %v1290 = vpack.c.bf16 %v1284, %v1283
    %v1291 = vpack.c.bf16 %v1285, %v1285
    %v1298 = vunpack.c.l.b16 %v1286
    %v1299 = vunpack.c.h.b16 %v1286
    %v1300 = vunpack.c.l.b16 %v1287
    %v1301 = vunpack.c.h.b16 %v1287
    %v1302 = vunpack.c.l.b16 %v1288
    %v1303 = vunpack.c.h.b16 %v1288
    %v1304 = vunpack.c.l.b16 %v1289
    %v1305 = vunpack.c.h.b16 %v1289
    %v1306 = vunpack.c.l.b16 %v1290
    %v1307 = vunpack.c.h.b16 %v1290
    %v1308 = vunpack.c.l.b16 %v1291
    %v1309 = vpack.c.b16 %v1298, %v1298
    %v1310 = vpack.c.b16 %v1299, %v1299
    %v1311 = vpack.c.b16 %v1300, %v1300
    %v1312 = vpack.c.b16 %v1301, %v1301
    %v1313 = vpack.c.b16 %v1302, %v1302
    %v1314 = vpack.c.b16 %v1303, %v1303
    %v1315 = vpack.c.b16 %v1304, %v1304
    %v1316 = vpack.c.b16 %v1305, %v1305
    %v1317 = vpack.c.b16 %v1306, %v1306
    %v1318 = vpack.c.b16 %v1307, %v1307
    %v1319 = vpack.c.b16 %v1308, %v1308
    %s1331 = scalar_lea.vmem %s3, 44
    %1332 = vst.msk [vmem:[%s1331] sm:$0xf] %vm1197, %v1309
    %1333 = vst.msk [vmem:[%s1331 + $0x4] sm:$0xf] %vm1197, %v1310
    %1334 = vst.msk [vmem:[%s1331 + $0x8] sm:$0xf] %vm1197, %v1311
    %1335 = vst.msk [vmem:[%s1331 + $0xc] sm:$0xf] %vm1197, %v1312
    %1336 = vst.msk [vmem:[%s1331 + $0x10] sm:$0xf] %vm1197, %v1313
    %1337 = vst.msk [vmem:[%s1331 + $0x14] sm:$0xf] %vm1197, %v1314
    %1338 = vst.msk [vmem:[%s1331 + $0x18] sm:$0xf] %vm1197, %v1315
    %1339 = vst.msk [vmem:[%s1331 + $0x1c] sm:$0xf] %vm1197, %v1316
    %1340 = vst.msk [vmem:[%s1331 + $0x20] sm:$0xf] %vm1197, %v1317
    %1341 = vst.msk [vmem:[%s1331 + $0x24] sm:$0xf] %vm1197, %v1318
    %1342 = vst.msk [vmem:[%s1331 + $0x28] sm:$0xf] %vm1197, %v1319
    // Predicated region
    $region22: #{value_net_forward.2} parent=1 // pred_check
      _
    $region23: #{value_net_forward.2} parent=1 // pred_check_branch
      %1344 = sbr.rel (0) target = $region25
    $region24: #{value_net_forward.2} parent=1 // pred_region
      _
    $region25: #{value_net_forward.2} parent=1 // pred_fallthru
      _
    // Predicated region
    $region26: #{value_net_forward.2} parent=1 // pred_check
      _
    $region27: #{value_net_forward.2} parent=1 // pred_check_branch
      %1346 = sbr.rel (0) target = $region29
    $region28: #{value_net_forward.2} parent=1 // pred_region
      _
    $region29: #{value_net_forward.2} parent=1 // pred_fallthru
      _
    %1347 = vsyncpa [#allocation4], 1
    %1348 = vsyncpa [#allocation6], 1

// kernel: value_net_forward.3
$region0: #{value_net_forward.3}
  #allocation0 [shape = 'u32[]', space=smem, size = 0x4, offset = 0x4, fixed_abs, tag = 'smem constant byte address 0x4 - core index']
  #allocation1 [shape = 'u32[144,128]{1,0:T(1,128)}', space=vmem, size = 0x12000, scoped, tag = 'internal scratch']
  %s0 = inlined_call_operand.vmem [shape: bf16[2,5632], index: 0, kind: input, shape index: {}]
  %s1 = inlined_call_operand.hbm [shape: bf16[5632,1024], index: 1, kind: input, shape index: {}]
  %s2 = inlined_call_operand.hbm [shape: f32[1,1024], index: 2, kind: input, shape index: {}]
  %s3 = inlined_call_operand.vmem [shape: f32[1024,8], index: 3, kind: input, shape index: {}]
  %s4 = inlined_call_operand.vmem [shape: f32[2,2,8], index: 4, kind: output, shape index: {}]
  %s5 = sld [smem:[#allocation0]]
  $region57: #{value_net_forward.3} parent=0
    _
  %s7 = ssub.s32 1, %s5
  %s8 = scalar_select 0, %s7, %s5
  $region1: #{value_net_forward.3} parent=0
    #allocation2 [shape = 'u8[11534336]{0}', space=vmem, size = 0xb00000, scoped, tag = 'input window, operand 1']
    #allocation3 [shape = 's32[2]{0}', space=sflag, size = 0x8, scoped, tag = 'scoped memory for value_net_forward.3']
    #allocation4 [shape = 'u8[4096]{0}', space=vmem, size = 0x1000, scoped, tag = 'input window, operand 2']
    #allocation5 [shape = 's32[2]{0}', space=sflag, size = 0x8, scoped, tag = 'scoped memory for value_net_forward.3']
    %9 = vsyncpa [#allocation3], 0
    %s10 = scalar_lea.sflag [#allocation3], 1
    %11 = vsyncpa %s10, 0
    %12 = vsyncpa [#allocation5], 0
    %s13 = scalar_lea.sflag [#allocation5], 1
    %14 = vsyncpa %s13, 0
    loop: start=0, step=1, limit=4
    $region2: #{value_net_forward.3} parent=1 // loop_pre_header
      _
    $region3: #{value_net_forward.3} parent=1 // loop_header
      %s16 = sphi 0, %s20
      %p17 = scmp.ge.s32.totalorder %s16, 4
      %s24 = sphi 0, %s24
      %s26 = sphi 0, %s24
      %s27 = sphi 0, %s26
      %s41 = sphi 0, %s27
      %s47 = sphi 0, %s49
      %s50 = sphi 0, %s47
      %s51 = sphi 0, %s50
      %s67 = sphi 0, %s51
      %s73 = sphi 0, %s75
      %s76 = sphi 0, %s73
      %s77 = sphi 0, %s76
      %s93 = sphi 0, %s77
      %s99 = sphi 0, %s101
      %s102 = sphi 0, %s99
      %s103 = sphi 0, %s102
      %s119 = sphi 0, %s103
      %s125 = sphi 0, %s127
      %s128 = sphi 0, %s125
      %s129 = sphi 0, %s128
      %s145 = sphi 0, %s129
    $region4: #{value_net_forward.3} parent=1 // loop_header_branch
      %19 = sbr.rel (%p17) target = $region8
    $region5: #{value_net_forward.3} parent=1 // loop_body
      %s21 = ssub.s32 %s16, 1
      %s22 = ssub.s32 %s16, 2
      %s23 = sadd.s32 %s16, 1
      %s25 = sadd.s32 %s24, 1
      %p28 = scmp.eq.s32.totalorder %s16, 1
      %p29 = scmp.ne.s32.totalorder %s24, %s26
      %p30 = scmp.eq.s32.totalorder %s16, 0
      %p31 = por %p29, %p30
      %p32 = scmp.ne.s32.totalorder %s24, %s26
      %p33 = scmp.eq.s32.totalorder %s21, 1
      %p34 = por %p32, %p33
      %p35 = scmp.ne.s32.totalorder %s26, %s27
      %p36 = scmp.eq.s32.totalorder %s21, 0
      %p37 = por %p35, %p36
      %p38 = scmp.ne.s32.totalorder %s26, %s27
      %p39 = scmp.eq.s32.totalorder %s22, 1
      %p40 = por %p38, %p39
      %p42 = scmp.ne.s32.totalorder %s27, %s41
      %p43 = scmp.eq.s32.totalorder %s22, 0
      %p44 = por %p42, %p43
      %s45 = ssub.s32 %s16, %s23
      %p46 = scmp.eq.s32.totalorder %s45, 0
      %s48 = sadd.s32 %s47, 1
      %s49 = scalar_select %p46, %s47, %s48
      %p52 = pneg %p46
      %p53 = scmp.eq.s32.totalorder %s16, 1
      %p54 = por %p52, %p53
      %p55 = scmp.ne.s32.totalorder %s47, %s50
      %p56 = scmp.eq.s32.totalorder %s16, 0
      %p57 = por %p55, %p56
      %p58 = scmp.ne.s32.totalorder %s47, %s50
      %p59 = scmp.eq.s32.totalorder %s21, 1
      %p60 = por %p58, %p59
      %p61 = scmp.ne.s32.totalorder %s50, %s51
      %p62 = scmp.eq.s32.totalorder %s21, 0
      %p63 = por %p61, %p62
      %p64 = scmp.ne.s32.totalorder %s50, %s51
      %p65 = scmp.eq.s32.totalorder %s22, 1
      %p66 = por %p64, %p65
      %p68 = scmp.ne.s32.totalorder %s51, %s67
      %p69 = scmp.eq.s32.totalorder %s22, 0
      %p70 = por %p68, %p69
      %s71 = ssub.s32 %s16, %s23
      %p72 = scmp.eq.s32.totalorder %s71, 0
      %s74 = sadd.s32 %s73, 1
      %s75 = scalar_select %p72, %s73, %s74
      %p78 = pneg %p72
      %p79 = scmp.eq.s32.totalorder %s16, 1
      %p80 = por %p78, %p79
      %p81 = scmp.ne.s32.totalorder %s73, %s76
      %p82 = scmp.eq.s32.totalorder %s16, 0
      %p83 = por %p81, %p82
      %p84 = scmp.ne.s32.totalorder %s73, %s76
      %p85 = scmp.eq.s32.totalorder %s21, 1
      %p86 = por %p84, %p85
      %p87 = scmp.ne.s32.totalorder %s76, %s77
      %p88 = scmp.eq.s32.totalorder %s21, 0
      %p89 = por %p87, %p88
      %p90 = scmp.ne.s32.totalorder %s76, %s77
      %p91 = scmp.eq.s32.totalorder %s22, 1
      %p92 = por %p90, %p91
      %p94 = scmp.ne.s32.totalorder %s77, %s93
      %p95 = scmp.eq.s32.totalorder %s22, 0
      %p96 = por %p94, %p95
      %s97 = ssub.s32 %s16, %s23
      %p98 = scmp.eq.s32.totalorder %s97, 0
      %s100 = sadd.s32 %s99, 1
      %s101 = scalar_select %p98, %s99, %s100
      %p104 = pneg %p98
      %p105 = scmp.eq.s32.totalorder %s16, 1
      %p106 = por %p104, %p105
      %p107 = scmp.ne.s32.totalorder %s99, %s102
      %p108 = scmp.eq.s32.totalorder %s16, 0
      %p109 = por %p107, %p108
      %p110 = scmp.ne.s32.totalorder %s99, %s102
      %p111 = scmp.eq.s32.totalorder %s21, 1
      %p112 = por %p110, %p111
      %p113 = scmp.ne.s32.totalorder %s102, %s103
      %p114 = scmp.eq.s32.totalorder %s21, 0
      %p115 = por %p113, %p114
      %p116 = scmp.ne.s32.totalorder %s102, %s103
      %p117 = scmp.eq.s32.totalorder %s22, 1
      %p118 = por %p116, %p117
      %p120 = scmp.ne.s32.totalorder %s103, %s119
      %p121 = scmp.eq.s32.totalorder %s22, 0
      %p122 = por %p120, %p121
      %s123 = ssub.s32 %s16, %s23
      %p124 = scmp.eq.s32.totalorder %s123, 0
      %s126 = sadd.s32 %s125, 1
      %s127 = scalar_select %p124, %s125, %s126
      %p130 = pneg %p124
      %p131 = scmp.eq.s32.totalorder %s16, 1
      %p132 = por %p130, %p131
      %p133 = scmp.ne.s32.totalorder %s125, %s128
      %p134 = scmp.eq.s32.totalorder %s16, 0
      %p135 = por %p133, %p134
      %p136 = scmp.ne.s32.totalorder %s125, %s128
      %p137 = scmp.eq.s32.totalorder %s21, 1
      %p138 = por %p136, %p137
      %p139 = scmp.ne.s32.totalorder %s128, %s129
      %p140 = scmp.eq.s32.totalorder %s21, 0
      %p141 = por %p139, %p140
      %p142 = scmp.ne.s32.totalorder %s128, %s129
      %p143 = scmp.eq.s32.totalorder %s22, 1
      %p144 = por %p142, %p143
      %p146 = scmp.ne.s32.totalorder %s129, %s145
      %p147 = scmp.eq.s32.totalorder %s22, 0
      %p148 = por %p146, %p147
      %p149 = scmp.le.s32.totalorder 1, %s16
      %p150 = scmp.lt.s32.totalorder %s16, 3
      %p151 = pnand %p149, %p150
      %p152 = pneg %p151
      // Predicated region
      $region9: #{value_net_forward.3} parent=5 // pred_check
        _
      $region10: #{value_net_forward.3} parent=5 // pred_check_branch
        %154 = sbr.rel (%p151) target = $region12
      $region11: #{value_net_forward.3} parent=5 // pred_region
        %s155 = ssub.s32 %s16, 1
        // Predicated region
        $region13: #{value_net_forward.3} parent=11 // pred_check
          %p156 = pneg %p37
        $region14: #{value_net_forward.3} parent=11 // pred_check_branch
          %158 = sbr.rel (%p156) target = $region16
        $region15: #{value_net_forward.3} parent=11 // pred_region
          _
        $region16: #{value_net_forward.3} parent=11 // pred_fallthru
          _
      $region12: #{value_net_forward.3} parent=5 // pred_fallthru
        _
      %p159 = scmp.lt.s32.totalorder %s16, 2
      // Predicated region
      $region17: #{value_net_forward.3} parent=5 // pred_check
        %p160 = pneg %p159
      $region18: #{value_net_forward.3} parent=5 // pred_check_branch
        %162 = sbr.rel (%p160) target = $region20
      $region19: #{value_net_forward.3} parent=5 // pred_region
        // Predicated region
        $region21: #{value_net_forward.3} parent=19 // pred_check
          %p163 = pneg %p57
        $region22: #{value_net_forward.3} parent=19 // pred_check_branch
          %165 = sbr.rel (%p163) target = $region24
        $region23: #{value_net_forward.3} parent=19 // pred_region
          %s166 = sand.u32 %s47, 1
          %s167 = scalar_lea.sflag [#allocation3], %s166
          %s168 = sand.u32 %s47, 1
          %s169 = smul.addr %s168, 11264
          %s170 = scalar_lea.vmem [#allocation2], %s169
          %s171 = smul.u32 4, %s16
          %s173 = ssub.s32 180224, 180224
          %174 = vsyncadd %s167, %s173
          %s175 = smul.addr %s171, 64
          %s176 = scalar_lea.hbm %s1, %s175
          %s177 = sshll.u32 %s170, 4
          %s178 = int_to_ptr.vmem [resolvable:$true] %s177
          %183 = dma.hbm_to_vmem [thread:$0]  %s176, 180224, %s178, %s167, 512, 256, 16
        $region24: #{value_net_forward.3} parent=19 // pred_fallthru
          _
        // Predicated region
        $region25: #{value_net_forward.3} parent=19 // pred_check
          %p184 = pneg %p83
        $region26: #{value_net_forward.3} parent=19 // pred_check_branch
          %186 = sbr.rel (%p184) target = $region28
        $region27: #{value_net_forward.3} parent=19 // pred_region
          %s187 = sand.u32 %s73, 1
          %s188 = scalar_lea.sflag [#allocation5], %s187
          %s189 = sand.u32 %s73, 1
          %s190 = smul.addr %s189, 4
          %s191 = scalar_lea.vmem [#allocation4], %s190
          %s192 = smul.u32 4, %s16
          %s194 = ssub.s32 64, 64
          %195 = vsyncadd %s188, %s194
          %s196 = smul.addr %s192, 16
          %s197 = scalar_lea.hbm %s2, %s196
          %s199 = sshll.u32 %s191, 4
          %s200 = int_to_ptr.vmem [resolvable:$true] %s199
          %202 = dma.hbm_to_vmem [thread:$0]  %s197, 64, %s200, %s188
        $region28: #{value_net_forward.3} parent=19 // pred_fallthru
          _
        // Predicated region
        $region29: #{value_net_forward.3} parent=19 // pred_check
          %p203 = pneg %p109
        $region30: #{value_net_forward.3} parent=19 // pred_check_branch
          %205 = sbr.rel (%p203) target = $region32
        $region31: #{value_net_forward.3} parent=19 // pred_region
          %s206 = smul.u32 64, %s16
          %p207 = scmp.lt.s32.totalorder %s206, 127
          %s208 = scalar_select %p207, %s206, 127
          %s209 = smul.addr %s208, 8
          %s210 = scalar_lea.vmem %s3, %s209
          %s211 = smul.u32 64, %s16
        $region32: #{value_net_forward.3} parent=19 // pred_fallthru
          _
      $region20: #{value_net_forward.3} parent=5 // pred_fallthru
        _
      %p212 = scmp.le.s32.totalorder 1, %s16
      %p213 = scmp.lt.s32.totalorder %s16, 3
      %p214 = pnand %p212, %p213
      %p215 = pneg %p214
      // Predicated region
      $region33: #{value_net_forward.3} parent=5 // pred_check
        _
      $region34: #{value_net_forward.3} parent=5 // pred_check_branch
        %217 = sbr.rel (%p214) target = $region36
      $region35: #{value_net_forward.3} parent=5 // pred_region
        %s218 = ssub.s32 %s16, 1
        %s219 = sand.u32 %s50, 1
        %s220 = scalar_lea.sflag [#allocation3], %s219
        %s221 = sand.u32 %s50, 1
        %s222 = smul.addr %s221, 11264
        %s223 = scalar_lea.vmem [#allocation2], %s222
        // Predicated region
        $region37: #{value_net_forward.3} parent=35 // pred_check
          %p224 = pneg %p63
        $region38: #{value_net_forward.3} parent=35 // pred_check_branch
          %226 = sbr.rel (%p224) target = $region40
        $region39: #{value_net_forward.3} parent=35 // pred_region
          %227 = dma.done %s220, 180224
        $region40: #{value_net_forward.3} parent=35 // pred_fallthru
          _
        %s228 = sand.u32 %s76, 1
        %s229 = scalar_lea.sflag [#allocation5], %s228
        %s230 = sand.u32 %s76, 1
        %s231 = smul.addr %s230, 4
        %s232 = scalar_lea.vmem [#allocation4], %s231
        // Predicated region
        $region41: #{value_net_forward.3} parent=35 // pred_check
          %p233 = pneg %p89
        $region42: #{value_net_forward.3} parent=35 // pred_check_branch
          %235 = sbr.rel (%p233) target = $region44
        $region43: #{value_net_forward.3} parent=35 // pred_region
          %236 = dma.done %s229, 64
        $region44: #{value_net_forward.3} parent=35 // pred_fallthru
          _
        %p237 = pneg %p37
        %p238 = pneg %p34
        %s239 = sand.u32 %s50, 1
        %s240 = scalar_lea.sflag [#allocation3], %s239
        %s241 = sand.u32 %s50, 1
        %s242 = smul.addr %s241, 11264
        %s243 = scalar_lea.vmem [#allocation2], %s242
        %p244 = pneg %p63
        %p245 = pneg %p60
        %s246 = sand.u32 %s76, 1
        %s247 = scalar_lea.sflag [#allocation5], %s246
        %s248 = sand.u32 %s76, 1
        %s249 = smul.addr %s248, 4
        %s250 = scalar_lea.vmem [#allocation4], %s249
        %p251 = pneg %p89
        %p252 = pneg %p86
        %s253 = smul.u32 64, %s21
        %p254 = scmp.lt.s32.totalorder %s253, 127
        %s255 = scalar_select %p254, %s253, 127
        %s256 = smul.addr %s255, 8
        %s257 = scalar_lea.vmem %s3, %s256
        %p258 = pneg %p115
        %p259 = pneg %p112
        %p260 = pneg %p141
        %p261 = pneg %p138
        %p262 = scmp.lt.s32.totalorder %s21, 1
        %s263 = scalar_select %p262, %s21, 1
        %s264 = smul.addr %s263, 2
        %s265 = scalar_lea.vmem %s4, %s264
        %s266 = smul.u32 4, %s21
        %s267 = smul.u32 4, %s21
        %s268 = smul.u32 64, %s21
        %p269 = scmp.lt.s32.totalorder %s268, 127
        %s270 = scalar_select %p269, %s268, 127
        %s271 = smul.addr %s270, 8
        %s272 = scalar_lea.vmem %s3, %s271
        %s273 = smul.u32 64, %s21
        %p274 = scmp.lt.s32.totalorder %s21, 1
        %s275 = scalar_select %p274, %s21, 1
        %s276 = smul.addr %s275, 2
        %s277 = scalar_lea.vmem %s4, %s276
        %v278 = vld [vmem:[%s0] sm:$0xff]
        %v279 = vld [vmem:[%s0 + $0x8] sm:$0xff]
        %v280 = vld [vmem:[%s0 + $0x10] sm:$0xff]
        %v281 = vld [vmem:[%s0 + $0x18] sm:$0xff]
        %v282 = vld [vmem:[%s0 + $0x20] sm:$0xff]
        %v283 = vld [vmem:[%s0 + $0x28] sm:$0xf]
        %v284 = vld [vmem:[%s223] sm:$0xff]
        %v285 = vld [vmem:[%s223 + $0x8] sm:$0xff]
        %v286 = vld [vmem:[%s223 + $0x10] sm:$0xff]
        %v287 = vld [vmem:[%s223 + $0x18] sm:$0xff]
        %v288 = vld [vmem:[%s223 + $0x20] sm:$0xff]
        %v289 = vld [vmem:[%s223 + $0x28] sm:$0xff]
        %v290 = vld [vmem:[%s223 + $0x30] sm:$0xff]
        %v291 = vld [vmem:[%s223 + $0x38] sm:$0xff]
        %v292 = vld [vmem:[%s223 + $0x40] sm:$0xff]
        %v293 = vld [vmem:[%s223 + $0x48] sm:$0xff]
        %v294 = vld [vmem:[%s223 + $0x50] sm:$0xff]
        %v295 = vld [vmem:[%s223 + $0x58] sm:$0xff]
        %v296 = vld [vmem:[%s223 + $0x60] sm:$0xff]
        %v297 = vld [vmem:[%s223 + $0x68] sm:$0xff]
        %v298 = vld [vmem:[%s223 + $0x70] sm:$0xff]
        %v299 = vld [vmem:[%s223 + $0x78] sm:$0xff]
        %v300 = vld [vmem:[%s223 + $0x80] sm:$0xff]
        %v301 = vld [vmem:[%s223 + $0x88] sm:$0xff]
        %v302 = vld [vmem:[%s223 + $0x90] sm:$0xff]
        %v303 = vld [vmem:[%s223 + $0x98] sm:$0xff]
        %v304 = vld [vmem:[%s223 + $0xa0] sm:$0xff]
        %v305 = vld [vmem:[%s223 + $0xa8] sm:$0xff]
        %v306 = vld [vmem:[%s223 + $0xb0] sm:$0xff]
        %v307 = vld [vmem:[%s223 + $0xb8] sm:$0xff]
        %v308 = vld [vmem:[%s223 + $0xc0] sm:$0xff]
        %v309 = vld [vmem:[%s223 + $0xc8] sm:$0xff]
        %v310 = vld [vmem:[%s223 + $0xd0] sm:$0xff]
        %v311 = vld [vmem:[%s223 + $0xd8] sm:$0xff]
        %v312 = vld [vmem:[%s223 + $0xe0] sm:$0xff]
        %v313 = vld [vmem:[%s223 + $0xe8] sm:$0xff]
        %v314 = vld [vmem:[%s223 + $0xf0] sm:$0xff]
        %v315 = vld [vmem:[%s223 + $0xf8] sm:$0xff]
        %v316 = vld [vmem:[%s223 + $0x100] sm:$0xff]
        %v317 = vld [vmem:[%s223 + $0x108] sm:$0xff]
        %v318 = vld [vmem:[%s223 + $0x110] sm:$0xff]
        %v319 = vld [vmem:[%s223 + $0x118] sm:$0xff]
        %v320 = vld [vmem:[%s223 + $0x120] sm:$0xff]
        %v321 = vld [vmem:[%s223 + $0x128] sm:$0xff]
        %v322 = vld [vmem:[%s223 + $0x130] sm:$0xff]
        %v323 = vld [vmem:[%s223 + $0x138] sm:$0xff]
        %v324 = vld [vmem:[%s223 + $0x140] sm:$0xff]
        %v325 = vld [vmem:[%s223 + $0x148] sm:$0xff]
        %v326 = vld [vmem:[%s223 + $0x150] sm:$0xff]
        %v327 = vld [vmem:[%s223 + $0x158] sm:$0xff]
        %v328 = vld [vmem:[%s223 + $0x160] sm:$0xff]
        %v329 = vld [vmem:[%s223 + $0x168] sm:$0xff]
        %v330 = vld [vmem:[%s223 + $0x170] sm:$0xff]
        %v331 = vld [vmem:[%s223 + $0x178] sm:$0xff]
        %v332 = vld [vmem:[%s223 + $0x180] sm:$0xff]
        %v333 = vld [vmem:[%s223 + $0x188] sm:$0xff]
        %v334 = vld [vmem:[%s223 + $0x190] sm:$0xff]
        %v335 = vld [vmem:[%s223 + $0x198] sm:$0xff]
        %v336 = vld [vmem:[%s223 + $0x1a0] sm:$0xff]
        %v337 = vld [vmem:[%s223 + $0x1a8] sm:$0xff]
        %v338 = vld [vmem:[%s223 + $0x1b0] sm:$0xff]
        %v339 = vld [vmem:[%s223 + $0x1b8] sm:$0xff]
        %v340 = vld [vmem:[%s223 + $0x1c0] sm:$0xff]
        %v341 = vld [vmem:[%s223 + $0x1c8] sm:$0xff]
        %v342 = vld [vmem:[%s223 + $0x1d0] sm:$0xff]
        %v343 = vld [vmem:[%s223 + $0x1d8] sm:$0xff]
        %v344 = vld [vmem:[%s223 + $0x1e0] sm:$0xff]
        %v345 = vld [vmem:[%s223 + $0x1e8] sm:$0xff]
        %v346 = vld [vmem:[%s223 + $0x1f0] sm:$0xff]
        %v347 = vld [vmem:[%s223 + $0x1f8] sm:$0xff]
        %v348 = vld [vmem:[%s223 + $0x200] sm:$0xff]
        %v349 = vld [vmem:[%s223 + $0x208] sm:$0xff]
        %v350 = vld [vmem:[%s223 + $0x210] sm:$0xff]
        %v351 = vld [vmem:[%s223 + $0x218] sm:$0xff]
        %v352 = vld [vmem:[%s223 + $0x220] sm:$0xff]
        %v353 = vld [vmem:[%s223 + $0x228] sm:$0xff]
        %v354 = vld [vmem:[%s223 + $0x230] sm:$0xff]
        %v355 = vld [vmem:[%s223 + $0x238] sm:$0xff]
        %v356 = vld [vmem:[%s223 + $0x240] sm:$0xff]
        %v357 = vld [vmem:[%s223 + $0x248] sm:$0xff]
        %v358 = vld [vmem:[%s223 + $0x250] sm:$0xff]
        %v359 = vld [vmem:[%s223 + $0x258] sm:$0xff]
        %v360 = vld [vmem:[%s223 + $0x260] sm:$0xff]
        %v361 = vld [vmem:[%s223 + $0x268] sm:$0xff]
        %v362 = vld [vmem:[%s223 + $0x270] sm:$0xff]
        %v363 = vld [vmem:[%s223 + $0x278] sm:$0xff]
        %v364 = vld [vmem:[%s223 + $0x280] sm:$0xff]
        %v365 = vld [vmem:[%s223 + $0x288] sm:$0xff]
        %v366 = vld [vmem:[%s223 + $0x290] sm:$0xff]
        %v367 = vld [vmem:[%s223 + $0x298] sm:$0xff]
        %v368 = vld [vmem:[%s223 + $0x2a0] sm:$0xff]
        %v369 = vld [vmem:[%s223 + $0x2a8] sm:$0xff]
        %v370 = vld [vmem:[%s223 + $0x2b0] sm:$0xff]
        %v371 = vld [vmem:[%s223 + $0x2b8] sm:$0xff]
        %v372 = vld [vmem:[%s223 + $0x2c0] sm:$0xff]
        %v373 = vld [vmem:[%s223 + $0x2c8] sm:$0xff]
        %v374 = vld [vmem:[%s223 + $0x2d0] sm:$0xff]
        %v375 = vld [vmem:[%s223 + $0x2d8] sm:$0xff]
        %v376 = vld [vmem:[%s223 + $0x2e0] sm:$0xff]
        %v377 = vld [vmem:[%s223 + $0x2e8] sm:$0xff]
        %v378 = vld [vmem:[%s223 + $0x2f0] sm:$0xff]
        %v379 = vld [vmem:[%s223 + $0x2f8] sm:$0xff]
        %v380 = vld [vmem:[%s223 + $0x300] sm:$0xff]
        %v381 = vld [vmem:[%s223 + $0x308] sm:$0xff]
        %v382 = vld [vmem:[%s223 + $0x310] sm:$0xff]
        %v383 = vld [vmem:[%s223 + $0x318] sm:$0xff]
        %v384 = vld [vmem:[%s223 + $0x320] sm:$0xff]
        %v385 = vld [vmem:[%s223 + $0x328] sm:$0xff]
        %v386 = vld [vmem:[%s223 + $0x330] sm:$0xff]
        %v387 = vld [vmem:[%s223 + $0x338] sm:$0xff]
        %v388 = vld [vmem:[%s223 + $0x340] sm:$0xff]
        %v389 = vld [vmem:[%s223 + $0x348] sm:$0xff]
        %v390 = vld [vmem:[%s223 + $0x350] sm:$0xff]
        %v391 = vld [vmem:[%s223 + $0x358] sm:$0xff]
        %v392 = vld [vmem:[%s223 + $0x360] sm:$0xff]
        %v393 = vld [vmem:[%s223 + $0x368] sm:$0xff]
        %v394 = vld [vmem:[%s223 + $0x370] sm:$0xff]
        %v395 = vld [vmem:[%s223 + $0x378] sm:$0xff]
        %v396 = vld [vmem:[%s223 + $0x380] sm:$0xff]
        %v397 = vld [vmem:[%s223 + $0x388] sm:$0xff]
        %v398 = vld [vmem:[%s223 + $0x390] sm:$0xff]
        %v399 = vld [vmem:[%s223 + $0x398] sm:$0xff]
        %v400 = vld [vmem:[%s223 + $0x3a0] sm:$0xff]
        %v401 = vld [vmem:[%s223 + $0x3a8] sm:$0xff]
        %v402 = vld [vmem:[%s223 + $0x3b0] sm:$0xff]
        %v403 = vld [vmem:[%s223 + $0x3b8] sm:$0xff]
        %v404 = vld [vmem:[%s223 + $0x3c0] sm:$0xff]
        %v405 = vld [vmem:[%s223 + $0x3c8] sm:$0xff]
        %v406 = vld [vmem:[%s223 + $0x3d0] sm:$0xff]
        %v407 = vld [vmem:[%s223 + $0x3d8] sm:$0xff]
        %v408 = vld [vmem:[%s223 + $0x3e0] sm:$0xff]
        %v409 = vld [vmem:[%s223 + $0x3e8] sm:$0xff]
        %v410 = vld [vmem:[%s223 + $0x3f0] sm:$0xff]
        %v411 = vld [vmem:[%s223 + $0x3f8] sm:$0xff]
        %v412 = vld [vmem:[%s223 + $0x400] sm:$0xff]
        %v413 = vld [vmem:[%s223 + $0x408] sm:$0xff]
        %v414 = vld [vmem:[%s223 + $0x410] sm:$0xff]
        %v415 = vld [vmem:[%s223 + $0x418] sm:$0xff]
        %v416 = vld [vmem:[%s223 + $0x420] sm:$0xff]
        %v417 = vld [vmem:[%s223 + $0x428] sm:$0xff]
        %v418 = vld [vmem:[%s223 + $0x430] sm:$0xff]
        %v419 = vld [vmem:[%s223 + $0x438] sm:$0xff]
        %v420 = vld [vmem:[%s223 + $0x440] sm:$0xff]
        %v421 = vld [vmem:[%s223 + $0x448] sm:$0xff]
        %v422 = vld [vmem:[%s223 + $0x450] sm:$0xff]
        %v423 = vld [vmem:[%s223 + $0x458] sm:$0xff]
        %v424 = vld [vmem:[%s223 + $0x460] sm:$0xff]
        %v425 = vld [vmem:[%s223 + $0x468] sm:$0xff]
        %v426 = vld [vmem:[%s223 + $0x470] sm:$0xff]
        %v427 = vld [vmem:[%s223 + $0x478] sm:$0xff]
        %v428 = vld [vmem:[%s223 + $0x480] sm:$0xff]
        %v429 = vld [vmem:[%s223 + $0x488] sm:$0xff]
        %v430 = vld [vmem:[%s223 + $0x490] sm:$0xff]
        %v431 = vld [vmem:[%s223 + $0x498] sm:$0xff]
        %v432 = vld [vmem:[%s223 + $0x4a0] sm:$0xff]
        %v433 = vld [vmem:[%s223 + $0x4a8] sm:$0xff]
        %v434 = vld [vmem:[%s223 + $0x4b0] sm:$0xff]
        %v435 = vld [vmem:[%s223 + $0x4b8] sm:$0xff]
        %v436 = vld [vmem:[%s223 + $0x4c0] sm:$0xff]
        %v437 = vld [vmem:[%s223 + $0x4c8] sm:$0xff]
        %v438 = vld [vmem:[%s223 + $0x4d0] sm:$0xff]
        %v439 = vld [vmem:[%s223 + $0x4d8] sm:$0xff]
        %v440 = vld [vmem:[%s223 + $0x4e0] sm:$0xff]
        %v441 = vld [vmem:[%s223 + $0x4e8] sm:$0xff]
        %v442 = vld [vmem:[%s223 + $0x4f0] sm:$0xff]
        %v443 = vld [vmem:[%s223 + $0x4f8] sm:$0xff]
        %v444 = vld [vmem:[%s223 + $0x500] sm:$0xff]
        %v445 = vld [vmem:[%s223 + $0x508] sm:$0xff]
        %v446 = vld [vmem:[%s223 + $0x510] sm:$0xff]
        %v447 = vld [vmem:[%s223 + $0x518] sm:$0xff]
        %v448 = vld [vmem:[%s223 + $0x520] sm:$0xff]
        %v449 = vld [vmem:[%s223 + $0x528] sm:$0xff]
        %v450 = vld [vmem:[%s223 + $0x530] sm:$0xff]
        %v451 = vld [vmem:[%s223 + $0x538] sm:$0xff]
        %v452 = vld [vmem:[%s223 + $0x540] sm:$0xff]
        %v453 = vld [vmem:[%s223 + $0x548] sm:$0xff]
        %v454 = vld [vmem:[%s223 + $0x550] sm:$0xff]
        %v455 = vld [vmem:[%s223 + $0x558] sm:$0xff]
        %v456 = vld [vmem:[%s223 + $0x560] sm:$0xff]
        %v457 = vld [vmem:[%s223 + $0x568] sm:$0xff]
        %v458 = vld [vmem:[%s223 + $0x570] sm:$0xff]
        %v459 = vld [vmem:[%s223 + $0x578] sm:$0xff]
        %v460 = vld [vmem:[%s223 + $0x580] sm:$0xff]
        %v461 = vld [vmem:[%s223 + $0x588] sm:$0xff]
        %v462 = vld [vmem:[%s223 + $0x590] sm:$0xff]
        %v463 = vld [vmem:[%s223 + $0x598] sm:$0xff]
        %v464 = vld [vmem:[%s223 + $0x5a0] sm:$0xff]
        %v465 = vld [vmem:[%s223 + $0x5a8] sm:$0xff]
        %v466 = vld [vmem:[%s223 + $0x5b0] sm:$0xff]
        %v467 = vld [vmem:[%s223 + $0x5b8] sm:$0xff]
        %v468 = vld [vmem:[%s223 + $0x5c0] sm:$0xff]
        %v469 = vld [vmem:[%s223 + $0x5c8] sm:$0xff]
        %v470 = vld [vmem:[%s223 + $0x5d0] sm:$0xff]
        %v471 = vld [vmem:[%s223 + $0x5d8] sm:$0xff]
        %v472 = vld [vmem:[%s223 + $0x5e0] sm:$0xff]
        %v473 = vld [vmem:[%s223 + $0x5e8] sm:$0xff]
        %v474 = vld [vmem:[%s223 + $0x5f0] sm:$0xff]
        %v475 = vld [vmem:[%s223 + $0x5f8] sm:$0xff]
        %v476 = vld [vmem:[%s223 + $0x600] sm:$0xff]
        %v477 = vld [vmem:[%s223 + $0x608] sm:$0xff]
        %v478 = vld [vmem:[%s223 + $0x610] sm:$0xff]
        %v479 = vld [vmem:[%s223 + $0x618] sm:$0xff]
        %v480 = vld [vmem:[%s223 + $0x620] sm:$0xff]
        %v481 = vld [vmem:[%s223 + $0x628] sm:$0xff]
        %v482 = vld [vmem:[%s223 + $0x630] sm:$0xff]
        %v483 = vld [vmem:[%s223 + $0x638] sm:$0xff]
        %v484 = vld [vmem:[%s223 + $0x640] sm:$0xff]
        %v485 = vld [vmem:[%s223 + $0x648] sm:$0xff]
        %v486 = vld [vmem:[%s223 + $0x650] sm:$0xff]
        %v487 = vld [vmem:[%s223 + $0x658] sm:$0xff]
        %v488 = vld [vmem:[%s223 + $0x660] sm:$0xff]
        %v489 = vld [vmem:[%s223 + $0x668] sm:$0xff]
        %v490 = vld [vmem:[%s223 + $0x670] sm:$0xff]
        %v491 = vld [vmem:[%s223 + $0x678] sm:$0xff]
        %v492 = vld [vmem:[%s223 + $0x680] sm:$0xff]
        %v493 = vld [vmem:[%s223 + $0x688] sm:$0xff]
        %v494 = vld [vmem:[%s223 + $0x690] sm:$0xff]
        %v495 = vld [vmem:[%s223 + $0x698] sm:$0xff]
        %v496 = vld [vmem:[%s223 + $0x6a0] sm:$0xff]
        %v497 = vld [vmem:[%s223 + $0x6a8] sm:$0xff]
        %v498 = vld [vmem:[%s223 + $0x6b0] sm:$0xff]
        %v499 = vld [vmem:[%s223 + $0x6b8] sm:$0xff]
        %v500 = vld [vmem:[%s223 + $0x6c0] sm:$0xff]
        %v501 = vld [vmem:[%s223 + $0x6c8] sm:$0xff]
        %v502 = vld [vmem:[%s223 + $0x6d0] sm:$0xff]
        %v503 = vld [vmem:[%s223 + $0x6d8] sm:$0xff]
        %v504 = vld [vmem:[%s223 + $0x6e0] sm:$0xff]
        %v505 = vld [vmem:[%s223 + $0x6e8] sm:$0xff]
        %v506 = vld [vmem:[%s223 + $0x6f0] sm:$0xff]
        %v507 = vld [vmem:[%s223 + $0x6f8] sm:$0xff]
        %v508 = vld [vmem:[%s223 + $0x700] sm:$0xff]
        %v509 = vld [vmem:[%s223 + $0x708] sm:$0xff]
        %v510 = vld [vmem:[%s223 + $0x710] sm:$0xff]
        %v511 = vld [vmem:[%s223 + $0x718] sm:$0xff]
        %v512 = vld [vmem:[%s223 + $0x720] sm:$0xff]
        %v513 = vld [vmem:[%s223 + $0x728] sm:$0xff]
        %v514 = vld [vmem:[%s223 + $0x730] sm:$0xff]
        %v515 = vld [vmem:[%s223 + $0x738] sm:$0xff]
        %v516 = vld [vmem:[%s223 + $0x740] sm:$0xff]
        %v517 = vld [vmem:[%s223 + $0x748] sm:$0xff]
        %v518 = vld [vmem:[%s223 + $0x750] sm:$0xff]
        %v519 = vld [vmem:[%s223 + $0x758] sm:$0xff]
        %v520 = vld [vmem:[%s223 + $0x760] sm:$0xff]
        %v521 = vld [vmem:[%s223 + $0x768] sm:$0xff]
        %v522 = vld [vmem:[%s223 + $0x770] sm:$0xff]
        %v523 = vld [vmem:[%s223 + $0x778] sm:$0xff]
        %v524 = vld [vmem:[%s223 + $0x780] sm:$0xff]
        %v525 = vld [vmem:[%s223 + $0x788] sm:$0xff]
        %v526 = vld [vmem:[%s223 + $0x790] sm:$0xff]
        %v527 = vld [vmem:[%s223 + $0x798] sm:$0xff]
        %v528 = vld [vmem:[%s223 + $0x7a0] sm:$0xff]
        %v529 = vld [vmem:[%s223 + $0x7a8] sm:$0xff]
        %v530 = vld [vmem:[%s223 + $0x7b0] sm:$0xff]
        %v531 = vld [vmem:[%s223 + $0x7b8] sm:$0xff]
        %v532 = vld [vmem:[%s223 + $0x7c0] sm:$0xff]
        %v533 = vld [vmem:[%s223 + $0x7c8] sm:$0xff]
        %v534 = vld [vmem:[%s223 + $0x7d0] sm:$0xff]
        %v535 = vld [vmem:[%s223 + $0x7d8] sm:$0xff]
        %v536 = vld [vmem:[%s223 + $0x7e0] sm:$0xff]
        %v537 = vld [vmem:[%s223 + $0x7e8] sm:$0xff]
        %v538 = vld [vmem:[%s223 + $0x7f0] sm:$0xff]
        %v539 = vld [vmem:[%s223 + $0x7f8] sm:$0xff]
        %v540 = vld [vmem:[%s223 + $0x800] sm:$0xff]
        %v541 = vld [vmem:[%s223 + $0x808] sm:$0xff]
        %v542 = vld [vmem:[%s223 + $0x810] sm:$0xff]
        %v543 = vld [vmem:[%s223 + $0x818] sm:$0xff]
        %v544 = vld [vmem:[%s223 + $0x820] sm:$0xff]
        %v545 = vld [vmem:[%s223 + $0x828] sm:$0xff]
        %v546 = vld [vmem:[%s223 + $0x830] sm:$0xff]
        %v547 = vld [vmem:[%s223 + $0x838] sm:$0xff]
        %v548 = vld [vmem:[%s223 + $0x840] sm:$0xff]
        %v549 = vld [vmem:[%s223 + $0x848] sm:$0xff]
        %v550 = vld [vmem:[%s223 + $0x850] sm:$0xff]
        %v551 = vld [vmem:[%s223 + $0x858] sm:$0xff]
        %v552 = vld [vmem:[%s223 + $0x860] sm:$0xff]
        %v553 = vld [vmem:[%s223 + $0x868] sm:$0xff]
        %v554 = vld [vmem:[%s223 + $0x870] sm:$0xff]
        %v555 = vld [vmem:[%s223 + $0x878] sm:$0xff]
        %v556 = vld [vmem:[%s223 + $0x880] sm:$0xff]
        %v557 = vld [vmem:[%s223 + $0x888] sm:$0xff]
        %v558 = vld [vmem:[%s223 + $0x890] sm:$0xff]
        %v559 = vld [vmem:[%s223 + $0x898] sm:$0xff]
        %v560 = vld [vmem:[%s223 + $0x8a0] sm:$0xff]
        %v561 = vld [vmem:[%s223 + $0x8a8] sm:$0xff]
        %v562 = vld [vmem:[%s223 + $0x8b0] sm:$0xff]
        %v563 = vld [vmem:[%s223 + $0x8b8] sm:$0xff]
        %v564 = vld [vmem:[%s223 + $0x8c0] sm:$0xff]
        %v565 = vld [vmem:[%s223 + $0x8c8] sm:$0xff]
        %v566 = vld [vmem:[%s223 + $0x8d0] sm:$0xff]
        %v567 = vld [vmem:[%s223 + $0x8d8] sm:$0xff]
        %v568 = vld [vmem:[%s223 + $0x8e0] sm:$0xff]
        %v569 = vld [vmem:[%s223 + $0x8e8] sm:$0xff]
        %v570 = vld [vmem:[%s223 + $0x8f0] sm:$0xff]
        %v571 = vld [vmem:[%s223 + $0x8f8] sm:$0xff]
        %v572 = vld [vmem:[%s223 + $0x900] sm:$0xff]
        %v573 = vld [vmem:[%s223 + $0x908] sm:$0xff]
        %v574 = vld [vmem:[%s223 + $0x910] sm:$0xff]
        %v575 = vld [vmem:[%s223 + $0x918] sm:$0xff]
        %v576 = vld [vmem:[%s223 + $0x920] sm:$0xff]
        %v577 = vld [vmem:[%s223 + $0x928] sm:$0xff]
        %v578 = vld [vmem:[%s223 + $0x930] sm:$0xff]
        %v579 = vld [vmem:[%s223 + $0x938] sm:$0xff]
        %v580 = vld [vmem:[%s223 + $0x940] sm:$0xff]
        %v581 = vld [vmem:[%s223 + $0x948] sm:$0xff]
        %v582 = vld [vmem:[%s223 + $0x950] sm:$0xff]
        %v583 = vld [vmem:[%s223 + $0x958] sm:$0xff]
        %v584 = vld [vmem:[%s223 + $0x960] sm:$0xff]
        %v585 = vld [vmem:[%s223 + $0x968] sm:$0xff]
        %v586 = vld [vmem:[%s223 + $0x970] sm:$0xff]
        %v587 = vld [vmem:[%s223 + $0x978] sm:$0xff]
        %v588 = vld [vmem:[%s223 + $0x980] sm:$0xff]
        %v589 = vld [vmem:[%s223 + $0x988] sm:$0xff]
        %v590 = vld [vmem:[%s223 + $0x990] sm:$0xff]
        %v591 = vld [vmem:[%s223 + $0x998] sm:$0xff]
        %v592 = vld [vmem:[%s223 + $0x9a0] sm:$0xff]
        %v593 = vld [vmem:[%s223 + $0x9a8] sm:$0xff]
        %v594 = vld [vmem:[%s223 + $0x9b0] sm:$0xff]
        %v595 = vld [vmem:[%s223 + $0x9b8] sm:$0xff]
        %v596 = vld [vmem:[%s223 + $0x9c0] sm:$0xff]
        %v597 = vld [vmem:[%s223 + $0x9c8] sm:$0xff]
        %v598 = vld [vmem:[%s223 + $0x9d0] sm:$0xff]
        %v599 = vld [vmem:[%s223 + $0x9d8] sm:$0xff]
        %v600 = vld [vmem:[%s223 + $0x9e0] sm:$0xff]
        %v601 = vld [vmem:[%s223 + $0x9e8] sm:$0xff]
        %v602 = vld [vmem:[%s223 + $0x9f0] sm:$0xff]
        %v603 = vld [vmem:[%s223 + $0x9f8] sm:$0xff]
        %v604 = vld [vmem:[%s223 + $0xa00] sm:$0xff]
        %v605 = vld [vmem:[%s223 + $0xa08] sm:$0xff]
        %v606 = vld [vmem:[%s223 + $0xa10] sm:$0xff]
        %v607 = vld [vmem:[%s223 + $0xa18] sm:$0xff]
        %v608 = vld [vmem:[%s223 + $0xa20] sm:$0xff]
        %v609 = vld [vmem:[%s223 + $0xa28] sm:$0xff]
        %v610 = vld [vmem:[%s223 + $0xa30] sm:$0xff]
        %v611 = vld [vmem:[%s223 + $0xa38] sm:$0xff]
        %v612 = vld [vmem:[%s223 + $0xa40] sm:$0xff]
        %v613 = vld [vmem:[%s223 + $0xa48] sm:$0xff]
        %v614 = vld [vmem:[%s223 + $0xa50] sm:$0xff]
        %v615 = vld [vmem:[%s223 + $0xa58] sm:$0xff]
        %v616 = vld [vmem:[%s223 + $0xa60] sm:$0xff]
        %v617 = vld [vmem:[%s223 + $0xa68] sm:$0xff]
        %v618 = vld [vmem:[%s223 + $0xa70] sm:$0xff]
        %v619 = vld [vmem:[%s223 + $0xa78] sm:$0xff]
        %v620 = vld [vmem:[%s223 + $0xa80] sm:$0xff]
        %v621 = vld [vmem:[%s223 + $0xa88] sm:$0xff]
        %v622 = vld [vmem:[%s223 + $0xa90] sm:$0xff]
        %v623 = vld [vmem:[%s223 + $0xa98] sm:$0xff]
        %v624 = vld [vmem:[%s223 + $0xaa0] sm:$0xff]
        %v625 = vld [vmem:[%s223 + $0xaa8] sm:$0xff]
        %v626 = vld [vmem:[%s223 + $0xab0] sm:$0xff]
        %v627 = vld [vmem:[%s223 + $0xab8] sm:$0xff]
        %v628 = vld [vmem:[%s223 + $0xac0] sm:$0xff]
        %v629 = vld [vmem:[%s223 + $0xac8] sm:$0xff]
        %v630 = vld [vmem:[%s223 + $0xad0] sm:$0xff]
        %v631 = vld [vmem:[%s223 + $0xad8] sm:$0xff]
        %v632 = vld [vmem:[%s223 + $0xae0] sm:$0xff]
        %v633 = vld [vmem:[%s223 + $0xae8] sm:$0xff]
        %v634 = vld [vmem:[%s223 + $0xaf0] sm:$0xff]
        %v635 = vld [vmem:[%s223 + $0xaf8] sm:$0xff]
        %v636 = vld [vmem:[%s223 + $0xb00] sm:$0xff]
        %v637 = vld [vmem:[%s223 + $0xb08] sm:$0xff]
        %v638 = vld [vmem:[%s223 + $0xb10] sm:$0xff]
        %v639 = vld [vmem:[%s223 + $0xb18] sm:$0xff]
        %v640 = vld [vmem:[%s223 + $0xb20] sm:$0xff]
        %v641 = vld [vmem:[%s223 + $0xb28] sm:$0xff]
        %v642 = vld [vmem:[%s223 + $0xb30] sm:$0xff]
        %v643 = vld [vmem:[%s223 + $0xb38] sm:$0xff]
        %v644 = vld [vmem:[%s223 + $0xb40] sm:$0xff]
        %v645 = vld [vmem:[%s223 + $0xb48] sm:$0xff]
        %v646 = vld [vmem:[%s223 + $0xb50] sm:$0xff]
        %v647 = vld [vmem:[%s223 + $0xb58] sm:$0xff]
        %v648 = vld [vmem:[%s223 + $0xb60] sm:$0xff]
        %v649 = vld [vmem:[%s223 + $0xb68] sm:$0xff]
        %v650 = vld [vmem:[%s223 + $0xb70] sm:$0xff]
        %v651 = vld [vmem:[%s223 + $0xb78] sm:$0xff]
        %v652 = vld [vmem:[%s223 + $0xb80] sm:$0xff]
        %v653 = vld [vmem:[%s223 + $0xb88] sm:$0xff]
        %v654 = vld [vmem:[%s223 + $0xb90] sm:$0xff]
        %v655 = vld [vmem:[%s223 + $0xb98] sm:$0xff]
        %v656 = vld [vmem:[%s223 + $0xba0] sm:$0xff]
        %v657 = vld [vmem:[%s223 + $0xba8] sm:$0xff]
        %v658 = vld [vmem:[%s223 + $0xbb0] sm:$0xff]
        %v659 = vld [vmem:[%s223 + $0xbb8] sm:$0xff]
        %v660 = vld [vmem:[%s223 + $0xbc0] sm:$0xff]
        %v661 = vld [vmem:[%s223 + $0xbc8] sm:$0xff]
        %v662 = vld [vmem:[%s223 + $0xbd0] sm:$0xff]
        %v663 = vld [vmem:[%s223 + $0xbd8] sm:$0xff]
        %v664 = vld [vmem:[%s223 + $0xbe0] sm:$0xff]
        %v665 = vld [vmem:[%s223 + $0xbe8] sm:$0xff]
        %v666 = vld [vmem:[%s223 + $0xbf0] sm:$0xff]
        %v667 = vld [vmem:[%s223 + $0xbf8] sm:$0xff]
        %v668 = vld [vmem:[%s223 + $0xc00] sm:$0xff]
        %v669 = vld [vmem:[%s223 + $0xc08] sm:$0xff]
        %v670 = vld [vmem:[%s223 + $0xc10] sm:$0xff]
        %v671 = vld [vmem:[%s223 + $0xc18] sm:$0xff]
        %v672 = vld [vmem:[%s223 + $0xc20] sm:$0xff]
        %v673 = vld [vmem:[%s223 + $0xc28] sm:$0xff]
        %v674 = vld [vmem:[%s223 + $0xc30] sm:$0xff]
        %v675 = vld [vmem:[%s223 + $0xc38] sm:$0xff]
        %v676 = vld [vmem:[%s223 + $0xc40] sm:$0xff]
        %v677 = vld [vmem:[%s223 + $0xc48] sm:$0xff]
        %v678 = vld [vmem:[%s223 + $0xc50] sm:$0xff]
        %v679 = vld [vmem:[%s223 + $0xc58] sm:$0xff]
        %v680 = vld [vmem:[%s223 + $0xc60] sm:$0xff]
        %v681 = vld [vmem:[%s223 + $0xc68] sm:$0xff]
        %v682 = vld [vmem:[%s223 + $0xc70] sm:$0xff]
        %v683 = vld [vmem:[%s223 + $0xc78] sm:$0xff]
        %v684 = vld [vmem:[%s223 + $0xc80] sm:$0xff]
        %v685 = vld [vmem:[%s223 + $0xc88] sm:$0xff]
        %v686 = vld [vmem:[%s223 + $0xc90] sm:$0xff]
        %v687 = vld [vmem:[%s223 + $0xc98] sm:$0xff]
        %v688 = vld [vmem:[%s223 + $0xca0] sm:$0xff]
        %v689 = vld [vmem:[%s223 + $0xca8] sm:$0xff]
        %v690 = vld [vmem:[%s223 + $0xcb0] sm:$0xff]
        %v691 = vld [vmem:[%s223 + $0xcb8] sm:$0xff]
        %v692 = vld [vmem:[%s223 + $0xcc0] sm:$0xff]
        %v693 = vld [vmem:[%s223 + $0xcc8] sm:$0xff]
        %v694 = vld [vmem:[%s223 + $0xcd0] sm:$0xff]
        %v695 = vld [vmem:[%s223 + $0xcd8] sm:$0xff]
        %v696 = vld [vmem:[%s223 + $0xce0] sm:$0xff]
        %v697 = vld [vmem:[%s223 + $0xce8] sm:$0xff]
        %v698 = vld [vmem:[%s223 + $0xcf0] sm:$0xff]
        %v699 = vld [vmem:[%s223 + $0xcf8] sm:$0xff]
        %v700 = vld [vmem:[%s223 + $0xd00] sm:$0xff]
        %v701 = vld [vmem:[%s223 + $0xd08] sm:$0xff]
        %v702 = vld [vmem:[%s223 + $0xd10] sm:$0xff]
        %v703 = vld [vmem:[%s223 + $0xd18] sm:$0xff]
        %v704 = vld [vmem:[%s223 + $0xd20] sm:$0xff]
        %v705 = vld [vmem:[%s223 + $0xd28] sm:$0xff]
        %v706 = vld [vmem:[%s223 + $0xd30] sm:$0xff]
        %v707 = vld [vmem:[%s223 + $0xd38] sm:$0xff]
        %v708 = vld [vmem:[%s223 + $0xd40] sm:$0xff]
        %v709 = vld [vmem:[%s223 + $0xd48] sm:$0xff]
        %v710 = vld [vmem:[%s223 + $0xd50] sm:$0xff]
        %v711 = vld [vmem:[%s223 + $0xd58] sm:$0xff]
        %v712 = vld [vmem:[%s223 + $0xd60] sm:$0xff]
        %v713 = vld [vmem:[%s223 + $0xd68] sm:$0xff]
        %v714 = vld [vmem:[%s223 + $0xd70] sm:$0xff]
        %v715 = vld [vmem:[%s223 + $0xd78] sm:$0xff]
        %v716 = vld [vmem:[%s223 + $0xd80] sm:$0xff]
        %v717 = vld [vmem:[%s223 + $0xd88] sm:$0xff]
        %v718 = vld [vmem:[%s223 + $0xd90] sm:$0xff]
        %v719 = vld [vmem:[%s223 + $0xd98] sm:$0xff]
        %v720 = vld [vmem:[%s223 + $0xda0] sm:$0xff]
        %v721 = vld [vmem:[%s223 + $0xda8] sm:$0xff]
        %v722 = vld [vmem:[%s223 + $0xdb0] sm:$0xff]
        %v723 = vld [vmem:[%s223 + $0xdb8] sm:$0xff]
        %v724 = vld [vmem:[%s223 + $0xdc0] sm:$0xff]
        %v725 = vld [vmem:[%s223 + $0xdc8] sm:$0xff]
        %v726 = vld [vmem:[%s223 + $0xdd0] sm:$0xff]
        %v727 = vld [vmem:[%s223 + $0xdd8] sm:$0xff]
        %v728 = vld [vmem:[%s223 + $0xde0] sm:$0xff]
        %v729 = vld [vmem:[%s223 + $0xde8] sm:$0xff]
        %v730 = vld [vmem:[%s223 + $0xdf0] sm:$0xff]
        %v731 = vld [vmem:[%s223 + $0xdf8] sm:$0xff]
        %v732 = vld [vmem:[%s223 + $0xe00] sm:$0xff]
        %v733 = vld [vmem:[%s223 + $0xe08] sm:$0xff]
        %v734 = vld [vmem:[%s223 + $0xe10] sm:$0xff]
        %v735 = vld [vmem:[%s223 + $0xe18] sm:$0xff]
        %v736 = vld [vmem:[%s223 + $0xe20] sm:$0xff]
        %v737 = vld [vmem:[%s223 + $0xe28] sm:$0xff]
        %v738 = vld [vmem:[%s223 + $0xe30] sm:$0xff]
        %v739 = vld [vmem:[%s223 + $0xe38] sm:$0xff]
        %v740 = vld [vmem:[%s223 + $0xe40] sm:$0xff]
        %v741 = vld [vmem:[%s223 + $0xe48] sm:$0xff]
        %v742 = vld [vmem:[%s223 + $0xe50] sm:$0xff]
        %v743 = vld [vmem:[%s223 + $0xe58] sm:$0xff]
        %v744 = vld [vmem:[%s223 + $0xe60] sm:$0xff]
        %v745 = vld [vmem:[%s223 + $0xe68] sm:$0xff]
        %v746 = vld [vmem:[%s223 + $0xe70] sm:$0xff]
        %v747 = vld [vmem:[%s223 + $0xe78] sm:$0xff]
        %v748 = vld [vmem:[%s223 + $0xe80] sm:$0xff]
        %v749 = vld [vmem:[%s223 + $0xe88] sm:$0xff]
        %v750 = vld [vmem:[%s223 + $0xe90] sm:$0xff]
        %v751 = vld [vmem:[%s223 + $0xe98] sm:$0xff]
        %v752 = vld [vmem:[%s223 + $0xea0] sm:$0xff]
        %v753 = vld [vmem:[%s223 + $0xea8] sm:$0xff]
        %v754 = vld [vmem:[%s223 + $0xeb0] sm:$0xff]
        %v755 = vld [vmem:[%s223 + $0xeb8] sm:$0xff]
        %v756 = vld [vmem:[%s223 + $0xec0] sm:$0xff]
        %v757 = vld [vmem:[%s223 + $0xec8] sm:$0xff]
        %v758 = vld [vmem:[%s223 + $0xed0] sm:$0xff]
        %v759 = vld [vmem:[%s223 + $0xed8] sm:$0xff]
        %v760 = vld [vmem:[%s223 + $0xee0] sm:$0xff]
        %v761 = vld [vmem:[%s223 + $0xee8] sm:$0xff]
        %v762 = vld [vmem:[%s223 + $0xef0] sm:$0xff]
        %v763 = vld [vmem:[%s223 + $0xef8] sm:$0xff]
        %v764 = vld [vmem:[%s223 + $0xf00] sm:$0xff]
        %v765 = vld [vmem:[%s223 + $0xf08] sm:$0xff]
        %v766 = vld [vmem:[%s223 + $0xf10] sm:$0xff]
        %v767 = vld [vmem:[%s223 + $0xf18] sm:$0xff]
        %v768 = vld [vmem:[%s223 + $0xf20] sm:$0xff]
        %v769 = vld [vmem:[%s223 + $0xf28] sm:$0xff]
        %v770 = vld [vmem:[%s223 + $0xf30] sm:$0xff]
        %v771 = vld [vmem:[%s223 + $0xf38] sm:$0xff]
        %v772 = vld [vmem:[%s223 + $0xf40] sm:$0xff]
        %v773 = vld [vmem:[%s223 + $0xf48] sm:$0xff]
        %v774 = vld [vmem:[%s223 + $0xf50] sm:$0xff]
        %v775 = vld [vmem:[%s223 + $0xf58] sm:$0xff]
        %v776 = vld [vmem:[%s223 + $0xf60] sm:$0xff]
        %v777 = vld [vmem:[%s223 + $0xf68] sm:$0xff]
        %v778 = vld [vmem:[%s223 + $0xf70] sm:$0xff]
        %v779 = vld [vmem:[%s223 + $0xf78] sm:$0xff]
        %v780 = vld [vmem:[%s223 + $0xf80] sm:$0xff]
        %v781 = vld [vmem:[%s223 + $0xf88] sm:$0xff]
        %v782 = vld [vmem:[%s223 + $0xf90] sm:$0xff]
        %v783 = vld [vmem:[%s223 + $0xf98] sm:$0xff]
        %v784 = vld [vmem:[%s223 + $0xfa0] sm:$0xff]
        %v785 = vld [vmem:[%s223 + $0xfa8] sm:$0xff]
        %v786 = vld [vmem:[%s223 + $0xfb0] sm:$0xff]
        %v787 = vld [vmem:[%s223 + $0xfb8] sm:$0xff]
        %v788 = vld [vmem:[%s223 + $0xfc0] sm:$0xff]
        %v789 = vld [vmem:[%s223 + $0xfc8] sm:$0xff]
        %v790 = vld [vmem:[%s223 + $0xfd0] sm:$0xff]
        %v791 = vld [vmem:[%s223 + $0xfd8] sm:$0xff]
        %v792 = vld [vmem:[%s223 + $0xfe0] sm:$0xff]
        %v793 = vld [vmem:[%s223 + $0xfe8] sm:$0xff]
        %v794 = vld [vmem:[%s223 + $0xff0] sm:$0xff]
        %v795 = vld [vmem:[%s223 + $0xff8] sm:$0xff]
        %v796 = vld [vmem:[%s223 + $0x1000] sm:$0xff]
        %v797 = vld [vmem:[%s223 + $0x1008] sm:$0xff]
        %v798 = vld [vmem:[%s223 + $0x1010] sm:$0xff]
        %v799 = vld [vmem:[%s223 + $0x1018] sm:$0xff]
        %v800 = vld [vmem:[%s223 + $0x1020] sm:$0xff]
        %v801 = vld [vmem:[%s223 + $0x1028] sm:$0xff]
        %v802 = vld [vmem:[%s223 + $0x1030] sm:$0xff]
        %v803 = vld [vmem:[%s223 + $0x1038] sm:$0xff]
        %v804 = vld [vmem:[%s223 + $0x1040] sm:$0xff]
        %v805 = vld [vmem:[%s223 + $0x1048] sm:$0xff]
        %v806 = vld [vmem:[%s223 + $0x1050] sm:$0xff]
        %v807 = vld [vmem:[%s223 + $0x1058] sm:$0xff]
        %v808 = vld [vmem:[%s223 + $0x1060] sm:$0xff]
        %v809 = vld [vmem:[%s223 + $0x1068] sm:$0xff]
        %v810 = vld [vmem:[%s223 + $0x1070] sm:$0xff]
        %v811 = vld [vmem:[%s223 + $0x1078] sm:$0xff]
        %v812 = vld [vmem:[%s223 + $0x1080] sm:$0xff]
        %v813 = vld [vmem:[%s223 + $0x1088] sm:$0xff]
        %v814 = vld [vmem:[%s223 + $0x1090] sm:$0xff]
        %v815 = vld [vmem:[%s223 + $0x1098] sm:$0xff]
        %v816 = vld [vmem:[%s223 + $0x10a0] sm:$0xff]
        %v817 = vld [vmem:[%s223 + $0x10a8] sm:$0xff]
        %v818 = vld [vmem:[%s223 + $0x10b0] sm:$0xff]
        %v819 = vld [vmem:[%s223 + $0x10b8] sm:$0xff]
        %v820 = vld [vmem:[%s223 + $0x10c0] sm:$0xff]
        %v821 = vld [vmem:[%s223 + $0x10c8] sm:$0xff]
        %v822 = vld [vmem:[%s223 + $0x10d0] sm:$0xff]
        %v823 = vld [vmem:[%s223 + $0x10d8] sm:$0xff]
        %v824 = vld [vmem:[%s223 + $0x10e0] sm:$0xff]
        %v825 = vld [vmem:[%s223 + $0x10e8] sm:$0xff]
        %v826 = vld [vmem:[%s223 + $0x10f0] sm:$0xff]
        %v827 = vld [vmem:[%s223 + $0x10f8] sm:$0xff]
        %v828 = vld [vmem:[%s223 + $0x1100] sm:$0xff]
        %v829 = vld [vmem:[%s223 + $0x1108] sm:$0xff]
        %v830 = vld [vmem:[%s223 + $0x1110] sm:$0xff]
        %v831 = vld [vmem:[%s223 + $0x1118] sm:$0xff]
        %v832 = vld [vmem:[%s223 + $0x1120] sm:$0xff]
        %v833 = vld [vmem:[%s223 + $0x1128] sm:$0xff]
        %v834 = vld [vmem:[%s223 + $0x1130] sm:$0xff]
        %v835 = vld [vmem:[%s223 + $0x1138] sm:$0xff]
        %v836 = vld [vmem:[%s223 + $0x1140] sm:$0xff]
        %v837 = vld [vmem:[%s223 + $0x1148] sm:$0xff]
        %v838 = vld [vmem:[%s223 + $0x1150] sm:$0xff]
        %v839 = vld [vmem:[%s223 + $0x1158] sm:$0xff]
        %v840 = vld [vmem:[%s223 + $0x1160] sm:$0xff]
        %v841 = vld [vmem:[%s223 + $0x1168] sm:$0xff]
        %v842 = vld [vmem:[%s223 + $0x1170] sm:$0xff]
        %v843 = vld [vmem:[%s223 + $0x1178] sm:$0xff]
        %v844 = vld [vmem:[%s223 + $0x1180] sm:$0xff]
        %v845 = vld [vmem:[%s223 + $0x1188] sm:$0xff]
        %v846 = vld [vmem:[%s223 + $0x1190] sm:$0xff]
        %v847 = vld [vmem:[%s223 + $0x1198] sm:$0xff]
        %v848 = vld [vmem:[%s223 + $0x11a0] sm:$0xff]
        %v849 = vld [vmem:[%s223 + $0x11a8] sm:$0xff]
        %v850 = vld [vmem:[%s223 + $0x11b0] sm:$0xff]
        %v851 = vld [vmem:[%s223 + $0x11b8] sm:$0xff]
        %v852 = vld [vmem:[%s223 + $0x11c0] sm:$0xff]
        %v853 = vld [vmem:[%s223 + $0x11c8] sm:$0xff]
        %v854 = vld [vmem:[%s223 + $0x11d0] sm:$0xff]
        %v855 = vld [vmem:[%s223 + $0x11d8] sm:$0xff]
        %v856 = vld [vmem:[%s223 + $0x11e0] sm:$0xff]
        %v857 = vld [vmem:[%s223 + $0x11e8] sm:$0xff]
        %v858 = vld [vmem:[%s223 + $0x11f0] sm:$0xff]
        %v859 = vld [vmem:[%s223 + $0x11f8] sm:$0xff]
        %v860 = vld [vmem:[%s223 + $0x1200] sm:$0xff]
        %v861 = vld [vmem:[%s223 + $0x1208] sm:$0xff]
        %v862 = vld [vmem:[%s223 + $0x1210] sm:$0xff]
        %v863 = vld [vmem:[%s223 + $0x1218] sm:$0xff]
        %v864 = vld [vmem:[%s223 + $0x1220] sm:$0xff]
        %v865 = vld [vmem:[%s223 + $0x1228] sm:$0xff]
        %v866 = vld [vmem:[%s223 + $0x1230] sm:$0xff]
        %v867 = vld [vmem:[%s223 + $0x1238] sm:$0xff]
        %v868 = vld [vmem:[%s223 + $0x1240] sm:$0xff]
        %v869 = vld [vmem:[%s223 + $0x1248] sm:$0xff]
        %v870 = vld [vmem:[%s223 + $0x1250] sm:$0xff]
        %v871 = vld [vmem:[%s223 + $0x1258] sm:$0xff]
        %v872 = vld [vmem:[%s223 + $0x1260] sm:$0xff]
        %v873 = vld [vmem:[%s223 + $0x1268] sm:$0xff]
        %v874 = vld [vmem:[%s223 + $0x1270] sm:$0xff]
        %v875 = vld [vmem:[%s223 + $0x1278] sm:$0xff]
        %v876 = vld [vmem:[%s223 + $0x1280] sm:$0xff]
        %v877 = vld [vmem:[%s223 + $0x1288] sm:$0xff]
        %v878 = vld [vmem:[%s223 + $0x1290] sm:$0xff]
        %v879 = vld [vmem:[%s223 + $0x1298] sm:$0xff]
        %v880 = vld [vmem:[%s223 + $0x12a0] sm:$0xff]
        %v881 = vld [vmem:[%s223 + $0x12a8] sm:$0xff]
        %v882 = vld [vmem:[%s223 + $0x12b0] sm:$0xff]
        %v883 = vld [vmem:[%s223 + $0x12b8] sm:$0xff]
        %v884 = vld [vmem:[%s223 + $0x12c0] sm:$0xff]
        %v885 = vld [vmem:[%s223 + $0x12c8] sm:$0xff]
        %v886 = vld [vmem:[%s223 + $0x12d0] sm:$0xff]
        %v887 = vld [vmem:[%s223 + $0x12d8] sm:$0xff]
        %v888 = vld [vmem:[%s223 + $0x12e0] sm:$0xff]
        %v889 = vld [vmem:[%s223 + $0x12e8] sm:$0xff]
        %v890 = vld [vmem:[%s223 + $0x12f0] sm:$0xff]
        %v891 = vld [vmem:[%s223 + $0x12f8] sm:$0xff]
        %v892 = vld [vmem:[%s223 + $0x1300] sm:$0xff]
        %v893 = vld [vmem:[%s223 + $0x1308] sm:$0xff]
        %v894 = vld [vmem:[%s223 + $0x1310] sm:$0xff]
        %v895 = vld [vmem:[%s223 + $0x1318] sm:$0xff]
        %v896 = vld [vmem:[%s223 + $0x1320] sm:$0xff]
        %v897 = vld [vmem:[%s223 + $0x1328] sm:$0xff]
        %v898 = vld [vmem:[%s223 + $0x1330] sm:$0xff]
        %v899 = vld [vmem:[%s223 + $0x1338] sm:$0xff]
        %v900 = vld [vmem:[%s223 + $0x1340] sm:$0xff]
        %v901 = vld [vmem:[%s223 + $0x1348] sm:$0xff]
        %v902 = vld [vmem:[%s223 + $0x1350] sm:$0xff]
        %v903 = vld [vmem:[%s223 + $0x1358] sm:$0xff]
        %v904 = vld [vmem:[%s223 + $0x1360] sm:$0xff]
        %v905 = vld [vmem:[%s223 + $0x1368] sm:$0xff]
        %v906 = vld [vmem:[%s223 + $0x1370] sm:$0xff]
        %v907 = vld [vmem:[%s223 + $0x1378] sm:$0xff]
        %v908 = vld [vmem:[%s223 + $0x1380] sm:$0xff]
        %v909 = vld [vmem:[%s223 + $0x1388] sm:$0xff]
        %v910 = vld [vmem:[%s223 + $0x1390] sm:$0xff]
        %v911 = vld [vmem:[%s223 + $0x1398] sm:$0xff]
        %v912 = vld [vmem:[%s223 + $0x13a0] sm:$0xff]
        %v913 = vld [vmem:[%s223 + $0x13a8] sm:$0xff]
        %v914 = vld [vmem:[%s223 + $0x13b0] sm:$0xff]
        %v915 = vld [vmem:[%s223 + $0x13b8] sm:$0xff]
        %v916 = vld [vmem:[%s223 + $0x13c0] sm:$0xff]
        %v917 = vld [vmem:[%s223 + $0x13c8] sm:$0xff]
        %v918 = vld [vmem:[%s223 + $0x13d0] sm:$0xff]
        %v919 = vld [vmem:[%s223 + $0x13d8] sm:$0xff]
        %v920 = vld [vmem:[%s223 + $0x13e0] sm:$0xff]
        %v921 = vld [vmem:[%s223 + $0x13e8] sm:$0xff]
        %v922 = vld [vmem:[%s223 + $0x13f0] sm:$0xff]
        %v923 = vld [vmem:[%s223 + $0x13f8] sm:$0xff]
        %v924 = vld [vmem:[%s223 + $0x1400] sm:$0xff]
        %v925 = vld [vmem:[%s223 + $0x1408] sm:$0xff]
        %v926 = vld [vmem:[%s223 + $0x1410] sm:$0xff]
        %v927 = vld [vmem:[%s223 + $0x1418] sm:$0xff]
        %v928 = vld [vmem:[%s223 + $0x1420] sm:$0xff]
        %v929 = vld [vmem:[%s223 + $0x1428] sm:$0xff]
        %v930 = vld [vmem:[%s223 + $0x1430] sm:$0xff]
        %v931 = vld [vmem:[%s223 + $0x1438] sm:$0xff]
        %v932 = vld [vmem:[%s223 + $0x1440] sm:$0xff]
        %v933 = vld [vmem:[%s223 + $0x1448] sm:$0xff]
        %v934 = vld [vmem:[%s223 + $0x1450] sm:$0xff]
        %v935 = vld [vmem:[%s223 + $0x1458] sm:$0xff]
        %v936 = vld [vmem:[%s223 + $0x1460] sm:$0xff]
        %v937 = vld [vmem:[%s223 + $0x1468] sm:$0xff]
        %v938 = vld [vmem:[%s223 + $0x1470] sm:$0xff]
        %v939 = vld [vmem:[%s223 + $0x1478] sm:$0xff]
        %v940 = vld [vmem:[%s223 + $0x1480] sm:$0xff]
        %v941 = vld [vmem:[%s223 + $0x1488] sm:$0xff]
        %v942 = vld [vmem:[%s223 + $0x1490] sm:$0xff]
        %v943 = vld [vmem:[%s223 + $0x1498] sm:$0xff]
        %v944 = vld [vmem:[%s223 + $0x14a0] sm:$0xff]
        %v945 = vld [vmem:[%s223 + $0x14a8] sm:$0xff]
        %v946 = vld [vmem:[%s223 + $0x14b0] sm:$0xff]
        %v947 = vld [vmem:[%s223 + $0x14b8] sm:$0xff]
        %v948 = vld [vmem:[%s223 + $0x14c0] sm:$0xff]
        %v949 = vld [vmem:[%s223 + $0x14c8] sm:$0xff]
        %v950 = vld [vmem:[%s223 + $0x14d0] sm:$0xff]
        %v951 = vld [vmem:[%s223 + $0x14d8] sm:$0xff]
        %v952 = vld [vmem:[%s223 + $0x14e0] sm:$0xff]
        %v953 = vld [vmem:[%s223 + $0x14e8] sm:$0xff]
        %v954 = vld [vmem:[%s223 + $0x14f0] sm:$0xff]
        %v955 = vld [vmem:[%s223 + $0x14f8] sm:$0xff]
        %v956 = vld [vmem:[%s223 + $0x1500] sm:$0xff]
        %v957 = vld [vmem:[%s223 + $0x1508] sm:$0xff]
        %v958 = vld [vmem:[%s223 + $0x1510] sm:$0xff]
        %v959 = vld [vmem:[%s223 + $0x1518] sm:$0xff]
        %v960 = vld [vmem:[%s223 + $0x1520] sm:$0xff]
        %v961 = vld [vmem:[%s223 + $0x1528] sm:$0xff]
        %v962 = vld [vmem:[%s223 + $0x1530] sm:$0xff]
        %v963 = vld [vmem:[%s223 + $0x1538] sm:$0xff]
        %v964 = vld [vmem:[%s223 + $0x1540] sm:$0xff]
        %v965 = vld [vmem:[%s223 + $0x1548] sm:$0xff]
        %v966 = vld [vmem:[%s223 + $0x1550] sm:$0xff]
        %v967 = vld [vmem:[%s223 + $0x1558] sm:$0xff]
        %v968 = vld [vmem:[%s223 + $0x1560] sm:$0xff]
        %v969 = vld [vmem:[%s223 + $0x1568] sm:$0xff]
        %v970 = vld [vmem:[%s223 + $0x1570] sm:$0xff]
        %v971 = vld [vmem:[%s223 + $0x1578] sm:$0xff]
        %v972 = vld [vmem:[%s223 + $0x1580] sm:$0xff]
        %v973 = vld [vmem:[%s223 + $0x1588] sm:$0xff]
        %v974 = vld [vmem:[%s223 + $0x1590] sm:$0xff]
        %v975 = vld [vmem:[%s223 + $0x1598] sm:$0xff]
        %v976 = vld [vmem:[%s223 + $0x15a0] sm:$0xff]
        %v977 = vld [vmem:[%s223 + $0x15a8] sm:$0xff]
        %v978 = vld [vmem:[%s223 + $0x15b0] sm:$0xff]
        %v979 = vld [vmem:[%s223 + $0x15b8] sm:$0xff]
        %v980 = vld [vmem:[%s223 + $0x15c0] sm:$0xff]
        %v981 = vld [vmem:[%s223 + $0x15c8] sm:$0xff]
        %v982 = vld [vmem:[%s223 + $0x15d0] sm:$0xff]
        %v983 = vld [vmem:[%s223 + $0x15d8] sm:$0xff]
        %v984 = vld [vmem:[%s223 + $0x15e0] sm:$0xff]
        %v985 = vld [vmem:[%s223 + $0x15e8] sm:$0xff]
        %v986 = vld [vmem:[%s223 + $0x15f0] sm:$0xff]
        %v987 = vld [vmem:[%s223 + $0x15f8] sm:$0xff]
        %v988 = vld [vmem:[%s223 + $0x1600] sm:$0xff]
        %v989 = vld [vmem:[%s223 + $0x1608] sm:$0xff]
        %v990 = vld [vmem:[%s223 + $0x1610] sm:$0xff]
        %v991 = vld [vmem:[%s223 + $0x1618] sm:$0xff]
        %v992 = vld [vmem:[%s223 + $0x1620] sm:$0xff]
        %v993 = vld [vmem:[%s223 + $0x1628] sm:$0xff]
        %v994 = vld [vmem:[%s223 + $0x1630] sm:$0xff]
        %v995 = vld [vmem:[%s223 + $0x1638] sm:$0xff]
        %v996 = vld [vmem:[%s223 + $0x1640] sm:$0xff]
        %v997 = vld [vmem:[%s223 + $0x1648] sm:$0xff]
        %v998 = vld [vmem:[%s223 + $0x1650] sm:$0xff]
        %v999 = vld [vmem:[%s223 + $0x1658] sm:$0xff]
        %v1000 = vld [vmem:[%s223 + $0x1660] sm:$0xff]
        %v1001 = vld [vmem:[%s223 + $0x1668] sm:$0xff]
        %v1002 = vld [vmem:[%s223 + $0x1670] sm:$0xff]
        %v1003 = vld [vmem:[%s223 + $0x1678] sm:$0xff]
        %v1004 = vld [vmem:[%s223 + $0x1680] sm:$0xff]
        %v1005 = vld [vmem:[%s223 + $0x1688] sm:$0xff]
        %v1006 = vld [vmem:[%s223 + $0x1690] sm:$0xff]
        %v1007 = vld [vmem:[%s223 + $0x1698] sm:$0xff]
        %v1008 = vld [vmem:[%s223 + $0x16a0] sm:$0xff]
        %v1009 = vld [vmem:[%s223 + $0x16a8] sm:$0xff]
        %v1010 = vld [vmem:[%s223 + $0x16b0] sm:$0xff]
        %v1011 = vld [vmem:[%s223 + $0x16b8] sm:$0xff]
        %v1012 = vld [vmem:[%s223 + $0x16c0] sm:$0xff]
        %v1013 = vld [vmem:[%s223 + $0x16c8] sm:$0xff]
        %v1014 = vld [vmem:[%s223 + $0x16d0] sm:$0xff]
        %v1015 = vld [vmem:[%s223 + $0x16d8] sm:$0xff]
        %v1016 = vld [vmem:[%s223 + $0x16e0] sm:$0xff]
        %v1017 = vld [vmem:[%s223 + $0x16e8] sm:$0xff]
        %v1018 = vld [vmem:[%s223 + $0x16f0] sm:$0xff]
        %v1019 = vld [vmem:[%s223 + $0x16f8] sm:$0xff]
        %v1020 = vld [vmem:[%s223 + $0x1700] sm:$0xff]
        %v1021 = vld [vmem:[%s223 + $0x1708] sm:$0xff]
        %v1022 = vld [vmem:[%s223 + $0x1710] sm:$0xff]
        %v1023 = vld [vmem:[%s223 + $0x1718] sm:$0xff]
        %v1024 = vld [vmem:[%s223 + $0x1720] sm:$0xff]
        %v1025 = vld [vmem:[%s223 + $0x1728] sm:$0xff]
        %v1026 = vld [vmem:[%s223 + $0x1730] sm:$0xff]
        %v1027 = vld [vmem:[%s223 + $0x1738] sm:$0xff]
        %v1028 = vld [vmem:[%s223 + $0x1740] sm:$0xff]
        %v1029 = vld [vmem:[%s223 + $0x1748] sm:$0xff]
        %v1030 = vld [vmem:[%s223 + $0x1750] sm:$0xff]
        %v1031 = vld [vmem:[%s223 + $0x1758] sm:$0xff]
        %v1032 = vld [vmem:[%s223 + $0x1760] sm:$0xff]
        %v1033 = vld [vmem:[%s223 + $0x1768] sm:$0xff]
        %v1034 = vld [vmem:[%s223 + $0x1770] sm:$0xff]
        %v1035 = vld [vmem:[%s223 + $0x1778] sm:$0xff]
        %v1036 = vld [vmem:[%s223 + $0x1780] sm:$0xff]
        %v1037 = vld [vmem:[%s223 + $0x1788] sm:$0xff]
        %v1038 = vld [vmem:[%s223 + $0x1790] sm:$0xff]
        %v1039 = vld [vmem:[%s223 + $0x1798] sm:$0xff]
        %v1040 = vld [vmem:[%s223 + $0x17a0] sm:$0xff]
        %v1041 = vld [vmem:[%s223 + $0x17a8] sm:$0xff]
        %v1042 = vld [vmem:[%s223 + $0x17b0] sm:$0xff]
        %v1043 = vld [vmem:[%s223 + $0x17b8] sm:$0xff]
        %v1044 = vld [vmem:[%s223 + $0x17c0] sm:$0xff]
        %v1045 = vld [vmem:[%s223 + $0x17c8] sm:$0xff]
        %v1046 = vld [vmem:[%s223 + $0x17d0] sm:$0xff]
        %v1047 = vld [vmem:[%s223 + $0x17d8] sm:$0xff]
        %v1048 = vld [vmem:[%s223 + $0x17e0] sm:$0xff]
        %v1049 = vld [vmem:[%s223 + $0x17e8] sm:$0xff]
        %v1050 = vld [vmem:[%s223 + $0x17f0] sm:$0xff]
        %v1051 = vld [vmem:[%s223 + $0x17f8] sm:$0xff]
        %v1052 = vld [vmem:[%s223 + $0x1800] sm:$0xff]
        %v1053 = vld [vmem:[%s223 + $0x1808] sm:$0xff]
        %v1054 = vld [vmem:[%s223 + $0x1810] sm:$0xff]
        %v1055 = vld [vmem:[%s223 + $0x1818] sm:$0xff]
        %v1056 = vld [vmem:[%s223 + $0x1820] sm:$0xff]
        %v1057 = vld [vmem:[%s223 + $0x1828] sm:$0xff]
        %v1058 = vld [vmem:[%s223 + $0x1830] sm:$0xff]
        %v1059 = vld [vmem:[%s223 + $0x1838] sm:$0xff]
        %v1060 = vld [vmem:[%s223 + $0x1840] sm:$0xff]
        %v1061 = vld [vmem:[%s223 + $0x1848] sm:$0xff]
        %v1062 = vld [vmem:[%s223 + $0x1850] sm:$0xff]
        %v1063 = vld [vmem:[%s223 + $0x1858] sm:$0xff]
        %v1064 = vld [vmem:[%s223 + $0x1860] sm:$0xff]
        %v1065 = vld [vmem:[%s223 + $0x1868] sm:$0xff]
        %v1066 = vld [vmem:[%s223 + $0x1870] sm:$0xff]
        %v1067 = vld [vmem:[%s223 + $0x1878] sm:$0xff]
        %v1068 = vld [vmem:[%s223 + $0x1880] sm:$0xff]
        %v1069 = vld [vmem:[%s223 + $0x1888] sm:$0xff]
        %v1070 = vld [vmem:[%s223 + $0x1890] sm:$0xff]
        %v1071 = vld [vmem:[%s223 + $0x1898] sm:$0xff]
        %v1072 = vld [vmem:[%s223 + $0x18a0] sm:$0xff]
        %v1073 = vld [vmem:[%s223 + $0x18a8] sm:$0xff]
        %v1074 = vld [vmem:[%s223 + $0x18b0] sm:$0xff]
        %v1075 = vld [vmem:[%s223 + $0x18b8] sm:$0xff]
        %v1076 = vld [vmem:[%s223 + $0x18c0] sm:$0xff]
        %v1077 = vld [vmem:[%s223 + $0x18c8] sm:$0xff]
        %v1078 = vld [vmem:[%s223 + $0x18d0] sm:$0xff]
        %v1079 = vld [vmem:[%s223 + $0x18d8] sm:$0xff]
        %v1080 = vld [vmem:[%s223 + $0x18e0] sm:$0xff]
        %v1081 = vld [vmem:[%s223 + $0x18e8] sm:$0xff]
        %v1082 = vld [vmem:[%s223 + $0x18f0] sm:$0xff]
        %v1083 = vld [vmem:[%s223 + $0x18f8] sm:$0xff]
        %v1084 = vld [vmem:[%s223 + $0x1900] sm:$0xff]
        %v1085 = vld [vmem:[%s223 + $0x1908] sm:$0xff]
        %v1086 = vld [vmem:[%s223 + $0x1910] sm:$0xff]
        %v1087 = vld [vmem:[%s223 + $0x1918] sm:$0xff]
        %v1088 = vld [vmem:[%s223 + $0x1920] sm:$0xff]
        %v1089 = vld [vmem:[%s223 + $0x1928] sm:$0xff]
        %v1090 = vld [vmem:[%s223 + $0x1930] sm:$0xff]
        %v1091 = vld [vmem:[%s223 + $0x1938] sm:$0xff]
        %v1092 = vld [vmem:[%s223 + $0x1940] sm:$0xff]
        %v1093 = vld [vmem:[%s223 + $0x1948] sm:$0xff]
        %v1094 = vld [vmem:[%s223 + $0x1950] sm:$0xff]
        %v1095 = vld [vmem:[%s223 + $0x1958] sm:$0xff]
        %v1096 = vld [vmem:[%s223 + $0x1960] sm:$0xff]
        %v1097 = vld [vmem:[%s223 + $0x1968] sm:$0xff]
        %v1098 = vld [vmem:[%s223 + $0x1970] sm:$0xff]
        %v1099 = vld [vmem:[%s223 + $0x1978] sm:$0xff]
        %v1100 = vld [vmem:[%s223 + $0x1980] sm:$0xff]
        %v1101 = vld [vmem:[%s223 + $0x1988] sm:$0xff]
        %v1102 = vld [vmem:[%s223 + $0x1990] sm:$0xff]
        %v1103 = vld [vmem:[%s223 + $0x1998] sm:$0xff]
        %v1104 = vld [vmem:[%s223 + $0x19a0] sm:$0xff]
        %v1105 = vld [vmem:[%s223 + $0x19a8] sm:$0xff]
        %v1106 = vld [vmem:[%s223 + $0x19b0] sm:$0xff]
        %v1107 = vld [vmem:[%s223 + $0x19b8] sm:$0xff]
        %v1108 = vld [vmem:[%s223 + $0x19c0] sm:$0xff]
        %v1109 = vld [vmem:[%s223 + $0x19c8] sm:$0xff]
        %v1110 = vld [vmem:[%s223 + $0x19d0] sm:$0xff]
        %v1111 = vld [vmem:[%s223 + $0x19d8] sm:$0xff]
        %v1112 = vld [vmem:[%s223 + $0x19e0] sm:$0xff]
        %v1113 = vld [vmem:[%s223 + $0x19e8] sm:$0xff]
        %v1114 = vld [vmem:[%s223 + $0x19f0] sm:$0xff]
        %v1115 = vld [vmem:[%s223 + $0x19f8] sm:$0xff]
        %v1116 = vld [vmem:[%s223 + $0x1a00] sm:$0xff]
        %v1117 = vld [vmem:[%s223 + $0x1a08] sm:$0xff]
        %v1118 = vld [vmem:[%s223 + $0x1a10] sm:$0xff]
        %v1119 = vld [vmem:[%s223 + $0x1a18] sm:$0xff]
        %v1120 = vld [vmem:[%s223 + $0x1a20] sm:$0xff]
        %v1121 = vld [vmem:[%s223 + $0x1a28] sm:$0xff]
        %v1122 = vld [vmem:[%s223 + $0x1a30] sm:$0xff]
        %v1123 = vld [vmem:[%s223 + $0x1a38] sm:$0xff]
        %v1124 = vld [vmem:[%s223 + $0x1a40] sm:$0xff]
        %v1125 = vld [vmem:[%s223 + $0x1a48] sm:$0xff]
        %v1126 = vld [vmem:[%s223 + $0x1a50] sm:$0xff]
        %v1127 = vld [vmem:[%s223 + $0x1a58] sm:$0xff]
        %v1128 = vld [vmem:[%s223 + $0x1a60] sm:$0xff]
        %v1129 = vld [vmem:[%s223 + $0x1a68] sm:$0xff]
        %v1130 = vld [vmem:[%s223 + $0x1a70] sm:$0xff]
        %v1131 = vld [vmem:[%s223 + $0x1a78] sm:$0xff]
        %v1132 = vld [vmem:[%s223 + $0x1a80] sm:$0xff]
        %v1133 = vld [vmem:[%s223 + $0x1a88] sm:$0xff]
        %v1134 = vld [vmem:[%s223 + $0x1a90] sm:$0xff]
        %v1135 = vld [vmem:[%s223 + $0x1a98] sm:$0xff]
        %v1136 = vld [vmem:[%s223 + $0x1aa0] sm:$0xff]
        %v1137 = vld [vmem:[%s223 + $0x1aa8] sm:$0xff]
        %v1138 = vld [vmem:[%s223 + $0x1ab0] sm:$0xff]
        %v1139 = vld [vmem:[%s223 + $0x1ab8] sm:$0xff]
        %v1140 = vld [vmem:[%s223 + $0x1ac0] sm:$0xff]
        %v1141 = vld [vmem:[%s223 + $0x1ac8] sm:$0xff]
        %v1142 = vld [vmem:[%s223 + $0x1ad0] sm:$0xff]
        %v1143 = vld [vmem:[%s223 + $0x1ad8] sm:$0xff]
        %v1144 = vld [vmem:[%s223 + $0x1ae0] sm:$0xff]
        %v1145 = vld [vmem:[%s223 + $0x1ae8] sm:$0xff]
        %v1146 = vld [vmem:[%s223 + $0x1af0] sm:$0xff]
        %v1147 = vld [vmem:[%s223 + $0x1af8] sm:$0xff]
        %v1148 = vld [vmem:[%s223 + $0x1b00] sm:$0xff]
        %v1149 = vld [vmem:[%s223 + $0x1b08] sm:$0xff]
        %v1150 = vld [vmem:[%s223 + $0x1b10] sm:$0xff]
        %v1151 = vld [vmem:[%s223 + $0x1b18] sm:$0xff]
        %v1152 = vld [vmem:[%s223 + $0x1b20] sm:$0xff]
        %v1153 = vld [vmem:[%s223 + $0x1b28] sm:$0xff]
        %v1154 = vld [vmem:[%s223 + $0x1b30] sm:$0xff]
        %v1155 = vld [vmem:[%s223 + $0x1b38] sm:$0xff]
        %v1156 = vld [vmem:[%s223 + $0x1b40] sm:$0xff]
        %v1157 = vld [vmem:[%s223 + $0x1b48] sm:$0xff]
        %v1158 = vld [vmem:[%s223 + $0x1b50] sm:$0xff]
        %v1159 = vld [vmem:[%s223 + $0x1b58] sm:$0xff]
        %v1160 = vld [vmem:[%s223 + $0x1b60] sm:$0xff]
        %v1161 = vld [vmem:[%s223 + $0x1b68] sm:$0xff]
        %v1162 = vld [vmem:[%s223 + $0x1b70] sm:$0xff]
        %v1163 = vld [vmem:[%s223 + $0x1b78] sm:$0xff]
        %v1164 = vld [vmem:[%s223 + $0x1b80] sm:$0xff]
        %v1165 = vld [vmem:[%s223 + $0x1b88] sm:$0xff]
        %v1166 = vld [vmem:[%s223 + $0x1b90] sm:$0xff]
        %v1167 = vld [vmem:[%s223 + $0x1b98] sm:$0xff]
        %v1168 = vld [vmem:[%s223 + $0x1ba0] sm:$0xff]
        %v1169 = vld [vmem:[%s223 + $0x1ba8] sm:$0xff]
        %v1170 = vld [vmem:[%s223 + $0x1bb0] sm:$0xff]
        %v1171 = vld [vmem:[%s223 + $0x1bb8] sm:$0xff]
        %v1172 = vld [vmem:[%s223 + $0x1bc0] sm:$0xff]
        %v1173 = vld [vmem:[%s223 + $0x1bc8] sm:$0xff]
        %v1174 = vld [vmem:[%s223 + $0x1bd0] sm:$0xff]
        %v1175 = vld [vmem:[%s223 + $0x1bd8] sm:$0xff]
        %v1176 = vld [vmem:[%s223 + $0x1be0] sm:$0xff]
        %v1177 = vld [vmem:[%s223 + $0x1be8] sm:$0xff]
        %v1178 = vld [vmem:[%s223 + $0x1bf0] sm:$0xff]
        %v1179 = vld [vmem:[%s223 + $0x1bf8] sm:$0xff]
        %v1180 = vld [vmem:[%s223 + $0x1c00] sm:$0xff]
        %v1181 = vld [vmem:[%s223 + $0x1c08] sm:$0xff]
        %v1182 = vld [vmem:[%s223 + $0x1c10] sm:$0xff]
        %v1183 = vld [vmem:[%s223 + $0x1c18] sm:$0xff]
        %v1184 = vld [vmem:[%s223 + $0x1c20] sm:$0xff]
        %v1185 = vld [vmem:[%s223 + $0x1c28] sm:$0xff]
        %v1186 = vld [vmem:[%s223 + $0x1c30] sm:$0xff]
        %v1187 = vld [vmem:[%s223 + $0x1c38] sm:$0xff]
        %v1188 = vld [vmem:[%s223 + $0x1c40] sm:$0xff]
        %v1189 = vld [vmem:[%s223 + $0x1c48] sm:$0xff]
        %v1190 = vld [vmem:[%s223 + $0x1c50] sm:$0xff]
        %v1191 = vld [vmem:[%s223 + $0x1c58] sm:$0xff]
        %v1192 = vld [vmem:[%s223 + $0x1c60] sm:$0xff]
        %v1193 = vld [vmem:[%s223 + $0x1c68] sm:$0xff]
        %v1194 = vld [vmem:[%s223 + $0x1c70] sm:$0xff]
        %v1195 = vld [vmem:[%s223 + $0x1c78] sm:$0xff]
        %v1196 = vld [vmem:[%s223 + $0x1c80] sm:$0xff]
        %v1197 = vld [vmem:[%s223 + $0x1c88] sm:$0xff]
        %v1198 = vld [vmem:[%s223 + $0x1c90] sm:$0xff]
        %v1199 = vld [vmem:[%s223 + $0x1c98] sm:$0xff]
        %v1200 = vld [vmem:[%s223 + $0x1ca0] sm:$0xff]
        %v1201 = vld [vmem:[%s223 + $0x1ca8] sm:$0xff]
        %v1202 = vld [vmem:[%s223 + $0x1cb0] sm:$0xff]
        %v1203 = vld [vmem:[%s223 + $0x1cb8] sm:$0xff]
        %v1204 = vld [vmem:[%s223 + $0x1cc0] sm:$0xff]
        %v1205 = vld [vmem:[%s223 + $0x1cc8] sm:$0xff]
        %v1206 = vld [vmem:[%s223 + $0x1cd0] sm:$0xff]
        %v1207 = vld [vmem:[%s223 + $0x1cd8] sm:$0xff]
        %v1208 = vld [vmem:[%s223 + $0x1ce0] sm:$0xff]
        %v1209 = vld [vmem:[%s223 + $0x1ce8] sm:$0xff]
        %v1210 = vld [vmem:[%s223 + $0x1cf0] sm:$0xff]
        %v1211 = vld [vmem:[%s223 + $0x1cf8] sm:$0xff]
        %v1212 = vld [vmem:[%s223 + $0x1d00] sm:$0xff]
        %v1213 = vld [vmem:[%s223 + $0x1d08] sm:$0xff]
        %v1214 = vld [vmem:[%s223 + $0x1d10] sm:$0xff]
        %v1215 = vld [vmem:[%s223 + $0x1d18] sm:$0xff]
        %v1216 = vld [vmem:[%s223 + $0x1d20] sm:$0xff]
        %v1217 = vld [vmem:[%s223 + $0x1d28] sm:$0xff]
        %v1218 = vld [vmem:[%s223 + $0x1d30] sm:$0xff]
        %v1219 = vld [vmem:[%s223 + $0x1d38] sm:$0xff]
        %v1220 = vld [vmem:[%s223 + $0x1d40] sm:$0xff]
        %v1221 = vld [vmem:[%s223 + $0x1d48] sm:$0xff]
        %v1222 = vld [vmem:[%s223 + $0x1d50] sm:$0xff]
        %v1223 = vld [vmem:[%s223 + $0x1d58] sm:$0xff]
        %v1224 = vld [vmem:[%s223 + $0x1d60] sm:$0xff]
        %v1225 = vld [vmem:[%s223 + $0x1d68] sm:$0xff]
        %v1226 = vld [vmem:[%s223 + $0x1d70] sm:$0xff]
        %v1227 = vld [vmem:[%s223 + $0x1d78] sm:$0xff]
        %v1228 = vld [vmem:[%s223 + $0x1d80] sm:$0xff]
        %v1229 = vld [vmem:[%s223 + $0x1d88] sm:$0xff]
        %v1230 = vld [vmem:[%s223 + $0x1d90] sm:$0xff]
        %v1231 = vld [vmem:[%s223 + $0x1d98] sm:$0xff]
        %v1232 = vld [vmem:[%s223 + $0x1da0] sm:$0xff]
        %v1233 = vld [vmem:[%s223 + $0x1da8] sm:$0xff]
        %v1234 = vld [vmem:[%s223 + $0x1db0] sm:$0xff]
        %v1235 = vld [vmem:[%s223 + $0x1db8] sm:$0xff]
        %v1236 = vld [vmem:[%s223 + $0x1dc0] sm:$0xff]
        %v1237 = vld [vmem:[%s223 + $0x1dc8] sm:$0xff]
        %v1238 = vld [vmem:[%s223 + $0x1dd0] sm:$0xff]
        %v1239 = vld [vmem:[%s223 + $0x1dd8] sm:$0xff]
        %v1240 = vld [vmem:[%s223 + $0x1de0] sm:$0xff]
        %v1241 = vld [vmem:[%s223 + $0x1de8] sm:$0xff]
        %v1242 = vld [vmem:[%s223 + $0x1df0] sm:$0xff]
        %v1243 = vld [vmem:[%s223 + $0x1df8] sm:$0xff]
        %v1244 = vld [vmem:[%s223 + $0x1e00] sm:$0xff]
        %v1245 = vld [vmem:[%s223 + $0x1e08] sm:$0xff]
        %v1246 = vld [vmem:[%s223 + $0x1e10] sm:$0xff]
        %v1247 = vld [vmem:[%s223 + $0x1e18] sm:$0xff]
        %v1248 = vld [vmem:[%s223 + $0x1e20] sm:$0xff]
        %v1249 = vld [vmem:[%s223 + $0x1e28] sm:$0xff]
        %v1250 = vld [vmem:[%s223 + $0x1e30] sm:$0xff]
        %v1251 = vld [vmem:[%s223 + $0x1e38] sm:$0xff]
        %v1252 = vld [vmem:[%s223 + $0x1e40] sm:$0xff]
        %v1253 = vld [vmem:[%s223 + $0x1e48] sm:$0xff]
        %v1254 = vld [vmem:[%s223 + $0x1e50] sm:$0xff]
        %v1255 = vld [vmem:[%s223 + $0x1e58] sm:$0xff]
        %v1256 = vld [vmem:[%s223 + $0x1e60] sm:$0xff]
        %v1257 = vld [vmem:[%s223 + $0x1e68] sm:$0xff]
        %v1258 = vld [vmem:[%s223 + $0x1e70] sm:$0xff]
        %v1259 = vld [vmem:[%s223 + $0x1e78] sm:$0xff]
        %v1260 = vld [vmem:[%s223 + $0x1e80] sm:$0xff]
        %v1261 = vld [vmem:[%s223 + $0x1e88] sm:$0xff]
        %v1262 = vld [vmem:[%s223 + $0x1e90] sm:$0xff]
        %v1263 = vld [vmem:[%s223 + $0x1e98] sm:$0xff]
        %v1264 = vld [vmem:[%s223 + $0x1ea0] sm:$0xff]
        %v1265 = vld [vmem:[%s223 + $0x1ea8] sm:$0xff]
        %v1266 = vld [vmem:[%s223 + $0x1eb0] sm:$0xff]
        %v1267 = vld [vmem:[%s223 + $0x1eb8] sm:$0xff]
        %v1268 = vld [vmem:[%s223 + $0x1ec0] sm:$0xff]
        %v1269 = vld [vmem:[%s223 + $0x1ec8] sm:$0xff]
        %v1270 = vld [vmem:[%s223 + $0x1ed0] sm:$0xff]
        %v1271 = vld [vmem:[%s223 + $0x1ed8] sm:$0xff]
        %v1272 = vld [vmem:[%s223 + $0x1ee0] sm:$0xff]
        %v1273 = vld [vmem:[%s223 + $0x1ee8] sm:$0xff]
        %v1274 = vld [vmem:[%s223 + $0x1ef0] sm:$0xff]
        %v1275 = vld [vmem:[%s223 + $0x1ef8] sm:$0xff]
        %v1276 = vld [vmem:[%s223 + $0x1f00] sm:$0xff]
        %v1277 = vld [vmem:[%s223 + $0x1f08] sm:$0xff]
        %v1278 = vld [vmem:[%s223 + $0x1f10] sm:$0xff]
        %v1279 = vld [vmem:[%s223 + $0x1f18] sm:$0xff]
        %v1280 = vld [vmem:[%s223 + $0x1f20] sm:$0xff]
        %v1281 = vld [vmem:[%s223 + $0x1f28] sm:$0xff]
        %v1282 = vld [vmem:[%s223 + $0x1f30] sm:$0xff]
        %v1283 = vld [vmem:[%s223 + $0x1f38] sm:$0xff]
        %v1284 = vld [vmem:[%s223 + $0x1f40] sm:$0xff]
        %v1285 = vld [vmem:[%s223 + $0x1f48] sm:$0xff]
        %v1286 = vld [vmem:[%s223 + $0x1f50] sm:$0xff]
        %v1287 = vld [vmem:[%s223 + $0x1f58] sm:$0xff]
        %v1288 = vld [vmem:[%s223 + $0x1f60] sm:$0xff]
        %v1289 = vld [vmem:[%s223 + $0x1f68] sm:$0xff]
        %v1290 = vld [vmem:[%s223 + $0x1f70] sm:$0xff]
        %v1291 = vld [vmem:[%s223 + $0x1f78] sm:$0xff]
        %v1292 = vld [vmem:[%s223 + $0x1f80] sm:$0xff]
        %v1293 = vld [vmem:[%s223 + $0x1f88] sm:$0xff]
        %v1294 = vld [vmem:[%s223 + $0x1f90] sm:$0xff]
        %v1295 = vld [vmem:[%s223 + $0x1f98] sm:$0xff]
        %v1296 = vld [vmem:[%s223 + $0x1fa0] sm:$0xff]
        %v1297 = vld [vmem:[%s223 + $0x1fa8] sm:$0xff]
        %v1298 = vld [vmem:[%s223 + $0x1fb0] sm:$0xff]
        %v1299 = vld [vmem:[%s223 + $0x1fb8] sm:$0xff]
        %v1300 = vld [vmem:[%s223 + $0x1fc0] sm:$0xff]
        %v1301 = vld [vmem:[%s223 + $0x1fc8] sm:$0xff]
        %v1302 = vld [vmem:[%s223 + $0x1fd0] sm:$0xff]
        %v1303 = vld [vmem:[%s223 + $0x1fd8] sm:$0xff]
        %v1304 = vld [vmem:[%s223 + $0x1fe0] sm:$0xff]
        %v1305 = vld [vmem:[%s223 + $0x1fe8] sm:$0xff]
        %v1306 = vld [vmem:[%s223 + $0x1ff0] sm:$0xff]
        %v1307 = vld [vmem:[%s223 + $0x1ff8] sm:$0xff]
        %v1308 = vld [vmem:[%s223 + $0x2000] sm:$0xff]
        %v1309 = vld [vmem:[%s223 + $0x2008] sm:$0xff]
        %v1310 = vld [vmem:[%s223 + $0x2010] sm:$0xff]
        %v1311 = vld [vmem:[%s223 + $0x2018] sm:$0xff]
        %v1312 = vld [vmem:[%s223 + $0x2020] sm:$0xff]
        %v1313 = vld [vmem:[%s223 + $0x2028] sm:$0xff]
        %v1314 = vld [vmem:[%s223 + $0x2030] sm:$0xff]
        %v1315 = vld [vmem:[%s223 + $0x2038] sm:$0xff]
        %v1316 = vld [vmem:[%s223 + $0x2040] sm:$0xff]
        %v1317 = vld [vmem:[%s223 + $0x2048] sm:$0xff]
        %v1318 = vld [vmem:[%s223 + $0x2050] sm:$0xff]
        %v1319 = vld [vmem:[%s223 + $0x2058] sm:$0xff]
        %v1320 = vld [vmem:[%s223 + $0x2060] sm:$0xff]
        %v1321 = vld [vmem:[%s223 + $0x2068] sm:$0xff]
        %v1322 = vld [vmem:[%s223 + $0x2070] sm:$0xff]
        %v1323 = vld [vmem:[%s223 + $0x2078] sm:$0xff]
        %v1324 = vld [vmem:[%s223 + $0x2080] sm:$0xff]
        %v1325 = vld [vmem:[%s223 + $0x2088] sm:$0xff]
        %v1326 = vld [vmem:[%s223 + $0x2090] sm:$0xff]
        %v1327 = vld [vmem:[%s223 + $0x2098] sm:$0xff]
        %v1328 = vld [vmem:[%s223 + $0x20a0] sm:$0xff]
        %v1329 = vld [vmem:[%s223 + $0x20a8] sm:$0xff]
        %v1330 = vld [vmem:[%s223 + $0x20b0] sm:$0xff]
        %v1331 = vld [vmem:[%s223 + $0x20b8] sm:$0xff]
        %v1332 = vld [vmem:[%s223 + $0x20c0] sm:$0xff]
        %v1333 = vld [vmem:[%s223 + $0x20c8] sm:$0xff]
        %v1334 = vld [vmem:[%s223 + $0x20d0] sm:$0xff]
        %v1335 = vld [vmem:[%s223 + $0x20d8] sm:$0xff]
        %v1336 = vld [vmem:[%s223 + $0x20e0] sm:$0xff]
        %v1337 = vld [vmem:[%s223 + $0x20e8] sm:$0xff]
        %v1338 = vld [vmem:[%s223 + $0x20f0] sm:$0xff]
        %v1339 = vld [vmem:[%s223 + $0x20f8] sm:$0xff]
        %v1340 = vld [vmem:[%s223 + $0x2100] sm:$0xff]
        %v1341 = vld [vmem:[%s223 + $0x2108] sm:$0xff]
        %v1342 = vld [vmem:[%s223 + $0x2110] sm:$0xff]
        %v1343 = vld [vmem:[%s223 + $0x2118] sm:$0xff]
        %v1344 = vld [vmem:[%s223 + $0x2120] sm:$0xff]
        %v1345 = vld [vmem:[%s223 + $0x2128] sm:$0xff]
        %v1346 = vld [vmem:[%s223 + $0x2130] sm:$0xff]
        %v1347 = vld [vmem:[%s223 + $0x2138] sm:$0xff]
        %v1348 = vld [vmem:[%s223 + $0x2140] sm:$0xff]
        %v1349 = vld [vmem:[%s223 + $0x2148] sm:$0xff]
        %v1350 = vld [vmem:[%s223 + $0x2150] sm:$0xff]
        %v1351 = vld [vmem:[%s223 + $0x2158] sm:$0xff]
        %v1352 = vld [vmem:[%s223 + $0x2160] sm:$0xff]
        %v1353 = vld [vmem:[%s223 + $0x2168] sm:$0xff]
        %v1354 = vld [vmem:[%s223 + $0x2170] sm:$0xff]
        %v1355 = vld [vmem:[%s223 + $0x2178] sm:$0xff]
        %v1356 = vld [vmem:[%s223 + $0x2180] sm:$0xff]
        %v1357 = vld [vmem:[%s223 + $0x2188] sm:$0xff]
        %v1358 = vld [vmem:[%s223 + $0x2190] sm:$0xff]
        %v1359 = vld [vmem:[%s223 + $0x2198] sm:$0xff]
        %v1360 = vld [vmem:[%s223 + $0x21a0] sm:$0xff]
        %v1361 = vld [vmem:[%s223 + $0x21a8] sm:$0xff]
        %v1362 = vld [vmem:[%s223 + $0x21b0] sm:$0xff]
        %v1363 = vld [vmem:[%s223 + $0x21b8] sm:$0xff]
        %v1364 = vld [vmem:[%s223 + $0x21c0] sm:$0xff]
        %v1365 = vld [vmem:[%s223 + $0x21c8] sm:$0xff]
        %v1366 = vld [vmem:[%s223 + $0x21d0] sm:$0xff]
        %v1367 = vld [vmem:[%s223 + $0x21d8] sm:$0xff]
        %v1368 = vld [vmem:[%s223 + $0x21e0] sm:$0xff]
        %v1369 = vld [vmem:[%s223 + $0x21e8] sm:$0xff]
        %v1370 = vld [vmem:[%s223 + $0x21f0] sm:$0xff]
        %v1371 = vld [vmem:[%s223 + $0x21f8] sm:$0xff]
        %v1372 = vld [vmem:[%s223 + $0x2200] sm:$0xff]
        %v1373 = vld [vmem:[%s223 + $0x2208] sm:$0xff]
        %v1374 = vld [vmem:[%s223 + $0x2210] sm:$0xff]
        %v1375 = vld [vmem:[%s223 + $0x2218] sm:$0xff]
        %v1376 = vld [vmem:[%s223 + $0x2220] sm:$0xff]
        %v1377 = vld [vmem:[%s223 + $0x2228] sm:$0xff]
        %v1378 = vld [vmem:[%s223 + $0x2230] sm:$0xff]
        %v1379 = vld [vmem:[%s223 + $0x2238] sm:$0xff]
        %v1380 = vld [vmem:[%s223 + $0x2240] sm:$0xff]
        %v1381 = vld [vmem:[%s223 + $0x2248] sm:$0xff]
        %v1382 = vld [vmem:[%s223 + $0x2250] sm:$0xff]
        %v1383 = vld [vmem:[%s223 + $0x2258] sm:$0xff]
        %v1384 = vld [vmem:[%s223 + $0x2260] sm:$0xff]
        %v1385 = vld [vmem:[%s223 + $0x2268] sm:$0xff]
        %v1386 = vld [vmem:[%s223 + $0x2270] sm:$0xff]
        %v1387 = vld [vmem:[%s223 + $0x2278] sm:$0xff]
        %v1388 = vld [vmem:[%s223 + $0x2280] sm:$0xff]
        %v1389 = vld [vmem:[%s223 + $0x2288] sm:$0xff]
        %v1390 = vld [vmem:[%s223 + $0x2290] sm:$0xff]
        %v1391 = vld [vmem:[%s223 + $0x2298] sm:$0xff]
        %v1392 = vld [vmem:[%s223 + $0x22a0] sm:$0xff]
        %v1393 = vld [vmem:[%s223 + $0x22a8] sm:$0xff]
        %v1394 = vld [vmem:[%s223 + $0x22b0] sm:$0xff]
        %v1395 = vld [vmem:[%s223 + $0x22b8] sm:$0xff]
        %v1396 = vld [vmem:[%s223 + $0x22c0] sm:$0xff]
        %v1397 = vld [vmem:[%s223 + $0x22c8] sm:$0xff]
        %v1398 = vld [vmem:[%s223 + $0x22d0] sm:$0xff]
        %v1399 = vld [vmem:[%s223 + $0x22d8] sm:$0xff]
        %v1400 = vld [vmem:[%s223 + $0x22e0] sm:$0xff]
        %v1401 = vld [vmem:[%s223 + $0x22e8] sm:$0xff]
        %v1402 = vld [vmem:[%s223 + $0x22f0] sm:$0xff]
        %v1403 = vld [vmem:[%s223 + $0x22f8] sm:$0xff]
        %v1404 = vld [vmem:[%s223 + $0x2300] sm:$0xff]
        %v1405 = vld [vmem:[%s223 + $0x2308] sm:$0xff]
        %v1406 = vld [vmem:[%s223 + $0x2310] sm:$0xff]
        %v1407 = vld [vmem:[%s223 + $0x2318] sm:$0xff]
        %v1408 = vld [vmem:[%s223 + $0x2320] sm:$0xff]
        %v1409 = vld [vmem:[%s223 + $0x2328] sm:$0xff]
        %v1410 = vld [vmem:[%s223 + $0x2330] sm:$0xff]
        %v1411 = vld [vmem:[%s223 + $0x2338] sm:$0xff]
        %v1412 = vld [vmem:[%s223 + $0x2340] sm:$0xff]
        %v1413 = vld [vmem:[%s223 + $0x2348] sm:$0xff]
        %v1414 = vld [vmem:[%s223 + $0x2350] sm:$0xff]
        %v1415 = vld [vmem:[%s223 + $0x2358] sm:$0xff]
        %v1416 = vld [vmem:[%s223 + $0x2360] sm:$0xff]
        %v1417 = vld [vmem:[%s223 + $0x2368] sm:$0xff]
        %v1418 = vld [vmem:[%s223 + $0x2370] sm:$0xff]
        %v1419 = vld [vmem:[%s223 + $0x2378] sm:$0xff]
        %v1420 = vld [vmem:[%s223 + $0x2380] sm:$0xff]
        %v1421 = vld [vmem:[%s223 + $0x2388] sm:$0xff]
        %v1422 = vld [vmem:[%s223 + $0x2390] sm:$0xff]
        %v1423 = vld [vmem:[%s223 + $0x2398] sm:$0xff]
        %v1424 = vld [vmem:[%s223 + $0x23a0] sm:$0xff]
        %v1425 = vld [vmem:[%s223 + $0x23a8] sm:$0xff]
        %v1426 = vld [vmem:[%s223 + $0x23b0] sm:$0xff]
        %v1427 = vld [vmem:[%s223 + $0x23b8] sm:$0xff]
        %v1428 = vld [vmem:[%s223 + $0x23c0] sm:$0xff]
        %v1429 = vld [vmem:[%s223 + $0x23c8] sm:$0xff]
        %v1430 = vld [vmem:[%s223 + $0x23d0] sm:$0xff]
        %v1431 = vld [vmem:[%s223 + $0x23d8] sm:$0xff]
        %v1432 = vld [vmem:[%s223 + $0x23e0] sm:$0xff]
        %v1433 = vld [vmem:[%s223 + $0x23e8] sm:$0xff]
        %v1434 = vld [vmem:[%s223 + $0x23f0] sm:$0xff]
        %v1435 = vld [vmem:[%s223 + $0x23f8] sm:$0xff]
        %v1436 = vld [vmem:[%s223 + $0x2400] sm:$0xff]
        %v1437 = vld [vmem:[%s223 + $0x2408] sm:$0xff]
        %v1438 = vld [vmem:[%s223 + $0x2410] sm:$0xff]
        %v1439 = vld [vmem:[%s223 + $0x2418] sm:$0xff]
        %v1440 = vld [vmem:[%s223 + $0x2420] sm:$0xff]
        %v1441 = vld [vmem:[%s223 + $0x2428] sm:$0xff]
        %v1442 = vld [vmem:[%s223 + $0x2430] sm:$0xff]
        %v1443 = vld [vmem:[%s223 + $0x2438] sm:$0xff]
        %v1444 = vld [vmem:[%s223 + $0x2440] sm:$0xff]
        %v1445 = vld [vmem:[%s223 + $0x2448] sm:$0xff]
        %v1446 = vld [vmem:[%s223 + $0x2450] sm:$0xff]
        %v1447 = vld [vmem:[%s223 + $0x2458] sm:$0xff]
        %v1448 = vld [vmem:[%s223 + $0x2460] sm:$0xff]
        %v1449 = vld [vmem:[%s223 + $0x2468] sm:$0xff]
        %v1450 = vld [vmem:[%s223 + $0x2470] sm:$0xff]
        %v1451 = vld [vmem:[%s223 + $0x2478] sm:$0xff]
        %v1452 = vld [vmem:[%s223 + $0x2480] sm:$0xff]
        %v1453 = vld [vmem:[%s223 + $0x2488] sm:$0xff]
        %v1454 = vld [vmem:[%s223 + $0x2490] sm:$0xff]
        %v1455 = vld [vmem:[%s223 + $0x2498] sm:$0xff]
        %v1456 = vld [vmem:[%s223 + $0x24a0] sm:$0xff]
        %v1457 = vld [vmem:[%s223 + $0x24a8] sm:$0xff]
        %v1458 = vld [vmem:[%s223 + $0x24b0] sm:$0xff]
        %v1459 = vld [vmem:[%s223 + $0x24b8] sm:$0xff]
        %v1460 = vld [vmem:[%s223 + $0x24c0] sm:$0xff]
        %v1461 = vld [vmem:[%s223 + $0x24c8] sm:$0xff]
        %v1462 = vld [vmem:[%s223 + $0x24d0] sm:$0xff]
        %v1463 = vld [vmem:[%s223 + $0x24d8] sm:$0xff]
        %v1464 = vld [vmem:[%s223 + $0x24e0] sm:$0xff]
        %v1465 = vld [vmem:[%s223 + $0x24e8] sm:$0xff]
        %v1466 = vld [vmem:[%s223 + $0x24f0] sm:$0xff]
        %v1467 = vld [vmem:[%s223 + $0x24f8] sm:$0xff]
        %v1468 = vld [vmem:[%s223 + $0x2500] sm:$0xff]
        %v1469 = vld [vmem:[%s223 + $0x2508] sm:$0xff]
        %v1470 = vld [vmem:[%s223 + $0x2510] sm:$0xff]
        %v1471 = vld [vmem:[%s223 + $0x2518] sm:$0xff]
        %v1472 = vld [vmem:[%s223 + $0x2520] sm:$0xff]
        %v1473 = vld [vmem:[%s223 + $0x2528] sm:$0xff]
        %v1474 = vld [vmem:[%s223 + $0x2530] sm:$0xff]
        %v1475 = vld [vmem:[%s223 + $0x2538] sm:$0xff]
        %v1476 = vld [vmem:[%s223 + $0x2540] sm:$0xff]
        %v1477 = vld [vmem:[%s223 + $0x2548] sm:$0xff]
        %v1478 = vld [vmem:[%s223 + $0x2550] sm:$0xff]
        %v1479 = vld [vmem:[%s223 + $0x2558] sm:$0xff]
        %v1480 = vld [vmem:[%s223 + $0x2560] sm:$0xff]
        %v1481 = vld [vmem:[%s223 + $0x2568] sm:$0xff]
        %v1482 = vld [vmem:[%s223 + $0x2570] sm:$0xff]
        %v1483 = vld [vmem:[%s223 + $0x2578] sm:$0xff]
        %v1484 = vld [vmem:[%s223 + $0x2580] sm:$0xff]
        %v1485 = vld [vmem:[%s223 + $0x2588] sm:$0xff]
        %v1486 = vld [vmem:[%s223 + $0x2590] sm:$0xff]
        %v1487 = vld [vmem:[%s223 + $0x2598] sm:$0xff]
        %v1488 = vld [vmem:[%s223 + $0x25a0] sm:$0xff]
        %v1489 = vld [vmem:[%s223 + $0x25a8] sm:$0xff]
        %v1490 = vld [vmem:[%s223 + $0x25b0] sm:$0xff]
        %v1491 = vld [vmem:[%s223 + $0x25b8] sm:$0xff]
        %v1492 = vld [vmem:[%s223 + $0x25c0] sm:$0xff]
        %v1493 = vld [vmem:[%s223 + $0x25c8] sm:$0xff]
        %v1494 = vld [vmem:[%s223 + $0x25d0] sm:$0xff]
        %v1495 = vld [vmem:[%s223 + $0x25d8] sm:$0xff]
        %v1496 = vld [vmem:[%s223 + $0x25e0] sm:$0xff]
        %v1497 = vld [vmem:[%s223 + $0x25e8] sm:$0xff]
        %v1498 = vld [vmem:[%s223 + $0x25f0] sm:$0xff]
        %v1499 = vld [vmem:[%s223 + $0x25f8] sm:$0xff]
        %v1500 = vld [vmem:[%s223 + $0x2600] sm:$0xff]
        %v1501 = vld [vmem:[%s223 + $0x2608] sm:$0xff]
        %v1502 = vld [vmem:[%s223 + $0x2610] sm:$0xff]
        %v1503 = vld [vmem:[%s223 + $0x2618] sm:$0xff]
        %v1504 = vld [vmem:[%s223 + $0x2620] sm:$0xff]
        %v1505 = vld [vmem:[%s223 + $0x2628] sm:$0xff]
        %v1506 = vld [vmem:[%s223 + $0x2630] sm:$0xff]
        %v1507 = vld [vmem:[%s223 + $0x2638] sm:$0xff]
        %v1508 = vld [vmem:[%s223 + $0x2640] sm:$0xff]
        %v1509 = vld [vmem:[%s223 + $0x2648] sm:$0xff]
        %v1510 = vld [vmem:[%s223 + $0x2650] sm:$0xff]
        %v1511 = vld [vmem:[%s223 + $0x2658] sm:$0xff]
        %v1512 = vld [vmem:[%s223 + $0x2660] sm:$0xff]
        %v1513 = vld [vmem:[%s223 + $0x2668] sm:$0xff]
        %v1514 = vld [vmem:[%s223 + $0x2670] sm:$0xff]
        %v1515 = vld [vmem:[%s223 + $0x2678] sm:$0xff]
        %v1516 = vld [vmem:[%s223 + $0x2680] sm:$0xff]
        %v1517 = vld [vmem:[%s223 + $0x2688] sm:$0xff]
        %v1518 = vld [vmem:[%s223 + $0x2690] sm:$0xff]
        %v1519 = vld [vmem:[%s223 + $0x2698] sm:$0xff]
        %v1520 = vld [vmem:[%s223 + $0x26a0] sm:$0xff]
        %v1521 = vld [vmem:[%s223 + $0x26a8] sm:$0xff]
        %v1522 = vld [vmem:[%s223 + $0x26b0] sm:$0xff]
        %v1523 = vld [vmem:[%s223 + $0x26b8] sm:$0xff]
        %v1524 = vld [vmem:[%s223 + $0x26c0] sm:$0xff]
        %v1525 = vld [vmem:[%s223 + $0x26c8] sm:$0xff]
        %v1526 = vld [vmem:[%s223 + $0x26d0] sm:$0xff]
        %v1527 = vld [vmem:[%s223 + $0x26d8] sm:$0xff]
        %v1528 = vld [vmem:[%s223 + $0x26e0] sm:$0xff]
        %v1529 = vld [vmem:[%s223 + $0x26e8] sm:$0xff]
        %v1530 = vld [vmem:[%s223 + $0x26f0] sm:$0xff]
        %v1531 = vld [vmem:[%s223 + $0x26f8] sm:$0xff]
        %v1532 = vld [vmem:[%s223 + $0x2700] sm:$0xff]
        %v1533 = vld [vmem:[%s223 + $0x2708] sm:$0xff]
        %v1534 = vld [vmem:[%s223 + $0x2710] sm:$0xff]
        %v1535 = vld [vmem:[%s223 + $0x2718] sm:$0xff]
        %v1536 = vld [vmem:[%s223 + $0x2720] sm:$0xff]
        %v1537 = vld [vmem:[%s223 + $0x2728] sm:$0xff]
        %v1538 = vld [vmem:[%s223 + $0x2730] sm:$0xff]
        %v1539 = vld [vmem:[%s223 + $0x2738] sm:$0xff]
        %v1540 = vld [vmem:[%s223 + $0x2740] sm:$0xff]
        %v1541 = vld [vmem:[%s223 + $0x2748] sm:$0xff]
        %v1542 = vld [vmem:[%s223 + $0x2750] sm:$0xff]
        %v1543 = vld [vmem:[%s223 + $0x2758] sm:$0xff]
        %v1544 = vld [vmem:[%s223 + $0x2760] sm:$0xff]
        %v1545 = vld [vmem:[%s223 + $0x2768] sm:$0xff]
        %v1546 = vld [vmem:[%s223 + $0x2770] sm:$0xff]
        %v1547 = vld [vmem:[%s223 + $0x2778] sm:$0xff]
        %v1548 = vld [vmem:[%s223 + $0x2780] sm:$0xff]
        %v1549 = vld [vmem:[%s223 + $0x2788] sm:$0xff]
        %v1550 = vld [vmem:[%s223 + $0x2790] sm:$0xff]
        %v1551 = vld [vmem:[%s223 + $0x2798] sm:$0xff]
        %v1552 = vld [vmem:[%s223 + $0x27a0] sm:$0xff]
        %v1553 = vld [vmem:[%s223 + $0x27a8] sm:$0xff]
        %v1554 = vld [vmem:[%s223 + $0x27b0] sm:$0xff]
        %v1555 = vld [vmem:[%s223 + $0x27b8] sm:$0xff]
        %v1556 = vld [vmem:[%s223 + $0x27c0] sm:$0xff]
        %v1557 = vld [vmem:[%s223 + $0x27c8] sm:$0xff]
        %v1558 = vld [vmem:[%s223 + $0x27d0] sm:$0xff]
        %v1559 = vld [vmem:[%s223 + $0x27d8] sm:$0xff]
        %v1560 = vld [vmem:[%s223 + $0x27e0] sm:$0xff]
        %v1561 = vld [vmem:[%s223 + $0x27e8] sm:$0xff]
        %v1562 = vld [vmem:[%s223 + $0x27f0] sm:$0xff]
        %v1563 = vld [vmem:[%s223 + $0x27f8] sm:$0xff]
        %v1564 = vld [vmem:[%s223 + $0x2800] sm:$0xff]
        %v1565 = vld [vmem:[%s223 + $0x2808] sm:$0xff]
        %v1566 = vld [vmem:[%s223 + $0x2810] sm:$0xff]
        %v1567 = vld [vmem:[%s223 + $0x2818] sm:$0xff]
        %v1568 = vld [vmem:[%s223 + $0x2820] sm:$0xff]
        %v1569 = vld [vmem:[%s223 + $0x2828] sm:$0xff]
        %v1570 = vld [vmem:[%s223 + $0x2830] sm:$0xff]
        %v1571 = vld [vmem:[%s223 + $0x2838] sm:$0xff]
        %v1572 = vld [vmem:[%s223 + $0x2840] sm:$0xff]
        %v1573 = vld [vmem:[%s223 + $0x2848] sm:$0xff]
        %v1574 = vld [vmem:[%s223 + $0x2850] sm:$0xff]
        %v1575 = vld [vmem:[%s223 + $0x2858] sm:$0xff]
        %v1576 = vld [vmem:[%s223 + $0x2860] sm:$0xff]
        %v1577 = vld [vmem:[%s223 + $0x2868] sm:$0xff]
        %v1578 = vld [vmem:[%s223 + $0x2870] sm:$0xff]
        %v1579 = vld [vmem:[%s223 + $0x2878] sm:$0xff]
        %v1580 = vld [vmem:[%s223 + $0x2880] sm:$0xff]
        %v1581 = vld [vmem:[%s223 + $0x2888] sm:$0xff]
        %v1582 = vld [vmem:[%s223 + $0x2890] sm:$0xff]
        %v1583 = vld [vmem:[%s223 + $0x2898] sm:$0xff]
        %v1584 = vld [vmem:[%s223 + $0x28a0] sm:$0xff]
        %v1585 = vld [vmem:[%s223 + $0x28a8] sm:$0xff]
        %v1586 = vld [vmem:[%s223 + $0x28b0] sm:$0xff]
        %v1587 = vld [vmem:[%s223 + $0x28b8] sm:$0xff]
        %v1588 = vld [vmem:[%s223 + $0x28c0] sm:$0xff]
        %v1589 = vld [vmem:[%s223 + $0x28c8] sm:$0xff]
        %v1590 = vld [vmem:[%s223 + $0x28d0] sm:$0xff]
        %v1591 = vld [vmem:[%s223 + $0x28d8] sm:$0xff]
        %v1592 = vld [vmem:[%s223 + $0x28e0] sm:$0xff]
        %v1593 = vld [vmem:[%s223 + $0x28e8] sm:$0xff]
        %v1594 = vld [vmem:[%s223 + $0x28f0] sm:$0xff]
        %v1595 = vld [vmem:[%s223 + $0x28f8] sm:$0xff]
        %v1596 = vld [vmem:[%s223 + $0x2900] sm:$0xff]
        %v1597 = vld [vmem:[%s223 + $0x2908] sm:$0xff]
        %v1598 = vld [vmem:[%s223 + $0x2910] sm:$0xff]
        %v1599 = vld [vmem:[%s223 + $0x2918] sm:$0xff]
        %v1600 = vld [vmem:[%s223 + $0x2920] sm:$0xff]
        %v1601 = vld [vmem:[%s223 + $0x2928] sm:$0xff]
        %v1602 = vld [vmem:[%s223 + $0x2930] sm:$0xff]
        %v1603 = vld [vmem:[%s223 + $0x2938] sm:$0xff]
        %v1604 = vld [vmem:[%s223 + $0x2940] sm:$0xff]
        %v1605 = vld [vmem:[%s223 + $0x2948] sm:$0xff]
        %v1606 = vld [vmem:[%s223 + $0x2950] sm:$0xff]
        %v1607 = vld [vmem:[%s223 + $0x2958] sm:$0xff]
        %v1608 = vld [vmem:[%s223 + $0x2960] sm:$0xff]
        %v1609 = vld [vmem:[%s223 + $0x2968] sm:$0xff]
        %v1610 = vld [vmem:[%s223 + $0x2970] sm:$0xff]
        %v1611 = vld [vmem:[%s223 + $0x2978] sm:$0xff]
        %v1612 = vld [vmem:[%s223 + $0x2980] sm:$0xff]
        %v1613 = vld [vmem:[%s223 + $0x2988] sm:$0xff]
        %v1614 = vld [vmem:[%s223 + $0x2990] sm:$0xff]
        %v1615 = vld [vmem:[%s223 + $0x2998] sm:$0xff]
        %v1616 = vld [vmem:[%s223 + $0x29a0] sm:$0xff]
        %v1617 = vld [vmem:[%s223 + $0x29a8] sm:$0xff]
        %v1618 = vld [vmem:[%s223 + $0x29b0] sm:$0xff]
        %v1619 = vld [vmem:[%s223 + $0x29b8] sm:$0xff]
        %v1620 = vld [vmem:[%s223 + $0x29c0] sm:$0xff]
        %v1621 = vld [vmem:[%s223 + $0x29c8] sm:$0xff]
        %v1622 = vld [vmem:[%s223 + $0x29d0] sm:$0xff]
        %v1623 = vld [vmem:[%s223 + $0x29d8] sm:$0xff]
        %v1624 = vld [vmem:[%s223 + $0x29e0] sm:$0xff]
        %v1625 = vld [vmem:[%s223 + $0x29e8] sm:$0xff]
        %v1626 = vld [vmem:[%s223 + $0x29f0] sm:$0xff]
        %v1627 = vld [vmem:[%s223 + $0x29f8] sm:$0xff]
        %v1628 = vld [vmem:[%s223 + $0x2a00] sm:$0xff]
        %v1629 = vld [vmem:[%s223 + $0x2a08] sm:$0xff]
        %v1630 = vld [vmem:[%s223 + $0x2a10] sm:$0xff]
        %v1631 = vld [vmem:[%s223 + $0x2a18] sm:$0xff]
        %v1632 = vld [vmem:[%s223 + $0x2a20] sm:$0xff]
        %v1633 = vld [vmem:[%s223 + $0x2a28] sm:$0xff]
        %v1634 = vld [vmem:[%s223 + $0x2a30] sm:$0xff]
        %v1635 = vld [vmem:[%s223 + $0x2a38] sm:$0xff]
        %v1636 = vld [vmem:[%s223 + $0x2a40] sm:$0xff]
        %v1637 = vld [vmem:[%s223 + $0x2a48] sm:$0xff]
        %v1638 = vld [vmem:[%s223 + $0x2a50] sm:$0xff]
        %v1639 = vld [vmem:[%s223 + $0x2a58] sm:$0xff]
        %v1640 = vld [vmem:[%s223 + $0x2a60] sm:$0xff]
        %v1641 = vld [vmem:[%s223 + $0x2a68] sm:$0xff]
        %v1642 = vld [vmem:[%s223 + $0x2a70] sm:$0xff]
        %v1643 = vld [vmem:[%s223 + $0x2a78] sm:$0xff]
        %v1644 = vld [vmem:[%s223 + $0x2a80] sm:$0xff]
        %v1645 = vld [vmem:[%s223 + $0x2a88] sm:$0xff]
        %v1646 = vld [vmem:[%s223 + $0x2a90] sm:$0xff]
        %v1647 = vld [vmem:[%s223 + $0x2a98] sm:$0xff]
        %v1648 = vld [vmem:[%s223 + $0x2aa0] sm:$0xff]
        %v1649 = vld [vmem:[%s223 + $0x2aa8] sm:$0xff]
        %v1650 = vld [vmem:[%s223 + $0x2ab0] sm:$0xff]
        %v1651 = vld [vmem:[%s223 + $0x2ab8] sm:$0xff]
        %v1652 = vld [vmem:[%s223 + $0x2ac0] sm:$0xff]
        %v1653 = vld [vmem:[%s223 + $0x2ac8] sm:$0xff]
        %v1654 = vld [vmem:[%s223 + $0x2ad0] sm:$0xff]
        %v1655 = vld [vmem:[%s223 + $0x2ad8] sm:$0xff]
        %v1656 = vld [vmem:[%s223 + $0x2ae0] sm:$0xff]
        %v1657 = vld [vmem:[%s223 + $0x2ae8] sm:$0xff]
        %v1658 = vld [vmem:[%s223 + $0x2af0] sm:$0xff]
        %v1659 = vld [vmem:[%s223 + $0x2af8] sm:$0xff]
        %v1660 = vld [vmem:[%s223 + $0x2b00] sm:$0xff]
        %v1661 = vld [vmem:[%s223 + $0x2b08] sm:$0xff]
        %v1662 = vld [vmem:[%s223 + $0x2b10] sm:$0xff]
        %v1663 = vld [vmem:[%s223 + $0x2b18] sm:$0xff]
        %v1664 = vld [vmem:[%s223 + $0x2b20] sm:$0xff]
        %v1665 = vld [vmem:[%s223 + $0x2b28] sm:$0xff]
        %v1666 = vld [vmem:[%s223 + $0x2b30] sm:$0xff]
        %v1667 = vld [vmem:[%s223 + $0x2b38] sm:$0xff]
        %v1668 = vld [vmem:[%s223 + $0x2b40] sm:$0xff]
        %v1669 = vld [vmem:[%s223 + $0x2b48] sm:$0xff]
        %v1670 = vld [vmem:[%s223 + $0x2b50] sm:$0xff]
        %v1671 = vld [vmem:[%s223 + $0x2b58] sm:$0xff]
        %v1672 = vld [vmem:[%s223 + $0x2b60] sm:$0xff]
        %v1673 = vld [vmem:[%s223 + $0x2b68] sm:$0xff]
        %v1674 = vld [vmem:[%s223 + $0x2b70] sm:$0xff]
        %v1675 = vld [vmem:[%s223 + $0x2b78] sm:$0xff]
        %v1676 = vld [vmem:[%s223 + $0x2b80] sm:$0xff]
        %v1677 = vld [vmem:[%s223 + $0x2b88] sm:$0xff]
        %v1678 = vld [vmem:[%s223 + $0x2b90] sm:$0xff]
        %v1679 = vld [vmem:[%s223 + $0x2b98] sm:$0xff]
        %v1680 = vld [vmem:[%s223 + $0x2ba0] sm:$0xff]
        %v1681 = vld [vmem:[%s223 + $0x2ba8] sm:$0xff]
        %v1682 = vld [vmem:[%s223 + $0x2bb0] sm:$0xff]
        %v1683 = vld [vmem:[%s223 + $0x2bb8] sm:$0xff]
        %v1684 = vld [vmem:[%s223 + $0x2bc0] sm:$0xff]
        %v1685 = vld [vmem:[%s223 + $0x2bc8] sm:$0xff]
        %v1686 = vld [vmem:[%s223 + $0x2bd0] sm:$0xff]
        %v1687 = vld [vmem:[%s223 + $0x2bd8] sm:$0xff]
        %v1688 = vld [vmem:[%s223 + $0x2be0] sm:$0xff]
        %v1689 = vld [vmem:[%s223 + $0x2be8] sm:$0xff]
        %v1690 = vld [vmem:[%s223 + $0x2bf0] sm:$0xff]
        %v1691 = vld [vmem:[%s223 + $0x2bf8] sm:$0xff]
        %v1692 = vld [vmem:[%s232] sm:$0xf]
        %v1694 = vlaneseq
        %v1695 = vshrl.u32 %v1694, 7
        %v1696 = vsub.s32 0, %v1695
        %v1697 = vrot.slane %v1692, %v1696
        %v1698 = vlaneseq
        %v1699 = vshrl.u32 %v1698, 7
        %v1700 = vsub.s32 1, %v1699
        %v1701 = vrot.slane %v1692, %v1700
        %v1702 = vlaneseq
        %v1703 = vshrl.u32 %v1702, 7
        %v1704 = vsub.s32 2, %v1703
        %v1705 = vrot.slane %v1692, %v1704
        %v1706 = vlaneseq
        %v1707 = vshrl.u32 %v1706, 7
        %v1708 = vsub.s32 3, %v1707
        %v1709 = vrot.slane %v1692, %v1708
        %v1720 = vcombine.high %v278, %v278
        %v1722 = vunpack.c.l.s4 1966171168
        %v1723 = vunpack.c.0.s8 %v1722
        %v1724 = vlaneseq
        %v1725 = vshrl.u32 %v1724, 7
        %v1726 = vsub.s32 %v1723, %v1725
        %v1727 = vrot.slane %v278, %v1726
        %v1729 = vunpack.c.l.s4 1966171168
        %v1730 = vunpack.c.0.s8 %v1729
        %v1731 = vlaneseq
        %v1732 = vshrl.u32 %v1731, 7
        %v1733 = vsub.s32 %v1730, %v1732
        %v1734 = vrot.slane %v1720, %v1733
        %v1735 = vcombine.high %v1727, %v1727
        %v1736 = vcombine.high %v1734, %v1734
        %v1738 = vunpack.c.l.s4 1966171168
        %v1739 = vunpack.c.0.s8 %v1738
        %v1740 = vlaneseq
        %v1741 = vshrl.u32 %v1740, 7
        %v1742 = vsub.s32 %v1739, %v1741
        %v1743 = vrot.slane %v1727, %v1742
        %v1745 = vunpack.c.l.s4 1966171168
        %v1746 = vunpack.c.0.s8 %v1745
        %v1747 = vlaneseq
        %v1748 = vshrl.u32 %v1747, 7
        %v1749 = vsub.s32 %v1746, %v1748
        %v1750 = vrot.slane %v1734, %v1749
        %v1752 = vunpack.c.l.s4 1966171168
        %v1753 = vunpack.c.0.s8 %v1752
        %v1754 = vlaneseq
        %v1755 = vshrl.u32 %v1754, 7
        %v1756 = vsub.s32 %v1753, %v1755
        %v1757 = vrot.slane %v1735, %v1756
        %v1759 = vunpack.c.l.s4 1966171168
        %v1760 = vunpack.c.0.s8 %v1759
        %v1761 = vlaneseq
        %v1762 = vshrl.u32 %v1761, 7
        %v1763 = vsub.s32 %v1760, %v1762
        %v1764 = vrot.slane %v1736, %v1763
        %v1765 = vcombine.high %v1743, %v1743
        %v1766 = vcombine.high %v1750, %v1750
        %v1767 = vcombine.high %v1757, %v1757
        %v1768 = vcombine.high %v1764, %v1764
        %v1769 = vcombine.high %v279, %v279
        %v1771 = vunpack.c.l.s4 1966171168
        %v1772 = vunpack.c.0.s8 %v1771
        %v1773 = vlaneseq
        %v1774 = vshrl.u32 %v1773, 7
        %v1775 = vsub.s32 %v1772, %v1774
        %v1776 = vrot.slane %v279, %v1775
        %v1778 = vunpack.c.l.s4 1966171168
        %v1779 = vunpack.c.0.s8 %v1778
        %v1780 = vlaneseq
        %v1781 = vshrl.u32 %v1780, 7
        %v1782 = vsub.s32 %v1779, %v1781
        %v1783 = vrot.slane %v1769, %v1782
        %v1784 = vcombine.high %v1776, %v1776
        %v1785 = vcombine.high %v1783, %v1783
        %v1787 = vunpack.c.l.s4 1966171168
        %v1788 = vunpack.c.0.s8 %v1787
        %v1789 = vlaneseq
        %v1790 = vshrl.u32 %v1789, 7
        %v1791 = vsub.s32 %v1788, %v1790
        %v1792 = vrot.slane %v1776, %v1791
        %v1794 = vunpack.c.l.s4 1966171168
        %v1795 = vunpack.c.0.s8 %v1794
        %v1796 = vlaneseq
        %v1797 = vshrl.u32 %v1796, 7
        %v1798 = vsub.s32 %v1795, %v1797
        %v1799 = vrot.slane %v1783, %v1798
        %v1801 = vunpack.c.l.s4 1966171168
        %v1802 = vunpack.c.0.s8 %v1801
        %v1803 = vlaneseq
        %v1804 = vshrl.u32 %v1803, 7
        %v1805 = vsub.s32 %v1802, %v1804
        %v1806 = vrot.slane %v1784, %v1805
        %v1808 = vunpack.c.l.s4 1966171168
        %v1809 = vunpack.c.0.s8 %v1808
        %v1810 = vlaneseq
        %v1811 = vshrl.u32 %v1810, 7
        %v1812 = vsub.s32 %v1809, %v1811
        %v1813 = vrot.slane %v1785, %v1812
        %v1814 = vcombine.high %v1792, %v1792
        %v1815 = vcombine.high %v1799, %v1799
        %v1816 = vcombine.high %v1806, %v1806
        %v1817 = vcombine.high %v1813, %v1813
        %v1818 = vcombine.high %v280, %v280
        %v1820 = vunpack.c.l.s4 1966171168
        %v1821 = vunpack.c.0.s8 %v1820
        %v1822 = vlaneseq
        %v1823 = vshrl.u32 %v1822, 7
        %v1824 = vsub.s32 %v1821, %v1823
        %v1825 = vrot.slane %v280, %v1824
        %v1827 = vunpack.c.l.s4 1966171168
        %v1828 = vunpack.c.0.s8 %v1827
        %v1829 = vlaneseq
        %v1830 = vshrl.u32 %v1829, 7
        %v1831 = vsub.s32 %v1828, %v1830
        %v1832 = vrot.slane %v1818, %v1831
        %v1833 = vcombine.high %v1825, %v1825
        %v1834 = vcombine.high %v1832, %v1832
        %v1836 = vunpack.c.l.s4 1966171168
        %v1837 = vunpack.c.0.s8 %v1836
        %v1838 = vlaneseq
        %v1839 = vshrl.u32 %v1838, 7
        %v1840 = vsub.s32 %v1837, %v1839
        %v1841 = vrot.slane %v1825, %v1840
        %v1843 = vunpack.c.l.s4 1966171168
        %v1844 = vunpack.c.0.s8 %v1843
        %v1845 = vlaneseq
        %v1846 = vshrl.u32 %v1845, 7
        %v1847 = vsub.s32 %v1844, %v1846
        %v1848 = vrot.slane %v1832, %v1847
        %v1850 = vunpack.c.l.s4 1966171168
        %v1851 = vunpack.c.0.s8 %v1850
        %v1852 = vlaneseq
        %v1853 = vshrl.u32 %v1852, 7
        %v1854 = vsub.s32 %v1851, %v1853
        %v1855 = vrot.slane %v1833, %v1854
        %v1857 = vunpack.c.l.s4 1966171168
        %v1858 = vunpack.c.0.s8 %v1857
        %v1859 = vlaneseq
        %v1860 = vshrl.u32 %v1859, 7
        %v1861 = vsub.s32 %v1858, %v1860
        %v1862 = vrot.slane %v1834, %v1861
        %v1863 = vcombine.high %v1841, %v1841
        %v1864 = vcombine.high %v1848, %v1848
        %v1865 = vcombine.high %v1855, %v1855
        %v1866 = vcombine.high %v1862, %v1862
        %v1867 = vcombine.high %v281, %v281
        %v1869 = vunpack.c.l.s4 1966171168
        %v1870 = vunpack.c.0.s8 %v1869
        %v1871 = vlaneseq
        %v1872 = vshrl.u32 %v1871, 7
        %v1873 = vsub.s32 %v1870, %v1872
        %v1874 = vrot.slane %v281, %v1873
        %v1876 = vunpack.c.l.s4 1966171168
        %v1877 = vunpack.c.0.s8 %v1876
        %v1878 = vlaneseq
        %v1879 = vshrl.u32 %v1878, 7
        %v1880 = vsub.s32 %v1877, %v1879
        %v1881 = vrot.slane %v1867, %v1880
        %v1882 = vcombine.high %v1874, %v1874
        %v1883 = vcombine.high %v1881, %v1881
        %v1885 = vunpack.c.l.s4 1966171168
        %v1886 = vunpack.c.0.s8 %v1885
        %v1887 = vlaneseq
        %v1888 = vshrl.u32 %v1887, 7
        %v1889 = vsub.s32 %v1886, %v1888
        %v1890 = vrot.slane %v1874, %v1889
        %v1892 = vunpack.c.l.s4 1966171168
        %v1893 = vunpack.c.0.s8 %v1892
        %v1894 = vlaneseq
        %v1895 = vshrl.u32 %v1894, 7
        %v1896 = vsub.s32 %v1893, %v1895
        %v1897 = vrot.slane %v1881, %v1896
        %v1899 = vunpack.c.l.s4 1966171168
        %v1900 = vunpack.c.0.s8 %v1899
        %v1901 = vlaneseq
        %v1902 = vshrl.u32 %v1901, 7
        %v1903 = vsub.s32 %v1900, %v1902
        %v1904 = vrot.slane %v1882, %v1903
        %v1906 = vunpack.c.l.s4 1966171168
        %v1907 = vunpack.c.0.s8 %v1906
        %v1908 = vlaneseq
        %v1909 = vshrl.u32 %v1908, 7
        %v1910 = vsub.s32 %v1907, %v1909
        %v1911 = vrot.slane %v1883, %v1910
        %v1912 = vcombine.high %v1890, %v1890
        %v1913 = vcombine.high %v1897, %v1897
        %v1914 = vcombine.high %v1904, %v1904
        %v1915 = vcombine.high %v1911, %v1911
        %v1916 = vcombine.high %v282, %v282
        %v1918 = vunpack.c.l.s4 1966171168
        %v1919 = vunpack.c.0.s8 %v1918
        %v1920 = vlaneseq
        %v1921 = vshrl.u32 %v1920, 7
        %v1922 = vsub.s32 %v1919, %v1921
        %v1923 = vrot.slane %v282, %v1922
        %v1925 = vunpack.c.l.s4 1966171168
        %v1926 = vunpack.c.0.s8 %v1925
        %v1927 = vlaneseq
        %v1928 = vshrl.u32 %v1927, 7
        %v1929 = vsub.s32 %v1926, %v1928
        %v1930 = vrot.slane %v1916, %v1929
        %v1931 = vcombine.high %v1923, %v1923
        %v1932 = vcombine.high %v1930, %v1930
        %v1934 = vunpack.c.l.s4 1966171168
        %v1935 = vunpack.c.0.s8 %v1934
        %v1936 = vlaneseq
        %v1937 = vshrl.u32 %v1936, 7
        %v1938 = vsub.s32 %v1935, %v1937
        %v1939 = vrot.slane %v1923, %v1938
        %v1941 = vunpack.c.l.s4 1966171168
        %v1942 = vunpack.c.0.s8 %v1941
        %v1943 = vlaneseq
        %v1944 = vshrl.u32 %v1943, 7
        %v1945 = vsub.s32 %v1942, %v1944
        %v1946 = vrot.slane %v1930, %v1945
        %v1948 = vunpack.c.l.s4 1966171168
        %v1949 = vunpack.c.0.s8 %v1948
        %v1950 = vlaneseq
        %v1951 = vshrl.u32 %v1950, 7
        %v1952 = vsub.s32 %v1949, %v1951
        %v1953 = vrot.slane %v1931, %v1952
        %v1955 = vunpack.c.l.s4 1966171168
        %v1956 = vunpack.c.0.s8 %v1955
        %v1957 = vlaneseq
        %v1958 = vshrl.u32 %v1957, 7
        %v1959 = vsub.s32 %v1956, %v1958
        %v1960 = vrot.slane %v1932, %v1959
        %v1961 = vcombine.high %v1939, %v1939
        %v1962 = vcombine.high %v1946, %v1946
        %v1963 = vcombine.high %v1953, %v1953
        %v1964 = vcombine.high %v1960, %v1960
        %v1966 = vunpack.c.l.s4 1966171168
        %v1967 = vunpack.c.0.s8 %v1966
        %v1968 = vlaneseq
        %v1969 = vshrl.u32 %v1968, 7
        %v1970 = vsub.s32 %v1967, %v1969
        %v1971 = vrot.slane %v283, %v1970
        %v1972 = vcombine.high %v1971, %v1971
        %v1974 = vunpack.c.l.s4 1966171168
        %v1975 = vunpack.c.0.s8 %v1974
        %v1976 = vlaneseq
        %v1977 = vshrl.u32 %v1976, 7
        %v1978 = vsub.s32 %v1975, %v1977
        %v1979 = vrot.slane %v1971, %v1978
        %v1981 = vunpack.c.l.s4 1966171168
        %v1982 = vunpack.c.0.s8 %v1981
        %v1983 = vlaneseq
        %v1984 = vshrl.u32 %v1983, 7
        %v1985 = vsub.s32 %v1982, %v1984
        %v1986 = vrot.slane %v1972, %v1985
        %v1987 = vcombine.high %v1979, %v1979
        %v1988 = vcombine.high %v1986, %v1986
        %v3441 = vunpack.c.l.b16 %v284
        %v3442 = vunpack.c.h.b16 %v284
        %v3443 = vunpack.c.l.b16 %v285
        %v3444 = vunpack.c.h.b16 %v285
        %v3445 = vunpack.c.l.b16 %v286
        %v3446 = vunpack.c.h.b16 %v286
        %v3447 = vunpack.c.l.b16 %v287
        %v3448 = vunpack.c.h.b16 %v287
        %v3449 = vunpack.c.l.b16 %v288
        %v3450 = vunpack.c.h.b16 %v288
        %v3451 = vunpack.c.l.b16 %v289
        %v3452 = vunpack.c.h.b16 %v289
        %v3453 = vunpack.c.l.b16 %v290
        %v3454 = vunpack.c.h.b16 %v290
        %v3455 = vunpack.c.l.b16 %v291
        %v3456 = vunpack.c.h.b16 %v291
        %v3457 = vunpack.c.l.b16 %v292
        %v3458 = vunpack.c.h.b16 %v292
        %v3459 = vunpack.c.l.b16 %v293
        %v3460 = vunpack.c.h.b16 %v293
        %v3461 = vunpack.c.l.b16 %v294
        %v3462 = vunpack.c.h.b16 %v294
        %v3463 = vunpack.c.l.b16 %v295
        %v3464 = vunpack.c.h.b16 %v295
        %v3465 = vunpack.c.l.b16 %v296
        %v3466 = vunpack.c.h.b16 %v296
        %v3467 = vunpack.c.l.b16 %v297
        %v3468 = vunpack.c.h.b16 %v297
        %v3469 = vunpack.c.l.b16 %v298
        %v3470 = vunpack.c.h.b16 %v298
        %v3471 = vunpack.c.l.b16 %v299
        %v3472 = vunpack.c.h.b16 %v299
        %v3473 = vunpack.c.l.b16 %v300
        %v3474 = vunpack.c.h.b16 %v300
        %v3475 = vunpack.c.l.b16 %v301
        %v3476 = vunpack.c.h.b16 %v301
        %v3477 = vunpack.c.l.b16 %v302
        %v3478 = vunpack.c.h.b16 %v302
        %v3479 = vunpack.c.l.b16 %v303
        %v3480 = vunpack.c.h.b16 %v303
        %v3481 = vunpack.c.l.b16 %v304
        %v3482 = vunpack.c.h.b16 %v304
        %v3483 = vunpack.c.l.b16 %v305
        %v3484 = vunpack.c.h.b16 %v305
        %v3485 = vunpack.c.l.b16 %v306
        %v3486 = vunpack.c.h.b16 %v306
        %v3487 = vunpack.c.l.b16 %v307
        %v3488 = vunpack.c.h.b16 %v307
        %v3489 = vunpack.c.l.b16 %v308
        %v3490 = vunpack.c.h.b16 %v308
        %v3491 = vunpack.c.l.b16 %v309
        %v3492 = vunpack.c.h.b16 %v309
        %v3493 = vunpack.c.l.b16 %v310
        %v3494 = vunpack.c.h.b16 %v310
        %v3495 = vunpack.c.l.b16 %v311
        %v3496 = vunpack.c.h.b16 %v311
        %v3497 = vunpack.c.l.b16 %v312
        %v3498 = vunpack.c.h.b16 %v312
        %v3499 = vunpack.c.l.b16 %v313
        %v3500 = vunpack.c.h.b16 %v313
        %v3501 = vunpack.c.l.b16 %v314
        %v3502 = vunpack.c.h.b16 %v314
        %v3503 = vunpack.c.l.b16 %v315
        %v3504 = vunpack.c.h.b16 %v315
        %v3505 = vunpack.c.l.b16 %v316
        %v3506 = vunpack.c.h.b16 %v316
        %v3507 = vunpack.c.l.b16 %v317
        %v3508 = vunpack.c.h.b16 %v317
        %v3509 = vunpack.c.l.b16 %v318
        %v3510 = vunpack.c.h.b16 %v318
        %v3511 = vunpack.c.l.b16 %v319
        %v3512 = vunpack.c.h.b16 %v319
        %v3513 = vunpack.c.l.b16 %v320
        %v3514 = vunpack.c.h.b16 %v320
        %v3515 = vunpack.c.l.b16 %v321
        %v3516 = vunpack.c.h.b16 %v321
        %v3517 = vunpack.c.l.b16 %v322
        %v3518 = vunpack.c.h.b16 %v322
        %v3519 = vunpack.c.l.b16 %v323
        %v3520 = vunpack.c.h.b16 %v323
        %v3521 = vunpack.c.l.b16 %v324
        %v3522 = vunpack.c.h.b16 %v324
        %v3523 = vunpack.c.l.b16 %v325
        %v3524 = vunpack.c.h.b16 %v325
        %v3525 = vunpack.c.l.b16 %v326
        %v3526 = vunpack.c.h.b16 %v326
        %v3527 = vunpack.c.l.b16 %v327
        %v3528 = vunpack.c.h.b16 %v327
        %v3529 = vunpack.c.l.b16 %v328
        %v3530 = vunpack.c.h.b16 %v328
        %v3531 = vunpack.c.l.b16 %v329
        %v3532 = vunpack.c.h.b16 %v329
        %v3533 = vunpack.c.l.b16 %v330
        %v3534 = vunpack.c.h.b16 %v330
        %v3535 = vunpack.c.l.b16 %v331
        %v3536 = vunpack.c.h.b16 %v331
        %v3537 = vunpack.c.l.b16 %v332
        %v3538 = vunpack.c.h.b16 %v332
        %v3539 = vunpack.c.l.b16 %v333
        %v3540 = vunpack.c.h.b16 %v333
        %v3541 = vunpack.c.l.b16 %v334
        %v3542 = vunpack.c.h.b16 %v334
        %v3543 = vunpack.c.l.b16 %v335
        %v3544 = vunpack.c.h.b16 %v335
        %v3545 = vunpack.c.l.b16 %v336
        %v3546 = vunpack.c.h.b16 %v336
        %v3547 = vunpack.c.l.b16 %v337
        %v3548 = vunpack.c.h.b16 %v337
        %v3549 = vunpack.c.l.b16 %v338
        %v3550 = vunpack.c.h.b16 %v338
        %v3551 = vunpack.c.l.b16 %v339
        %v3552 = vunpack.c.h.b16 %v339
        %v3553 = vunpack.c.l.b16 %v340
        %v3554 = vunpack.c.h.b16 %v340
        %v3555 = vunpack.c.l.b16 %v341
        %v3556 = vunpack.c.h.b16 %v341
        %v3557 = vunpack.c.l.b16 %v342
        %v3558 = vunpack.c.h.b16 %v342
        %v3559 = vunpack.c.l.b16 %v343
        %v3560 = vunpack.c.h.b16 %v343
        %v3561 = vunpack.c.l.b16 %v344
        %v3562 = vunpack.c.h.b16 %v344
        %v3563 = vunpack.c.l.b16 %v345
        %v3564 = vunpack.c.h.b16 %v345
        %v3565 = vunpack.c.l.b16 %v346
        %v3566 = vunpack.c.h.b16 %v346
        %v3567 = vunpack.c.l.b16 %v347
        %v3568 = vunpack.c.h.b16 %v347
        %v3569 = vunpack.c.l.b16 %v348
        %v3570 = vunpack.c.h.b16 %v348
        %v3571 = vunpack.c.l.b16 %v349
        %v3572 = vunpack.c.h.b16 %v349
        %v3573 = vunpack.c.l.b16 %v350
        %v3574 = vunpack.c.h.b16 %v350
        %v3575 = vunpack.c.l.b16 %v351
        %v3576 = vunpack.c.h.b16 %v351
        %v3577 = vunpack.c.l.b16 %v352
        %v3578 = vunpack.c.h.b16 %v352
        %v3579 = vunpack.c.l.b16 %v353
        %v3580 = vunpack.c.h.b16 %v353
        %v3581 = vunpack.c.l.b16 %v354
        %v3582 = vunpack.c.h.b16 %v354
        %v3583 = vunpack.c.l.b16 %v355
        %v3584 = vunpack.c.h.b16 %v355
        %v3585 = vunpack.c.l.b16 %v356
        %v3586 = vunpack.c.h.b16 %v356
        %v3587 = vunpack.c.l.b16 %v357
        %v3588 = vunpack.c.h.b16 %v357
        %v3589 = vunpack.c.l.b16 %v358
        %v3590 = vunpack.c.h.b16 %v358
        %v3591 = vunpack.c.l.b16 %v359
        %v3592 = vunpack.c.h.b16 %v359
        %v3593 = vunpack.c.l.b16 %v360
        %v3594 = vunpack.c.h.b16 %v360
        %v3595 = vunpack.c.l.b16 %v361
        %v3596 = vunpack.c.h.b16 %v361
        %v3597 = vunpack.c.l.b16 %v362
        %v3598 = vunpack.c.h.b16 %v362
        %v3599 = vunpack.c.l.b16 %v363
        %v3600 = vunpack.c.h.b16 %v363
        %v3601 = vunpack.c.l.b16 %v364
        %v3602 = vunpack.c.h.b16 %v364
        %v3603 = vunpack.c.l.b16 %v365
        %v3604 = vunpack.c.h.b16 %v365
        %v3605 = vunpack.c.l.b16 %v366
        %v3606 = vunpack.c.h.b16 %v366
        %v3607 = vunpack.c.l.b16 %v367
        %v3608 = vunpack.c.h.b16 %v367
        %v3609 = vunpack.c.l.b16 %v368
        %v3610 = vunpack.c.h.b16 %v368
        %v3611 = vunpack.c.l.b16 %v369
        %v3612 = vunpack.c.h.b16 %v369
        %v3613 = vunpack.c.l.b16 %v370
        %v3614 = vunpack.c.h.b16 %v370
        %v3615 = vunpack.c.l.b16 %v371
        %v3616 = vunpack.c.h.b16 %v371
        %v3617 = vunpack.c.l.b16 %v372
        %v3618 = vunpack.c.h.b16 %v372
        %v3619 = vunpack.c.l.b16 %v373
        %v3620 = vunpack.c.h.b16 %v373
        %v3621 = vunpack.c.l.b16 %v374
        %v3622 = vunpack.c.h.b16 %v374
        %v3623 = vunpack.c.l.b16 %v375
        %v3624 = vunpack.c.h.b16 %v375
        %v3625 = vunpack.c.l.b16 %v376
        %v3626 = vunpack.c.h.b16 %v376
        %v3627 = vunpack.c.l.b16 %v377
        %v3628 = vunpack.c.h.b16 %v377
        %v3629 = vunpack.c.l.b16 %v378
        %v3630 = vunpack.c.h.b16 %v378
        %v3631 = vunpack.c.l.b16 %v379
        %v3632 = vunpack.c.h.b16 %v379
        %v3633 = vunpack.c.l.b16 %v380
        %v3634 = vunpack.c.h.b16 %v380
        %v3635 = vunpack.c.l.b16 %v381
        %v3636 = vunpack.c.h.b16 %v381
        %v3637 = vunpack.c.l.b16 %v382
        %v3638 = vunpack.c.h.b16 %v382
        %v3639 = vunpack.c.l.b16 %v383
        %v3640 = vunpack.c.h.b16 %v383
        %v3641 = vunpack.c.l.b16 %v384
        %v3642 = vunpack.c.h.b16 %v384
        %v3643 = vunpack.c.l.b16 %v385
        %v3644 = vunpack.c.h.b16 %v385
        %v3645 = vunpack.c.l.b16 %v386
        %v3646 = vunpack.c.h.b16 %v386
        %v3647 = vunpack.c.l.b16 %v387
        %v3648 = vunpack.c.h.b16 %v387
        %v3649 = vunpack.c.l.b16 %v388
        %v3650 = vunpack.c.h.b16 %v388
        %v3651 = vunpack.c.l.b16 %v389
        %v3652 = vunpack.c.h.b16 %v389
        %v3653 = vunpack.c.l.b16 %v390
        %v3654 = vunpack.c.h.b16 %v390
        %v3655 = vunpack.c.l.b16 %v391
        %v3656 = vunpack.c.h.b16 %v391
        %v3657 = vunpack.c.l.b16 %v392
        %v3658 = vunpack.c.h.b16 %v392
        %v3659 = vunpack.c.l.b16 %v393
        %v3660 = vunpack.c.h.b16 %v393
        %v3661 = vunpack.c.l.b16 %v394
        %v3662 = vunpack.c.h.b16 %v394
        %v3663 = vunpack.c.l.b16 %v395
        %v3664 = vunpack.c.h.b16 %v395
        %v3665 = vunpack.c.l.b16 %v396
        %v3666 = vunpack.c.h.b16 %v396
        %v3667 = vunpack.c.l.b16 %v397
        %v3668 = vunpack.c.h.b16 %v397
        %v3669 = vunpack.c.l.b16 %v398
        %v3670 = vunpack.c.h.b16 %v398
        %v3671 = vunpack.c.l.b16 %v399
        %v3672 = vunpack.c.h.b16 %v399
        %v3673 = vunpack.c.l.b16 %v400
        %v3674 = vunpack.c.h.b16 %v400
        %v3675 = vunpack.c.l.b16 %v401
        %v3676 = vunpack.c.h.b16 %v401
        %v3677 = vunpack.c.l.b16 %v402
        %v3678 = vunpack.c.h.b16 %v402
        %v3679 = vunpack.c.l.b16 %v403
        %v3680 = vunpack.c.h.b16 %v403
        %v3681 = vunpack.c.l.b16 %v404
        %v3682 = vunpack.c.h.b16 %v404
        %v3683 = vunpack.c.l.b16 %v405
        %v3684 = vunpack.c.h.b16 %v405
        %v3685 = vunpack.c.l.b16 %v406
        %v3686 = vunpack.c.h.b16 %v406
        %v3687 = vunpack.c.l.b16 %v407
        %v3688 = vunpack.c.h.b16 %v407
        %v3689 = vunpack.c.l.b16 %v408
        %v3690 = vunpack.c.h.b16 %v408
        %v3691 = vunpack.c.l.b16 %v409
        %v3692 = vunpack.c.h.b16 %v409
        %v3693 = vunpack.c.l.b16 %v410
        %v3694 = vunpack.c.h.b16 %v410
        %v3695 = vunpack.c.l.b16 %v411
        %v3696 = vunpack.c.h.b16 %v411
        %v3697 = vunpack.c.l.b16 %v412
        %v3698 = vunpack.c.h.b16 %v412
        %v3699 = vunpack.c.l.b16 %v413
        %v3700 = vunpack.c.h.b16 %v413
        %v3701 = vunpack.c.l.b16 %v414
        %v3702 = vunpack.c.h.b16 %v414
        %v3703 = vunpack.c.l.b16 %v415
        %v3704 = vunpack.c.h.b16 %v415
        %v3705 = vunpack.c.l.b16 %v416
        %v3706 = vunpack.c.h.b16 %v416
        %v3707 = vunpack.c.l.b16 %v417
        %v3708 = vunpack.c.h.b16 %v417
        %v3709 = vunpack.c.l.b16 %v418
        %v3710 = vunpack.c.h.b16 %v418
        %v3711 = vunpack.c.l.b16 %v419
        %v3712 = vunpack.c.h.b16 %v419
        %v3713 = vunpack.c.l.b16 %v420
        %v3714 = vunpack.c.h.b16 %v420
        %v3715 = vunpack.c.l.b16 %v421
        %v3716 = vunpack.c.h.b16 %v421
        %v3717 = vunpack.c.l.b16 %v422
        %v3718 = vunpack.c.h.b16 %v422
        %v3719 = vunpack.c.l.b16 %v423
        %v3720 = vunpack.c.h.b16 %v423
        %v3721 = vunpack.c.l.b16 %v424
        %v3722 = vunpack.c.h.b16 %v424
        %v3723 = vunpack.c.l.b16 %v425
        %v3724 = vunpack.c.h.b16 %v425
        %v3725 = vunpack.c.l.b16 %v426
        %v3726 = vunpack.c.h.b16 %v426
        %v3727 = vunpack.c.l.b16 %v427
        %v3728 = vunpack.c.h.b16 %v427
        %v3729 = vunpack.c.l.b16 %v428
        %v3730 = vunpack.c.h.b16 %v428
        %v3731 = vunpack.c.l.b16 %v429
        %v3732 = vunpack.c.h.b16 %v429
        %v3733 = vunpack.c.l.b16 %v430
        %v3734 = vunpack.c.h.b16 %v430
        %v3735 = vunpack.c.l.b16 %v431
        %v3736 = vunpack.c.h.b16 %v431
        %v3737 = vunpack.c.l.b16 %v432
        %v3738 = vunpack.c.h.b16 %v432
        %v3739 = vunpack.c.l.b16 %v433
        %v3740 = vunpack.c.h.b16 %v433
        %v3741 = vunpack.c.l.b16 %v434
        %v3742 = vunpack.c.h.b16 %v434
        %v3743 = vunpack.c.l.b16 %v435
        %v3744 = vunpack.c.h.b16 %v435
        %v3745 = vunpack.c.l.b16 %v436
        %v3746 = vunpack.c.h.b16 %v436
        %v3747 = vunpack.c.l.b16 %v437
        %v3748 = vunpack.c.h.b16 %v437
        %v3749 = vunpack.c.l.b16 %v438
        %v3750 = vunpack.c.h.b16 %v438
        %v3751 = vunpack.c.l.b16 %v439
        %v3752 = vunpack.c.h.b16 %v439
        %v3753 = vunpack.c.l.b16 %v440
        %v3754 = vunpack.c.h.b16 %v440
        %v3755 = vunpack.c.l.b16 %v441
        %v3756 = vunpack.c.h.b16 %v441
        %v3757 = vunpack.c.l.b16 %v442
        %v3758 = vunpack.c.h.b16 %v442
        %v3759 = vunpack.c.l.b16 %v443
        %v3760 = vunpack.c.h.b16 %v443
        %v3761 = vunpack.c.l.b16 %v444
        %v3762 = vunpack.c.h.b16 %v444
        %v3763 = vunpack.c.l.b16 %v445
        %v3764 = vunpack.c.h.b16 %v445
        %v3765 = vunpack.c.l.b16 %v446
        %v3766 = vunpack.c.h.b16 %v446
        %v3767 = vunpack.c.l.b16 %v447
        %v3768 = vunpack.c.h.b16 %v447
        %v3769 = vunpack.c.l.b16 %v448
        %v3770 = vunpack.c.h.b16 %v448
        %v3771 = vunpack.c.l.b16 %v449
        %v3772 = vunpack.c.h.b16 %v449
        %v3773 = vunpack.c.l.b16 %v450
        %v3774 = vunpack.c.h.b16 %v450
        %v3775 = vunpack.c.l.b16 %v451
        %v3776 = vunpack.c.h.b16 %v451
        %v3777 = vunpack.c.l.b16 %v452
        %v3778 = vunpack.c.h.b16 %v452
        %v3779 = vunpack.c.l.b16 %v453
        %v3780 = vunpack.c.h.b16 %v453
        %v3781 = vunpack.c.l.b16 %v454
        %v3782 = vunpack.c.h.b16 %v454
        %v3783 = vunpack.c.l.b16 %v455
        %v3784 = vunpack.c.h.b16 %v455
        %v3785 = vunpack.c.l.b16 %v456
        %v3786 = vunpack.c.h.b16 %v456
        %v3787 = vunpack.c.l.b16 %v457
        %v3788 = vunpack.c.h.b16 %v457
        %v3789 = vunpack.c.l.b16 %v458
        %v3790 = vunpack.c.h.b16 %v458
        %v3791 = vunpack.c.l.b16 %v459
        %v3792 = vunpack.c.h.b16 %v459
        %v3793 = vunpack.c.l.b16 %v460
        %v3794 = vunpack.c.h.b16 %v460
        %v3795 = vunpack.c.l.b16 %v461
        %v3796 = vunpack.c.h.b16 %v461
        %v3797 = vunpack.c.l.b16 %v462
        %v3798 = vunpack.c.h.b16 %v462
        %v3799 = vunpack.c.l.b16 %v463
        %v3800 = vunpack.c.h.b16 %v463
        %v3801 = vunpack.c.l.b16 %v464
        %v3802 = vunpack.c.h.b16 %v464
        %v3803 = vunpack.c.l.b16 %v465
        %v3804 = vunpack.c.h.b16 %v465
        %v3805 = vunpack.c.l.b16 %v466
        %v3806 = vunpack.c.h.b16 %v466
        %v3807 = vunpack.c.l.b16 %v467
        %v3808 = vunpack.c.h.b16 %v467
        %v3809 = vunpack.c.l.b16 %v468
        %v3810 = vunpack.c.h.b16 %v468
        %v3811 = vunpack.c.l.b16 %v469
        %v3812 = vunpack.c.h.b16 %v469
        %v3813 = vunpack.c.l.b16 %v470
        %v3814 = vunpack.c.h.b16 %v470
        %v3815 = vunpack.c.l.b16 %v471
        %v3816 = vunpack.c.h.b16 %v471
        %v3817 = vunpack.c.l.b16 %v472
        %v3818 = vunpack.c.h.b16 %v472
        %v3819 = vunpack.c.l.b16 %v473
        %v3820 = vunpack.c.h.b16 %v473
        %v3821 = vunpack.c.l.b16 %v474
        %v3822 = vunpack.c.h.b16 %v474
        %v3823 = vunpack.c.l.b16 %v475
        %v3824 = vunpack.c.h.b16 %v475
        %v3825 = vunpack.c.l.b16 %v476
        %v3826 = vunpack.c.h.b16 %v476
        %v3827 = vunpack.c.l.b16 %v477
        %v3828 = vunpack.c.h.b16 %v477
        %v3829 = vunpack.c.l.b16 %v478
        %v3830 = vunpack.c.h.b16 %v478
        %v3831 = vunpack.c.l.b16 %v479
        %v3832 = vunpack.c.h.b16 %v479
        %v3833 = vunpack.c.l.b16 %v480
        %v3834 = vunpack.c.h.b16 %v480
        %v3835 = vunpack.c.l.b16 %v481
        %v3836 = vunpack.c.h.b16 %v481
        %v3837 = vunpack.c.l.b16 %v482
        %v3838 = vunpack.c.h.b16 %v482
        %v3839 = vunpack.c.l.b16 %v483
        %v3840 = vunpack.c.h.b16 %v483
        %v3841 = vunpack.c.l.b16 %v484
        %v3842 = vunpack.c.h.b16 %v484
        %v3843 = vunpack.c.l.b16 %v485
        %v3844 = vunpack.c.h.b16 %v485
        %v3845 = vunpack.c.l.b16 %v486
        %v3846 = vunpack.c.h.b16 %v486
        %v3847 = vunpack.c.l.b16 %v487
        %v3848 = vunpack.c.h.b16 %v487
        %v3849 = vunpack.c.l.b16 %v488
        %v3850 = vunpack.c.h.b16 %v488
        %v3851 = vunpack.c.l.b16 %v489
        %v3852 = vunpack.c.h.b16 %v489
        %v3853 = vunpack.c.l.b16 %v490
        %v3854 = vunpack.c.h.b16 %v490
        %v3855 = vunpack.c.l.b16 %v491
        %v3856 = vunpack.c.h.b16 %v491
        %v3857 = vunpack.c.l.b16 %v492
        %v3858 = vunpack.c.h.b16 %v492
        %v3859 = vunpack.c.l.b16 %v493
        %v3860 = vunpack.c.h.b16 %v493
        %v3861 = vunpack.c.l.b16 %v494
        %v3862 = vunpack.c.h.b16 %v494
        %v3863 = vunpack.c.l.b16 %v495
        %v3864 = vunpack.c.h.b16 %v495
        %v3865 = vunpack.c.l.b16 %v496
        %v3866 = vunpack.c.h.b16 %v496
        %v3867 = vunpack.c.l.b16 %v497
        %v3868 = vunpack.c.h.b16 %v497
        %v3869 = vunpack.c.l.b16 %v498
        %v3870 = vunpack.c.h.b16 %v498
        %v3871 = vunpack.c.l.b16 %v499
        %v3872 = vunpack.c.h.b16 %v499
        %v3873 = vunpack.c.l.b16 %v500
        %v3874 = vunpack.c.h.b16 %v500
        %v3875 = vunpack.c.l.b16 %v501
        %v3876 = vunpack.c.h.b16 %v501
        %v3877 = vunpack.c.l.b16 %v502
        %v3878 = vunpack.c.h.b16 %v502
        %v3879 = vunpack.c.l.b16 %v503
        %v3880 = vunpack.c.h.b16 %v503
        %v3881 = vunpack.c.l.b16 %v504
        %v3882 = vunpack.c.h.b16 %v504
        %v3883 = vunpack.c.l.b16 %v505
        %v3884 = vunpack.c.h.b16 %v505
        %v3885 = vunpack.c.l.b16 %v506
        %v3886 = vunpack.c.h.b16 %v506
        %v3887 = vunpack.c.l.b16 %v507
        %v3888 = vunpack.c.h.b16 %v507
        %v3889 = vunpack.c.l.b16 %v508
        %v3890 = vunpack.c.h.b16 %v508
        %v3891 = vunpack.c.l.b16 %v509
        %v3892 = vunpack.c.h.b16 %v509
        %v3893 = vunpack.c.l.b16 %v510
        %v3894 = vunpack.c.h.b16 %v510
        %v3895 = vunpack.c.l.b16 %v511
        %v3896 = vunpack.c.h.b16 %v511
        %v3897 = vunpack.c.l.b16 %v512
        %v3898 = vunpack.c.h.b16 %v512
        %v3899 = vunpack.c.l.b16 %v513
        %v3900 = vunpack.c.h.b16 %v513
        %v3901 = vunpack.c.l.b16 %v514
        %v3902 = vunpack.c.h.b16 %v514
        %v3903 = vunpack.c.l.b16 %v515
        %v3904 = vunpack.c.h.b16 %v515
        %v3905 = vunpack.c.l.b16 %v516
        %v3906 = vunpack.c.h.b16 %v516
        %v3907 = vunpack.c.l.b16 %v517
        %v3908 = vunpack.c.h.b16 %v517
        %v3909 = vunpack.c.l.b16 %v518
        %v3910 = vunpack.c.h.b16 %v518
        %v3911 = vunpack.c.l.b16 %v519
        %v3912 = vunpack.c.h.b16 %v519
        %v3913 = vunpack.c.l.b16 %v520
        %v3914 = vunpack.c.h.b16 %v520
        %v3915 = vunpack.c.l.b16 %v521
        %v3916 = vunpack.c.h.b16 %v521
        %v3917 = vunpack.c.l.b16 %v522
        %v3918 = vunpack.c.h.b16 %v522
        %v3919 = vunpack.c.l.b16 %v523
        %v3920 = vunpack.c.h.b16 %v523
        %v3921 = vunpack.c.l.b16 %v524
        %v3922 = vunpack.c.h.b16 %v524
        %v3923 = vunpack.c.l.b16 %v525
        %v3924 = vunpack.c.h.b16 %v525
        %v3925 = vunpack.c.l.b16 %v526
        %v3926 = vunpack.c.h.b16 %v526
        %v3927 = vunpack.c.l.b16 %v527
        %v3928 = vunpack.c.h.b16 %v527
        %v3929 = vunpack.c.l.b16 %v528
        %v3930 = vunpack.c.h.b16 %v528
        %v3931 = vunpack.c.l.b16 %v529
        %v3932 = vunpack.c.h.b16 %v529
        %v3933 = vunpack.c.l.b16 %v530
        %v3934 = vunpack.c.h.b16 %v530
        %v3935 = vunpack.c.l.b16 %v531
        %v3936 = vunpack.c.h.b16 %v531
        %v3937 = vunpack.c.l.b16 %v532
        %v3938 = vunpack.c.h.b16 %v532
        %v3939 = vunpack.c.l.b16 %v533
        %v3940 = vunpack.c.h.b16 %v533
        %v3941 = vunpack.c.l.b16 %v534
        %v3942 = vunpack.c.h.b16 %v534
        %v3943 = vunpack.c.l.b16 %v535
        %v3944 = vunpack.c.h.b16 %v535
        %v3945 = vunpack.c.l.b16 %v536
        %v3946 = vunpack.c.h.b16 %v536
        %v3947 = vunpack.c.l.b16 %v537
        %v3948 = vunpack.c.h.b16 %v537
        %v3949 = vunpack.c.l.b16 %v538
        %v3950 = vunpack.c.h.b16 %v538
        %v3951 = vunpack.c.l.b16 %v539
        %v3952 = vunpack.c.h.b16 %v539
        %v3953 = vunpack.c.l.b16 %v540
        %v3954 = vunpack.c.h.b16 %v540
        %v3955 = vunpack.c.l.b16 %v541
        %v3956 = vunpack.c.h.b16 %v541
        %v3957 = vunpack.c.l.b16 %v542
        %v3958 = vunpack.c.h.b16 %v542
        %v3959 = vunpack.c.l.b16 %v543
        %v3960 = vunpack.c.h.b16 %v543
        %v3961 = vunpack.c.l.b16 %v544
        %v3962 = vunpack.c.h.b16 %v544
        %v3963 = vunpack.c.l.b16 %v545
        %v3964 = vunpack.c.h.b16 %v545
        %v3965 = vunpack.c.l.b16 %v546
        %v3966 = vunpack.c.h.b16 %v546
        %v3967 = vunpack.c.l.b16 %v547
        %v3968 = vunpack.c.h.b16 %v547
        %v3969 = vunpack.c.l.b16 %v548
        %v3970 = vunpack.c.h.b16 %v548
        %v3971 = vunpack.c.l.b16 %v549
        %v3972 = vunpack.c.h.b16 %v549
        %v3973 = vunpack.c.l.b16 %v550
        %v3974 = vunpack.c.h.b16 %v550
        %v3975 = vunpack.c.l.b16 %v551
        %v3976 = vunpack.c.h.b16 %v551
        %v3977 = vunpack.c.l.b16 %v552
        %v3978 = vunpack.c.h.b16 %v552
        %v3979 = vunpack.c.l.b16 %v553
        %v3980 = vunpack.c.h.b16 %v553
        %v3981 = vunpack.c.l.b16 %v554
        %v3982 = vunpack.c.h.b16 %v554
        %v3983 = vunpack.c.l.b16 %v555
        %v3984 = vunpack.c.h.b16 %v555
        %v3985 = vunpack.c.l.b16 %v556
        %v3986 = vunpack.c.h.b16 %v556
        %v3987 = vunpack.c.l.b16 %v557
        %v3988 = vunpack.c.h.b16 %v557
        %v3989 = vunpack.c.l.b16 %v558
        %v3990 = vunpack.c.h.b16 %v558
        %v3991 = vunpack.c.l.b16 %v559
        %v3992 = vunpack.c.h.b16 %v559
        %v3993 = vunpack.c.l.b16 %v560
        %v3994 = vunpack.c.h.b16 %v560
        %v3995 = vunpack.c.l.b16 %v561
        %v3996 = vunpack.c.h.b16 %v561
        %v3997 = vunpack.c.l.b16 %v562
        %v3998 = vunpack.c.h.b16 %v562
        %v3999 = vunpack.c.l.b16 %v563
        %v4000 = vunpack.c.h.b16 %v563
        %v4001 = vunpack.c.l.b16 %v564
        %v4002 = vunpack.c.h.b16 %v564
        %v4003 = vunpack.c.l.b16 %v565
        %v4004 = vunpack.c.h.b16 %v565
        %v4005 = vunpack.c.l.b16 %v566
        %v4006 = vunpack.c.h.b16 %v566
        %v4007 = vunpack.c.l.b16 %v567
        %v4008 = vunpack.c.h.b16 %v567
        %v4009 = vunpack.c.l.b16 %v568
        %v4010 = vunpack.c.h.b16 %v568
        %v4011 = vunpack.c.l.b16 %v569
        %v4012 = vunpack.c.h.b16 %v569
        %v4013 = vunpack.c.l.b16 %v570
        %v4014 = vunpack.c.h.b16 %v570
        %v4015 = vunpack.c.l.b16 %v571
        %v4016 = vunpack.c.h.b16 %v571
        %v4017 = vunpack.c.l.b16 %v572
        %v4018 = vunpack.c.h.b16 %v572
        %v4019 = vunpack.c.l.b16 %v573
        %v4020 = vunpack.c.h.b16 %v573
        %v4021 = vunpack.c.l.b16 %v574
        %v4022 = vunpack.c.h.b16 %v574
        %v4023 = vunpack.c.l.b16 %v575
        %v4024 = vunpack.c.h.b16 %v575
        %v4025 = vunpack.c.l.b16 %v576
        %v4026 = vunpack.c.h.b16 %v576
        %v4027 = vunpack.c.l.b16 %v577
        %v4028 = vunpack.c.h.b16 %v577
        %v4029 = vunpack.c.l.b16 %v578
        %v4030 = vunpack.c.h.b16 %v578
        %v4031 = vunpack.c.l.b16 %v579
        %v4032 = vunpack.c.h.b16 %v579
        %v4033 = vunpack.c.l.b16 %v580
        %v4034 = vunpack.c.h.b16 %v580
        %v4035 = vunpack.c.l.b16 %v581
        %v4036 = vunpack.c.h.b16 %v581
        %v4037 = vunpack.c.l.b16 %v582
        %v4038 = vunpack.c.h.b16 %v582
        %v4039 = vunpack.c.l.b16 %v583
        %v4040 = vunpack.c.h.b16 %v583
        %v4041 = vunpack.c.l.b16 %v584
        %v4042 = vunpack.c.h.b16 %v584
        %v4043 = vunpack.c.l.b16 %v585
        %v4044 = vunpack.c.h.b16 %v585
        %v4045 = vunpack.c.l.b16 %v586
        %v4046 = vunpack.c.h.b16 %v586
        %v4047 = vunpack.c.l.b16 %v587
        %v4048 = vunpack.c.h.b16 %v587
        %v4049 = vunpack.c.l.b16 %v588
        %v4050 = vunpack.c.h.b16 %v588
        %v4051 = vunpack.c.l.b16 %v589
        %v4052 = vunpack.c.h.b16 %v589
        %v4053 = vunpack.c.l.b16 %v590
        %v4054 = vunpack.c.h.b16 %v590
        %v4055 = vunpack.c.l.b16 %v591
        %v4056 = vunpack.c.h.b16 %v591
        %v4057 = vunpack.c.l.b16 %v592
        %v4058 = vunpack.c.h.b16 %v592
        %v4059 = vunpack.c.l.b16 %v593
        %v4060 = vunpack.c.h.b16 %v593
        %v4061 = vunpack.c.l.b16 %v594
        %v4062 = vunpack.c.h.b16 %v594
        %v4063 = vunpack.c.l.b16 %v595
        %v4064 = vunpack.c.h.b16 %v595
        %v4065 = vunpack.c.l.b16 %v596
        %v4066 = vunpack.c.h.b16 %v596
        %v4067 = vunpack.c.l.b16 %v597
        %v4068 = vunpack.c.h.b16 %v597
        %v4069 = vunpack.c.l.b16 %v598
        %v4070 = vunpack.c.h.b16 %v598
        %v4071 = vunpack.c.l.b16 %v599
        %v4072 = vunpack.c.h.b16 %v599
        %v4073 = vunpack.c.l.b16 %v600
        %v4074 = vunpack.c.h.b16 %v600
        %v4075 = vunpack.c.l.b16 %v601
        %v4076 = vunpack.c.h.b16 %v601
        %v4077 = vunpack.c.l.b16 %v602
        %v4078 = vunpack.c.h.b16 %v602
        %v4079 = vunpack.c.l.b16 %v603
        %v4080 = vunpack.c.h.b16 %v603
        %v4081 = vunpack.c.l.b16 %v604
        %v4082 = vunpack.c.h.b16 %v604
        %v4083 = vunpack.c.l.b16 %v605
        %v4084 = vunpack.c.h.b16 %v605
        %v4085 = vunpack.c.l.b16 %v606
        %v4086 = vunpack.c.h.b16 %v606
        %v4087 = vunpack.c.l.b16 %v607
        %v4088 = vunpack.c.h.b16 %v607
        %v4089 = vunpack.c.l.b16 %v608
        %v4090 = vunpack.c.h.b16 %v608
        %v4091 = vunpack.c.l.b16 %v609
        %v4092 = vunpack.c.h.b16 %v609
        %v4093 = vunpack.c.l.b16 %v610
        %v4094 = vunpack.c.h.b16 %v610
        %v4095 = vunpack.c.l.b16 %v611
        %v4096 = vunpack.c.h.b16 %v611
        %v4097 = vunpack.c.l.b16 %v612
        %v4098 = vunpack.c.h.b16 %v612
        %v4099 = vunpack.c.l.b16 %v613
        %v4100 = vunpack.c.h.b16 %v613
        %v4101 = vunpack.c.l.b16 %v614
        %v4102 = vunpack.c.h.b16 %v614
        %v4103 = vunpack.c.l.b16 %v615
        %v4104 = vunpack.c.h.b16 %v615
        %v4105 = vunpack.c.l.b16 %v616
        %v4106 = vunpack.c.h.b16 %v616
        %v4107 = vunpack.c.l.b16 %v617
        %v4108 = vunpack.c.h.b16 %v617
        %v4109 = vunpack.c.l.b16 %v618
        %v4110 = vunpack.c.h.b16 %v618
        %v4111 = vunpack.c.l.b16 %v619
        %v4112 = vunpack.c.h.b16 %v619
        %v4113 = vunpack.c.l.b16 %v620
        %v4114 = vunpack.c.h.b16 %v620
        %v4115 = vunpack.c.l.b16 %v621
        %v4116 = vunpack.c.h.b16 %v621
        %v4117 = vunpack.c.l.b16 %v622
        %v4118 = vunpack.c.h.b16 %v622
        %v4119 = vunpack.c.l.b16 %v623
        %v4120 = vunpack.c.h.b16 %v623
        %v4121 = vunpack.c.l.b16 %v624
        %v4122 = vunpack.c.h.b16 %v624
        %v4123 = vunpack.c.l.b16 %v625
        %v4124 = vunpack.c.h.b16 %v625
        %v4125 = vunpack.c.l.b16 %v626
        %v4126 = vunpack.c.h.b16 %v626
        %v4127 = vunpack.c.l.b16 %v627
        %v4128 = vunpack.c.h.b16 %v627
        %v4129 = vunpack.c.l.b16 %v628
        %v4130 = vunpack.c.h.b16 %v628
        %v4131 = vunpack.c.l.b16 %v629
        %v4132 = vunpack.c.h.b16 %v629
        %v4133 = vunpack.c.l.b16 %v630
        %v4134 = vunpack.c.h.b16 %v630
        %v4135 = vunpack.c.l.b16 %v631
        %v4136 = vunpack.c.h.b16 %v631
        %v4137 = vunpack.c.l.b16 %v632
        %v4138 = vunpack.c.h.b16 %v632
        %v4139 = vunpack.c.l.b16 %v633
        %v4140 = vunpack.c.h.b16 %v633
        %v4141 = vunpack.c.l.b16 %v634
        %v4142 = vunpack.c.h.b16 %v634
        %v4143 = vunpack.c.l.b16 %v635
        %v4144 = vunpack.c.h.b16 %v635
        %v4145 = vunpack.c.l.b16 %v636
        %v4146 = vunpack.c.h.b16 %v636
        %v4147 = vunpack.c.l.b16 %v637
        %v4148 = vunpack.c.h.b16 %v637
        %v4149 = vunpack.c.l.b16 %v638
        %v4150 = vunpack.c.h.b16 %v638
        %v4151 = vunpack.c.l.b16 %v639
        %v4152 = vunpack.c.h.b16 %v639
        %v4153 = vunpack.c.l.b16 %v640
        %v4154 = vunpack.c.h.b16 %v640
        %v4155 = vunpack.c.l.b16 %v641
        %v4156 = vunpack.c.h.b16 %v641
        %v4157 = vunpack.c.l.b16 %v642
        %v4158 = vunpack.c.h.b16 %v642
        %v4159 = vunpack.c.l.b16 %v643
        %v4160 = vunpack.c.h.b16 %v643
        %v4161 = vunpack.c.l.b16 %v644
        %v4162 = vunpack.c.h.b16 %v644
        %v4163 = vunpack.c.l.b16 %v645
        %v4164 = vunpack.c.h.b16 %v645
        %v4165 = vunpack.c.l.b16 %v646
        %v4166 = vunpack.c.h.b16 %v646
        %v4167 = vunpack.c.l.b16 %v647
        %v4168 = vunpack.c.h.b16 %v647
        %v4169 = vunpack.c.l.b16 %v648
        %v4170 = vunpack.c.h.b16 %v648
        %v4171 = vunpack.c.l.b16 %v649
        %v4172 = vunpack.c.h.b16 %v649
        %v4173 = vunpack.c.l.b16 %v650
        %v4174 = vunpack.c.h.b16 %v650
        %v4175 = vunpack.c.l.b16 %v651
        %v4176 = vunpack.c.h.b16 %v651
        %v4177 = vunpack.c.l.b16 %v652
        %v4178 = vunpack.c.h.b16 %v652
        %v4179 = vunpack.c.l.b16 %v653
        %v4180 = vunpack.c.h.b16 %v653
        %v4181 = vunpack.c.l.b16 %v654
        %v4182 = vunpack.c.h.b16 %v654
        %v4183 = vunpack.c.l.b16 %v655
        %v4184 = vunpack.c.h.b16 %v655
        %v4185 = vunpack.c.l.b16 %v656
        %v4186 = vunpack.c.h.b16 %v656
        %v4187 = vunpack.c.l.b16 %v657
        %v4188 = vunpack.c.h.b16 %v657
        %v4189 = vunpack.c.l.b16 %v658
        %v4190 = vunpack.c.h.b16 %v658
        %v4191 = vunpack.c.l.b16 %v659
        %v4192 = vunpack.c.h.b16 %v659
        %v4193 = vunpack.c.l.b16 %v660
        %v4194 = vunpack.c.h.b16 %v660
        %v4195 = vunpack.c.l.b16 %v661
        %v4196 = vunpack.c.h.b16 %v661
        %v4197 = vunpack.c.l.b16 %v662
        %v4198 = vunpack.c.h.b16 %v662
        %v4199 = vunpack.c.l.b16 %v663
        %v4200 = vunpack.c.h.b16 %v663
        %v4201 = vunpack.c.l.b16 %v664
        %v4202 = vunpack.c.h.b16 %v664
        %v4203 = vunpack.c.l.b16 %v665
        %v4204 = vunpack.c.h.b16 %v665
        %v4205 = vunpack.c.l.b16 %v666
        %v4206 = vunpack.c.h.b16 %v666
        %v4207 = vunpack.c.l.b16 %v667
        %v4208 = vunpack.c.h.b16 %v667
        %v4209 = vunpack.c.l.b16 %v668
        %v4210 = vunpack.c.h.b16 %v668
        %v4211 = vunpack.c.l.b16 %v669
        %v4212 = vunpack.c.h.b16 %v669
        %v4213 = vunpack.c.l.b16 %v670
        %v4214 = vunpack.c.h.b16 %v670
        %v4215 = vunpack.c.l.b16 %v671
        %v4216 = vunpack.c.h.b16 %v671
        %v4217 = vunpack.c.l.b16 %v672
        %v4218 = vunpack.c.h.b16 %v672
        %v4219 = vunpack.c.l.b16 %v673
        %v4220 = vunpack.c.h.b16 %v673
        %v4221 = vunpack.c.l.b16 %v674
        %v4222 = vunpack.c.h.b16 %v674
        %v4223 = vunpack.c.l.b16 %v675
        %v4224 = vunpack.c.h.b16 %v675
        %v4225 = vunpack.c.l.b16 %v676
        %v4226 = vunpack.c.h.b16 %v676
        %v4227 = vunpack.c.l.b16 %v677
        %v4228 = vunpack.c.h.b16 %v677
        %v4229 = vunpack.c.l.b16 %v678
        %v4230 = vunpack.c.h.b16 %v678
        %v4231 = vunpack.c.l.b16 %v679
        %v4232 = vunpack.c.h.b16 %v679
        %v4233 = vunpack.c.l.b16 %v680
        %v4234 = vunpack.c.h.b16 %v680
        %v4235 = vunpack.c.l.b16 %v681
        %v4236 = vunpack.c.h.b16 %v681
        %v4237 = vunpack.c.l.b16 %v682
        %v4238 = vunpack.c.h.b16 %v682
        %v4239 = vunpack.c.l.b16 %v683
        %v4240 = vunpack.c.h.b16 %v683
        %v4241 = vunpack.c.l.b16 %v684
        %v4242 = vunpack.c.h.b16 %v684
        %v4243 = vunpack.c.l.b16 %v685
        %v4244 = vunpack.c.h.b16 %v685
        %v4245 = vunpack.c.l.b16 %v686
        %v4246 = vunpack.c.h.b16 %v686
        %v4247 = vunpack.c.l.b16 %v687
        %v4248 = vunpack.c.h.b16 %v687
        %v4249 = vunpack.c.l.b16 %v688
        %v4250 = vunpack.c.h.b16 %v688
        %v4251 = vunpack.c.l.b16 %v689
        %v4252 = vunpack.c.h.b16 %v689
        %v4253 = vunpack.c.l.b16 %v690
        %v4254 = vunpack.c.h.b16 %v690
        %v4255 = vunpack.c.l.b16 %v691
        %v4256 = vunpack.c.h.b16 %v691
        %v4257 = vunpack.c.l.b16 %v692
        %v4258 = vunpack.c.h.b16 %v692
        %v4259 = vunpack.c.l.b16 %v693
        %v4260 = vunpack.c.h.b16 %v693
        %v4261 = vunpack.c.l.b16 %v694
        %v4262 = vunpack.c.h.b16 %v694
        %v4263 = vunpack.c.l.b16 %v695
        %v4264 = vunpack.c.h.b16 %v695
        %v4265 = vunpack.c.l.b16 %v696
        %v4266 = vunpack.c.h.b16 %v696
        %v4267 = vunpack.c.l.b16 %v697
        %v4268 = vunpack.c.h.b16 %v697
        %v4269 = vunpack.c.l.b16 %v698
        %v4270 = vunpack.c.h.b16 %v698
        %v4271 = vunpack.c.l.b16 %v699
        %v4272 = vunpack.c.h.b16 %v699
        %v4273 = vunpack.c.l.b16 %v700
        %v4274 = vunpack.c.h.b16 %v700
        %v4275 = vunpack.c.l.b16 %v701
        %v4276 = vunpack.c.h.b16 %v701
        %v4277 = vunpack.c.l.b16 %v702
        %v4278 = vunpack.c.h.b16 %v702
        %v4279 = vunpack.c.l.b16 %v703
        %v4280 = vunpack.c.h.b16 %v703
        %v4281 = vunpack.c.l.b16 %v704
        %v4282 = vunpack.c.h.b16 %v704
        %v4283 = vunpack.c.l.b16 %v705
        %v4284 = vunpack.c.h.b16 %v705
        %v4285 = vunpack.c.l.b16 %v706
        %v4286 = vunpack.c.h.b16 %v706
        %v4287 = vunpack.c.l.b16 %v707
        %v4288 = vunpack.c.h.b16 %v707
        %v4289 = vunpack.c.l.b16 %v708
        %v4290 = vunpack.c.h.b16 %v708
        %v4291 = vunpack.c.l.b16 %v709
        %v4292 = vunpack.c.h.b16 %v709
        %v4293 = vunpack.c.l.b16 %v710
        %v4294 = vunpack.c.h.b16 %v710
        %v4295 = vunpack.c.l.b16 %v711
        %v4296 = vunpack.c.h.b16 %v711
        %v4297 = vunpack.c.l.b16 %v712
        %v4298 = vunpack.c.h.b16 %v712
        %v4299 = vunpack.c.l.b16 %v713
        %v4300 = vunpack.c.h.b16 %v713
        %v4301 = vunpack.c.l.b16 %v714
        %v4302 = vunpack.c.h.b16 %v714
        %v4303 = vunpack.c.l.b16 %v715
        %v4304 = vunpack.c.h.b16 %v715
        %v4305 = vunpack.c.l.b16 %v716
        %v4306 = vunpack.c.h.b16 %v716
        %v4307 = vunpack.c.l.b16 %v717
        %v4308 = vunpack.c.h.b16 %v717
        %v4309 = vunpack.c.l.b16 %v718
        %v4310 = vunpack.c.h.b16 %v718
        %v4311 = vunpack.c.l.b16 %v719
        %v4312 = vunpack.c.h.b16 %v719
        %v4313 = vunpack.c.l.b16 %v720
        %v4314 = vunpack.c.h.b16 %v720
        %v4315 = vunpack.c.l.b16 %v721
        %v4316 = vunpack.c.h.b16 %v721
        %v4317 = vunpack.c.l.b16 %v722
        %v4318 = vunpack.c.h.b16 %v722
        %v4319 = vunpack.c.l.b16 %v723
        %v4320 = vunpack.c.h.b16 %v723
        %v4321 = vunpack.c.l.b16 %v724
        %v4322 = vunpack.c.h.b16 %v724
        %v4323 = vunpack.c.l.b16 %v725
        %v4324 = vunpack.c.h.b16 %v725
        %v4325 = vunpack.c.l.b16 %v726
        %v4326 = vunpack.c.h.b16 %v726
        %v4327 = vunpack.c.l.b16 %v727
        %v4328 = vunpack.c.h.b16 %v727
        %v4329 = vunpack.c.l.b16 %v728
        %v4330 = vunpack.c.h.b16 %v728
        %v4331 = vunpack.c.l.b16 %v729
        %v4332 = vunpack.c.h.b16 %v729
        %v4333 = vunpack.c.l.b16 %v730
        %v4334 = vunpack.c.h.b16 %v730
        %v4335 = vunpack.c.l.b16 %v731
        %v4336 = vunpack.c.h.b16 %v731
        %v4337 = vunpack.c.l.b16 %v732
        %v4338 = vunpack.c.h.b16 %v732
        %v4339 = vunpack.c.l.b16 %v733
        %v4340 = vunpack.c.h.b16 %v733
        %v4341 = vunpack.c.l.b16 %v734
        %v4342 = vunpack.c.h.b16 %v734
        %v4343 = vunpack.c.l.b16 %v735
        %v4344 = vunpack.c.h.b16 %v735
        %v4345 = vunpack.c.l.b16 %v736
        %v4346 = vunpack.c.h.b16 %v736
        %v4347 = vunpack.c.l.b16 %v737
        %v4348 = vunpack.c.h.b16 %v737
        %v4349 = vunpack.c.l.b16 %v738
        %v4350 = vunpack.c.h.b16 %v738
        %v4351 = vunpack.c.l.b16 %v739
        %v4352 = vunpack.c.h.b16 %v739
        %v4353 = vunpack.c.l.b16 %v740
        %v4354 = vunpack.c.h.b16 %v740
        %v4355 = vunpack.c.l.b16 %v741
        %v4356 = vunpack.c.h.b16 %v741
        %v4357 = vunpack.c.l.b16 %v742
        %v4358 = vunpack.c.h.b16 %v742
        %v4359 = vunpack.c.l.b16 %v743
        %v4360 = vunpack.c.h.b16 %v743
        %v4361 = vunpack.c.l.b16 %v744
        %v4362 = vunpack.c.h.b16 %v744
        %v4363 = vunpack.c.l.b16 %v745
        %v4364 = vunpack.c.h.b16 %v745
        %v4365 = vunpack.c.l.b16 %v746
        %v4366 = vunpack.c.h.b16 %v746
        %v4367 = vunpack.c.l.b16 %v747
        %v4368 = vunpack.c.h.b16 %v747
        %v4369 = vunpack.c.l.b16 %v748
        %v4370 = vunpack.c.h.b16 %v748
        %v4371 = vunpack.c.l.b16 %v749
        %v4372 = vunpack.c.h.b16 %v749
        %v4373 = vunpack.c.l.b16 %v750
        %v4374 = vunpack.c.h.b16 %v750
        %v4375 = vunpack.c.l.b16 %v751
        %v4376 = vunpack.c.h.b16 %v751
        %v4377 = vunpack.c.l.b16 %v752
        %v4378 = vunpack.c.h.b16 %v752
        %v4379 = vunpack.c.l.b16 %v753
        %v4380 = vunpack.c.h.b16 %v753
        %v4381 = vunpack.c.l.b16 %v754
        %v4382 = vunpack.c.h.b16 %v754
        %v4383 = vunpack.c.l.b16 %v755
        %v4384 = vunpack.c.h.b16 %v755
        %v4385 = vunpack.c.l.b16 %v756
        %v4386 = vunpack.c.h.b16 %v756
        %v4387 = vunpack.c.l.b16 %v757
        %v4388 = vunpack.c.h.b16 %v757
        %v4389 = vunpack.c.l.b16 %v758
        %v4390 = vunpack.c.h.b16 %v758
        %v4391 = vunpack.c.l.b16 %v759
        %v4392 = vunpack.c.h.b16 %v759
        %v4393 = vunpack.c.l.b16 %v760
        %v4394 = vunpack.c.h.b16 %v760
        %v4395 = vunpack.c.l.b16 %v761
        %v4396 = vunpack.c.h.b16 %v761
        %v4397 = vunpack.c.l.b16 %v762
        %v4398 = vunpack.c.h.b16 %v762
        %v4399 = vunpack.c.l.b16 %v763
        %v4400 = vunpack.c.h.b16 %v763
        %v4401 = vunpack.c.l.b16 %v764
        %v4402 = vunpack.c.h.b16 %v764
        %v4403 = vunpack.c.l.b16 %v765
        %v4404 = vunpack.c.h.b16 %v765
        %v4405 = vunpack.c.l.b16 %v766
        %v4406 = vunpack.c.h.b16 %v766
        %v4407 = vunpack.c.l.b16 %v767
        %v4408 = vunpack.c.h.b16 %v767
        %v4409 = vunpack.c.l.b16 %v768
        %v4410 = vunpack.c.h.b16 %v768
        %v4411 = vunpack.c.l.b16 %v769
        %v4412 = vunpack.c.h.b16 %v769
        %v4413 = vunpack.c.l.b16 %v770
        %v4414 = vunpack.c.h.b16 %v770
        %v4415 = vunpack.c.l.b16 %v771
        %v4416 = vunpack.c.h.b16 %v771
        %v4417 = vunpack.c.l.b16 %v772
        %v4418 = vunpack.c.h.b16 %v772
        %v4419 = vunpack.c.l.b16 %v773
        %v4420 = vunpack.c.h.b16 %v773
        %v4421 = vunpack.c.l.b16 %v774
        %v4422 = vunpack.c.h.b16 %v774
        %v4423 = vunpack.c.l.b16 %v775
        %v4424 = vunpack.c.h.b16 %v775
        %v4425 = vunpack.c.l.b16 %v776
        %v4426 = vunpack.c.h.b16 %v776
        %v4427 = vunpack.c.l.b16 %v777
        %v4428 = vunpack.c.h.b16 %v777
        %v4429 = vunpack.c.l.b16 %v778
        %v4430 = vunpack.c.h.b16 %v778
        %v4431 = vunpack.c.l.b16 %v779
        %v4432 = vunpack.c.h.b16 %v779
        %v4433 = vunpack.c.l.b16 %v780
        %v4434 = vunpack.c.h.b16 %v780
        %v4435 = vunpack.c.l.b16 %v781
        %v4436 = vunpack.c.h.b16 %v781
        %v4437 = vunpack.c.l.b16 %v782
        %v4438 = vunpack.c.h.b16 %v782
        %v4439 = vunpack.c.l.b16 %v783
        %v4440 = vunpack.c.h.b16 %v783
        %v4441 = vunpack.c.l.b16 %v784
        %v4442 = vunpack.c.h.b16 %v784
        %v4443 = vunpack.c.l.b16 %v785
        %v4444 = vunpack.c.h.b16 %v785
        %v4445 = vunpack.c.l.b16 %v786
        %v4446 = vunpack.c.h.b16 %v786
        %v4447 = vunpack.c.l.b16 %v787
        %v4448 = vunpack.c.h.b16 %v787
        %v4449 = vunpack.c.l.b16 %v788
        %v4450 = vunpack.c.h.b16 %v788
        %v4451 = vunpack.c.l.b16 %v789
        %v4452 = vunpack.c.h.b16 %v789
        %v4453 = vunpack.c.l.b16 %v790
        %v4454 = vunpack.c.h.b16 %v790
        %v4455 = vunpack.c.l.b16 %v791
        %v4456 = vunpack.c.h.b16 %v791
        %v4457 = vunpack.c.l.b16 %v792
        %v4458 = vunpack.c.h.b16 %v792
        %v4459 = vunpack.c.l.b16 %v793
        %v4460 = vunpack.c.h.b16 %v793
        %v4461 = vunpack.c.l.b16 %v794
        %v4462 = vunpack.c.h.b16 %v794
        %v4463 = vunpack.c.l.b16 %v795
        %v4464 = vunpack.c.h.b16 %v795
        %v4465 = vunpack.c.l.b16 %v796
        %v4466 = vunpack.c.h.b16 %v796
        %v4467 = vunpack.c.l.b16 %v797
        %v4468 = vunpack.c.h.b16 %v797
        %v4469 = vunpack.c.l.b16 %v798
        %v4470 = vunpack.c.h.b16 %v798
        %v4471 = vunpack.c.l.b16 %v799
        %v4472 = vunpack.c.h.b16 %v799
        %v4473 = vunpack.c.l.b16 %v800
        %v4474 = vunpack.c.h.b16 %v800
        %v4475 = vunpack.c.l.b16 %v801
        %v4476 = vunpack.c.h.b16 %v801
        %v4477 = vunpack.c.l.b16 %v802
        %v4478 = vunpack.c.h.b16 %v802
        %v4479 = vunpack.c.l.b16 %v803
        %v4480 = vunpack.c.h.b16 %v803
        %v4481 = vunpack.c.l.b16 %v804
        %v4482 = vunpack.c.h.b16 %v804
        %v4483 = vunpack.c.l.b16 %v805
        %v4484 = vunpack.c.h.b16 %v805
        %v4485 = vunpack.c.l.b16 %v806
        %v4486 = vunpack.c.h.b16 %v806
        %v4487 = vunpack.c.l.b16 %v807
        %v4488 = vunpack.c.h.b16 %v807
        %v4489 = vunpack.c.l.b16 %v808
        %v4490 = vunpack.c.h.b16 %v808
        %v4491 = vunpack.c.l.b16 %v809
        %v4492 = vunpack.c.h.b16 %v809
        %v4493 = vunpack.c.l.b16 %v810
        %v4494 = vunpack.c.h.b16 %v810
        %v4495 = vunpack.c.l.b16 %v811
        %v4496 = vunpack.c.h.b16 %v811
        %v4497 = vunpack.c.l.b16 %v812
        %v4498 = vunpack.c.h.b16 %v812
        %v4499 = vunpack.c.l.b16 %v813
        %v4500 = vunpack.c.h.b16 %v813
        %v4501 = vunpack.c.l.b16 %v814
        %v4502 = vunpack.c.h.b16 %v814
        %v4503 = vunpack.c.l.b16 %v815
        %v4504 = vunpack.c.h.b16 %v815
        %v4505 = vunpack.c.l.b16 %v816
        %v4506 = vunpack.c.h.b16 %v816
        %v4507 = vunpack.c.l.b16 %v817
        %v4508 = vunpack.c.h.b16 %v817
        %v4509 = vunpack.c.l.b16 %v818
        %v4510 = vunpack.c.h.b16 %v818
        %v4511 = vunpack.c.l.b16 %v819
        %v4512 = vunpack.c.h.b16 %v819
        %v4513 = vunpack.c.l.b16 %v820
        %v4514 = vunpack.c.h.b16 %v820
        %v4515 = vunpack.c.l.b16 %v821
        %v4516 = vunpack.c.h.b16 %v821
        %v4517 = vunpack.c.l.b16 %v822
        %v4518 = vunpack.c.h.b16 %v822
        %v4519 = vunpack.c.l.b16 %v823
        %v4520 = vunpack.c.h.b16 %v823
        %v4521 = vunpack.c.l.b16 %v824
        %v4522 = vunpack.c.h.b16 %v824
        %v4523 = vunpack.c.l.b16 %v825
        %v4524 = vunpack.c.h.b16 %v825
        %v4525 = vunpack.c.l.b16 %v826
        %v4526 = vunpack.c.h.b16 %v826
        %v4527 = vunpack.c.l.b16 %v827
        %v4528 = vunpack.c.h.b16 %v827
        %v4529 = vunpack.c.l.b16 %v828
        %v4530 = vunpack.c.h.b16 %v828
        %v4531 = vunpack.c.l.b16 %v829
        %v4532 = vunpack.c.h.b16 %v829
        %v4533 = vunpack.c.l.b16 %v830
        %v4534 = vunpack.c.h.b16 %v830
        %v4535 = vunpack.c.l.b16 %v831
        %v4536 = vunpack.c.h.b16 %v831
        %v4537 = vunpack.c.l.b16 %v832
        %v4538 = vunpack.c.h.b16 %v832
        %v4539 = vunpack.c.l.b16 %v833
        %v4540 = vunpack.c.h.b16 %v833
        %v4541 = vunpack.c.l.b16 %v834
        %v4542 = vunpack.c.h.b16 %v834
        %v4543 = vunpack.c.l.b16 %v835
        %v4544 = vunpack.c.h.b16 %v835
        %v4545 = vunpack.c.l.b16 %v836
        %v4546 = vunpack.c.h.b16 %v836
        %v4547 = vunpack.c.l.b16 %v837
        %v4548 = vunpack.c.h.b16 %v837
        %v4549 = vunpack.c.l.b16 %v838
        %v4550 = vunpack.c.h.b16 %v838
        %v4551 = vunpack.c.l.b16 %v839
        %v4552 = vunpack.c.h.b16 %v839
        %v4553 = vunpack.c.l.b16 %v840
        %v4554 = vunpack.c.h.b16 %v840
        %v4555 = vunpack.c.l.b16 %v841
        %v4556 = vunpack.c.h.b16 %v841
        %v4557 = vunpack.c.l.b16 %v842
        %v4558 = vunpack.c.h.b16 %v842
        %v4559 = vunpack.c.l.b16 %v843
        %v4560 = vunpack.c.h.b16 %v843
        %v4561 = vunpack.c.l.b16 %v844
        %v4562 = vunpack.c.h.b16 %v844
        %v4563 = vunpack.c.l.b16 %v845
        %v4564 = vunpack.c.h.b16 %v845
        %v4565 = vunpack.c.l.b16 %v846
        %v4566 = vunpack.c.h.b16 %v846
        %v4567 = vunpack.c.l.b16 %v847
        %v4568 = vunpack.c.h.b16 %v847
        %v4569 = vunpack.c.l.b16 %v848
        %v4570 = vunpack.c.h.b16 %v848
        %v4571 = vunpack.c.l.b16 %v849
        %v4572 = vunpack.c.h.b16 %v849
        %v4573 = vunpack.c.l.b16 %v850
        %v4574 = vunpack.c.h.b16 %v850
        %v4575 = vunpack.c.l.b16 %v851
        %v4576 = vunpack.c.h.b16 %v851
        %v4577 = vunpack.c.l.b16 %v852
        %v4578 = vunpack.c.h.b16 %v852
        %v4579 = vunpack.c.l.b16 %v853
        %v4580 = vunpack.c.h.b16 %v853
        %v4581 = vunpack.c.l.b16 %v854
        %v4582 = vunpack.c.h.b16 %v854
        %v4583 = vunpack.c.l.b16 %v855
        %v4584 = vunpack.c.h.b16 %v855
        %v4585 = vunpack.c.l.b16 %v856
        %v4586 = vunpack.c.h.b16 %v856
        %v4587 = vunpack.c.l.b16 %v857
        %v4588 = vunpack.c.h.b16 %v857
        %v4589 = vunpack.c.l.b16 %v858
        %v4590 = vunpack.c.h.b16 %v858
        %v4591 = vunpack.c.l.b16 %v859
        %v4592 = vunpack.c.h.b16 %v859
        %v4593 = vunpack.c.l.b16 %v860
        %v4594 = vunpack.c.h.b16 %v860
        %v4595 = vunpack.c.l.b16 %v861
        %v4596 = vunpack.c.h.b16 %v861
        %v4597 = vunpack.c.l.b16 %v862
        %v4598 = vunpack.c.h.b16 %v862
        %v4599 = vunpack.c.l.b16 %v863
        %v4600 = vunpack.c.h.b16 %v863
        %v4601 = vunpack.c.l.b16 %v864
        %v4602 = vunpack.c.h.b16 %v864
        %v4603 = vunpack.c.l.b16 %v865
        %v4604 = vunpack.c.h.b16 %v865
        %v4605 = vunpack.c.l.b16 %v866
        %v4606 = vunpack.c.h.b16 %v866
        %v4607 = vunpack.c.l.b16 %v867
        %v4608 = vunpack.c.h.b16 %v867
        %v4609 = vunpack.c.l.b16 %v868
        %v4610 = vunpack.c.h.b16 %v868
        %v4611 = vunpack.c.l.b16 %v869
        %v4612 = vunpack.c.h.b16 %v869
        %v4613 = vunpack.c.l.b16 %v870
        %v4614 = vunpack.c.h.b16 %v870
        %v4615 = vunpack.c.l.b16 %v871
        %v4616 = vunpack.c.h.b16 %v871
        %v4617 = vunpack.c.l.b16 %v872
        %v4618 = vunpack.c.h.b16 %v872
        %v4619 = vunpack.c.l.b16 %v873
        %v4620 = vunpack.c.h.b16 %v873
        %v4621 = vunpack.c.l.b16 %v874
        %v4622 = vunpack.c.h.b16 %v874
        %v4623 = vunpack.c.l.b16 %v875
        %v4624 = vunpack.c.h.b16 %v875
        %v4625 = vunpack.c.l.b16 %v876
        %v4626 = vunpack.c.h.b16 %v876
        %v4627 = vunpack.c.l.b16 %v877
        %v4628 = vunpack.c.h.b16 %v877
        %v4629 = vunpack.c.l.b16 %v878
        %v4630 = vunpack.c.h.b16 %v878
        %v4631 = vunpack.c.l.b16 %v879
        %v4632 = vunpack.c.h.b16 %v879
        %v4633 = vunpack.c.l.b16 %v880
        %v4634 = vunpack.c.h.b16 %v880
        %v4635 = vunpack.c.l.b16 %v881
        %v4636 = vunpack.c.h.b16 %v881
        %v4637 = vunpack.c.l.b16 %v882
        %v4638 = vunpack.c.h.b16 %v882
        %v4639 = vunpack.c.l.b16 %v883
        %v4640 = vunpack.c.h.b16 %v883
        %v4641 = vunpack.c.l.b16 %v884
        %v4642 = vunpack.c.h.b16 %v884
        %v4643 = vunpack.c.l.b16 %v885
        %v4644 = vunpack.c.h.b16 %v885
        %v4645 = vunpack.c.l.b16 %v886
        %v4646 = vunpack.c.h.b16 %v886
        %v4647 = vunpack.c.l.b16 %v887
        %v4648 = vunpack.c.h.b16 %v887
        %v4649 = vunpack.c.l.b16 %v888
        %v4650 = vunpack.c.h.b16 %v888
        %v4651 = vunpack.c.l.b16 %v889
        %v4652 = vunpack.c.h.b16 %v889
        %v4653 = vunpack.c.l.b16 %v890
        %v4654 = vunpack.c.h.b16 %v890
        %v4655 = vunpack.c.l.b16 %v891
        %v4656 = vunpack.c.h.b16 %v891
        %v4657 = vunpack.c.l.b16 %v892
        %v4658 = vunpack.c.h.b16 %v892
        %v4659 = vunpack.c.l.b16 %v893
        %v4660 = vunpack.c.h.b16 %v893
        %v4661 = vunpack.c.l.b16 %v894
        %v4662 = vunpack.c.h.b16 %v894
        %v4663 = vunpack.c.l.b16 %v895
        %v4664 = vunpack.c.h.b16 %v895
        %v4665 = vunpack.c.l.b16 %v896
        %v4666 = vunpack.c.h.b16 %v896
        %v4667 = vunpack.c.l.b16 %v897
        %v4668 = vunpack.c.h.b16 %v897
        %v4669 = vunpack.c.l.b16 %v898
        %v4670 = vunpack.c.h.b16 %v898
        %v4671 = vunpack.c.l.b16 %v899
        %v4672 = vunpack.c.h.b16 %v899
        %v4673 = vunpack.c.l.b16 %v900
        %v4674 = vunpack.c.h.b16 %v900
        %v4675 = vunpack.c.l.b16 %v901
        %v4676 = vunpack.c.h.b16 %v901
        %v4677 = vunpack.c.l.b16 %v902
        %v4678 = vunpack.c.h.b16 %v902
        %v4679 = vunpack.c.l.b16 %v903
        %v4680 = vunpack.c.h.b16 %v903
        %v4681 = vunpack.c.l.b16 %v904
        %v4682 = vunpack.c.h.b16 %v904
        %v4683 = vunpack.c.l.b16 %v905
        %v4684 = vunpack.c.h.b16 %v905
        %v4685 = vunpack.c.l.b16 %v906
        %v4686 = vunpack.c.h.b16 %v906
        %v4687 = vunpack.c.l.b16 %v907
        %v4688 = vunpack.c.h.b16 %v907
        %v4689 = vunpack.c.l.b16 %v908
        %v4690 = vunpack.c.h.b16 %v908
        %v4691 = vunpack.c.l.b16 %v909
        %v4692 = vunpack.c.h.b16 %v909
        %v4693 = vunpack.c.l.b16 %v910
        %v4694 = vunpack.c.h.b16 %v910
        %v4695 = vunpack.c.l.b16 %v911
        %v4696 = vunpack.c.h.b16 %v911
        %v4697 = vunpack.c.l.b16 %v912
        %v4698 = vunpack.c.h.b16 %v912
        %v4699 = vunpack.c.l.b16 %v913
        %v4700 = vunpack.c.h.b16 %v913
        %v4701 = vunpack.c.l.b16 %v914
        %v4702 = vunpack.c.h.b16 %v914
        %v4703 = vunpack.c.l.b16 %v915
        %v4704 = vunpack.c.h.b16 %v915
        %v4705 = vunpack.c.l.b16 %v916
        %v4706 = vunpack.c.h.b16 %v916
        %v4707 = vunpack.c.l.b16 %v917
        %v4708 = vunpack.c.h.b16 %v917
        %v4709 = vunpack.c.l.b16 %v918
        %v4710 = vunpack.c.h.b16 %v918
        %v4711 = vunpack.c.l.b16 %v919
        %v4712 = vunpack.c.h.b16 %v919
        %v4713 = vunpack.c.l.b16 %v920
        %v4714 = vunpack.c.h.b16 %v920
        %v4715 = vunpack.c.l.b16 %v921
        %v4716 = vunpack.c.h.b16 %v921
        %v4717 = vunpack.c.l.b16 %v922
        %v4718 = vunpack.c.h.b16 %v922
        %v4719 = vunpack.c.l.b16 %v923
        %v4720 = vunpack.c.h.b16 %v923
        %v4721 = vunpack.c.l.b16 %v924
        %v4722 = vunpack.c.h.b16 %v924
        %v4723 = vunpack.c.l.b16 %v925
        %v4724 = vunpack.c.h.b16 %v925
        %v4725 = vunpack.c.l.b16 %v926
        %v4726 = vunpack.c.h.b16 %v926
        %v4727 = vunpack.c.l.b16 %v927
        %v4728 = vunpack.c.h.b16 %v927
        %v4729 = vunpack.c.l.b16 %v928
        %v4730 = vunpack.c.h.b16 %v928
        %v4731 = vunpack.c.l.b16 %v929
        %v4732 = vunpack.c.h.b16 %v929
        %v4733 = vunpack.c.l.b16 %v930
        %v4734 = vunpack.c.h.b16 %v930
        %v4735 = vunpack.c.l.b16 %v931
        %v4736 = vunpack.c.h.b16 %v931
        %v4737 = vunpack.c.l.b16 %v932
        %v4738 = vunpack.c.h.b16 %v932
        %v4739 = vunpack.c.l.b16 %v933
        %v4740 = vunpack.c.h.b16 %v933
        %v4741 = vunpack.c.l.b16 %v934
        %v4742 = vunpack.c.h.b16 %v934
        %v4743 = vunpack.c.l.b16 %v935
        %v4744 = vunpack.c.h.b16 %v935
        %v4745 = vunpack.c.l.b16 %v936
        %v4746 = vunpack.c.h.b16 %v936
        %v4747 = vunpack.c.l.b16 %v937
        %v4748 = vunpack.c.h.b16 %v937
        %v4749 = vunpack.c.l.b16 %v938
        %v4750 = vunpack.c.h.b16 %v938
        %v4751 = vunpack.c.l.b16 %v939
        %v4752 = vunpack.c.h.b16 %v939
        %v4753 = vunpack.c.l.b16 %v940
        %v4754 = vunpack.c.h.b16 %v940
        %v4755 = vunpack.c.l.b16 %v941
        %v4756 = vunpack.c.h.b16 %v941
        %v4757 = vunpack.c.l.b16 %v942
        %v4758 = vunpack.c.h.b16 %v942
        %v4759 = vunpack.c.l.b16 %v943
        %v4760 = vunpack.c.h.b16 %v943
        %v4761 = vunpack.c.l.b16 %v944
        %v4762 = vunpack.c.h.b16 %v944
        %v4763 = vunpack.c.l.b16 %v945
        %v4764 = vunpack.c.h.b16 %v945
        %v4765 = vunpack.c.l.b16 %v946
        %v4766 = vunpack.c.h.b16 %v946
        %v4767 = vunpack.c.l.b16 %v947
        %v4768 = vunpack.c.h.b16 %v947
        %v4769 = vunpack.c.l.b16 %v948
        %v4770 = vunpack.c.h.b16 %v948
        %v4771 = vunpack.c.l.b16 %v949
        %v4772 = vunpack.c.h.b16 %v949
        %v4773 = vunpack.c.l.b16 %v950
        %v4774 = vunpack.c.h.b16 %v950
        %v4775 = vunpack.c.l.b16 %v951
        %v4776 = vunpack.c.h.b16 %v951
        %v4777 = vunpack.c.l.b16 %v952
        %v4778 = vunpack.c.h.b16 %v952
        %v4779 = vunpack.c.l.b16 %v953
        %v4780 = vunpack.c.h.b16 %v953
        %v4781 = vunpack.c.l.b16 %v954
        %v4782 = vunpack.c.h.b16 %v954
        %v4783 = vunpack.c.l.b16 %v955
        %v4784 = vunpack.c.h.b16 %v955
        %v4785 = vunpack.c.l.b16 %v956
        %v4786 = vunpack.c.h.b16 %v956
        %v4787 = vunpack.c.l.b16 %v957
        %v4788 = vunpack.c.h.b16 %v957
        %v4789 = vunpack.c.l.b16 %v958
        %v4790 = vunpack.c.h.b16 %v958
        %v4791 = vunpack.c.l.b16 %v959
        %v4792 = vunpack.c.h.b16 %v959
        %v4793 = vunpack.c.l.b16 %v960
        %v4794 = vunpack.c.h.b16 %v960
        %v4795 = vunpack.c.l.b16 %v961
        %v4796 = vunpack.c.h.b16 %v961
        %v4797 = vunpack.c.l.b16 %v962
        %v4798 = vunpack.c.h.b16 %v962
        %v4799 = vunpack.c.l.b16 %v963
        %v4800 = vunpack.c.h.b16 %v963
        %v4801 = vunpack.c.l.b16 %v964
        %v4802 = vunpack.c.h.b16 %v964
        %v4803 = vunpack.c.l.b16 %v965
        %v4804 = vunpack.c.h.b16 %v965
        %v4805 = vunpack.c.l.b16 %v966
        %v4806 = vunpack.c.h.b16 %v966
        %v4807 = vunpack.c.l.b16 %v967
        %v4808 = vunpack.c.h.b16 %v967
        %v4809 = vunpack.c.l.b16 %v968
        %v4810 = vunpack.c.h.b16 %v968
        %v4811 = vunpack.c.l.b16 %v969
        %v4812 = vunpack.c.h.b16 %v969
        %v4813 = vunpack.c.l.b16 %v970
        %v4814 = vunpack.c.h.b16 %v970
        %v4815 = vunpack.c.l.b16 %v971
        %v4816 = vunpack.c.h.b16 %v971
        %v4817 = vunpack.c.l.b16 %v972
        %v4818 = vunpack.c.h.b16 %v972
        %v4819 = vunpack.c.l.b16 %v973
        %v4820 = vunpack.c.h.b16 %v973
        %v4821 = vunpack.c.l.b16 %v974
        %v4822 = vunpack.c.h.b16 %v974
        %v4823 = vunpack.c.l.b16 %v975
        %v4824 = vunpack.c.h.b16 %v975
        %v4825 = vunpack.c.l.b16 %v976
        %v4826 = vunpack.c.h.b16 %v976
        %v4827 = vunpack.c.l.b16 %v977
        %v4828 = vunpack.c.h.b16 %v977
        %v4829 = vunpack.c.l.b16 %v978
        %v4830 = vunpack.c.h.b16 %v978
        %v4831 = vunpack.c.l.b16 %v979
        %v4832 = vunpack.c.h.b16 %v979
        %v4833 = vunpack.c.l.b16 %v980
        %v4834 = vunpack.c.h.b16 %v980
        %v4835 = vunpack.c.l.b16 %v981
        %v4836 = vunpack.c.h.b16 %v981
        %v4837 = vunpack.c.l.b16 %v982
        %v4838 = vunpack.c.h.b16 %v982
        %v4839 = vunpack.c.l.b16 %v983
        %v4840 = vunpack.c.h.b16 %v983
        %v4841 = vunpack.c.l.b16 %v984
        %v4842 = vunpack.c.h.b16 %v984
        %v4843 = vunpack.c.l.b16 %v985
        %v4844 = vunpack.c.h.b16 %v985
        %v4845 = vunpack.c.l.b16 %v986
        %v4846 = vunpack.c.h.b16 %v986
        %v4847 = vunpack.c.l.b16 %v987
        %v4848 = vunpack.c.h.b16 %v987
        %v4849 = vunpack.c.l.b16 %v988
        %v4850 = vunpack.c.h.b16 %v988
        %v4851 = vunpack.c.l.b16 %v989
        %v4852 = vunpack.c.h.b16 %v989
        %v4853 = vunpack.c.l.b16 %v990
        %v4854 = vunpack.c.h.b16 %v990
        %v4855 = vunpack.c.l.b16 %v991
        %v4856 = vunpack.c.h.b16 %v991
        %v4857 = vunpack.c.l.b16 %v992
        %v4858 = vunpack.c.h.b16 %v992
        %v4859 = vunpack.c.l.b16 %v993
        %v4860 = vunpack.c.h.b16 %v993
        %v4861 = vunpack.c.l.b16 %v994
        %v4862 = vunpack.c.h.b16 %v994
        %v4863 = vunpack.c.l.b16 %v995
        %v4864 = vunpack.c.h.b16 %v995
        %v4865 = vunpack.c.l.b16 %v996
        %v4866 = vunpack.c.h.b16 %v996
        %v4867 = vunpack.c.l.b16 %v997
        %v4868 = vunpack.c.h.b16 %v997
        %v4869 = vunpack.c.l.b16 %v998
        %v4870 = vunpack.c.h.b16 %v998
        %v4871 = vunpack.c.l.b16 %v999
        %v4872 = vunpack.c.h.b16 %v999
        %v4873 = vunpack.c.l.b16 %v1000
        %v4874 = vunpack.c.h.b16 %v1000
        %v4875 = vunpack.c.l.b16 %v1001
        %v4876 = vunpack.c.h.b16 %v1001
        %v4877 = vunpack.c.l.b16 %v1002
        %v4878 = vunpack.c.h.b16 %v1002
        %v4879 = vunpack.c.l.b16 %v1003
        %v4880 = vunpack.c.h.b16 %v1003
        %v4881 = vunpack.c.l.b16 %v1004
        %v4882 = vunpack.c.h.b16 %v1004
        %v4883 = vunpack.c.l.b16 %v1005
        %v4884 = vunpack.c.h.b16 %v1005
        %v4885 = vunpack.c.l.b16 %v1006
        %v4886 = vunpack.c.h.b16 %v1006
        %v4887 = vunpack.c.l.b16 %v1007
        %v4888 = vunpack.c.h.b16 %v1007
        %v4889 = vunpack.c.l.b16 %v1008
        %v4890 = vunpack.c.h.b16 %v1008
        %v4891 = vunpack.c.l.b16 %v1009
        %v4892 = vunpack.c.h.b16 %v1009
        %v4893 = vunpack.c.l.b16 %v1010
        %v4894 = vunpack.c.h.b16 %v1010
        %v4895 = vunpack.c.l.b16 %v1011
        %v4896 = vunpack.c.h.b16 %v1011
        %v4897 = vunpack.c.l.b16 %v1012
        %v4898 = vunpack.c.h.b16 %v1012
        %v4899 = vunpack.c.l.b16 %v1013
        %v4900 = vunpack.c.h.b16 %v1013
        %v4901 = vunpack.c.l.b16 %v1014
        %v4902 = vunpack.c.h.b16 %v1014
        %v4903 = vunpack.c.l.b16 %v1015
        %v4904 = vunpack.c.h.b16 %v1015
        %v4905 = vunpack.c.l.b16 %v1016
        %v4906 = vunpack.c.h.b16 %v1016
        %v4907 = vunpack.c.l.b16 %v1017
        %v4908 = vunpack.c.h.b16 %v1017
        %v4909 = vunpack.c.l.b16 %v1018
        %v4910 = vunpack.c.h.b16 %v1018
        %v4911 = vunpack.c.l.b16 %v1019
        %v4912 = vunpack.c.h.b16 %v1019
        %v4913 = vunpack.c.l.b16 %v1020
        %v4914 = vunpack.c.h.b16 %v1020
        %v4915 = vunpack.c.l.b16 %v1021
        %v4916 = vunpack.c.h.b16 %v1021
        %v4917 = vunpack.c.l.b16 %v1022
        %v4918 = vunpack.c.h.b16 %v1022
        %v4919 = vunpack.c.l.b16 %v1023
        %v4920 = vunpack.c.h.b16 %v1023
        %v4921 = vunpack.c.l.b16 %v1024
        %v4922 = vunpack.c.h.b16 %v1024
        %v4923 = vunpack.c.l.b16 %v1025
        %v4924 = vunpack.c.h.b16 %v1025
        %v4925 = vunpack.c.l.b16 %v1026
        %v4926 = vunpack.c.h.b16 %v1026
        %v4927 = vunpack.c.l.b16 %v1027
        %v4928 = vunpack.c.h.b16 %v1027
        %v4929 = vunpack.c.l.b16 %v1028
        %v4930 = vunpack.c.h.b16 %v1028
        %v4931 = vunpack.c.l.b16 %v1029
        %v4932 = vunpack.c.h.b16 %v1029
        %v4933 = vunpack.c.l.b16 %v1030
        %v4934 = vunpack.c.h.b16 %v1030
        %v4935 = vunpack.c.l.b16 %v1031
        %v4936 = vunpack.c.h.b16 %v1031
        %v4937 = vunpack.c.l.b16 %v1032
        %v4938 = vunpack.c.h.b16 %v1032
        %v4939 = vunpack.c.l.b16 %v1033
        %v4940 = vunpack.c.h.b16 %v1033
        %v4941 = vunpack.c.l.b16 %v1034
        %v4942 = vunpack.c.h.b16 %v1034
        %v4943 = vunpack.c.l.b16 %v1035
        %v4944 = vunpack.c.h.b16 %v1035
        %v4945 = vunpack.c.l.b16 %v1036
        %v4946 = vunpack.c.h.b16 %v1036
        %v4947 = vunpack.c.l.b16 %v1037
        %v4948 = vunpack.c.h.b16 %v1037
        %v4949 = vunpack.c.l.b16 %v1038
        %v4950 = vunpack.c.h.b16 %v1038
        %v4951 = vunpack.c.l.b16 %v1039
        %v4952 = vunpack.c.h.b16 %v1039
        %v4953 = vunpack.c.l.b16 %v1040
        %v4954 = vunpack.c.h.b16 %v1040
        %v4955 = vunpack.c.l.b16 %v1041
        %v4956 = vunpack.c.h.b16 %v1041
        %v4957 = vunpack.c.l.b16 %v1042
        %v4958 = vunpack.c.h.b16 %v1042
        %v4959 = vunpack.c.l.b16 %v1043
        %v4960 = vunpack.c.h.b16 %v1043
        %v4961 = vunpack.c.l.b16 %v1044
        %v4962 = vunpack.c.h.b16 %v1044
        %v4963 = vunpack.c.l.b16 %v1045
        %v4964 = vunpack.c.h.b16 %v1045
        %v4965 = vunpack.c.l.b16 %v1046
        %v4966 = vunpack.c.h.b16 %v1046
        %v4967 = vunpack.c.l.b16 %v1047
        %v4968 = vunpack.c.h.b16 %v1047
        %v4969 = vunpack.c.l.b16 %v1048
        %v4970 = vunpack.c.h.b16 %v1048
        %v4971 = vunpack.c.l.b16 %v1049
        %v4972 = vunpack.c.h.b16 %v1049
        %v4973 = vunpack.c.l.b16 %v1050
        %v4974 = vunpack.c.h.b16 %v1050
        %v4975 = vunpack.c.l.b16 %v1051
        %v4976 = vunpack.c.h.b16 %v1051
        %v4977 = vunpack.c.l.b16 %v1052
        %v4978 = vunpack.c.h.b16 %v1052
        %v4979 = vunpack.c.l.b16 %v1053
        %v4980 = vunpack.c.h.b16 %v1053
        %v4981 = vunpack.c.l.b16 %v1054
        %v4982 = vunpack.c.h.b16 %v1054
        %v4983 = vunpack.c.l.b16 %v1055
        %v4984 = vunpack.c.h.b16 %v1055
        %v4985 = vunpack.c.l.b16 %v1056
        %v4986 = vunpack.c.h.b16 %v1056
        %v4987 = vunpack.c.l.b16 %v1057
        %v4988 = vunpack.c.h.b16 %v1057
        %v4989 = vunpack.c.l.b16 %v1058
        %v4990 = vunpack.c.h.b16 %v1058
        %v4991 = vunpack.c.l.b16 %v1059
        %v4992 = vunpack.c.h.b16 %v1059
        %v4993 = vunpack.c.l.b16 %v1060
        %v4994 = vunpack.c.h.b16 %v1060
        %v4995 = vunpack.c.l.b16 %v1061
        %v4996 = vunpack.c.h.b16 %v1061
        %v4997 = vunpack.c.l.b16 %v1062
        %v4998 = vunpack.c.h.b16 %v1062
        %v4999 = vunpack.c.l.b16 %v1063
        %v5000 = vunpack.c.h.b16 %v1063
        %v5001 = vunpack.c.l.b16 %v1064
        %v5002 = vunpack.c.h.b16 %v1064
        %v5003 = vunpack.c.l.b16 %v1065
        %v5004 = vunpack.c.h.b16 %v1065
        %v5005 = vunpack.c.l.b16 %v1066
        %v5006 = vunpack.c.h.b16 %v1066
        %v5007 = vunpack.c.l.b16 %v1067
        %v5008 = vunpack.c.h.b16 %v1067
        %v5009 = vunpack.c.l.b16 %v1068
        %v5010 = vunpack.c.h.b16 %v1068
        %v5011 = vunpack.c.l.b16 %v1069
        %v5012 = vunpack.c.h.b16 %v1069
        %v5013 = vunpack.c.l.b16 %v1070
        %v5014 = vunpack.c.h.b16 %v1070
        %v5015 = vunpack.c.l.b16 %v1071
        %v5016 = vunpack.c.h.b16 %v1071
        %v5017 = vunpack.c.l.b16 %v1072
        %v5018 = vunpack.c.h.b16 %v1072
        %v5019 = vunpack.c.l.b16 %v1073
        %v5020 = vunpack.c.h.b16 %v1073
        %v5021 = vunpack.c.l.b16 %v1074
        %v5022 = vunpack.c.h.b16 %v1074
        %v5023 = vunpack.c.l.b16 %v1075
        %v5024 = vunpack.c.h.b16 %v1075
        %v5025 = vunpack.c.l.b16 %v1076
        %v5026 = vunpack.c.h.b16 %v1076
        %v5027 = vunpack.c.l.b16 %v1077
        %v5028 = vunpack.c.h.b16 %v1077
        %v5029 = vunpack.c.l.b16 %v1078
        %v5030 = vunpack.c.h.b16 %v1078
        %v5031 = vunpack.c.l.b16 %v1079
        %v5032 = vunpack.c.h.b16 %v1079
        %v5033 = vunpack.c.l.b16 %v1080
        %v5034 = vunpack.c.h.b16 %v1080
        %v5035 = vunpack.c.l.b16 %v1081
        %v5036 = vunpack.c.h.b16 %v1081
        %v5037 = vunpack.c.l.b16 %v1082
        %v5038 = vunpack.c.h.b16 %v1082
        %v5039 = vunpack.c.l.b16 %v1083
        %v5040 = vunpack.c.h.b16 %v1083
        %v5041 = vunpack.c.l.b16 %v1084
        %v5042 = vunpack.c.h.b16 %v1084
        %v5043 = vunpack.c.l.b16 %v1085
        %v5044 = vunpack.c.h.b16 %v1085
        %v5045 = vunpack.c.l.b16 %v1086
        %v5046 = vunpack.c.h.b16 %v1086
        %v5047 = vunpack.c.l.b16 %v1087
        %v5048 = vunpack.c.h.b16 %v1087
        %v5049 = vunpack.c.l.b16 %v1088
        %v5050 = vunpack.c.h.b16 %v1088
        %v5051 = vunpack.c.l.b16 %v1089
        %v5052 = vunpack.c.h.b16 %v1089
        %v5053 = vunpack.c.l.b16 %v1090
        %v5054 = vunpack.c.h.b16 %v1090
        %v5055 = vunpack.c.l.b16 %v1091
        %v5056 = vunpack.c.h.b16 %v1091
        %v5057 = vunpack.c.l.b16 %v1092
        %v5058 = vunpack.c.h.b16 %v1092
        %v5059 = vunpack.c.l.b16 %v1093
        %v5060 = vunpack.c.h.b16 %v1093
        %v5061 = vunpack.c.l.b16 %v1094
        %v5062 = vunpack.c.h.b16 %v1094
        %v5063 = vunpack.c.l.b16 %v1095
        %v5064 = vunpack.c.h.b16 %v1095
        %v5065 = vunpack.c.l.b16 %v1096
        %v5066 = vunpack.c.h.b16 %v1096
        %v5067 = vunpack.c.l.b16 %v1097
        %v5068 = vunpack.c.h.b16 %v1097
        %v5069 = vunpack.c.l.b16 %v1098
        %v5070 = vunpack.c.h.b16 %v1098
        %v5071 = vunpack.c.l.b16 %v1099
        %v5072 = vunpack.c.h.b16 %v1099
        %v5073 = vunpack.c.l.b16 %v1100
        %v5074 = vunpack.c.h.b16 %v1100
        %v5075 = vunpack.c.l.b16 %v1101
        %v5076 = vunpack.c.h.b16 %v1101
        %v5077 = vunpack.c.l.b16 %v1102
        %v5078 = vunpack.c.h.b16 %v1102
        %v5079 = vunpack.c.l.b16 %v1103
        %v5080 = vunpack.c.h.b16 %v1103
        %v5081 = vunpack.c.l.b16 %v1104
        %v5082 = vunpack.c.h.b16 %v1104
        %v5083 = vunpack.c.l.b16 %v1105
        %v5084 = vunpack.c.h.b16 %v1105
        %v5085 = vunpack.c.l.b16 %v1106
        %v5086 = vunpack.c.h.b16 %v1106
        %v5087 = vunpack.c.l.b16 %v1107
        %v5088 = vunpack.c.h.b16 %v1107
        %v5089 = vunpack.c.l.b16 %v1108
        %v5090 = vunpack.c.h.b16 %v1108
        %v5091 = vunpack.c.l.b16 %v1109
        %v5092 = vunpack.c.h.b16 %v1109
        %v5093 = vunpack.c.l.b16 %v1110
        %v5094 = vunpack.c.h.b16 %v1110
        %v5095 = vunpack.c.l.b16 %v1111
        %v5096 = vunpack.c.h.b16 %v1111
        %v5097 = vunpack.c.l.b16 %v1112
        %v5098 = vunpack.c.h.b16 %v1112
        %v5099 = vunpack.c.l.b16 %v1113
        %v5100 = vunpack.c.h.b16 %v1113
        %v5101 = vunpack.c.l.b16 %v1114
        %v5102 = vunpack.c.h.b16 %v1114
        %v5103 = vunpack.c.l.b16 %v1115
        %v5104 = vunpack.c.h.b16 %v1115
        %v5105 = vunpack.c.l.b16 %v1116
        %v5106 = vunpack.c.h.b16 %v1116
        %v5107 = vunpack.c.l.b16 %v1117
        %v5108 = vunpack.c.h.b16 %v1117
        %v5109 = vunpack.c.l.b16 %v1118
        %v5110 = vunpack.c.h.b16 %v1118
        %v5111 = vunpack.c.l.b16 %v1119
        %v5112 = vunpack.c.h.b16 %v1119
        %v5113 = vunpack.c.l.b16 %v1120
        %v5114 = vunpack.c.h.b16 %v1120
        %v5115 = vunpack.c.l.b16 %v1121
        %v5116 = vunpack.c.h.b16 %v1121
        %v5117 = vunpack.c.l.b16 %v1122
        %v5118 = vunpack.c.h.b16 %v1122
        %v5119 = vunpack.c.l.b16 %v1123
        %v5120 = vunpack.c.h.b16 %v1123
        %v5121 = vunpack.c.l.b16 %v1124
        %v5122 = vunpack.c.h.b16 %v1124
        %v5123 = vunpack.c.l.b16 %v1125
        %v5124 = vunpack.c.h.b16 %v1125
        %v5125 = vunpack.c.l.b16 %v1126
        %v5126 = vunpack.c.h.b16 %v1126
        %v5127 = vunpack.c.l.b16 %v1127
        %v5128 = vunpack.c.h.b16 %v1127
        %v5129 = vunpack.c.l.b16 %v1128
        %v5130 = vunpack.c.h.b16 %v1128
        %v5131 = vunpack.c.l.b16 %v1129
        %v5132 = vunpack.c.h.b16 %v1129
        %v5133 = vunpack.c.l.b16 %v1130
        %v5134 = vunpack.c.h.b16 %v1130
        %v5135 = vunpack.c.l.b16 %v1131
        %v5136 = vunpack.c.h.b16 %v1131
        %v5137 = vunpack.c.l.b16 %v1132
        %v5138 = vunpack.c.h.b16 %v1132
        %v5139 = vunpack.c.l.b16 %v1133
        %v5140 = vunpack.c.h.b16 %v1133
        %v5141 = vunpack.c.l.b16 %v1134
        %v5142 = vunpack.c.h.b16 %v1134
        %v5143 = vunpack.c.l.b16 %v1135
        %v5144 = vunpack.c.h.b16 %v1135
        %v5145 = vunpack.c.l.b16 %v1136
        %v5146 = vunpack.c.h.b16 %v1136
        %v5147 = vunpack.c.l.b16 %v1137
        %v5148 = vunpack.c.h.b16 %v1137
        %v5149 = vunpack.c.l.b16 %v1138
        %v5150 = vunpack.c.h.b16 %v1138
        %v5151 = vunpack.c.l.b16 %v1139
        %v5152 = vunpack.c.h.b16 %v1139
        %v5153 = vunpack.c.l.b16 %v1140
        %v5154 = vunpack.c.h.b16 %v1140
        %v5155 = vunpack.c.l.b16 %v1141
        %v5156 = vunpack.c.h.b16 %v1141
        %v5157 = vunpack.c.l.b16 %v1142
        %v5158 = vunpack.c.h.b16 %v1142
        %v5159 = vunpack.c.l.b16 %v1143
        %v5160 = vunpack.c.h.b16 %v1143
        %v5161 = vunpack.c.l.b16 %v1144
        %v5162 = vunpack.c.h.b16 %v1144
        %v5163 = vunpack.c.l.b16 %v1145
        %v5164 = vunpack.c.h.b16 %v1145
        %v5165 = vunpack.c.l.b16 %v1146
        %v5166 = vunpack.c.h.b16 %v1146
        %v5167 = vunpack.c.l.b16 %v1147
        %v5168 = vunpack.c.h.b16 %v1147
        %v5169 = vunpack.c.l.b16 %v1148
        %v5170 = vunpack.c.h.b16 %v1148
        %v5171 = vunpack.c.l.b16 %v1149
        %v5172 = vunpack.c.h.b16 %v1149
        %v5173 = vunpack.c.l.b16 %v1150
        %v5174 = vunpack.c.h.b16 %v1150
        %v5175 = vunpack.c.l.b16 %v1151
        %v5176 = vunpack.c.h.b16 %v1151
        %v5177 = vunpack.c.l.b16 %v1152
        %v5178 = vunpack.c.h.b16 %v1152
        %v5179 = vunpack.c.l.b16 %v1153
        %v5180 = vunpack.c.h.b16 %v1153
        %v5181 = vunpack.c.l.b16 %v1154
        %v5182 = vunpack.c.h.b16 %v1154
        %v5183 = vunpack.c.l.b16 %v1155
        %v5184 = vunpack.c.h.b16 %v1155
        %v5185 = vunpack.c.l.b16 %v1156
        %v5186 = vunpack.c.h.b16 %v1156
        %v5187 = vunpack.c.l.b16 %v1157
        %v5188 = vunpack.c.h.b16 %v1157
        %v5189 = vunpack.c.l.b16 %v1158
        %v5190 = vunpack.c.h.b16 %v1158
        %v5191 = vunpack.c.l.b16 %v1159
        %v5192 = vunpack.c.h.b16 %v1159
        %v5193 = vunpack.c.l.b16 %v1160
        %v5194 = vunpack.c.h.b16 %v1160
        %v5195 = vunpack.c.l.b16 %v1161
        %v5196 = vunpack.c.h.b16 %v1161
        %v5197 = vunpack.c.l.b16 %v1162
        %v5198 = vunpack.c.h.b16 %v1162
        %v5199 = vunpack.c.l.b16 %v1163
        %v5200 = vunpack.c.h.b16 %v1163
        %v5201 = vunpack.c.l.b16 %v1164
        %v5202 = vunpack.c.h.b16 %v1164
        %v5203 = vunpack.c.l.b16 %v1165
        %v5204 = vunpack.c.h.b16 %v1165
        %v5205 = vunpack.c.l.b16 %v1166
        %v5206 = vunpack.c.h.b16 %v1166
        %v5207 = vunpack.c.l.b16 %v1167
        %v5208 = vunpack.c.h.b16 %v1167
        %v5209 = vunpack.c.l.b16 %v1168
        %v5210 = vunpack.c.h.b16 %v1168
        %v5211 = vunpack.c.l.b16 %v1169
        %v5212 = vunpack.c.h.b16 %v1169
        %v5213 = vunpack.c.l.b16 %v1170
        %v5214 = vunpack.c.h.b16 %v1170
        %v5215 = vunpack.c.l.b16 %v1171
        %v5216 = vunpack.c.h.b16 %v1171
        %v5217 = vunpack.c.l.b16 %v1172
        %v5218 = vunpack.c.h.b16 %v1172
        %v5219 = vunpack.c.l.b16 %v1173
        %v5220 = vunpack.c.h.b16 %v1173
        %v5221 = vunpack.c.l.b16 %v1174
        %v5222 = vunpack.c.h.b16 %v1174
        %v5223 = vunpack.c.l.b16 %v1175
        %v5224 = vunpack.c.h.b16 %v1175
        %v5225 = vunpack.c.l.b16 %v1176
        %v5226 = vunpack.c.h.b16 %v1176
        %v5227 = vunpack.c.l.b16 %v1177
        %v5228 = vunpack.c.h.b16 %v1177
        %v5229 = vunpack.c.l.b16 %v1178
        %v5230 = vunpack.c.h.b16 %v1178
        %v5231 = vunpack.c.l.b16 %v1179
        %v5232 = vunpack.c.h.b16 %v1179
        %v5233 = vunpack.c.l.b16 %v1180
        %v5234 = vunpack.c.h.b16 %v1180
        %v5235 = vunpack.c.l.b16 %v1181
        %v5236 = vunpack.c.h.b16 %v1181
        %v5237 = vunpack.c.l.b16 %v1182
        %v5238 = vunpack.c.h.b16 %v1182
        %v5239 = vunpack.c.l.b16 %v1183
        %v5240 = vunpack.c.h.b16 %v1183
        %v5241 = vunpack.c.l.b16 %v1184
        %v5242 = vunpack.c.h.b16 %v1184
        %v5243 = vunpack.c.l.b16 %v1185
        %v5244 = vunpack.c.h.b16 %v1185
        %v5245 = vunpack.c.l.b16 %v1186
        %v5246 = vunpack.c.h.b16 %v1186
        %v5247 = vunpack.c.l.b16 %v1187
        %v5248 = vunpack.c.h.b16 %v1187
        %v5249 = vunpack.c.l.b16 %v1188
        %v5250 = vunpack.c.h.b16 %v1188
        %v5251 = vunpack.c.l.b16 %v1189
        %v5252 = vunpack.c.h.b16 %v1189
        %v5253 = vunpack.c.l.b16 %v1190
        %v5254 = vunpack.c.h.b16 %v1190
        %v5255 = vunpack.c.l.b16 %v1191
        %v5256 = vunpack.c.h.b16 %v1191
        %v5257 = vunpack.c.l.b16 %v1192
        %v5258 = vunpack.c.h.b16 %v1192
        %v5259 = vunpack.c.l.b16 %v1193
        %v5260 = vunpack.c.h.b16 %v1193
        %v5261 = vunpack.c.l.b16 %v1194
        %v5262 = vunpack.c.h.b16 %v1194
        %v5263 = vunpack.c.l.b16 %v1195
        %v5264 = vunpack.c.h.b16 %v1195
        %v5265 = vunpack.c.l.b16 %v1196
        %v5266 = vunpack.c.h.b16 %v1196
        %v5267 = vunpack.c.l.b16 %v1197
        %v5268 = vunpack.c.h.b16 %v1197
        %v5269 = vunpack.c.l.b16 %v1198
        %v5270 = vunpack.c.h.b16 %v1198
        %v5271 = vunpack.c.l.b16 %v1199
        %v5272 = vunpack.c.h.b16 %v1199
        %v5273 = vunpack.c.l.b16 %v1200
        %v5274 = vunpack.c.h.b16 %v1200
        %v5275 = vunpack.c.l.b16 %v1201
        %v5276 = vunpack.c.h.b16 %v1201
        %v5277 = vunpack.c.l.b16 %v1202
        %v5278 = vunpack.c.h.b16 %v1202
        %v5279 = vunpack.c.l.b16 %v1203
        %v5280 = vunpack.c.h.b16 %v1203
        %v5281 = vunpack.c.l.b16 %v1204
        %v5282 = vunpack.c.h.b16 %v1204
        %v5283 = vunpack.c.l.b16 %v1205
        %v5284 = vunpack.c.h.b16 %v1205
        %v5285 = vunpack.c.l.b16 %v1206
        %v5286 = vunpack.c.h.b16 %v1206
        %v5287 = vunpack.c.l.b16 %v1207
        %v5288 = vunpack.c.h.b16 %v1207
        %v5289 = vunpack.c.l.b16 %v1208
        %v5290 = vunpack.c.h.b16 %v1208
        %v5291 = vunpack.c.l.b16 %v1209
        %v5292 = vunpack.c.h.b16 %v1209
        %v5293 = vunpack.c.l.b16 %v1210
        %v5294 = vunpack.c.h.b16 %v1210
        %v5295 = vunpack.c.l.b16 %v1211
        %v5296 = vunpack.c.h.b16 %v1211
        %v5297 = vunpack.c.l.b16 %v1212
        %v5298 = vunpack.c.h.b16 %v1212
        %v5299 = vunpack.c.l.b16 %v1213
        %v5300 = vunpack.c.h.b16 %v1213
        %v5301 = vunpack.c.l.b16 %v1214
        %v5302 = vunpack.c.h.b16 %v1214
        %v5303 = vunpack.c.l.b16 %v1215
        %v5304 = vunpack.c.h.b16 %v1215
        %v5305 = vunpack.c.l.b16 %v1216
        %v5306 = vunpack.c.h.b16 %v1216
        %v5307 = vunpack.c.l.b16 %v1217
        %v5308 = vunpack.c.h.b16 %v1217
        %v5309 = vunpack.c.l.b16 %v1218
        %v5310 = vunpack.c.h.b16 %v1218
        %v5311 = vunpack.c.l.b16 %v1219
        %v5312 = vunpack.c.h.b16 %v1219
        %v5313 = vunpack.c.l.b16 %v1220
        %v5314 = vunpack.c.h.b16 %v1220
        %v5315 = vunpack.c.l.b16 %v1221
        %v5316 = vunpack.c.h.b16 %v1221
        %v5317 = vunpack.c.l.b16 %v1222
        %v5318 = vunpack.c.h.b16 %v1222
        %v5319 = vunpack.c.l.b16 %v1223
        %v5320 = vunpack.c.h.b16 %v1223
        %v5321 = vunpack.c.l.b16 %v1224
        %v5322 = vunpack.c.h.b16 %v1224
        %v5323 = vunpack.c.l.b16 %v1225
        %v5324 = vunpack.c.h.b16 %v1225
        %v5325 = vunpack.c.l.b16 %v1226
        %v5326 = vunpack.c.h.b16 %v1226
        %v5327 = vunpack.c.l.b16 %v1227
        %v5328 = vunpack.c.h.b16 %v1227
        %v5329 = vunpack.c.l.b16 %v1228
        %v5330 = vunpack.c.h.b16 %v1228
        %v5331 = vunpack.c.l.b16 %v1229
        %v5332 = vunpack.c.h.b16 %v1229
        %v5333 = vunpack.c.l.b16 %v1230
        %v5334 = vunpack.c.h.b16 %v1230
        %v5335 = vunpack.c.l.b16 %v1231
        %v5336 = vunpack.c.h.b16 %v1231
        %v5337 = vunpack.c.l.b16 %v1232
        %v5338 = vunpack.c.h.b16 %v1232
        %v5339 = vunpack.c.l.b16 %v1233
        %v5340 = vunpack.c.h.b16 %v1233
        %v5341 = vunpack.c.l.b16 %v1234
        %v5342 = vunpack.c.h.b16 %v1234
        %v5343 = vunpack.c.l.b16 %v1235
        %v5344 = vunpack.c.h.b16 %v1235
        %v5345 = vunpack.c.l.b16 %v1236
        %v5346 = vunpack.c.h.b16 %v1236
        %v5347 = vunpack.c.l.b16 %v1237
        %v5348 = vunpack.c.h.b16 %v1237
        %v5349 = vunpack.c.l.b16 %v1238
        %v5350 = vunpack.c.h.b16 %v1238
        %v5351 = vunpack.c.l.b16 %v1239
        %v5352 = vunpack.c.h.b16 %v1239
        %v5353 = vunpack.c.l.b16 %v1240
        %v5354 = vunpack.c.h.b16 %v1240
        %v5355 = vunpack.c.l.b16 %v1241
        %v5356 = vunpack.c.h.b16 %v1241
        %v5357 = vunpack.c.l.b16 %v1242
        %v5358 = vunpack.c.h.b16 %v1242
        %v5359 = vunpack.c.l.b16 %v1243
        %v5360 = vunpack.c.h.b16 %v1243
        %v5361 = vunpack.c.l.b16 %v1244
        %v5362 = vunpack.c.h.b16 %v1244
        %v5363 = vunpack.c.l.b16 %v1245
        %v5364 = vunpack.c.h.b16 %v1245
        %v5365 = vunpack.c.l.b16 %v1246
        %v5366 = vunpack.c.h.b16 %v1246
        %v5367 = vunpack.c.l.b16 %v1247
        %v5368 = vunpack.c.h.b16 %v1247
        %v5369 = vunpack.c.l.b16 %v1248
        %v5370 = vunpack.c.h.b16 %v1248
        %v5371 = vunpack.c.l.b16 %v1249
        %v5372 = vunpack.c.h.b16 %v1249
        %v5373 = vunpack.c.l.b16 %v1250
        %v5374 = vunpack.c.h.b16 %v1250
        %v5375 = vunpack.c.l.b16 %v1251
        %v5376 = vunpack.c.h.b16 %v1251
        %v5377 = vunpack.c.l.b16 %v1252
        %v5378 = vunpack.c.h.b16 %v1252
        %v5379 = vunpack.c.l.b16 %v1253
        %v5380 = vunpack.c.h.b16 %v1253
        %v5381 = vunpack.c.l.b16 %v1254
        %v5382 = vunpack.c.h.b16 %v1254
        %v5383 = vunpack.c.l.b16 %v1255
        %v5384 = vunpack.c.h.b16 %v1255
        %v5385 = vunpack.c.l.b16 %v1256
        %v5386 = vunpack.c.h.b16 %v1256
        %v5387 = vunpack.c.l.b16 %v1257
        %v5388 = vunpack.c.h.b16 %v1257
        %v5389 = vunpack.c.l.b16 %v1258
        %v5390 = vunpack.c.h.b16 %v1258
        %v5391 = vunpack.c.l.b16 %v1259
        %v5392 = vunpack.c.h.b16 %v1259
        %v5393 = vunpack.c.l.b16 %v1260
        %v5394 = vunpack.c.h.b16 %v1260
        %v5395 = vunpack.c.l.b16 %v1261
        %v5396 = vunpack.c.h.b16 %v1261
        %v5397 = vunpack.c.l.b16 %v1262
        %v5398 = vunpack.c.h.b16 %v1262
        %v5399 = vunpack.c.l.b16 %v1263
        %v5400 = vunpack.c.h.b16 %v1263
        %v5401 = vunpack.c.l.b16 %v1264
        %v5402 = vunpack.c.h.b16 %v1264
        %v5403 = vunpack.c.l.b16 %v1265
        %v5404 = vunpack.c.h.b16 %v1265
        %v5405 = vunpack.c.l.b16 %v1266
        %v5406 = vunpack.c.h.b16 %v1266
        %v5407 = vunpack.c.l.b16 %v1267
        %v5408 = vunpack.c.h.b16 %v1267
        %v5409 = vunpack.c.l.b16 %v1268
        %v5410 = vunpack.c.h.b16 %v1268
        %v5411 = vunpack.c.l.b16 %v1269
        %v5412 = vunpack.c.h.b16 %v1269
        %v5413 = vunpack.c.l.b16 %v1270
        %v5414 = vunpack.c.h.b16 %v1270
        %v5415 = vunpack.c.l.b16 %v1271
        %v5416 = vunpack.c.h.b16 %v1271
        %v5417 = vunpack.c.l.b16 %v1272
        %v5418 = vunpack.c.h.b16 %v1272
        %v5419 = vunpack.c.l.b16 %v1273
        %v5420 = vunpack.c.h.b16 %v1273
        %v5421 = vunpack.c.l.b16 %v1274
        %v5422 = vunpack.c.h.b16 %v1274
        %v5423 = vunpack.c.l.b16 %v1275
        %v5424 = vunpack.c.h.b16 %v1275
        %v5425 = vunpack.c.l.b16 %v1276
        %v5426 = vunpack.c.h.b16 %v1276
        %v5427 = vunpack.c.l.b16 %v1277
        %v5428 = vunpack.c.h.b16 %v1277
        %v5429 = vunpack.c.l.b16 %v1278
        %v5430 = vunpack.c.h.b16 %v1278
        %v5431 = vunpack.c.l.b16 %v1279
        %v5432 = vunpack.c.h.b16 %v1279
        %v5433 = vunpack.c.l.b16 %v1280
        %v5434 = vunpack.c.h.b16 %v1280
        %v5435 = vunpack.c.l.b16 %v1281
        %v5436 = vunpack.c.h.b16 %v1281
        %v5437 = vunpack.c.l.b16 %v1282
        %v5438 = vunpack.c.h.b16 %v1282
        %v5439 = vunpack.c.l.b16 %v1283
        %v5440 = vunpack.c.h.b16 %v1283
        %v5441 = vunpack.c.l.b16 %v1284
        %v5442 = vunpack.c.h.b16 %v1284
        %v5443 = vunpack.c.l.b16 %v1285
        %v5444 = vunpack.c.h.b16 %v1285
        %v5445 = vunpack.c.l.b16 %v1286
        %v5446 = vunpack.c.h.b16 %v1286
        %v5447 = vunpack.c.l.b16 %v1287
        %v5448 = vunpack.c.h.b16 %v1287
        %v5449 = vunpack.c.l.b16 %v1288
        %v5450 = vunpack.c.h.b16 %v1288
        %v5451 = vunpack.c.l.b16 %v1289
        %v5452 = vunpack.c.h.b16 %v1289
        %v5453 = vunpack.c.l.b16 %v1290
        %v5454 = vunpack.c.h.b16 %v1290
        %v5455 = vunpack.c.l.b16 %v1291
        %v5456 = vunpack.c.h.b16 %v1291
        %v5457 = vunpack.c.l.b16 %v1292
        %v5458 = vunpack.c.h.b16 %v1292
        %v5459 = vunpack.c.l.b16 %v1293
        %v5460 = vunpack.c.h.b16 %v1293
        %v5461 = vunpack.c.l.b16 %v1294
        %v5462 = vunpack.c.h.b16 %v1294
        %v5463 = vunpack.c.l.b16 %v1295
        %v5464 = vunpack.c.h.b16 %v1295
        %v5465 = vunpack.c.l.b16 %v1296
        %v5466 = vunpack.c.h.b16 %v1296
        %v5467 = vunpack.c.l.b16 %v1297
        %v5468 = vunpack.c.h.b16 %v1297
        %v5469 = vunpack.c.l.b16 %v1298
        %v5470 = vunpack.c.h.b16 %v1298
        %v5471 = vunpack.c.l.b16 %v1299
        %v5472 = vunpack.c.h.b16 %v1299
        %v5473 = vunpack.c.l.b16 %v1300
        %v5474 = vunpack.c.h.b16 %v1300
        %v5475 = vunpack.c.l.b16 %v1301
        %v5476 = vunpack.c.h.b16 %v1301
        %v5477 = vunpack.c.l.b16 %v1302
        %v5478 = vunpack.c.h.b16 %v1302
        %v5479 = vunpack.c.l.b16 %v1303
        %v5480 = vunpack.c.h.b16 %v1303
        %v5481 = vunpack.c.l.b16 %v1304
        %v5482 = vunpack.c.h.b16 %v1304
        %v5483 = vunpack.c.l.b16 %v1305
        %v5484 = vunpack.c.h.b16 %v1305
        %v5485 = vunpack.c.l.b16 %v1306
        %v5486 = vunpack.c.h.b16 %v1306
        %v5487 = vunpack.c.l.b16 %v1307
        %v5488 = vunpack.c.h.b16 %v1307
        %v5489 = vunpack.c.l.b16 %v1308
        %v5490 = vunpack.c.h.b16 %v1308
        %v5491 = vunpack.c.l.b16 %v1309
        %v5492 = vunpack.c.h.b16 %v1309
        %v5493 = vunpack.c.l.b16 %v1310
        %v5494 = vunpack.c.h.b16 %v1310
        %v5495 = vunpack.c.l.b16 %v1311
        %v5496 = vunpack.c.h.b16 %v1311
        %v5497 = vunpack.c.l.b16 %v1312
        %v5498 = vunpack.c.h.b16 %v1312
        %v5499 = vunpack.c.l.b16 %v1313
        %v5500 = vunpack.c.h.b16 %v1313
        %v5501 = vunpack.c.l.b16 %v1314
        %v5502 = vunpack.c.h.b16 %v1314
        %v5503 = vunpack.c.l.b16 %v1315
        %v5504 = vunpack.c.h.b16 %v1315
        %v5505 = vunpack.c.l.b16 %v1316
        %v5506 = vunpack.c.h.b16 %v1316
        %v5507 = vunpack.c.l.b16 %v1317
        %v5508 = vunpack.c.h.b16 %v1317
        %v5509 = vunpack.c.l.b16 %v1318
        %v5510 = vunpack.c.h.b16 %v1318
        %v5511 = vunpack.c.l.b16 %v1319
        %v5512 = vunpack.c.h.b16 %v1319
        %v5513 = vunpack.c.l.b16 %v1320
        %v5514 = vunpack.c.h.b16 %v1320
        %v5515 = vunpack.c.l.b16 %v1321
        %v5516 = vunpack.c.h.b16 %v1321
        %v5517 = vunpack.c.l.b16 %v1322
        %v5518 = vunpack.c.h.b16 %v1322
        %v5519 = vunpack.c.l.b16 %v1323
        %v5520 = vunpack.c.h.b16 %v1323
        %v5521 = vunpack.c.l.b16 %v1324
        %v5522 = vunpack.c.h.b16 %v1324
        %v5523 = vunpack.c.l.b16 %v1325
        %v5524 = vunpack.c.h.b16 %v1325
        %v5525 = vunpack.c.l.b16 %v1326
        %v5526 = vunpack.c.h.b16 %v1326
        %v5527 = vunpack.c.l.b16 %v1327
        %v5528 = vunpack.c.h.b16 %v1327
        %v5529 = vunpack.c.l.b16 %v1328
        %v5530 = vunpack.c.h.b16 %v1328
        %v5531 = vunpack.c.l.b16 %v1329
        %v5532 = vunpack.c.h.b16 %v1329
        %v5533 = vunpack.c.l.b16 %v1330
        %v5534 = vunpack.c.h.b16 %v1330
        %v5535 = vunpack.c.l.b16 %v1331
        %v5536 = vunpack.c.h.b16 %v1331
        %v5537 = vunpack.c.l.b16 %v1332
        %v5538 = vunpack.c.h.b16 %v1332
        %v5539 = vunpack.c.l.b16 %v1333
        %v5540 = vunpack.c.h.b16 %v1333
        %v5541 = vunpack.c.l.b16 %v1334
        %v5542 = vunpack.c.h.b16 %v1334
        %v5543 = vunpack.c.l.b16 %v1335
        %v5544 = vunpack.c.h.b16 %v1335
        %v5545 = vunpack.c.l.b16 %v1336
        %v5546 = vunpack.c.h.b16 %v1336
        %v5547 = vunpack.c.l.b16 %v1337
        %v5548 = vunpack.c.h.b16 %v1337
        %v5549 = vunpack.c.l.b16 %v1338
        %v5550 = vunpack.c.h.b16 %v1338
        %v5551 = vunpack.c.l.b16 %v1339
        %v5552 = vunpack.c.h.b16 %v1339
        %v5553 = vunpack.c.l.b16 %v1340
        %v5554 = vunpack.c.h.b16 %v1340
        %v5555 = vunpack.c.l.b16 %v1341
        %v5556 = vunpack.c.h.b16 %v1341
        %v5557 = vunpack.c.l.b16 %v1342
        %v5558 = vunpack.c.h.b16 %v1342
        %v5559 = vunpack.c.l.b16 %v1343
        %v5560 = vunpack.c.h.b16 %v1343
        %v5561 = vunpack.c.l.b16 %v1344
        %v5562 = vunpack.c.h.b16 %v1344
        %v5563 = vunpack.c.l.b16 %v1345
        %v5564 = vunpack.c.h.b16 %v1345
        %v5565 = vunpack.c.l.b16 %v1346
        %v5566 = vunpack.c.h.b16 %v1346
        %v5567 = vunpack.c.l.b16 %v1347
        %v5568 = vunpack.c.h.b16 %v1347
        %v5569 = vunpack.c.l.b16 %v1348
        %v5570 = vunpack.c.h.b16 %v1348
        %v5571 = vunpack.c.l.b16 %v1349
        %v5572 = vunpack.c.h.b16 %v1349
        %v5573 = vunpack.c.l.b16 %v1350
        %v5574 = vunpack.c.h.b16 %v1350
        %v5575 = vunpack.c.l.b16 %v1351
        %v5576 = vunpack.c.h.b16 %v1351
        %v5577 = vunpack.c.l.b16 %v1352
        %v5578 = vunpack.c.h.b16 %v1352
        %v5579 = vunpack.c.l.b16 %v1353
        %v5580 = vunpack.c.h.b16 %v1353
        %v5581 = vunpack.c.l.b16 %v1354
        %v5582 = vunpack.c.h.b16 %v1354
        %v5583 = vunpack.c.l.b16 %v1355
        %v5584 = vunpack.c.h.b16 %v1355
        %v5585 = vunpack.c.l.b16 %v1356
        %v5586 = vunpack.c.h.b16 %v1356
        %v5587 = vunpack.c.l.b16 %v1357
        %v5588 = vunpack.c.h.b16 %v1357
        %v5589 = vunpack.c.l.b16 %v1358
        %v5590 = vunpack.c.h.b16 %v1358
        %v5591 = vunpack.c.l.b16 %v1359
        %v5592 = vunpack.c.h.b16 %v1359
        %v5593 = vunpack.c.l.b16 %v1360
        %v5594 = vunpack.c.h.b16 %v1360
        %v5595 = vunpack.c.l.b16 %v1361
        %v5596 = vunpack.c.h.b16 %v1361
        %v5597 = vunpack.c.l.b16 %v1362
        %v5598 = vunpack.c.h.b16 %v1362
        %v5599 = vunpack.c.l.b16 %v1363
        %v5600 = vunpack.c.h.b16 %v1363
        %v5601 = vunpack.c.l.b16 %v1364
        %v5602 = vunpack.c.h.b16 %v1364
        %v5603 = vunpack.c.l.b16 %v1365
        %v5604 = vunpack.c.h.b16 %v1365
        %v5605 = vunpack.c.l.b16 %v1366
        %v5606 = vunpack.c.h.b16 %v1366
        %v5607 = vunpack.c.l.b16 %v1367
        %v5608 = vunpack.c.h.b16 %v1367
        %v5609 = vunpack.c.l.b16 %v1368
        %v5610 = vunpack.c.h.b16 %v1368
        %v5611 = vunpack.c.l.b16 %v1369
        %v5612 = vunpack.c.h.b16 %v1369
        %v5613 = vunpack.c.l.b16 %v1370
        %v5614 = vunpack.c.h.b16 %v1370
        %v5615 = vunpack.c.l.b16 %v1371
        %v5616 = vunpack.c.h.b16 %v1371
        %v5617 = vunpack.c.l.b16 %v1372
        %v5618 = vunpack.c.h.b16 %v1372
        %v5619 = vunpack.c.l.b16 %v1373
        %v5620 = vunpack.c.h.b16 %v1373
        %v5621 = vunpack.c.l.b16 %v1374
        %v5622 = vunpack.c.h.b16 %v1374
        %v5623 = vunpack.c.l.b16 %v1375
        %v5624 = vunpack.c.h.b16 %v1375
        %v5625 = vunpack.c.l.b16 %v1376
        %v5626 = vunpack.c.h.b16 %v1376
        %v5627 = vunpack.c.l.b16 %v1377
        %v5628 = vunpack.c.h.b16 %v1377
        %v5629 = vunpack.c.l.b16 %v1378
        %v5630 = vunpack.c.h.b16 %v1378
        %v5631 = vunpack.c.l.b16 %v1379
        %v5632 = vunpack.c.h.b16 %v1379
        %v5633 = vunpack.c.l.b16 %v1380
        %v5634 = vunpack.c.h.b16 %v1380
        %v5635 = vunpack.c.l.b16 %v1381
        %v5636 = vunpack.c.h.b16 %v1381
        %v5637 = vunpack.c.l.b16 %v1382
        %v5638 = vunpack.c.h.b16 %v1382
        %v5639 = vunpack.c.l.b16 %v1383
        %v5640 = vunpack.c.h.b16 %v1383
        %v5641 = vunpack.c.l.b16 %v1384
        %v5642 = vunpack.c.h.b16 %v1384
        %v5643 = vunpack.c.l.b16 %v1385
        %v5644 = vunpack.c.h.b16 %v1385
        %v5645 = vunpack.c.l.b16 %v1386
        %v5646 = vunpack.c.h.b16 %v1386
        %v5647 = vunpack.c.l.b16 %v1387
        %v5648 = vunpack.c.h.b16 %v1387
        %v5649 = vunpack.c.l.b16 %v1388
        %v5650 = vunpack.c.h.b16 %v1388
        %v5651 = vunpack.c.l.b16 %v1389
        %v5652 = vunpack.c.h.b16 %v1389
        %v5653 = vunpack.c.l.b16 %v1390
        %v5654 = vunpack.c.h.b16 %v1390
        %v5655 = vunpack.c.l.b16 %v1391
        %v5656 = vunpack.c.h.b16 %v1391
        %v5657 = vunpack.c.l.b16 %v1392
        %v5658 = vunpack.c.h.b16 %v1392
        %v5659 = vunpack.c.l.b16 %v1393
        %v5660 = vunpack.c.h.b16 %v1393
        %v5661 = vunpack.c.l.b16 %v1394
        %v5662 = vunpack.c.h.b16 %v1394
        %v5663 = vunpack.c.l.b16 %v1395
        %v5664 = vunpack.c.h.b16 %v1395
        %v5665 = vunpack.c.l.b16 %v1396
        %v5666 = vunpack.c.h.b16 %v1396
        %v5667 = vunpack.c.l.b16 %v1397
        %v5668 = vunpack.c.h.b16 %v1397
        %v5669 = vunpack.c.l.b16 %v1398
        %v5670 = vunpack.c.h.b16 %v1398
        %v5671 = vunpack.c.l.b16 %v1399
        %v5672 = vunpack.c.h.b16 %v1399
        %v5673 = vunpack.c.l.b16 %v1400
        %v5674 = vunpack.c.h.b16 %v1400
        %v5675 = vunpack.c.l.b16 %v1401
        %v5676 = vunpack.c.h.b16 %v1401
        %v5677 = vunpack.c.l.b16 %v1402
        %v5678 = vunpack.c.h.b16 %v1402
        %v5679 = vunpack.c.l.b16 %v1403
        %v5680 = vunpack.c.h.b16 %v1403
        %v5681 = vunpack.c.l.b16 %v1404
        %v5682 = vunpack.c.h.b16 %v1404
        %v5683 = vunpack.c.l.b16 %v1405
        %v5684 = vunpack.c.h.b16 %v1405
        %v5685 = vunpack.c.l.b16 %v1406
        %v5686 = vunpack.c.h.b16 %v1406
        %v5687 = vunpack.c.l.b16 %v1407
        %v5688 = vunpack.c.h.b16 %v1407
        %v5689 = vunpack.c.l.b16 %v1408
        %v5690 = vunpack.c.h.b16 %v1408
        %v5691 = vunpack.c.l.b16 %v1409
        %v5692 = vunpack.c.h.b16 %v1409
        %v5693 = vunpack.c.l.b16 %v1410
        %v5694 = vunpack.c.h.b16 %v1410
        %v5695 = vunpack.c.l.b16 %v1411
        %v5696 = vunpack.c.h.b16 %v1411
        %v5697 = vunpack.c.l.b16 %v1412
        %v5698 = vunpack.c.h.b16 %v1412
        %v5699 = vunpack.c.l.b16 %v1413
        %v5700 = vunpack.c.h.b16 %v1413
        %v5701 = vunpack.c.l.b16 %v1414
        %v5702 = vunpack.c.h.b16 %v1414
        %v5703 = vunpack.c.l.b16 %v1415
        %v5704 = vunpack.c.h.b16 %v1415
        %v5705 = vunpack.c.l.b16 %v1416
        %v5706 = vunpack.c.h.b16 %v1416
        %v5707 = vunpack.c.l.b16 %v1417
        %v5708 = vunpack.c.h.b16 %v1417
        %v5709 = vunpack.c.l.b16 %v1418
        %v5710 = vunpack.c.h.b16 %v1418
        %v5711 = vunpack.c.l.b16 %v1419
        %v5712 = vunpack.c.h.b16 %v1419
        %v5713 = vunpack.c.l.b16 %v1420
        %v5714 = vunpack.c.h.b16 %v1420
        %v5715 = vunpack.c.l.b16 %v1421
        %v5716 = vunpack.c.h.b16 %v1421
        %v5717 = vunpack.c.l.b16 %v1422
        %v5718 = vunpack.c.h.b16 %v1422
        %v5719 = vunpack.c.l.b16 %v1423
        %v5720 = vunpack.c.h.b16 %v1423
        %v5721 = vunpack.c.l.b16 %v1424
        %v5722 = vunpack.c.h.b16 %v1424
        %v5723 = vunpack.c.l.b16 %v1425
        %v5724 = vunpack.c.h.b16 %v1425
        %v5725 = vunpack.c.l.b16 %v1426
        %v5726 = vunpack.c.h.b16 %v1426
        %v5727 = vunpack.c.l.b16 %v1427
        %v5728 = vunpack.c.h.b16 %v1427
        %v5729 = vunpack.c.l.b16 %v1428
        %v5730 = vunpack.c.h.b16 %v1428
        %v5731 = vunpack.c.l.b16 %v1429
        %v5732 = vunpack.c.h.b16 %v1429
        %v5733 = vunpack.c.l.b16 %v1430
        %v5734 = vunpack.c.h.b16 %v1430
        %v5735 = vunpack.c.l.b16 %v1431
        %v5736 = vunpack.c.h.b16 %v1431
        %v5737 = vunpack.c.l.b16 %v1432
        %v5738 = vunpack.c.h.b16 %v1432
        %v5739 = vunpack.c.l.b16 %v1433
        %v5740 = vunpack.c.h.b16 %v1433
        %v5741 = vunpack.c.l.b16 %v1434
        %v5742 = vunpack.c.h.b16 %v1434
        %v5743 = vunpack.c.l.b16 %v1435
        %v5744 = vunpack.c.h.b16 %v1435
        %v5745 = vunpack.c.l.b16 %v1436
        %v5746 = vunpack.c.h.b16 %v1436
        %v5747 = vunpack.c.l.b16 %v1437
        %v5748 = vunpack.c.h.b16 %v1437
        %v5749 = vunpack.c.l.b16 %v1438
        %v5750 = vunpack.c.h.b16 %v1438
        %v5751 = vunpack.c.l.b16 %v1439
        %v5752 = vunpack.c.h.b16 %v1439
        %v5753 = vunpack.c.l.b16 %v1440
        %v5754 = vunpack.c.h.b16 %v1440
        %v5755 = vunpack.c.l.b16 %v1441
        %v5756 = vunpack.c.h.b16 %v1441
        %v5757 = vunpack.c.l.b16 %v1442
        %v5758 = vunpack.c.h.b16 %v1442
        %v5759 = vunpack.c.l.b16 %v1443
        %v5760 = vunpack.c.h.b16 %v1443
        %v5761 = vunpack.c.l.b16 %v1444
        %v5762 = vunpack.c.h.b16 %v1444
        %v5763 = vunpack.c.l.b16 %v1445
        %v5764 = vunpack.c.h.b16 %v1445
        %v5765 = vunpack.c.l.b16 %v1446
        %v5766 = vunpack.c.h.b16 %v1446
        %v5767 = vunpack.c.l.b16 %v1447
        %v5768 = vunpack.c.h.b16 %v1447
        %v5769 = vunpack.c.l.b16 %v1448
        %v5770 = vunpack.c.h.b16 %v1448
        %v5771 = vunpack.c.l.b16 %v1449
        %v5772 = vunpack.c.h.b16 %v1449
        %v5773 = vunpack.c.l.b16 %v1450
        %v5774 = vunpack.c.h.b16 %v1450
        %v5775 = vunpack.c.l.b16 %v1451
        %v5776 = vunpack.c.h.b16 %v1451
        %v5777 = vunpack.c.l.b16 %v1452
        %v5778 = vunpack.c.h.b16 %v1452
        %v5779 = vunpack.c.l.b16 %v1453
        %v5780 = vunpack.c.h.b16 %v1453
        %v5781 = vunpack.c.l.b16 %v1454
        %v5782 = vunpack.c.h.b16 %v1454
        %v5783 = vunpack.c.l.b16 %v1455
        %v5784 = vunpack.c.h.b16 %v1455
        %v5785 = vunpack.c.l.b16 %v1456
        %v5786 = vunpack.c.h.b16 %v1456
        %v5787 = vunpack.c.l.b16 %v1457
        %v5788 = vunpack.c.h.b16 %v1457
        %v5789 = vunpack.c.l.b16 %v1458
        %v5790 = vunpack.c.h.b16 %v1458
        %v5791 = vunpack.c.l.b16 %v1459
        %v5792 = vunpack.c.h.b16 %v1459
        %v5793 = vunpack.c.l.b16 %v1460
        %v5794 = vunpack.c.h.b16 %v1460
        %v5795 = vunpack.c.l.b16 %v1461
        %v5796 = vunpack.c.h.b16 %v1461
        %v5797 = vunpack.c.l.b16 %v1462
        %v5798 = vunpack.c.h.b16 %v1462
        %v5799 = vunpack.c.l.b16 %v1463
        %v5800 = vunpack.c.h.b16 %v1463
        %v5801 = vunpack.c.l.b16 %v1464
        %v5802 = vunpack.c.h.b16 %v1464
        %v5803 = vunpack.c.l.b16 %v1465
        %v5804 = vunpack.c.h.b16 %v1465
        %v5805 = vunpack.c.l.b16 %v1466
        %v5806 = vunpack.c.h.b16 %v1466
        %v5807 = vunpack.c.l.b16 %v1467
        %v5808 = vunpack.c.h.b16 %v1467
        %v5809 = vunpack.c.l.b16 %v1468
        %v5810 = vunpack.c.h.b16 %v1468
        %v5811 = vunpack.c.l.b16 %v1469
        %v5812 = vunpack.c.h.b16 %v1469
        %v5813 = vunpack.c.l.b16 %v1470
        %v5814 = vunpack.c.h.b16 %v1470
        %v5815 = vunpack.c.l.b16 %v1471
        %v5816 = vunpack.c.h.b16 %v1471
        %v5817 = vunpack.c.l.b16 %v1472
        %v5818 = vunpack.c.h.b16 %v1472
        %v5819 = vunpack.c.l.b16 %v1473
        %v5820 = vunpack.c.h.b16 %v1473
        %v5821 = vunpack.c.l.b16 %v1474
        %v5822 = vunpack.c.h.b16 %v1474
        %v5823 = vunpack.c.l.b16 %v1475
        %v5824 = vunpack.c.h.b16 %v1475
        %v5825 = vunpack.c.l.b16 %v1476
        %v5826 = vunpack.c.h.b16 %v1476
        %v5827 = vunpack.c.l.b16 %v1477
        %v5828 = vunpack.c.h.b16 %v1477
        %v5829 = vunpack.c.l.b16 %v1478
        %v5830 = vunpack.c.h.b16 %v1478
        %v5831 = vunpack.c.l.b16 %v1479
        %v5832 = vunpack.c.h.b16 %v1479
        %v5833 = vunpack.c.l.b16 %v1480
        %v5834 = vunpack.c.h.b16 %v1480
        %v5835 = vunpack.c.l.b16 %v1481
        %v5836 = vunpack.c.h.b16 %v1481
        %v5837 = vunpack.c.l.b16 %v1482
        %v5838 = vunpack.c.h.b16 %v1482
        %v5839 = vunpack.c.l.b16 %v1483
        %v5840 = vunpack.c.h.b16 %v1483
        %v5841 = vunpack.c.l.b16 %v1484
        %v5842 = vunpack.c.h.b16 %v1484
        %v5843 = vunpack.c.l.b16 %v1485
        %v5844 = vunpack.c.h.b16 %v1485
        %v5845 = vunpack.c.l.b16 %v1486
        %v5846 = vunpack.c.h.b16 %v1486
        %v5847 = vunpack.c.l.b16 %v1487
        %v5848 = vunpack.c.h.b16 %v1487
        %v5849 = vunpack.c.l.b16 %v1488
        %v5850 = vunpack.c.h.b16 %v1488
        %v5851 = vunpack.c.l.b16 %v1489
        %v5852 = vunpack.c.h.b16 %v1489
        %v5853 = vunpack.c.l.b16 %v1490
        %v5854 = vunpack.c.h.b16 %v1490
        %v5855 = vunpack.c.l.b16 %v1491
        %v5856 = vunpack.c.h.b16 %v1491
        %v5857 = vunpack.c.l.b16 %v1492
        %v5858 = vunpack.c.h.b16 %v1492
        %v5859 = vunpack.c.l.b16 %v1493
        %v5860 = vunpack.c.h.b16 %v1493
        %v5861 = vunpack.c.l.b16 %v1494
        %v5862 = vunpack.c.h.b16 %v1494
        %v5863 = vunpack.c.l.b16 %v1495
        %v5864 = vunpack.c.h.b16 %v1495
        %v5865 = vunpack.c.l.b16 %v1496
        %v5866 = vunpack.c.h.b16 %v1496
        %v5867 = vunpack.c.l.b16 %v1497
        %v5868 = vunpack.c.h.b16 %v1497
        %v5869 = vunpack.c.l.b16 %v1498
        %v5870 = vunpack.c.h.b16 %v1498
        %v5871 = vunpack.c.l.b16 %v1499
        %v5872 = vunpack.c.h.b16 %v1499
        %v5873 = vunpack.c.l.b16 %v1500
        %v5874 = vunpack.c.h.b16 %v1500
        %v5875 = vunpack.c.l.b16 %v1501
        %v5876 = vunpack.c.h.b16 %v1501
        %v5877 = vunpack.c.l.b16 %v1502
        %v5878 = vunpack.c.h.b16 %v1502
        %v5879 = vunpack.c.l.b16 %v1503
        %v5880 = vunpack.c.h.b16 %v1503
        %v5881 = vunpack.c.l.b16 %v1504
        %v5882 = vunpack.c.h.b16 %v1504
        %v5883 = vunpack.c.l.b16 %v1505
        %v5884 = vunpack.c.h.b16 %v1505
        %v5885 = vunpack.c.l.b16 %v1506
        %v5886 = vunpack.c.h.b16 %v1506
        %v5887 = vunpack.c.l.b16 %v1507
        %v5888 = vunpack.c.h.b16 %v1507
        %v5889 = vunpack.c.l.b16 %v1508
        %v5890 = vunpack.c.h.b16 %v1508
        %v5891 = vunpack.c.l.b16 %v1509
        %v5892 = vunpack.c.h.b16 %v1509
        %v5893 = vunpack.c.l.b16 %v1510
        %v5894 = vunpack.c.h.b16 %v1510
        %v5895 = vunpack.c.l.b16 %v1511
        %v5896 = vunpack.c.h.b16 %v1511
        %v5897 = vunpack.c.l.b16 %v1512
        %v5898 = vunpack.c.h.b16 %v1512
        %v5899 = vunpack.c.l.b16 %v1513
        %v5900 = vunpack.c.h.b16 %v1513
        %v5901 = vunpack.c.l.b16 %v1514
        %v5902 = vunpack.c.h.b16 %v1514
        %v5903 = vunpack.c.l.b16 %v1515
        %v5904 = vunpack.c.h.b16 %v1515
        %v5905 = vunpack.c.l.b16 %v1516
        %v5906 = vunpack.c.h.b16 %v1516
        %v5907 = vunpack.c.l.b16 %v1517
        %v5908 = vunpack.c.h.b16 %v1517
        %v5909 = vunpack.c.l.b16 %v1518
        %v5910 = vunpack.c.h.b16 %v1518
        %v5911 = vunpack.c.l.b16 %v1519
        %v5912 = vunpack.c.h.b16 %v1519
        %v5913 = vunpack.c.l.b16 %v1520
        %v5914 = vunpack.c.h.b16 %v1520
        %v5915 = vunpack.c.l.b16 %v1521
        %v5916 = vunpack.c.h.b16 %v1521
        %v5917 = vunpack.c.l.b16 %v1522
        %v5918 = vunpack.c.h.b16 %v1522
        %v5919 = vunpack.c.l.b16 %v1523
        %v5920 = vunpack.c.h.b16 %v1523
        %v5921 = vunpack.c.l.b16 %v1524
        %v5922 = vunpack.c.h.b16 %v1524
        %v5923 = vunpack.c.l.b16 %v1525
        %v5924 = vunpack.c.h.b16 %v1525
        %v5925 = vunpack.c.l.b16 %v1526
        %v5926 = vunpack.c.h.b16 %v1526
        %v5927 = vunpack.c.l.b16 %v1527
        %v5928 = vunpack.c.h.b16 %v1527
        %v5929 = vunpack.c.l.b16 %v1528
        %v5930 = vunpack.c.h.b16 %v1528
        %v5931 = vunpack.c.l.b16 %v1529
        %v5932 = vunpack.c.h.b16 %v1529
        %v5933 = vunpack.c.l.b16 %v1530
        %v5934 = vunpack.c.h.b16 %v1530
        %v5935 = vunpack.c.l.b16 %v1531
        %v5936 = vunpack.c.h.b16 %v1531
        %v5937 = vunpack.c.l.b16 %v1532
        %v5938 = vunpack.c.h.b16 %v1532
        %v5939 = vunpack.c.l.b16 %v1533
        %v5940 = vunpack.c.h.b16 %v1533
        %v5941 = vunpack.c.l.b16 %v1534
        %v5942 = vunpack.c.h.b16 %v1534
        %v5943 = vunpack.c.l.b16 %v1535
        %v5944 = vunpack.c.h.b16 %v1535
        %v5945 = vunpack.c.l.b16 %v1536
        %v5946 = vunpack.c.h.b16 %v1536
        %v5947 = vunpack.c.l.b16 %v1537
        %v5948 = vunpack.c.h.b16 %v1537
        %v5949 = vunpack.c.l.b16 %v1538
        %v5950 = vunpack.c.h.b16 %v1538
        %v5951 = vunpack.c.l.b16 %v1539
        %v5952 = vunpack.c.h.b16 %v1539
        %v5953 = vunpack.c.l.b16 %v1540
        %v5954 = vunpack.c.h.b16 %v1540
        %v5955 = vunpack.c.l.b16 %v1541
        %v5956 = vunpack.c.h.b16 %v1541
        %v5957 = vunpack.c.l.b16 %v1542
        %v5958 = vunpack.c.h.b16 %v1542
        %v5959 = vunpack.c.l.b16 %v1543
        %v5960 = vunpack.c.h.b16 %v1543
        %v5961 = vunpack.c.l.b16 %v1544
        %v5962 = vunpack.c.h.b16 %v1544
        %v5963 = vunpack.c.l.b16 %v1545
        %v5964 = vunpack.c.h.b16 %v1545
        %v5965 = vunpack.c.l.b16 %v1546
        %v5966 = vunpack.c.h.b16 %v1546
        %v5967 = vunpack.c.l.b16 %v1547
        %v5968 = vunpack.c.h.b16 %v1547
        %v5969 = vunpack.c.l.b16 %v1548
        %v5970 = vunpack.c.h.b16 %v1548
        %v5971 = vunpack.c.l.b16 %v1549
        %v5972 = vunpack.c.h.b16 %v1549
        %v5973 = vunpack.c.l.b16 %v1550
        %v5974 = vunpack.c.h.b16 %v1550
        %v5975 = vunpack.c.l.b16 %v1551
        %v5976 = vunpack.c.h.b16 %v1551
        %v5977 = vunpack.c.l.b16 %v1552
        %v5978 = vunpack.c.h.b16 %v1552
        %v5979 = vunpack.c.l.b16 %v1553
        %v5980 = vunpack.c.h.b16 %v1553
        %v5981 = vunpack.c.l.b16 %v1554
        %v5982 = vunpack.c.h.b16 %v1554
        %v5983 = vunpack.c.l.b16 %v1555
        %v5984 = vunpack.c.h.b16 %v1555
        %v5985 = vunpack.c.l.b16 %v1556
        %v5986 = vunpack.c.h.b16 %v1556
        %v5987 = vunpack.c.l.b16 %v1557
        %v5988 = vunpack.c.h.b16 %v1557
        %v5989 = vunpack.c.l.b16 %v1558
        %v5990 = vunpack.c.h.b16 %v1558
        %v5991 = vunpack.c.l.b16 %v1559
        %v5992 = vunpack.c.h.b16 %v1559
        %v5993 = vunpack.c.l.b16 %v1560
        %v5994 = vunpack.c.h.b16 %v1560
        %v5995 = vunpack.c.l.b16 %v1561
        %v5996 = vunpack.c.h.b16 %v1561
        %v5997 = vunpack.c.l.b16 %v1562
        %v5998 = vunpack.c.h.b16 %v1562
        %v5999 = vunpack.c.l.b16 %v1563
        %v6000 = vunpack.c.h.b16 %v1563
        %v6001 = vunpack.c.l.b16 %v1564
        %v6002 = vunpack.c.h.b16 %v1564
        %v6003 = vunpack.c.l.b16 %v1565
        %v6004 = vunpack.c.h.b16 %v1565
        %v6005 = vunpack.c.l.b16 %v1566
        %v6006 = vunpack.c.h.b16 %v1566
        %v6007 = vunpack.c.l.b16 %v1567
        %v6008 = vunpack.c.h.b16 %v1567
        %v6009 = vunpack.c.l.b16 %v1568
        %v6010 = vunpack.c.h.b16 %v1568
        %v6011 = vunpack.c.l.b16 %v1569
        %v6012 = vunpack.c.h.b16 %v1569
        %v6013 = vunpack.c.l.b16 %v1570
        %v6014 = vunpack.c.h.b16 %v1570
        %v6015 = vunpack.c.l.b16 %v1571
        %v6016 = vunpack.c.h.b16 %v1571
        %v6017 = vunpack.c.l.b16 %v1572
        %v6018 = vunpack.c.h.b16 %v1572
        %v6019 = vunpack.c.l.b16 %v1573
        %v6020 = vunpack.c.h.b16 %v1573
        %v6021 = vunpack.c.l.b16 %v1574
        %v6022 = vunpack.c.h.b16 %v1574
        %v6023 = vunpack.c.l.b16 %v1575
        %v6024 = vunpack.c.h.b16 %v1575
        %v6025 = vunpack.c.l.b16 %v1576
        %v6026 = vunpack.c.h.b16 %v1576
        %v6027 = vunpack.c.l.b16 %v1577
        %v6028 = vunpack.c.h.b16 %v1577
        %v6029 = vunpack.c.l.b16 %v1578
        %v6030 = vunpack.c.h.b16 %v1578
        %v6031 = vunpack.c.l.b16 %v1579
        %v6032 = vunpack.c.h.b16 %v1579
        %v6033 = vunpack.c.l.b16 %v1580
        %v6034 = vunpack.c.h.b16 %v1580
        %v6035 = vunpack.c.l.b16 %v1581
        %v6036 = vunpack.c.h.b16 %v1581
        %v6037 = vunpack.c.l.b16 %v1582
        %v6038 = vunpack.c.h.b16 %v1582
        %v6039 = vunpack.c.l.b16 %v1583
        %v6040 = vunpack.c.h.b16 %v1583
        %v6041 = vunpack.c.l.b16 %v1584
        %v6042 = vunpack.c.h.b16 %v1584
        %v6043 = vunpack.c.l.b16 %v1585
        %v6044 = vunpack.c.h.b16 %v1585
        %v6045 = vunpack.c.l.b16 %v1586
        %v6046 = vunpack.c.h.b16 %v1586
        %v6047 = vunpack.c.l.b16 %v1587
        %v6048 = vunpack.c.h.b16 %v1587
        %v6049 = vunpack.c.l.b16 %v1588
        %v6050 = vunpack.c.h.b16 %v1588
        %v6051 = vunpack.c.l.b16 %v1589
        %v6052 = vunpack.c.h.b16 %v1589
        %v6053 = vunpack.c.l.b16 %v1590
        %v6054 = vunpack.c.h.b16 %v1590
        %v6055 = vunpack.c.l.b16 %v1591
        %v6056 = vunpack.c.h.b16 %v1591
        %v6057 = vunpack.c.l.b16 %v1592
        %v6058 = vunpack.c.h.b16 %v1592
        %v6059 = vunpack.c.l.b16 %v1593
        %v6060 = vunpack.c.h.b16 %v1593
        %v6061 = vunpack.c.l.b16 %v1594
        %v6062 = vunpack.c.h.b16 %v1594
        %v6063 = vunpack.c.l.b16 %v1595
        %v6064 = vunpack.c.h.b16 %v1595
        %v6065 = vunpack.c.l.b16 %v1596
        %v6066 = vunpack.c.h.b16 %v1596
        %v6067 = vunpack.c.l.b16 %v1597
        %v6068 = vunpack.c.h.b16 %v1597
        %v6069 = vunpack.c.l.b16 %v1598
        %v6070 = vunpack.c.h.b16 %v1598
        %v6071 = vunpack.c.l.b16 %v1599
        %v6072 = vunpack.c.h.b16 %v1599
        %v6073 = vunpack.c.l.b16 %v1600
        %v6074 = vunpack.c.h.b16 %v1600
        %v6075 = vunpack.c.l.b16 %v1601
        %v6076 = vunpack.c.h.b16 %v1601
        %v6077 = vunpack.c.l.b16 %v1602
        %v6078 = vunpack.c.h.b16 %v1602
        %v6079 = vunpack.c.l.b16 %v1603
        %v6080 = vunpack.c.h.b16 %v1603
        %v6081 = vunpack.c.l.b16 %v1604
        %v6082 = vunpack.c.h.b16 %v1604
        %v6083 = vunpack.c.l.b16 %v1605
        %v6084 = vunpack.c.h.b16 %v1605
        %v6085 = vunpack.c.l.b16 %v1606
        %v6086 = vunpack.c.h.b16 %v1606
        %v6087 = vunpack.c.l.b16 %v1607
        %v6088 = vunpack.c.h.b16 %v1607
        %v6089 = vunpack.c.l.b16 %v1608
        %v6090 = vunpack.c.h.b16 %v1608
        %v6091 = vunpack.c.l.b16 %v1609
        %v6092 = vunpack.c.h.b16 %v1609
        %v6093 = vunpack.c.l.b16 %v1610
        %v6094 = vunpack.c.h.b16 %v1610
        %v6095 = vunpack.c.l.b16 %v1611
        %v6096 = vunpack.c.h.b16 %v1611
        %v6097 = vunpack.c.l.b16 %v1612
        %v6098 = vunpack.c.h.b16 %v1612
        %v6099 = vunpack.c.l.b16 %v1613
        %v6100 = vunpack.c.h.b16 %v1613
        %v6101 = vunpack.c.l.b16 %v1614
        %v6102 = vunpack.c.h.b16 %v1614
        %v6103 = vunpack.c.l.b16 %v1615
        %v6104 = vunpack.c.h.b16 %v1615
        %v6105 = vunpack.c.l.b16 %v1616
        %v6106 = vunpack.c.h.b16 %v1616
        %v6107 = vunpack.c.l.b16 %v1617
        %v6108 = vunpack.c.h.b16 %v1617
        %v6109 = vunpack.c.l.b16 %v1618
        %v6110 = vunpack.c.h.b16 %v1618
        %v6111 = vunpack.c.l.b16 %v1619
        %v6112 = vunpack.c.h.b16 %v1619
        %v6113 = vunpack.c.l.b16 %v1620
        %v6114 = vunpack.c.h.b16 %v1620
        %v6115 = vunpack.c.l.b16 %v1621
        %v6116 = vunpack.c.h.b16 %v1621
        %v6117 = vunpack.c.l.b16 %v1622
        %v6118 = vunpack.c.h.b16 %v1622
        %v6119 = vunpack.c.l.b16 %v1623
        %v6120 = vunpack.c.h.b16 %v1623
        %v6121 = vunpack.c.l.b16 %v1624
        %v6122 = vunpack.c.h.b16 %v1624
        %v6123 = vunpack.c.l.b16 %v1625
        %v6124 = vunpack.c.h.b16 %v1625
        %v6125 = vunpack.c.l.b16 %v1626
        %v6126 = vunpack.c.h.b16 %v1626
        %v6127 = vunpack.c.l.b16 %v1627
        %v6128 = vunpack.c.h.b16 %v1627
        %v6129 = vunpack.c.l.b16 %v1628
        %v6130 = vunpack.c.h.b16 %v1628
        %v6131 = vunpack.c.l.b16 %v1629
        %v6132 = vunpack.c.h.b16 %v1629
        %v6133 = vunpack.c.l.b16 %v1630
        %v6134 = vunpack.c.h.b16 %v1630
        %v6135 = vunpack.c.l.b16 %v1631
        %v6136 = vunpack.c.h.b16 %v1631
        %v6137 = vunpack.c.l.b16 %v1632
        %v6138 = vunpack.c.h.b16 %v1632
        %v6139 = vunpack.c.l.b16 %v1633
        %v6140 = vunpack.c.h.b16 %v1633
        %v6141 = vunpack.c.l.b16 %v1634
        %v6142 = vunpack.c.h.b16 %v1634
        %v6143 = vunpack.c.l.b16 %v1635
        %v6144 = vunpack.c.h.b16 %v1635
        %v6145 = vunpack.c.l.b16 %v1636
        %v6146 = vunpack.c.h.b16 %v1636
        %v6147 = vunpack.c.l.b16 %v1637
        %v6148 = vunpack.c.h.b16 %v1637
        %v6149 = vunpack.c.l.b16 %v1638
        %v6150 = vunpack.c.h.b16 %v1638
        %v6151 = vunpack.c.l.b16 %v1639
        %v6152 = vunpack.c.h.b16 %v1639
        %v6153 = vunpack.c.l.b16 %v1640
        %v6154 = vunpack.c.h.b16 %v1640
        %v6155 = vunpack.c.l.b16 %v1641
        %v6156 = vunpack.c.h.b16 %v1641
        %v6157 = vunpack.c.l.b16 %v1642
        %v6158 = vunpack.c.h.b16 %v1642
        %v6159 = vunpack.c.l.b16 %v1643
        %v6160 = vunpack.c.h.b16 %v1643
        %v6161 = vunpack.c.l.b16 %v1644
        %v6162 = vunpack.c.h.b16 %v1644
        %v6163 = vunpack.c.l.b16 %v1645
        %v6164 = vunpack.c.h.b16 %v1645
        %v6165 = vunpack.c.l.b16 %v1646
        %v6166 = vunpack.c.h.b16 %v1646
        %v6167 = vunpack.c.l.b16 %v1647
        %v6168 = vunpack.c.h.b16 %v1647
        %v6169 = vunpack.c.l.b16 %v1648
        %v6170 = vunpack.c.h.b16 %v1648
        %v6171 = vunpack.c.l.b16 %v1649
        %v6172 = vunpack.c.h.b16 %v1649
        %v6173 = vunpack.c.l.b16 %v1650
        %v6174 = vunpack.c.h.b16 %v1650
        %v6175 = vunpack.c.l.b16 %v1651
        %v6176 = vunpack.c.h.b16 %v1651
        %v6177 = vunpack.c.l.b16 %v1652
        %v6178 = vunpack.c.h.b16 %v1652
        %v6179 = vunpack.c.l.b16 %v1653
        %v6180 = vunpack.c.h.b16 %v1653
        %v6181 = vunpack.c.l.b16 %v1654
        %v6182 = vunpack.c.h.b16 %v1654
        %v6183 = vunpack.c.l.b16 %v1655
        %v6184 = vunpack.c.h.b16 %v1655
        %v6185 = vunpack.c.l.b16 %v1656
        %v6186 = vunpack.c.h.b16 %v1656
        %v6187 = vunpack.c.l.b16 %v1657
        %v6188 = vunpack.c.h.b16 %v1657
        %v6189 = vunpack.c.l.b16 %v1658
        %v6190 = vunpack.c.h.b16 %v1658
        %v6191 = vunpack.c.l.b16 %v1659
        %v6192 = vunpack.c.h.b16 %v1659
        %v6193 = vunpack.c.l.b16 %v1660
        %v6194 = vunpack.c.h.b16 %v1660
        %v6195 = vunpack.c.l.b16 %v1661
        %v6196 = vunpack.c.h.b16 %v1661
        %v6197 = vunpack.c.l.b16 %v1662
        %v6198 = vunpack.c.h.b16 %v1662
        %v6199 = vunpack.c.l.b16 %v1663
        %v6200 = vunpack.c.h.b16 %v1663
        %v6201 = vunpack.c.l.b16 %v1664
        %v6202 = vunpack.c.h.b16 %v1664
        %v6203 = vunpack.c.l.b16 %v1665
        %v6204 = vunpack.c.h.b16 %v1665
        %v6205 = vunpack.c.l.b16 %v1666
        %v6206 = vunpack.c.h.b16 %v1666
        %v6207 = vunpack.c.l.b16 %v1667
        %v6208 = vunpack.c.h.b16 %v1667
        %v6209 = vunpack.c.l.b16 %v1668
        %v6210 = vunpack.c.h.b16 %v1668
        %v6211 = vunpack.c.l.b16 %v1669
        %v6212 = vunpack.c.h.b16 %v1669
        %v6213 = vunpack.c.l.b16 %v1670
        %v6214 = vunpack.c.h.b16 %v1670
        %v6215 = vunpack.c.l.b16 %v1671
        %v6216 = vunpack.c.h.b16 %v1671
        %v6217 = vunpack.c.l.b16 %v1672
        %v6218 = vunpack.c.h.b16 %v1672
        %v6219 = vunpack.c.l.b16 %v1673
        %v6220 = vunpack.c.h.b16 %v1673
        %v6221 = vunpack.c.l.b16 %v1674
        %v6222 = vunpack.c.h.b16 %v1674
        %v6223 = vunpack.c.l.b16 %v1675
        %v6224 = vunpack.c.h.b16 %v1675
        %v6225 = vunpack.c.l.b16 %v1676
        %v6226 = vunpack.c.h.b16 %v1676
        %v6227 = vunpack.c.l.b16 %v1677
        %v6228 = vunpack.c.h.b16 %v1677
        %v6229 = vunpack.c.l.b16 %v1678
        %v6230 = vunpack.c.h.b16 %v1678
        %v6231 = vunpack.c.l.b16 %v1679
        %v6232 = vunpack.c.h.b16 %v1679
        %v6233 = vunpack.c.l.b16 %v1680
        %v6234 = vunpack.c.h.b16 %v1680
        %v6235 = vunpack.c.l.b16 %v1681
        %v6236 = vunpack.c.h.b16 %v1681
        %v6237 = vunpack.c.l.b16 %v1682
        %v6238 = vunpack.c.h.b16 %v1682
        %v6239 = vunpack.c.l.b16 %v1683
        %v6240 = vunpack.c.h.b16 %v1683
        %v6241 = vunpack.c.l.b16 %v1684
        %v6242 = vunpack.c.h.b16 %v1684
        %v6243 = vunpack.c.l.b16 %v1685
        %v6244 = vunpack.c.h.b16 %v1685
        %v6245 = vunpack.c.l.b16 %v1686
        %v6246 = vunpack.c.h.b16 %v1686
        %v6247 = vunpack.c.l.b16 %v1687
        %v6248 = vunpack.c.h.b16 %v1687
        %v6249 = vunpack.c.l.b16 %v1688
        %v6250 = vunpack.c.h.b16 %v1688
        %v6251 = vunpack.c.l.b16 %v1689
        %v6252 = vunpack.c.h.b16 %v1689
        %v6253 = vunpack.c.l.b16 %v1690
        %v6254 = vunpack.c.h.b16 %v1690
        %v6255 = vunpack.c.l.b16 %v1691
        %v6256 = vunpack.c.h.b16 %v1691
        %v6257 = vpack.c.b16 %v3445, %v3441
        %v6258 = vpack.c.b16 %v3446, %v3442
        %v6259 = vpack.c.b16 %v3447, %v3443
        %v6260 = vpack.c.b16 %v3448, %v3444
        %v6261 = vpack.c.b16 %v3453, %v3449
        %v6262 = vpack.c.b16 %v3454, %v3450
        %v6263 = vpack.c.b16 %v3455, %v3451
        %v6264 = vpack.c.b16 %v3456, %v3452
        %v6265 = vpack.c.b16 %v3461, %v3457
        %v6266 = vpack.c.b16 %v3462, %v3458
        %v6267 = vpack.c.b16 %v3463, %v3459
        %v6268 = vpack.c.b16 %v3464, %v3460
        %v6269 = vpack.c.b16 %v3469, %v3465
        %v6270 = vpack.c.b16 %v3470, %v3466
        %v6271 = vpack.c.b16 %v3471, %v3467
        %v6272 = vpack.c.b16 %v3472, %v3468
        %v6273 = vpack.c.b16 %v3477, %v3473
        %v6274 = vpack.c.b16 %v3478, %v3474
        %v6275 = vpack.c.b16 %v3479, %v3475
        %v6276 = vpack.c.b16 %v3480, %v3476
        %v6277 = vpack.c.b16 %v3485, %v3481
        %v6278 = vpack.c.b16 %v3486, %v3482
        %v6279 = vpack.c.b16 %v3487, %v3483
        %v6280 = vpack.c.b16 %v3488, %v3484
        %v6281 = vpack.c.b16 %v3493, %v3489
        %v6282 = vpack.c.b16 %v3494, %v3490
        %v6283 = vpack.c.b16 %v3495, %v3491
        %v6284 = vpack.c.b16 %v3496, %v3492
        %v6285 = vpack.c.b16 %v3501, %v3497
        %v6286 = vpack.c.b16 %v3502, %v3498
        %v6287 = vpack.c.b16 %v3503, %v3499
        %v6288 = vpack.c.b16 %v3504, %v3500
        %v6289 = vpack.c.b16 %v3509, %v3505
        %v6290 = vpack.c.b16 %v3510, %v3506
        %v6291 = vpack.c.b16 %v3511, %v3507
        %v6292 = vpack.c.b16 %v3512, %v3508
        %v6293 = vpack.c.b16 %v3517, %v3513
        %v6294 = vpack.c.b16 %v3518, %v3514
        %v6295 = vpack.c.b16 %v3519, %v3515
        %v6296 = vpack.c.b16 %v3520, %v3516
        %v6297 = vpack.c.b16 %v3525, %v3521
        %v6298 = vpack.c.b16 %v3526, %v3522
        %v6299 = vpack.c.b16 %v3527, %v3523
        %v6300 = vpack.c.b16 %v3528, %v3524
        %v6301 = vpack.c.b16 %v3533, %v3529
        %v6302 = vpack.c.b16 %v3534, %v3530
        %v6303 = vpack.c.b16 %v3535, %v3531
        %v6304 = vpack.c.b16 %v3536, %v3532
        %v6305 = vpack.c.b16 %v3541, %v3537
        %v6306 = vpack.c.b16 %v3542, %v3538
        %v6307 = vpack.c.b16 %v3543, %v3539
        %v6308 = vpack.c.b16 %v3544, %v3540
        %v6309 = vpack.c.b16 %v3549, %v3545
        %v6310 = vpack.c.b16 %v3550, %v3546
        %v6311 = vpack.c.b16 %v3551, %v3547
        %v6312 = vpack.c.b16 %v3552, %v3548
        %v6313 = vpack.c.b16 %v3557, %v3553
        %v6314 = vpack.c.b16 %v3558, %v3554
        %v6315 = vpack.c.b16 %v3559, %v3555
        %v6316 = vpack.c.b16 %v3560, %v3556
        %v6317 = vpack.c.b16 %v3565, %v3561
        %v6318 = vpack.c.b16 %v3566, %v3562
        %v6319 = vpack.c.b16 %v3567, %v3563
        %v6320 = vpack.c.b16 %v3568, %v3564
        %v6321 = vpack.c.b16 %v3573, %v3569
        %v6322 = vpack.c.b16 %v3574, %v3570
        %v6323 = vpack.c.b16 %v3575, %v3571
        %v6324 = vpack.c.b16 %v3576, %v3572
        %v6325 = vpack.c.b16 %v3581, %v3577
        %v6326 = vpack.c.b16 %v3582, %v3578
        %v6327 = vpack.c.b16 %v3583, %v3579
        %v6328 = vpack.c.b16 %v3584, %v3580
        %v6329 = vpack.c.b16 %v3589, %v3585
        %v6330 = vpack.c.b16 %v3590, %v3586
        %v6331 = vpack.c.b16 %v3591, %v3587
        %v6332 = vpack.c.b16 %v3592, %v3588
        %v6333 = vpack.c.b16 %v3597, %v3593
        %v6334 = vpack.c.b16 %v3598, %v3594
        %v6335 = vpack.c.b16 %v3599, %v3595
        %v6336 = vpack.c.b16 %v3600, %v3596
        %v6337 = vpack.c.b16 %v3605, %v3601
        %v6338 = vpack.c.b16 %v3606, %v3602
        %v6339 = vpack.c.b16 %v3607, %v3603
        %v6340 = vpack.c.b16 %v3608, %v3604
        %v6341 = vpack.c.b16 %v3613, %v3609
        %v6342 = vpack.c.b16 %v3614, %v3610
        %v6343 = vpack.c.b16 %v3615, %v3611
        %v6344 = vpack.c.b16 %v3616, %v3612
        %v6345 = vpack.c.b16 %v3621, %v3617
        %v6346 = vpack.c.b16 %v3622, %v3618
        %v6347 = vpack.c.b16 %v3623, %v3619
        %v6348 = vpack.c.b16 %v3624, %v3620
        %v6349 = vpack.c.b16 %v3629, %v3625
        %v6350 = vpack.c.b16 %v3630, %v3626
        %v6351 = vpack.c.b16 %v3631, %v3627
        %v6352 = vpack.c.b16 %v3632, %v3628
        %v6353 = vpack.c.b16 %v3637, %v3633
        %v6354 = vpack.c.b16 %v3638, %v3634
        %v6355 = vpack.c.b16 %v3639, %v3635
        %v6356 = vpack.c.b16 %v3640, %v3636
        %v6357 = vpack.c.b16 %v3645, %v3641
        %v6358 = vpack.c.b16 %v3646, %v3642
        %v6359 = vpack.c.b16 %v3647, %v3643
        %v6360 = vpack.c.b16 %v3648, %v3644
        %v6361 = vpack.c.b16 %v3653, %v3649
        %v6362 = vpack.c.b16 %v3654, %v3650
        %v6363 = vpack.c.b16 %v3655, %v3651
        %v6364 = vpack.c.b16 %v3656, %v3652
        %v6365 = vpack.c.b16 %v3661, %v3657
        %v6366 = vpack.c.b16 %v3662, %v3658
        %v6367 = vpack.c.b16 %v3663, %v3659
        %v6368 = vpack.c.b16 %v3664, %v3660
        %v6369 = vpack.c.b16 %v3669, %v3665
        %v6370 = vpack.c.b16 %v3670, %v3666
        %v6371 = vpack.c.b16 %v3671, %v3667
        %v6372 = vpack.c.b16 %v3672, %v3668
        %v6373 = vpack.c.b16 %v3677, %v3673
        %v6374 = vpack.c.b16 %v3678, %v3674
        %v6375 = vpack.c.b16 %v3679, %v3675
        %v6376 = vpack.c.b16 %v3680, %v3676
        %v6377 = vpack.c.b16 %v3685, %v3681
        %v6378 = vpack.c.b16 %v3686, %v3682
        %v6379 = vpack.c.b16 %v3687, %v3683
        %v6380 = vpack.c.b16 %v3688, %v3684
        %v6381 = vpack.c.b16 %v3693, %v3689
        %v6382 = vpack.c.b16 %v3694, %v3690
        %v6383 = vpack.c.b16 %v3695, %v3691
        %v6384 = vpack.c.b16 %v3696, %v3692
        %v6385 = vpack.c.b16 %v3701, %v3697
        %v6386 = vpack.c.b16 %v3702, %v3698
        %v6387 = vpack.c.b16 %v3703, %v3699
        %v6388 = vpack.c.b16 %v3704, %v3700
        %v6389 = vpack.c.b16 %v3709, %v3705
        %v6390 = vpack.c.b16 %v3710, %v3706
        %v6391 = vpack.c.b16 %v3711, %v3707
        %v6392 = vpack.c.b16 %v3712, %v3708
        %v6393 = vpack.c.b16 %v3717, %v3713
        %v6394 = vpack.c.b16 %v3718, %v3714
        %v6395 = vpack.c.b16 %v3719, %v3715
        %v6396 = vpack.c.b16 %v3720, %v3716
        %v6397 = vpack.c.b16 %v3725, %v3721
        %v6398 = vpack.c.b16 %v3726, %v3722
        %v6399 = vpack.c.b16 %v3727, %v3723
        %v6400 = vpack.c.b16 %v3728, %v3724
        %v6401 = vpack.c.b16 %v3733, %v3729
        %v6402 = vpack.c.b16 %v3734, %v3730
        %v6403 = vpack.c.b16 %v3735, %v3731
        %v6404 = vpack.c.b16 %v3736, %v3732
        %v6405 = vpack.c.b16 %v3741, %v3737
        %v6406 = vpack.c.b16 %v3742, %v3738
        %v6407 = vpack.c.b16 %v3743, %v3739
        %v6408 = vpack.c.b16 %v3744, %v3740
        %v6409 = vpack.c.b16 %v3749, %v3745
        %v6410 = vpack.c.b16 %v3750, %v3746
        %v6411 = vpack.c.b16 %v3751, %v3747
        %v6412 = vpack.c.b16 %v3752, %v3748
        %v6413 = vpack.c.b16 %v3757, %v3753
        %v6414 = vpack.c.b16 %v3758, %v3754
        %v6415 = vpack.c.b16 %v3759, %v3755
        %v6416 = vpack.c.b16 %v3760, %v3756
        %v6417 = vpack.c.b16 %v3765, %v3761
        %v6418 = vpack.c.b16 %v3766, %v3762
        %v6419 = vpack.c.b16 %v3767, %v3763
        %v6420 = vpack.c.b16 %v3768, %v3764
        %v6421 = vpack.c.b16 %v3773, %v3769
        %v6422 = vpack.c.b16 %v3774, %v3770
        %v6423 = vpack.c.b16 %v3775, %v3771
        %v6424 = vpack.c.b16 %v3776, %v3772
        %v6425 = vpack.c.b16 %v3781, %v3777
        %v6426 = vpack.c.b16 %v3782, %v3778
        %v6427 = vpack.c.b16 %v3783, %v3779
        %v6428 = vpack.c.b16 %v3784, %v3780
        %v6429 = vpack.c.b16 %v3789, %v3785
        %v6430 = vpack.c.b16 %v3790, %v3786
        %v6431 = vpack.c.b16 %v3791, %v3787
        %v6432 = vpack.c.b16 %v3792, %v3788
        %v6433 = vpack.c.b16 %v3797, %v3793
        %v6434 = vpack.c.b16 %v3798, %v3794
        %v6435 = vpack.c.b16 %v3799, %v3795
        %v6436 = vpack.c.b16 %v3800, %v3796
        %v6437 = vpack.c.b16 %v3805, %v3801
        %v6438 = vpack.c.b16 %v3806, %v3802
        %v6439 = vpack.c.b16 %v3807, %v3803
        %v6440 = vpack.c.b16 %v3808, %v3804
        %v6441 = vpack.c.b16 %v3813, %v3809
        %v6442 = vpack.c.b16 %v3814, %v3810
        %v6443 = vpack.c.b16 %v3815, %v3811
        %v6444 = vpack.c.b16 %v3816, %v3812
        %v6445 = vpack.c.b16 %v3821, %v3817
        %v6446 = vpack.c.b16 %v3822, %v3818
        %v6447 = vpack.c.b16 %v3823, %v3819
        %v6448 = vpack.c.b16 %v3824, %v3820
        %v6449 = vpack.c.b16 %v3829, %v3825
        %v6450 = vpack.c.b16 %v3830, %v3826
        %v6451 = vpack.c.b16 %v3831, %v3827
        %v6452 = vpack.c.b16 %v3832, %v3828
        %v6453 = vpack.c.b16 %v3837, %v3833
        %v6454 = vpack.c.b16 %v3838, %v3834
        %v6455 = vpack.c.b16 %v3839, %v3835
        %v6456 = vpack.c.b16 %v3840, %v3836
        %v6457 = vpack.c.b16 %v3845, %v3841
        %v6458 = vpack.c.b16 %v3846, %v3842
        %v6459 = vpack.c.b16 %v3847, %v3843
        %v6460 = vpack.c.b16 %v3848, %v3844
        %v6461 = vpack.c.b16 %v3853, %v3849
        %v6462 = vpack.c.b16 %v3854, %v3850
        %v6463 = vpack.c.b16 %v3855, %v3851
        %v6464 = vpack.c.b16 %v3856, %v3852
        %v6465 = vpack.c.b16 %v3861, %v3857
        %v6466 = vpack.c.b16 %v3862, %v3858
        %v6467 = vpack.c.b16 %v3863, %v3859
        %v6468 = vpack.c.b16 %v3864, %v3860
        %v6469 = vpack.c.b16 %v3869, %v3865
        %v6470 = vpack.c.b16 %v3870, %v3866
        %v6471 = vpack.c.b16 %v3871, %v3867
        %v6472 = vpack.c.b16 %v3872, %v3868
        %v6473 = vpack.c.b16 %v3877, %v3873
        %v6474 = vpack.c.b16 %v3878, %v3874
        %v6475 = vpack.c.b16 %v3879, %v3875
        %v6476 = vpack.c.b16 %v3880, %v3876
        %v6477 = vpack.c.b16 %v3885, %v3881
        %v6478 = vpack.c.b16 %v3886, %v3882
        %v6479 = vpack.c.b16 %v3887, %v3883
        %v6480 = vpack.c.b16 %v3888, %v3884
        %v6481 = vpack.c.b16 %v3893, %v3889
        %v6482 = vpack.c.b16 %v3894, %v3890
        %v6483 = vpack.c.b16 %v3895, %v3891
        %v6484 = vpack.c.b16 %v3896, %v3892
        %v6485 = vpack.c.b16 %v3901, %v3897
        %v6486 = vpack.c.b16 %v3902, %v3898
        %v6487 = vpack.c.b16 %v3903, %v3899
        %v6488 = vpack.c.b16 %v3904, %v3900
        %v6489 = vpack.c.b16 %v3909, %v3905
        %v6490 = vpack.c.b16 %v3910, %v3906
        %v6491 = vpack.c.b16 %v3911, %v3907
        %v6492 = vpack.c.b16 %v3912, %v3908
        %v6493 = vpack.c.b16 %v3917, %v3913
        %v6494 = vpack.c.b16 %v3918, %v3914
        %v6495 = vpack.c.b16 %v3919, %v3915
        %v6496 = vpack.c.b16 %v3920, %v3916
        %v6497 = vpack.c.b16 %v3925, %v3921
        %v6498 = vpack.c.b16 %v3926, %v3922
        %v6499 = vpack.c.b16 %v3927, %v3923
        %v6500 = vpack.c.b16 %v3928, %v3924
        %v6501 = vpack.c.b16 %v3933, %v3929
        %v6502 = vpack.c.b16 %v3934, %v3930
        %v6503 = vpack.c.b16 %v3935, %v3931
        %v6504 = vpack.c.b16 %v3936, %v3932
        %v6505 = vpack.c.b16 %v3941, %v3937
        %v6506 = vpack.c.b16 %v3942, %v3938
        %v6507 = vpack.c.b16 %v3943, %v3939
        %v6508 = vpack.c.b16 %v3944, %v3940
        %v6509 = vpack.c.b16 %v3949, %v3945
        %v6510 = vpack.c.b16 %v3950, %v3946
        %v6511 = vpack.c.b16 %v3951, %v3947
        %v6512 = vpack.c.b16 %v3952, %v3948
        %v6513 = vpack.c.b16 %v3957, %v3953
        %v6514 = vpack.c.b16 %v3958, %v3954
        %v6515 = vpack.c.b16 %v3959, %v3955
        %v6516 = vpack.c.b16 %v3960, %v3956
        %v6517 = vpack.c.b16 %v3965, %v3961
        %v6518 = vpack.c.b16 %v3966, %v3962
        %v6519 = vpack.c.b16 %v3967, %v3963
        %v6520 = vpack.c.b16 %v3968, %v3964
        %v6521 = vpack.c.b16 %v3973, %v3969
        %v6522 = vpack.c.b16 %v3974, %v3970
        %v6523 = vpack.c.b16 %v3975, %v3971
        %v6524 = vpack.c.b16 %v3976, %v3972
        %v6525 = vpack.c.b16 %v3981, %v3977
        %v6526 = vpack.c.b16 %v3982, %v3978
        %v6527 = vpack.c.b16 %v3983, %v3979
        %v6528 = vpack.c.b16 %v3984, %v3980
        %v6529 = vpack.c.b16 %v3989, %v3985
        %v6530 = vpack.c.b16 %v3990, %v3986
        %v6531 = vpack.c.b16 %v3991, %v3987
        %v6532 = vpack.c.b16 %v3992, %v3988
        %v6533 = vpack.c.b16 %v3997, %v3993
        %v6534 = vpack.c.b16 %v3998, %v3994
        %v6535 = vpack.c.b16 %v3999, %v3995
        %v6536 = vpack.c.b16 %v4000, %v3996
        %v6537 = vpack.c.b16 %v4005, %v4001
        %v6538 = vpack.c.b16 %v4006, %v4002
        %v6539 = vpack.c.b16 %v4007, %v4003
        %v6540 = vpack.c.b16 %v4008, %v4004
        %v6541 = vpack.c.b16 %v4013, %v4009
        %v6542 = vpack.c.b16 %v4014, %v4010
        %v6543 = vpack.c.b16 %v4015, %v4011
        %v6544 = vpack.c.b16 %v4016, %v4012
        %v6545 = vpack.c.b16 %v4021, %v4017
        %v6546 = vpack.c.b16 %v4022, %v4018
        %v6547 = vpack.c.b16 %v4023, %v4019
        %v6548 = vpack.c.b16 %v4024, %v4020
        %v6549 = vpack.c.b16 %v4029, %v4025
        %v6550 = vpack.c.b16 %v4030, %v4026
        %v6551 = vpack.c.b16 %v4031, %v4027
        %v6552 = vpack.c.b16 %v4032, %v4028
        %v6553 = vpack.c.b16 %v4037, %v4033
        %v6554 = vpack.c.b16 %v4038, %v4034
        %v6555 = vpack.c.b16 %v4039, %v4035
        %v6556 = vpack.c.b16 %v4040, %v4036
        %v6557 = vpack.c.b16 %v4045, %v4041
        %v6558 = vpack.c.b16 %v4046, %v4042
        %v6559 = vpack.c.b16 %v4047, %v4043
        %v6560 = vpack.c.b16 %v4048, %v4044
        %v6561 = vpack.c.b16 %v4053, %v4049
        %v6562 = vpack.c.b16 %v4054, %v4050
        %v6563 = vpack.c.b16 %v4055, %v4051
        %v6564 = vpack.c.b16 %v4056, %v4052
        %v6565 = vpack.c.b16 %v4061, %v4057
        %v6566 = vpack.c.b16 %v4062, %v4058
        %v6567 = vpack.c.b16 %v4063, %v4059
        %v6568 = vpack.c.b16 %v4064, %v4060
        %v6569 = vpack.c.b16 %v4069, %v4065
        %v6570 = vpack.c.b16 %v4070, %v4066
        %v6571 = vpack.c.b16 %v4071, %v4067
        %v6572 = vpack.c.b16 %v4072, %v4068
        %v6573 = vpack.c.b16 %v4077, %v4073
        %v6574 = vpack.c.b16 %v4078, %v4074
        %v6575 = vpack.c.b16 %v4079, %v4075
        %v6576 = vpack.c.b16 %v4080, %v4076
        %v6577 = vpack.c.b16 %v4085, %v4081
        %v6578 = vpack.c.b16 %v4086, %v4082
        %v6579 = vpack.c.b16 %v4087, %v4083
        %v6580 = vpack.c.b16 %v4088, %v4084
        %v6581 = vpack.c.b16 %v4093, %v4089
        %v6582 = vpack.c.b16 %v4094, %v4090
        %v6583 = vpack.c.b16 %v4095, %v4091
        %v6584 = vpack.c.b16 %v4096, %v4092
        %v6585 = vpack.c.b16 %v4101, %v4097
        %v6586 = vpack.c.b16 %v4102, %v4098
        %v6587 = vpack.c.b16 %v4103, %v4099
        %v6588 = vpack.c.b16 %v4104, %v4100
        %v6589 = vpack.c.b16 %v4109, %v4105
        %v6590 = vpack.c.b16 %v4110, %v4106
        %v6591 = vpack.c.b16 %v4111, %v4107
        %v6592 = vpack.c.b16 %v4112, %v4108
        %v6593 = vpack.c.b16 %v4117, %v4113
        %v6594 = vpack.c.b16 %v4118, %v4114
        %v6595 = vpack.c.b16 %v4119, %v4115
        %v6596 = vpack.c.b16 %v4120, %v4116
        %v6597 = vpack.c.b16 %v4125, %v4121
        %v6598 = vpack.c.b16 %v4126, %v4122
        %v6599 = vpack.c.b16 %v4127, %v4123
        %v6600 = vpack.c.b16 %v4128, %v4124
        %v6601 = vpack.c.b16 %v4133, %v4129
        %v6602 = vpack.c.b16 %v4134, %v4130
        %v6603 = vpack.c.b16 %v4135, %v4131
        %v6604 = vpack.c.b16 %v4136, %v4132
        %v6605 = vpack.c.b16 %v4141, %v4137
        %v6606 = vpack.c.b16 %v4142, %v4138
        %v6607 = vpack.c.b16 %v4143, %v4139
        %v6608 = vpack.c.b16 %v4144, %v4140
        %v6609 = vpack.c.b16 %v4149, %v4145
        %v6610 = vpack.c.b16 %v4150, %v4146
        %v6611 = vpack.c.b16 %v4151, %v4147
        %v6612 = vpack.c.b16 %v4152, %v4148
        %v6613 = vpack.c.b16 %v4157, %v4153
        %v6614 = vpack.c.b16 %v4158, %v4154
        %v6615 = vpack.c.b16 %v4159, %v4155
        %v6616 = vpack.c.b16 %v4160, %v4156
        %v6617 = vpack.c.b16 %v4165, %v4161
        %v6618 = vpack.c.b16 %v4166, %v4162
        %v6619 = vpack.c.b16 %v4167, %v4163
        %v6620 = vpack.c.b16 %v4168, %v4164
        %v6621 = vpack.c.b16 %v4173, %v4169
        %v6622 = vpack.c.b16 %v4174, %v4170
        %v6623 = vpack.c.b16 %v4175, %v4171
        %v6624 = vpack.c.b16 %v4176, %v4172
        %v6625 = vpack.c.b16 %v4181, %v4177
        %v6626 = vpack.c.b16 %v4182, %v4178
        %v6627 = vpack.c.b16 %v4183, %v4179
        %v6628 = vpack.c.b16 %v4184, %v4180
        %v6629 = vpack.c.b16 %v4189, %v4185
        %v6630 = vpack.c.b16 %v4190, %v4186
        %v6631 = vpack.c.b16 %v4191, %v4187
        %v6632 = vpack.c.b16 %v4192, %v4188
        %v6633 = vpack.c.b16 %v4197, %v4193
        %v6634 = vpack.c.b16 %v4198, %v4194
        %v6635 = vpack.c.b16 %v4199, %v4195
        %v6636 = vpack.c.b16 %v4200, %v4196
        %v6637 = vpack.c.b16 %v4205, %v4201
        %v6638 = vpack.c.b16 %v4206, %v4202
        %v6639 = vpack.c.b16 %v4207, %v4203
        %v6640 = vpack.c.b16 %v4208, %v4204
        %v6641 = vpack.c.b16 %v4213, %v4209
        %v6642 = vpack.c.b16 %v4214, %v4210
        %v6643 = vpack.c.b16 %v4215, %v4211
        %v6644 = vpack.c.b16 %v4216, %v4212
        %v6645 = vpack.c.b16 %v4221, %v4217
        %v6646 = vpack.c.b16 %v4222, %v4218
        %v6647 = vpack.c.b16 %v4223, %v4219
        %v6648 = vpack.c.b16 %v4224, %v4220
        %v6649 = vpack.c.b16 %v4229, %v4225
        %v6650 = vpack.c.b16 %v4230, %v4226
        %v6651 = vpack.c.b16 %v4231, %v4227
        %v6652 = vpack.c.b16 %v4232, %v4228
        %v6653 = vpack.c.b16 %v4237, %v4233
        %v6654 = vpack.c.b16 %v4238, %v4234
        %v6655 = vpack.c.b16 %v4239, %v4235
        %v6656 = vpack.c.b16 %v4240, %v4236
        %v6657 = vpack.c.b16 %v4245, %v4241
        %v6658 = vpack.c.b16 %v4246, %v4242
        %v6659 = vpack.c.b16 %v4247, %v4243
        %v6660 = vpack.c.b16 %v4248, %v4244
        %v6661 = vpack.c.b16 %v4253, %v4249
        %v6662 = vpack.c.b16 %v4254, %v4250
        %v6663 = vpack.c.b16 %v4255, %v4251
        %v6664 = vpack.c.b16 %v4256, %v4252
        %v6665 = vpack.c.b16 %v4261, %v4257
        %v6666 = vpack.c.b16 %v4262, %v4258
        %v6667 = vpack.c.b16 %v4263, %v4259
        %v6668 = vpack.c.b16 %v4264, %v4260
        %v6669 = vpack.c.b16 %v4269, %v4265
        %v6670 = vpack.c.b16 %v4270, %v4266
        %v6671 = vpack.c.b16 %v4271, %v4267
        %v6672 = vpack.c.b16 %v4272, %v4268
        %v6673 = vpack.c.b16 %v4277, %v4273
        %v6674 = vpack.c.b16 %v4278, %v4274
        %v6675 = vpack.c.b16 %v4279, %v4275
        %v6676 = vpack.c.b16 %v4280, %v4276
        %v6677 = vpack.c.b16 %v4285, %v4281
        %v6678 = vpack.c.b16 %v4286, %v4282
        %v6679 = vpack.c.b16 %v4287, %v4283
        %v6680 = vpack.c.b16 %v4288, %v4284
        %v6681 = vpack.c.b16 %v4293, %v4289
        %v6682 = vpack.c.b16 %v4294, %v4290
        %v6683 = vpack.c.b16 %v4295, %v4291
        %v6684 = vpack.c.b16 %v4296, %v4292
        %v6685 = vpack.c.b16 %v4301, %v4297
        %v6686 = vpack.c.b16 %v4302, %v4298
        %v6687 = vpack.c.b16 %v4303, %v4299
        %v6688 = vpack.c.b16 %v4304, %v4300
        %v6689 = vpack.c.b16 %v4309, %v4305
        %v6690 = vpack.c.b16 %v4310, %v4306
        %v6691 = vpack.c.b16 %v4311, %v4307
        %v6692 = vpack.c.b16 %v4312, %v4308
        %v6693 = vpack.c.b16 %v4317, %v4313
        %v6694 = vpack.c.b16 %v4318, %v4314
        %v6695 = vpack.c.b16 %v4319, %v4315
        %v6696 = vpack.c.b16 %v4320, %v4316
        %v6697 = vpack.c.b16 %v4325, %v4321
        %v6698 = vpack.c.b16 %v4326, %v4322
        %v6699 = vpack.c.b16 %v4327, %v4323
        %v6700 = vpack.c.b16 %v4328, %v4324
        %v6701 = vpack.c.b16 %v4333, %v4329
        %v6702 = vpack.c.b16 %v4334, %v4330
        %v6703 = vpack.c.b16 %v4335, %v4331
        %v6704 = vpack.c.b16 %v4336, %v4332
        %v6705 = vpack.c.b16 %v4341, %v4337
        %v6706 = vpack.c.b16 %v4342, %v4338
        %v6707 = vpack.c.b16 %v4343, %v4339
        %v6708 = vpack.c.b16 %v4344, %v4340
        %v6709 = vpack.c.b16 %v4349, %v4345
        %v6710 = vpack.c.b16 %v4350, %v4346
        %v6711 = vpack.c.b16 %v4351, %v4347
        %v6712 = vpack.c.b16 %v4352, %v4348
        %v6713 = vpack.c.b16 %v4357, %v4353
        %v6714 = vpack.c.b16 %v4358, %v4354
        %v6715 = vpack.c.b16 %v4359, %v4355
        %v6716 = vpack.c.b16 %v4360, %v4356
        %v6717 = vpack.c.b16 %v4365, %v4361
        %v6718 = vpack.c.b16 %v4366, %v4362
        %v6719 = vpack.c.b16 %v4367, %v4363
        %v6720 = vpack.c.b16 %v4368, %v4364
        %v6721 = vpack.c.b16 %v4373, %v4369
        %v6722 = vpack.c.b16 %v4374, %v4370
        %v6723 = vpack.c.b16 %v4375, %v4371
        %v6724 = vpack.c.b16 %v4376, %v4372
        %v6725 = vpack.c.b16 %v4381, %v4377
        %v6726 = vpack.c.b16 %v4382, %v4378
        %v6727 = vpack.c.b16 %v4383, %v4379
        %v6728 = vpack.c.b16 %v4384, %v4380
        %v6729 = vpack.c.b16 %v4389, %v4385
        %v6730 = vpack.c.b16 %v4390, %v4386
        %v6731 = vpack.c.b16 %v4391, %v4387
        %v6732 = vpack.c.b16 %v4392, %v4388
        %v6733 = vpack.c.b16 %v4397, %v4393
        %v6734 = vpack.c.b16 %v4398, %v4394
        %v6735 = vpack.c.b16 %v4399, %v4395
        %v6736 = vpack.c.b16 %v4400, %v4396
        %v6737 = vpack.c.b16 %v4405, %v4401
        %v6738 = vpack.c.b16 %v4406, %v4402
        %v6739 = vpack.c.b16 %v4407, %v4403
        %v6740 = vpack.c.b16 %v4408, %v4404
        %v6741 = vpack.c.b16 %v4413, %v4409
        %v6742 = vpack.c.b16 %v4414, %v4410
        %v6743 = vpack.c.b16 %v4415, %v4411
        %v6744 = vpack.c.b16 %v4416, %v4412
        %v6745 = vpack.c.b16 %v4421, %v4417
        %v6746 = vpack.c.b16 %v4422, %v4418
        %v6747 = vpack.c.b16 %v4423, %v4419
        %v6748 = vpack.c.b16 %v4424, %v4420
        %v6749 = vpack.c.b16 %v4429, %v4425
        %v6750 = vpack.c.b16 %v4430, %v4426
        %v6751 = vpack.c.b16 %v4431, %v4427
        %v6752 = vpack.c.b16 %v4432, %v4428
        %v6753 = vpack.c.b16 %v4437, %v4433
        %v6754 = vpack.c.b16 %v4438, %v4434
        %v6755 = vpack.c.b16 %v4439, %v4435
        %v6756 = vpack.c.b16 %v4440, %v4436
        %v6757 = vpack.c.b16 %v4445, %v4441
        %v6758 = vpack.c.b16 %v4446, %v4442
        %v6759 = vpack.c.b16 %v4447, %v4443
        %v6760 = vpack.c.b16 %v4448, %v4444
        %v6761 = vpack.c.b16 %v4453, %v4449
        %v6762 = vpack.c.b16 %v4454, %v4450
        %v6763 = vpack.c.b16 %v4455, %v4451
        %v6764 = vpack.c.b16 %v4456, %v4452
        %v6765 = vpack.c.b16 %v4461, %v4457
        %v6766 = vpack.c.b16 %v4462, %v4458
        %v6767 = vpack.c.b16 %v4463, %v4459
        %v6768 = vpack.c.b16 %v4464, %v4460
        %v6769 = vpack.c.b16 %v4469, %v4465
        %v6770 = vpack.c.b16 %v4470, %v4466
        %v6771 = vpack.c.b16 %v4471, %v4467
        %v6772 = vpack.c.b16 %v4472, %v4468
        %v6773 = vpack.c.b16 %v4477, %v4473
        %v6774 = vpack.c.b16 %v4478, %v4474
        %v6775 = vpack.c.b16 %v4479, %v4475
        %v6776 = vpack.c.b16 %v4480, %v4476
        %v6777 = vpack.c.b16 %v4485, %v4481
        %v6778 = vpack.c.b16 %v4486, %v4482
        %v6779 = vpack.c.b16 %v4487, %v4483
        %v6780 = vpack.c.b16 %v4488, %v4484
        %v6781 = vpack.c.b16 %v4493, %v4489
        %v6782 = vpack.c.b16 %v4494, %v4490
        %v6783 = vpack.c.b16 %v4495, %v4491
        %v6784 = vpack.c.b16 %v4496, %v4492
        %v6785 = vpack.c.b16 %v4501, %v4497
        %v6786 = vpack.c.b16 %v4502, %v4498
        %v6787 = vpack.c.b16 %v4503, %v4499
        %v6788 = vpack.c.b16 %v4504, %v4500
        %v6789 = vpack.c.b16 %v4509, %v4505
        %v6790 = vpack.c.b16 %v4510, %v4506
        %v6791 = vpack.c.b16 %v4511, %v4507
        %v6792 = vpack.c.b16 %v4512, %v4508
        %v6793 = vpack.c.b16 %v4517, %v4513
        %v6794 = vpack.c.b16 %v4518, %v4514
        %v6795 = vpack.c.b16 %v4519, %v4515
        %v6796 = vpack.c.b16 %v4520, %v4516
        %v6797 = vpack.c.b16 %v4525, %v4521
        %v6798 = vpack.c.b16 %v4526, %v4522
        %v6799 = vpack.c.b16 %v4527, %v4523
        %v6800 = vpack.c.b16 %v4528, %v4524
        %v6801 = vpack.c.b16 %v4533, %v4529
        %v6802 = vpack.c.b16 %v4534, %v4530
        %v6803 = vpack.c.b16 %v4535, %v4531
        %v6804 = vpack.c.b16 %v4536, %v4532
        %v6805 = vpack.c.b16 %v4541, %v4537
        %v6806 = vpack.c.b16 %v4542, %v4538
        %v6807 = vpack.c.b16 %v4543, %v4539
        %v6808 = vpack.c.b16 %v4544, %v4540
        %v6809 = vpack.c.b16 %v4549, %v4545
        %v6810 = vpack.c.b16 %v4550, %v4546
        %v6811 = vpack.c.b16 %v4551, %v4547
        %v6812 = vpack.c.b16 %v4552, %v4548
        %v6813 = vpack.c.b16 %v4557, %v4553
        %v6814 = vpack.c.b16 %v4558, %v4554
        %v6815 = vpack.c.b16 %v4559, %v4555
        %v6816 = vpack.c.b16 %v4560, %v4556
        %v6817 = vpack.c.b16 %v4565, %v4561
        %v6818 = vpack.c.b16 %v4566, %v4562
        %v6819 = vpack.c.b16 %v4567, %v4563
        %v6820 = vpack.c.b16 %v4568, %v4564
        %v6821 = vpack.c.b16 %v4573, %v4569
        %v6822 = vpack.c.b16 %v4574, %v4570
        %v6823 = vpack.c.b16 %v4575, %v4571
        %v6824 = vpack.c.b16 %v4576, %v4572
        %v6825 = vpack.c.b16 %v4581, %v4577
        %v6826 = vpack.c.b16 %v4582, %v4578
        %v6827 = vpack.c.b16 %v4583, %v4579
        %v6828 = vpack.c.b16 %v4584, %v4580
        %v6829 = vpack.c.b16 %v4589, %v4585
        %v6830 = vpack.c.b16 %v4590, %v4586
        %v6831 = vpack.c.b16 %v4591, %v4587
        %v6832 = vpack.c.b16 %v4592, %v4588
        %v6833 = vpack.c.b16 %v4597, %v4593
        %v6834 = vpack.c.b16 %v4598, %v4594
        %v6835 = vpack.c.b16 %v4599, %v4595
        %v6836 = vpack.c.b16 %v4600, %v4596
        %v6837 = vpack.c.b16 %v4605, %v4601
        %v6838 = vpack.c.b16 %v4606, %v4602
        %v6839 = vpack.c.b16 %v4607, %v4603
        %v6840 = vpack.c.b16 %v4608, %v4604
        %v6841 = vpack.c.b16 %v4613, %v4609
        %v6842 = vpack.c.b16 %v4614, %v4610
        %v6843 = vpack.c.b16 %v4615, %v4611
        %v6844 = vpack.c.b16 %v4616, %v4612
        %v6845 = vpack.c.b16 %v4621, %v4617
        %v6846 = vpack.c.b16 %v4622, %v4618
        %v6847 = vpack.c.b16 %v4623, %v4619
        %v6848 = vpack.c.b16 %v4624, %v4620
        %v6849 = vpack.c.b16 %v4629, %v4625
        %v6850 = vpack.c.b16 %v4630, %v4626
        %v6851 = vpack.c.b16 %v4631, %v4627
        %v6852 = vpack.c.b16 %v4632, %v4628
        %v6853 = vpack.c.b16 %v4637, %v4633
        %v6854 = vpack.c.b16 %v4638, %v4634
        %v6855 = vpack.c.b16 %v4639, %v4635
        %v6856 = vpack.c.b16 %v4640, %v4636
        %v6857 = vpack.c.b16 %v4645, %v4641
        %v6858 = vpack.c.b16 %v4646, %v4642
        %v6859 = vpack.c.b16 %v4647, %v4643
        %v6860 = vpack.c.b16 %v4648, %v4644
        %v6861 = vpack.c.b16 %v4653, %v4649
        %v6862 = vpack.c.b16 %v4654, %v4650
        %v6863 = vpack.c.b16 %v4655, %v4651
        %v6864 = vpack.c.b16 %v4656, %v4652
        %v6865 = vpack.c.b16 %v4661, %v4657
        %v6866 = vpack.c.b16 %v4662, %v4658
        %v6867 = vpack.c.b16 %v4663, %v4659
        %v6868 = vpack.c.b16 %v4664, %v4660
        %v6869 = vpack.c.b16 %v4669, %v4665
        %v6870 = vpack.c.b16 %v4670, %v4666
        %v6871 = vpack.c.b16 %v4671, %v4667
        %v6872 = vpack.c.b16 %v4672, %v4668
        %v6873 = vpack.c.b16 %v4677, %v4673
        %v6874 = vpack.c.b16 %v4678, %v4674
        %v6875 = vpack.c.b16 %v4679, %v4675
        %v6876 = vpack.c.b16 %v4680, %v4676
        %v6877 = vpack.c.b16 %v4685, %v4681
        %v6878 = vpack.c.b16 %v4686, %v4682
        %v6879 = vpack.c.b16 %v4687, %v4683
        %v6880 = vpack.c.b16 %v4688, %v4684
        %v6881 = vpack.c.b16 %v4693, %v4689
        %v6882 = vpack.c.b16 %v4694, %v4690
        %v6883 = vpack.c.b16 %v4695, %v4691
        %v6884 = vpack.c.b16 %v4696, %v4692
        %v6885 = vpack.c.b16 %v4701, %v4697
        %v6886 = vpack.c.b16 %v4702, %v4698
        %v6887 = vpack.c.b16 %v4703, %v4699
        %v6888 = vpack.c.b16 %v4704, %v4700
        %v6889 = vpack.c.b16 %v4709, %v4705
        %v6890 = vpack.c.b16 %v4710, %v4706
        %v6891 = vpack.c.b16 %v4711, %v4707
        %v6892 = vpack.c.b16 %v4712, %v4708
        %v6893 = vpack.c.b16 %v4717, %v4713
        %v6894 = vpack.c.b16 %v4718, %v4714
        %v6895 = vpack.c.b16 %v4719, %v4715
        %v6896 = vpack.c.b16 %v4720, %v4716
        %v6897 = vpack.c.b16 %v4725, %v4721
        %v6898 = vpack.c.b16 %v4726, %v4722
        %v6899 = vpack.c.b16 %v4727, %v4723
        %v6900 = vpack.c.b16 %v4728, %v4724
        %v6901 = vpack.c.b16 %v4733, %v4729
        %v6902 = vpack.c.b16 %v4734, %v4730
        %v6903 = vpack.c.b16 %v4735, %v4731
        %v6904 = vpack.c.b16 %v4736, %v4732
        %v6905 = vpack.c.b16 %v4741, %v4737
        %v6906 = vpack.c.b16 %v4742, %v4738
        %v6907 = vpack.c.b16 %v4743, %v4739
        %v6908 = vpack.c.b16 %v4744, %v4740
        %v6909 = vpack.c.b16 %v4749, %v4745
        %v6910 = vpack.c.b16 %v4750, %v4746
        %v6911 = vpack.c.b16 %v4751, %v4747
        %v6912 = vpack.c.b16 %v4752, %v4748
        %v6913 = vpack.c.b16 %v4757, %v4753
        %v6914 = vpack.c.b16 %v4758, %v4754
        %v6915 = vpack.c.b16 %v4759, %v4755
        %v6916 = vpack.c.b16 %v4760, %v4756
        %v6917 = vpack.c.b16 %v4765, %v4761
        %v6918 = vpack.c.b16 %v4766, %v4762
        %v6919 = vpack.c.b16 %v4767, %v4763
        %v6920 = vpack.c.b16 %v4768, %v4764
        %v6921 = vpack.c.b16 %v4773, %v4769
        %v6922 = vpack.c.b16 %v4774, %v4770
        %v6923 = vpack.c.b16 %v4775, %v4771
        %v6924 = vpack.c.b16 %v4776, %v4772
        %v6925 = vpack.c.b16 %v4781, %v4777
        %v6926 = vpack.c.b16 %v4782, %v4778
        %v6927 = vpack.c.b16 %v4783, %v4779
        %v6928 = vpack.c.b16 %v4784, %v4780
        %v6929 = vpack.c.b16 %v4789, %v4785
        %v6930 = vpack.c.b16 %v4790, %v4786
        %v6931 = vpack.c.b16 %v4791, %v4787
        %v6932 = vpack.c.b16 %v4792, %v4788
        %v6933 = vpack.c.b16 %v4797, %v4793
        %v6934 = vpack.c.b16 %v4798, %v4794
        %v6935 = vpack.c.b16 %v4799, %v4795
        %v6936 = vpack.c.b16 %v4800, %v4796
        %v6937 = vpack.c.b16 %v4805, %v4801
        %v6938 = vpack.c.b16 %v4806, %v4802
        %v6939 = vpack.c.b16 %v4807, %v4803
        %v6940 = vpack.c.b16 %v4808, %v4804
        %v6941 = vpack.c.b16 %v4813, %v4809
        %v6942 = vpack.c.b16 %v4814, %v4810
        %v6943 = vpack.c.b16 %v4815, %v4811
        %v6944 = vpack.c.b16 %v4816, %v4812
        %v6945 = vpack.c.b16 %v4821, %v4817
        %v6946 = vpack.c.b16 %v4822, %v4818
        %v6947 = vpack.c.b16 %v4823, %v4819
        %v6948 = vpack.c.b16 %v4824, %v4820
        %v6949 = vpack.c.b16 %v4829, %v4825
        %v6950 = vpack.c.b16 %v4830, %v4826
        %v6951 = vpack.c.b16 %v4831, %v4827
        %v6952 = vpack.c.b16 %v4832, %v4828
        %v6953 = vpack.c.b16 %v4837, %v4833
        %v6954 = vpack.c.b16 %v4838, %v4834
        %v6955 = vpack.c.b16 %v4839, %v4835
        %v6956 = vpack.c.b16 %v4840, %v4836
        %v6957 = vpack.c.b16 %v4845, %v4841
        %v6958 = vpack.c.b16 %v4846, %v4842
        %v6959 = vpack.c.b16 %v4847, %v4843
        %v6960 = vpack.c.b16 %v4848, %v4844
        %v6961 = vpack.c.b16 %v4853, %v4849
        %v6962 = vpack.c.b16 %v4854, %v4850
        %v6963 = vpack.c.b16 %v4855, %v4851
        %v6964 = vpack.c.b16 %v4856, %v4852
        %v6965 = vpack.c.b16 %v4861, %v4857
        %v6966 = vpack.c.b16 %v4862, %v4858
        %v6967 = vpack.c.b16 %v4863, %v4859
        %v6968 = vpack.c.b16 %v4864, %v4860
        %v6969 = vpack.c.b16 %v4869, %v4865
        %v6970 = vpack.c.b16 %v4870, %v4866
        %v6971 = vpack.c.b16 %v4871, %v4867
        %v6972 = vpack.c.b16 %v4872, %v4868
        %v6973 = vpack.c.b16 %v4877, %v4873
        %v6974 = vpack.c.b16 %v4878, %v4874
        %v6975 = vpack.c.b16 %v4879, %v4875
        %v6976 = vpack.c.b16 %v4880, %v4876
        %v6977 = vpack.c.b16 %v4885, %v4881
        %v6978 = vpack.c.b16 %v4886, %v4882
        %v6979 = vpack.c.b16 %v4887, %v4883
        %v6980 = vpack.c.b16 %v4888, %v4884
        %v6981 = vpack.c.b16 %v4893, %v4889
        %v6982 = vpack.c.b16 %v4894, %v4890
        %v6983 = vpack.c.b16 %v4895, %v4891
        %v6984 = vpack.c.b16 %v4896, %v4892
        %v6985 = vpack.c.b16 %v4901, %v4897
        %v6986 = vpack.c.b16 %v4902, %v4898
        %v6987 = vpack.c.b16 %v4903, %v4899
        %v6988 = vpack.c.b16 %v4904, %v4900
        %v6989 = vpack.c.b16 %v4909, %v4905
        %v6990 = vpack.c.b16 %v4910, %v4906
        %v6991 = vpack.c.b16 %v4911, %v4907
        %v6992 = vpack.c.b16 %v4912, %v4908
        %v6993 = vpack.c.b16 %v4917, %v4913
        %v6994 = vpack.c.b16 %v4918, %v4914
        %v6995 = vpack.c.b16 %v4919, %v4915
        %v6996 = vpack.c.b16 %v4920, %v4916
        %v6997 = vpack.c.b16 %v4925, %v4921
        %v6998 = vpack.c.b16 %v4926, %v4922
        %v6999 = vpack.c.b16 %v4927, %v4923
        %v7000 = vpack.c.b16 %v4928, %v4924
        %v7001 = vpack.c.b16 %v4933, %v4929
        %v7002 = vpack.c.b16 %v4934, %v4930
        %v7003 = vpack.c.b16 %v4935, %v4931
        %v7004 = vpack.c.b16 %v4936, %v4932
        %v7005 = vpack.c.b16 %v4941, %v4937
        %v7006 = vpack.c.b16 %v4942, %v4938
        %v7007 = vpack.c.b16 %v4943, %v4939
        %v7008 = vpack.c.b16 %v4944, %v4940
        %v7009 = vpack.c.b16 %v4949, %v4945
        %v7010 = vpack.c.b16 %v4950, %v4946
        %v7011 = vpack.c.b16 %v4951, %v4947
        %v7012 = vpack.c.b16 %v4952, %v4948
        %v7013 = vpack.c.b16 %v4957, %v4953
        %v7014 = vpack.c.b16 %v4958, %v4954
        %v7015 = vpack.c.b16 %v4959, %v4955
        %v7016 = vpack.c.b16 %v4960, %v4956
        %v7017 = vpack.c.b16 %v4965, %v4961
        %v7018 = vpack.c.b16 %v4966, %v4962
        %v7019 = vpack.c.b16 %v4967, %v4963
        %v7020 = vpack.c.b16 %v4968, %v4964
        %v7021 = vpack.c.b16 %v4973, %v4969
        %v7022 = vpack.c.b16 %v4974, %v4970
        %v7023 = vpack.c.b16 %v4975, %v4971
        %v7024 = vpack.c.b16 %v4976, %v4972
        %v7025 = vpack.c.b16 %v4981, %v4977
        %v7026 = vpack.c.b16 %v4982, %v4978
        %v7027 = vpack.c.b16 %v4983, %v4979
        %v7028 = vpack.c.b16 %v4984, %v4980
        %v7029 = vpack.c.b16 %v4989, %v4985
        %v7030 = vpack.c.b16 %v4990, %v4986
        %v7031 = vpack.c.b16 %v4991, %v4987
        %v7032 = vpack.c.b16 %v4992, %v4988
        %v7033 = vpack.c.b16 %v4997, %v4993
        %v7034 = vpack.c.b16 %v4998, %v4994
        %v7035 = vpack.c.b16 %v4999, %v4995
        %v7036 = vpack.c.b16 %v5000, %v4996
        %v7037 = vpack.c.b16 %v5005, %v5001
        %v7038 = vpack.c.b16 %v5006, %v5002
        %v7039 = vpack.c.b16 %v5007, %v5003
        %v7040 = vpack.c.b16 %v5008, %v5004
        %v7041 = vpack.c.b16 %v5013, %v5009
        %v7042 = vpack.c.b16 %v5014, %v5010
        %v7043 = vpack.c.b16 %v5015, %v5011
        %v7044 = vpack.c.b16 %v5016, %v5012
        %v7045 = vpack.c.b16 %v5021, %v5017
        %v7046 = vpack.c.b16 %v5022, %v5018
        %v7047 = vpack.c.b16 %v5023, %v5019
        %v7048 = vpack.c.b16 %v5024, %v5020
        %v7049 = vpack.c.b16 %v5029, %v5025
        %v7050 = vpack.c.b16 %v5030, %v5026
        %v7051 = vpack.c.b16 %v5031, %v5027
        %v7052 = vpack.c.b16 %v5032, %v5028
        %v7053 = vpack.c.b16 %v5037, %v5033
        %v7054 = vpack.c.b16 %v5038, %v5034
        %v7055 = vpack.c.b16 %v5039, %v5035
        %v7056 = vpack.c.b16 %v5040, %v5036
        %v7057 = vpack.c.b16 %v5045, %v5041
        %v7058 = vpack.c.b16 %v5046, %v5042
        %v7059 = vpack.c.b16 %v5047, %v5043
        %v7060 = vpack.c.b16 %v5048, %v5044
        %v7061 = vpack.c.b16 %v5053, %v5049
        %v7062 = vpack.c.b16 %v5054, %v5050
        %v7063 = vpack.c.b16 %v5055, %v5051
        %v7064 = vpack.c.b16 %v5056, %v5052
        %v7065 = vpack.c.b16 %v5061, %v5057
        %v7066 = vpack.c.b16 %v5062, %v5058
        %v7067 = vpack.c.b16 %v5063, %v5059
        %v7068 = vpack.c.b16 %v5064, %v5060
        %v7069 = vpack.c.b16 %v5069, %v5065
        %v7070 = vpack.c.b16 %v5070, %v5066
        %v7071 = vpack.c.b16 %v5071, %v5067
        %v7072 = vpack.c.b16 %v5072, %v5068
        %v7073 = vpack.c.b16 %v5077, %v5073
        %v7074 = vpack.c.b16 %v5078, %v5074
        %v7075 = vpack.c.b16 %v5079, %v5075
        %v7076 = vpack.c.b16 %v5080, %v5076
        %v7077 = vpack.c.b16 %v5085, %v5081
        %v7078 = vpack.c.b16 %v5086, %v5082
        %v7079 = vpack.c.b16 %v5087, %v5083
        %v7080 = vpack.c.b16 %v5088, %v5084
        %v7081 = vpack.c.b16 %v5093, %v5089
        %v7082 = vpack.c.b16 %v5094, %v5090
        %v7083 = vpack.c.b16 %v5095, %v5091
        %v7084 = vpack.c.b16 %v5096, %v5092
        %v7085 = vpack.c.b16 %v5101, %v5097
        %v7086 = vpack.c.b16 %v5102, %v5098
        %v7087 = vpack.c.b16 %v5103, %v5099
        %v7088 = vpack.c.b16 %v5104, %v5100
        %v7089 = vpack.c.b16 %v5109, %v5105
        %v7090 = vpack.c.b16 %v5110, %v5106
        %v7091 = vpack.c.b16 %v5111, %v5107
        %v7092 = vpack.c.b16 %v5112, %v5108
        %v7093 = vpack.c.b16 %v5117, %v5113
        %v7094 = vpack.c.b16 %v5118, %v5114
        %v7095 = vpack.c.b16 %v5119, %v5115
        %v7096 = vpack.c.b16 %v5120, %v5116
        %v7097 = vpack.c.b16 %v5125, %v5121
        %v7098 = vpack.c.b16 %v5126, %v5122
        %v7099 = vpack.c.b16 %v5127, %v5123
        %v7100 = vpack.c.b16 %v5128, %v5124
        %v7101 = vpack.c.b16 %v5133, %v5129
        %v7102 = vpack.c.b16 %v5134, %v5130
        %v7103 = vpack.c.b16 %v5135, %v5131
        %v7104 = vpack.c.b16 %v5136, %v5132
        %v7105 = vpack.c.b16 %v5141, %v5137
        %v7106 = vpack.c.b16 %v5142, %v5138
        %v7107 = vpack.c.b16 %v5143, %v5139
        %v7108 = vpack.c.b16 %v5144, %v5140
        %v7109 = vpack.c.b16 %v5149, %v5145
        %v7110 = vpack.c.b16 %v5150, %v5146
        %v7111 = vpack.c.b16 %v5151, %v5147
        %v7112 = vpack.c.b16 %v5152, %v5148
        %v7113 = vpack.c.b16 %v5157, %v5153
        %v7114 = vpack.c.b16 %v5158, %v5154
        %v7115 = vpack.c.b16 %v5159, %v5155
        %v7116 = vpack.c.b16 %v5160, %v5156
        %v7117 = vpack.c.b16 %v5165, %v5161
        %v7118 = vpack.c.b16 %v5166, %v5162
        %v7119 = vpack.c.b16 %v5167, %v5163
        %v7120 = vpack.c.b16 %v5168, %v5164
        %v7121 = vpack.c.b16 %v5173, %v5169
        %v7122 = vpack.c.b16 %v5174, %v5170
        %v7123 = vpack.c.b16 %v5175, %v5171
        %v7124 = vpack.c.b16 %v5176, %v5172
        %v7125 = vpack.c.b16 %v5181, %v5177
        %v7126 = vpack.c.b16 %v5182, %v5178
        %v7127 = vpack.c.b16 %v5183, %v5179
        %v7128 = vpack.c.b16 %v5184, %v5180
        %v7129 = vpack.c.b16 %v5189, %v5185
        %v7130 = vpack.c.b16 %v5190, %v5186
        %v7131 = vpack.c.b16 %v5191, %v5187
        %v7132 = vpack.c.b16 %v5192, %v5188
        %v7133 = vpack.c.b16 %v5197, %v5193
        %v7134 = vpack.c.b16 %v5198, %v5194
        %v7135 = vpack.c.b16 %v5199, %v5195
        %v7136 = vpack.c.b16 %v5200, %v5196
        %v7137 = vpack.c.b16 %v5205, %v5201
        %v7138 = vpack.c.b16 %v5206, %v5202
        %v7139 = vpack.c.b16 %v5207, %v5203
        %v7140 = vpack.c.b16 %v5208, %v5204
        %v7141 = vpack.c.b16 %v5213, %v5209
        %v7142 = vpack.c.b16 %v5214, %v5210
        %v7143 = vpack.c.b16 %v5215, %v5211
        %v7144 = vpack.c.b16 %v5216, %v5212
        %v7145 = vpack.c.b16 %v5221, %v5217
        %v7146 = vpack.c.b16 %v5222, %v5218
        %v7147 = vpack.c.b16 %v5223, %v5219
        %v7148 = vpack.c.b16 %v5224, %v5220
        %v7149 = vpack.c.b16 %v5229, %v5225
        %v7150 = vpack.c.b16 %v5230, %v5226
        %v7151 = vpack.c.b16 %v5231, %v5227
        %v7152 = vpack.c.b16 %v5232, %v5228
        %v7153 = vpack.c.b16 %v5237, %v5233
        %v7154 = vpack.c.b16 %v5238, %v5234
        %v7155 = vpack.c.b16 %v5239, %v5235
        %v7156 = vpack.c.b16 %v5240, %v5236
        %v7157 = vpack.c.b16 %v5245, %v5241
        %v7158 = vpack.c.b16 %v5246, %v5242
        %v7159 = vpack.c.b16 %v5247, %v5243
        %v7160 = vpack.c.b16 %v5248, %v5244
        %v7161 = vpack.c.b16 %v5253, %v5249
        %v7162 = vpack.c.b16 %v5254, %v5250
        %v7163 = vpack.c.b16 %v5255, %v5251
        %v7164 = vpack.c.b16 %v5256, %v5252
        %v7165 = vpack.c.b16 %v5261, %v5257
        %v7166 = vpack.c.b16 %v5262, %v5258
        %v7167 = vpack.c.b16 %v5263, %v5259
        %v7168 = vpack.c.b16 %v5264, %v5260
        %v7169 = vpack.c.b16 %v5269, %v5265
        %v7170 = vpack.c.b16 %v5270, %v5266
        %v7171 = vpack.c.b16 %v5271, %v5267
        %v7172 = vpack.c.b16 %v5272, %v5268
        %v7173 = vpack.c.b16 %v5277, %v5273
        %v7174 = vpack.c.b16 %v5278, %v5274
        %v7175 = vpack.c.b16 %v5279, %v5275
        %v7176 = vpack.c.b16 %v5280, %v5276
        %v7177 = vpack.c.b16 %v5285, %v5281
        %v7178 = vpack.c.b16 %v5286, %v5282
        %v7179 = vpack.c.b16 %v5287, %v5283
        %v7180 = vpack.c.b16 %v5288, %v5284
        %v7181 = vpack.c.b16 %v5293, %v5289
        %v7182 = vpack.c.b16 %v5294, %v5290
        %v7183 = vpack.c.b16 %v5295, %v5291
        %v7184 = vpack.c.b16 %v5296, %v5292
        %v7185 = vpack.c.b16 %v5301, %v5297
        %v7186 = vpack.c.b16 %v5302, %v5298
        %v7187 = vpack.c.b16 %v5303, %v5299
        %v7188 = vpack.c.b16 %v5304, %v5300
        %v7189 = vpack.c.b16 %v5309, %v5305
        %v7190 = vpack.c.b16 %v5310, %v5306
        %v7191 = vpack.c.b16 %v5311, %v5307
        %v7192 = vpack.c.b16 %v5312, %v5308
        %v7193 = vpack.c.b16 %v5317, %v5313
        %v7194 = vpack.c.b16 %v5318, %v5314
        %v7195 = vpack.c.b16 %v5319, %v5315
        %v7196 = vpack.c.b16 %v5320, %v5316
        %v7197 = vpack.c.b16 %v5325, %v5321
        %v7198 = vpack.c.b16 %v5326, %v5322
        %v7199 = vpack.c.b16 %v5327, %v5323
        %v7200 = vpack.c.b16 %v5328, %v5324
        %v7201 = vpack.c.b16 %v5333, %v5329
        %v7202 = vpack.c.b16 %v5334, %v5330
        %v7203 = vpack.c.b16 %v5335, %v5331
        %v7204 = vpack.c.b16 %v5336, %v5332
        %v7205 = vpack.c.b16 %v5341, %v5337
        %v7206 = vpack.c.b16 %v5342, %v5338
        %v7207 = vpack.c.b16 %v5343, %v5339
        %v7208 = vpack.c.b16 %v5344, %v5340
        %v7209 = vpack.c.b16 %v5349, %v5345
        %v7210 = vpack.c.b16 %v5350, %v5346
        %v7211 = vpack.c.b16 %v5351, %v5347
        %v7212 = vpack.c.b16 %v5352, %v5348
        %v7213 = vpack.c.b16 %v5357, %v5353
        %v7214 = vpack.c.b16 %v5358, %v5354
        %v7215 = vpack.c.b16 %v5359, %v5355
        %v7216 = vpack.c.b16 %v5360, %v5356
        %v7217 = vpack.c.b16 %v5365, %v5361
        %v7218 = vpack.c.b16 %v5366, %v5362
        %v7219 = vpack.c.b16 %v5367, %v5363
        %v7220 = vpack.c.b16 %v5368, %v5364
        %v7221 = vpack.c.b16 %v5373, %v5369
        %v7222 = vpack.c.b16 %v5374, %v5370
        %v7223 = vpack.c.b16 %v5375, %v5371
        %v7224 = vpack.c.b16 %v5376, %v5372
        %v7225 = vpack.c.b16 %v5381, %v5377
        %v7226 = vpack.c.b16 %v5382, %v5378
        %v7227 = vpack.c.b16 %v5383, %v5379
        %v7228 = vpack.c.b16 %v5384, %v5380
        %v7229 = vpack.c.b16 %v5389, %v5385
        %v7230 = vpack.c.b16 %v5390, %v5386
        %v7231 = vpack.c.b16 %v5391, %v5387
        %v7232 = vpack.c.b16 %v5392, %v5388
        %v7233 = vpack.c.b16 %v5397, %v5393
        %v7234 = vpack.c.b16 %v5398, %v5394
        %v7235 = vpack.c.b16 %v5399, %v5395
        %v7236 = vpack.c.b16 %v5400, %v5396
        %v7237 = vpack.c.b16 %v5405, %v5401
        %v7238 = vpack.c.b16 %v5406, %v5402
        %v7239 = vpack.c.b16 %v5407, %v5403
        %v7240 = vpack.c.b16 %v5408, %v5404
        %v7241 = vpack.c.b16 %v5413, %v5409
        %v7242 = vpack.c.b16 %v5414, %v5410
        %v7243 = vpack.c.b16 %v5415, %v5411
        %v7244 = vpack.c.b16 %v5416, %v5412
        %v7245 = vpack.c.b16 %v5421, %v5417
        %v7246 = vpack.c.b16 %v5422, %v5418
        %v7247 = vpack.c.b16 %v5423, %v5419
        %v7248 = vpack.c.b16 %v5424, %v5420
        %v7249 = vpack.c.b16 %v5429, %v5425
        %v7250 = vpack.c.b16 %v5430, %v5426
        %v7251 = vpack.c.b16 %v5431, %v5427
        %v7252 = vpack.c.b16 %v5432, %v5428
        %v7253 = vpack.c.b16 %v5437, %v5433
        %v7254 = vpack.c.b16 %v5438, %v5434
        %v7255 = vpack.c.b16 %v5439, %v5435
        %v7256 = vpack.c.b16 %v5440, %v5436
        %v7257 = vpack.c.b16 %v5445, %v5441
        %v7258 = vpack.c.b16 %v5446, %v5442
        %v7259 = vpack.c.b16 %v5447, %v5443
        %v7260 = vpack.c.b16 %v5448, %v5444
        %v7261 = vpack.c.b16 %v5453, %v5449
        %v7262 = vpack.c.b16 %v5454, %v5450
        %v7263 = vpack.c.b16 %v5455, %v5451
        %v7264 = vpack.c.b16 %v5456, %v5452
        %v7265 = vpack.c.b16 %v5461, %v5457
        %v7266 = vpack.c.b16 %v5462, %v5458
        %v7267 = vpack.c.b16 %v5463, %v5459
        %v7268 = vpack.c.b16 %v5464, %v5460
        %v7269 = vpack.c.b16 %v5469, %v5465
        %v7270 = vpack.c.b16 %v5470, %v5466
        %v7271 = vpack.c.b16 %v5471, %v5467
        %v7272 = vpack.c.b16 %v5472, %v5468
        %v7273 = vpack.c.b16 %v5477, %v5473
        %v7274 = vpack.c.b16 %v5478, %v5474
        %v7275 = vpack.c.b16 %v5479, %v5475
        %v7276 = vpack.c.b16 %v5480, %v5476
        %v7277 = vpack.c.b16 %v5485, %v5481
        %v7278 = vpack.c.b16 %v5486, %v5482
        %v7279 = vpack.c.b16 %v5487, %v5483
        %v7280 = vpack.c.b16 %v5488, %v5484
        %v7281 = vpack.c.b16 %v5493, %v5489
        %v7282 = vpack.c.b16 %v5494, %v5490
        %v7283 = vpack.c.b16 %v5495, %v5491
        %v7284 = vpack.c.b16 %v5496, %v5492
        %v7285 = vpack.c.b16 %v5501, %v5497
        %v7286 = vpack.c.b16 %v5502, %v5498
        %v7287 = vpack.c.b16 %v5503, %v5499
        %v7288 = vpack.c.b16 %v5504, %v5500
        %v7289 = vpack.c.b16 %v5509, %v5505
        %v7290 = vpack.c.b16 %v5510, %v5506
        %v7291 = vpack.c.b16 %v5511, %v5507
        %v7292 = vpack.c.b16 %v5512, %v5508
        %v7293 = vpack.c.b16 %v5517, %v5513
        %v7294 = vpack.c.b16 %v5518, %v5514
        %v7295 = vpack.c.b16 %v5519, %v5515
        %v7296 = vpack.c.b16 %v5520, %v5516
        %v7297 = vpack.c.b16 %v5525, %v5521
        %v7298 = vpack.c.b16 %v5526, %v5522
        %v7299 = vpack.c.b16 %v5527, %v5523
        %v7300 = vpack.c.b16 %v5528, %v5524
        %v7301 = vpack.c.b16 %v5533, %v5529
        %v7302 = vpack.c.b16 %v5534, %v5530
        %v7303 = vpack.c.b16 %v5535, %v5531
        %v7304 = vpack.c.b16 %v5536, %v5532
        %v7305 = vpack.c.b16 %v5541, %v5537
        %v7306 = vpack.c.b16 %v5542, %v5538
        %v7307 = vpack.c.b16 %v5543, %v5539
        %v7308 = vpack.c.b16 %v5544, %v5540
        %v7309 = vpack.c.b16 %v5549, %v5545
        %v7310 = vpack.c.b16 %v5550, %v5546
        %v7311 = vpack.c.b16 %v5551, %v5547
        %v7312 = vpack.c.b16 %v5552, %v5548
        %v7313 = vpack.c.b16 %v5557, %v5553
        %v7314 = vpack.c.b16 %v5558, %v5554
        %v7315 = vpack.c.b16 %v5559, %v5555
        %v7316 = vpack.c.b16 %v5560, %v5556
        %v7317 = vpack.c.b16 %v5565, %v5561
        %v7318 = vpack.c.b16 %v5566, %v5562
        %v7319 = vpack.c.b16 %v5567, %v5563
        %v7320 = vpack.c.b16 %v5568, %v5564
        %v7321 = vpack.c.b16 %v5573, %v5569
        %v7322 = vpack.c.b16 %v5574, %v5570
        %v7323 = vpack.c.b16 %v5575, %v5571
        %v7324 = vpack.c.b16 %v5576, %v5572
        %v7325 = vpack.c.b16 %v5581, %v5577
        %v7326 = vpack.c.b16 %v5582, %v5578
        %v7327 = vpack.c.b16 %v5583, %v5579
        %v7328 = vpack.c.b16 %v5584, %v5580
        %v7329 = vpack.c.b16 %v5589, %v5585
        %v7330 = vpack.c.b16 %v5590, %v5586
        %v7331 = vpack.c.b16 %v5591, %v5587
        %v7332 = vpack.c.b16 %v5592, %v5588
        %v7333 = vpack.c.b16 %v5597, %v5593
        %v7334 = vpack.c.b16 %v5598, %v5594
        %v7335 = vpack.c.b16 %v5599, %v5595
        %v7336 = vpack.c.b16 %v5600, %v5596
        %v7337 = vpack.c.b16 %v5605, %v5601
        %v7338 = vpack.c.b16 %v5606, %v5602
        %v7339 = vpack.c.b16 %v5607, %v5603
        %v7340 = vpack.c.b16 %v5608, %v5604
        %v7341 = vpack.c.b16 %v5613, %v5609
        %v7342 = vpack.c.b16 %v5614, %v5610
        %v7343 = vpack.c.b16 %v5615, %v5611
        %v7344 = vpack.c.b16 %v5616, %v5612
        %v7345 = vpack.c.b16 %v5621, %v5617
        %v7346 = vpack.c.b16 %v5622, %v5618
        %v7347 = vpack.c.b16 %v5623, %v5619
        %v7348 = vpack.c.b16 %v5624, %v5620
        %v7349 = vpack.c.b16 %v5629, %v5625
        %v7350 = vpack.c.b16 %v5630, %v5626
        %v7351 = vpack.c.b16 %v5631, %v5627
        %v7352 = vpack.c.b16 %v5632, %v5628
        %v7353 = vpack.c.b16 %v5637, %v5633
        %v7354 = vpack.c.b16 %v5638, %v5634
        %v7355 = vpack.c.b16 %v5639, %v5635
        %v7356 = vpack.c.b16 %v5640, %v5636
        %v7357 = vpack.c.b16 %v5645, %v5641
        %v7358 = vpack.c.b16 %v5646, %v5642
        %v7359 = vpack.c.b16 %v5647, %v5643
        %v7360 = vpack.c.b16 %v5648, %v5644
        %v7361 = vpack.c.b16 %v5653, %v5649
        %v7362 = vpack.c.b16 %v5654, %v5650
        %v7363 = vpack.c.b16 %v5655, %v5651
        %v7364 = vpack.c.b16 %v5656, %v5652
        %v7365 = vpack.c.b16 %v5661, %v5657
        %v7366 = vpack.c.b16 %v5662, %v5658
        %v7367 = vpack.c.b16 %v5663, %v5659
        %v7368 = vpack.c.b16 %v5664, %v5660
        %v7369 = vpack.c.b16 %v5669, %v5665
        %v7370 = vpack.c.b16 %v5670, %v5666
        %v7371 = vpack.c.b16 %v5671, %v5667
        %v7372 = vpack.c.b16 %v5672, %v5668
        %v7373 = vpack.c.b16 %v5677, %v5673
        %v7374 = vpack.c.b16 %v5678, %v5674
        %v7375 = vpack.c.b16 %v5679, %v5675
        %v7376 = vpack.c.b16 %v5680, %v5676
        %v7377 = vpack.c.b16 %v5685, %v5681
        %v7378 = vpack.c.b16 %v5686, %v5682
        %v7379 = vpack.c.b16 %v5687, %v5683
        %v7380 = vpack.c.b16 %v5688, %v5684
        %v7381 = vpack.c.b16 %v5693, %v5689
        %v7382 = vpack.c.b16 %v5694, %v5690
        %v7383 = vpack.c.b16 %v5695, %v5691
        %v7384 = vpack.c.b16 %v5696, %v5692
        %v7385 = vpack.c.b16 %v5701, %v5697
        %v7386 = vpack.c.b16 %v5702, %v5698
        %v7387 = vpack.c.b16 %v5703, %v5699
        %v7388 = vpack.c.b16 %v5704, %v5700
        %v7389 = vpack.c.b16 %v5709, %v5705
        %v7390 = vpack.c.b16 %v5710, %v5706
        %v7391 = vpack.c.b16 %v5711, %v5707
        %v7392 = vpack.c.b16 %v5712, %v5708
        %v7393 = vpack.c.b16 %v5717, %v5713
        %v7394 = vpack.c.b16 %v5718, %v5714
        %v7395 = vpack.c.b16 %v5719, %v5715
        %v7396 = vpack.c.b16 %v5720, %v5716
        %v7397 = vpack.c.b16 %v5725, %v5721
        %v7398 = vpack.c.b16 %v5726, %v5722
        %v7399 = vpack.c.b16 %v5727, %v5723
        %v7400 = vpack.c.b16 %v5728, %v5724
        %v7401 = vpack.c.b16 %v5733, %v5729
        %v7402 = vpack.c.b16 %v5734, %v5730
        %v7403 = vpack.c.b16 %v5735, %v5731
        %v7404 = vpack.c.b16 %v5736, %v5732
        %v7405 = vpack.c.b16 %v5741, %v5737
        %v7406 = vpack.c.b16 %v5742, %v5738
        %v7407 = vpack.c.b16 %v5743, %v5739
        %v7408 = vpack.c.b16 %v5744, %v5740
        %v7409 = vpack.c.b16 %v5749, %v5745
        %v7410 = vpack.c.b16 %v5750, %v5746
        %v7411 = vpack.c.b16 %v5751, %v5747
        %v7412 = vpack.c.b16 %v5752, %v5748
        %v7413 = vpack.c.b16 %v5757, %v5753
        %v7414 = vpack.c.b16 %v5758, %v5754
        %v7415 = vpack.c.b16 %v5759, %v5755
        %v7416 = vpack.c.b16 %v5760, %v5756
        %v7417 = vpack.c.b16 %v5765, %v5761
        %v7418 = vpack.c.b16 %v5766, %v5762
        %v7419 = vpack.c.b16 %v5767, %v5763
        %v7420 = vpack.c.b16 %v5768, %v5764
        %v7421 = vpack.c.b16 %v5773, %v5769
        %v7422 = vpack.c.b16 %v5774, %v5770
        %v7423 = vpack.c.b16 %v5775, %v5771
        %v7424 = vpack.c.b16 %v5776, %v5772
        %v7425 = vpack.c.b16 %v5781, %v5777
        %v7426 = vpack.c.b16 %v5782, %v5778
        %v7427 = vpack.c.b16 %v5783, %v5779
        %v7428 = vpack.c.b16 %v5784, %v5780
        %v7429 = vpack.c.b16 %v5789, %v5785
        %v7430 = vpack.c.b16 %v5790, %v5786
        %v7431 = vpack.c.b16 %v5791, %v5787
        %v7432 = vpack.c.b16 %v5792, %v5788
        %v7433 = vpack.c.b16 %v5797, %v5793
        %v7434 = vpack.c.b16 %v5798, %v5794
        %v7435 = vpack.c.b16 %v5799, %v5795
        %v7436 = vpack.c.b16 %v5800, %v5796
        %v7437 = vpack.c.b16 %v5805, %v5801
        %v7438 = vpack.c.b16 %v5806, %v5802
        %v7439 = vpack.c.b16 %v5807, %v5803
        %v7440 = vpack.c.b16 %v5808, %v5804
        %v7441 = vpack.c.b16 %v5813, %v5809
        %v7442 = vpack.c.b16 %v5814, %v5810
        %v7443 = vpack.c.b16 %v5815, %v5811
        %v7444 = vpack.c.b16 %v5816, %v5812
        %v7445 = vpack.c.b16 %v5821, %v5817
        %v7446 = vpack.c.b16 %v5822, %v5818
        %v7447 = vpack.c.b16 %v5823, %v5819
        %v7448 = vpack.c.b16 %v5824, %v5820
        %v7449 = vpack.c.b16 %v5829, %v5825
        %v7450 = vpack.c.b16 %v5830, %v5826
        %v7451 = vpack.c.b16 %v5831, %v5827
        %v7452 = vpack.c.b16 %v5832, %v5828
        %v7453 = vpack.c.b16 %v5837, %v5833
        %v7454 = vpack.c.b16 %v5838, %v5834
        %v7455 = vpack.c.b16 %v5839, %v5835
        %v7456 = vpack.c.b16 %v5840, %v5836
        %v7457 = vpack.c.b16 %v5845, %v5841
        %v7458 = vpack.c.b16 %v5846, %v5842
        %v7459 = vpack.c.b16 %v5847, %v5843
        %v7460 = vpack.c.b16 %v5848, %v5844
        %v7461 = vpack.c.b16 %v5853, %v5849
        %v7462 = vpack.c.b16 %v5854, %v5850
        %v7463 = vpack.c.b16 %v5855, %v5851
        %v7464 = vpack.c.b16 %v5856, %v5852
        %v7465 = vpack.c.b16 %v5861, %v5857
        %v7466 = vpack.c.b16 %v5862, %v5858
        %v7467 = vpack.c.b16 %v5863, %v5859
        %v7468 = vpack.c.b16 %v5864, %v5860
        %v7469 = vpack.c.b16 %v5869, %v5865
        %v7470 = vpack.c.b16 %v5870, %v5866
        %v7471 = vpack.c.b16 %v5871, %v5867
        %v7472 = vpack.c.b16 %v5872, %v5868
        %v7473 = vpack.c.b16 %v5877, %v5873
        %v7474 = vpack.c.b16 %v5878, %v5874
        %v7475 = vpack.c.b16 %v5879, %v5875
        %v7476 = vpack.c.b16 %v5880, %v5876
        %v7477 = vpack.c.b16 %v5885, %v5881
        %v7478 = vpack.c.b16 %v5886, %v5882
        %v7479 = vpack.c.b16 %v5887, %v5883
        %v7480 = vpack.c.b16 %v5888, %v5884
        %v7481 = vpack.c.b16 %v5893, %v5889
        %v7482 = vpack.c.b16 %v5894, %v5890
        %v7483 = vpack.c.b16 %v5895, %v5891
        %v7484 = vpack.c.b16 %v5896, %v5892
        %v7485 = vpack.c.b16 %v5901, %v5897
        %v7486 = vpack.c.b16 %v5902, %v5898
        %v7487 = vpack.c.b16 %v5903, %v5899
        %v7488 = vpack.c.b16 %v5904, %v5900
        %v7489 = vpack.c.b16 %v5909, %v5905
        %v7490 = vpack.c.b16 %v5910, %v5906
        %v7491 = vpack.c.b16 %v5911, %v5907
        %v7492 = vpack.c.b16 %v5912, %v5908
        %v7493 = vpack.c.b16 %v5917, %v5913
        %v7494 = vpack.c.b16 %v5918, %v5914
        %v7495 = vpack.c.b16 %v5919, %v5915
        %v7496 = vpack.c.b16 %v5920, %v5916
        %v7497 = vpack.c.b16 %v5925, %v5921
        %v7498 = vpack.c.b16 %v5926, %v5922
        %v7499 = vpack.c.b16 %v5927, %v5923
        %v7500 = vpack.c.b16 %v5928, %v5924
        %v7501 = vpack.c.b16 %v5933, %v5929
        %v7502 = vpack.c.b16 %v5934, %v5930
        %v7503 = vpack.c.b16 %v5935, %v5931
        %v7504 = vpack.c.b16 %v5936, %v5932
        %v7505 = vpack.c.b16 %v5941, %v5937
        %v7506 = vpack.c.b16 %v5942, %v5938
        %v7507 = vpack.c.b16 %v5943, %v5939
        %v7508 = vpack.c.b16 %v5944, %v5940
        %v7509 = vpack.c.b16 %v5949, %v5945
        %v7510 = vpack.c.b16 %v5950, %v5946
        %v7511 = vpack.c.b16 %v5951, %v5947
        %v7512 = vpack.c.b16 %v5952, %v5948
        %v7513 = vpack.c.b16 %v5957, %v5953
        %v7514 = vpack.c.b16 %v5958, %v5954
        %v7515 = vpack.c.b16 %v5959, %v5955
        %v7516 = vpack.c.b16 %v5960, %v5956
        %v7517 = vpack.c.b16 %v5965, %v5961
        %v7518 = vpack.c.b16 %v5966, %v5962
        %v7519 = vpack.c.b16 %v5967, %v5963
        %v7520 = vpack.c.b16 %v5968, %v5964
        %v7521 = vpack.c.b16 %v5973, %v5969
        %v7522 = vpack.c.b16 %v5974, %v5970
        %v7523 = vpack.c.b16 %v5975, %v5971
        %v7524 = vpack.c.b16 %v5976, %v5972
        %v7525 = vpack.c.b16 %v5981, %v5977
        %v7526 = vpack.c.b16 %v5982, %v5978
        %v7527 = vpack.c.b16 %v5983, %v5979
        %v7528 = vpack.c.b16 %v5984, %v5980
        %v7529 = vpack.c.b16 %v5989, %v5985
        %v7530 = vpack.c.b16 %v5990, %v5986
        %v7531 = vpack.c.b16 %v5991, %v5987
        %v7532 = vpack.c.b16 %v5992, %v5988
        %v7533 = vpack.c.b16 %v5997, %v5993
        %v7534 = vpack.c.b16 %v5998, %v5994
        %v7535 = vpack.c.b16 %v5999, %v5995
        %v7536 = vpack.c.b16 %v6000, %v5996
        %v7537 = vpack.c.b16 %v6005, %v6001
        %v7538 = vpack.c.b16 %v6006, %v6002
        %v7539 = vpack.c.b16 %v6007, %v6003
        %v7540 = vpack.c.b16 %v6008, %v6004
        %v7541 = vpack.c.b16 %v6013, %v6009
        %v7542 = vpack.c.b16 %v6014, %v6010
        %v7543 = vpack.c.b16 %v6015, %v6011
        %v7544 = vpack.c.b16 %v6016, %v6012
        %v7545 = vpack.c.b16 %v6021, %v6017
        %v7546 = vpack.c.b16 %v6022, %v6018
        %v7547 = vpack.c.b16 %v6023, %v6019
        %v7548 = vpack.c.b16 %v6024, %v6020
        %v7549 = vpack.c.b16 %v6029, %v6025
        %v7550 = vpack.c.b16 %v6030, %v6026
        %v7551 = vpack.c.b16 %v6031, %v6027
        %v7552 = vpack.c.b16 %v6032, %v6028
        %v7553 = vpack.c.b16 %v6037, %v6033
        %v7554 = vpack.c.b16 %v6038, %v6034
        %v7555 = vpack.c.b16 %v6039, %v6035
        %v7556 = vpack.c.b16 %v6040, %v6036
        %v7557 = vpack.c.b16 %v6045, %v6041
        %v7558 = vpack.c.b16 %v6046, %v6042
        %v7559 = vpack.c.b16 %v6047, %v6043
        %v7560 = vpack.c.b16 %v6048, %v6044
        %v7561 = vpack.c.b16 %v6053, %v6049
        %v7562 = vpack.c.b16 %v6054, %v6050
        %v7563 = vpack.c.b16 %v6055, %v6051
        %v7564 = vpack.c.b16 %v6056, %v6052
        %v7565 = vpack.c.b16 %v6061, %v6057
        %v7566 = vpack.c.b16 %v6062, %v6058
        %v7567 = vpack.c.b16 %v6063, %v6059
        %v7568 = vpack.c.b16 %v6064, %v6060
        %v7569 = vpack.c.b16 %v6069, %v6065
        %v7570 = vpack.c.b16 %v6070, %v6066
        %v7571 = vpack.c.b16 %v6071, %v6067
        %v7572 = vpack.c.b16 %v6072, %v6068
        %v7573 = vpack.c.b16 %v6077, %v6073
        %v7574 = vpack.c.b16 %v6078, %v6074
        %v7575 = vpack.c.b16 %v6079, %v6075
        %v7576 = vpack.c.b16 %v6080, %v6076
        %v7577 = vpack.c.b16 %v6085, %v6081
        %v7578 = vpack.c.b16 %v6086, %v6082
        %v7579 = vpack.c.b16 %v6087, %v6083
        %v7580 = vpack.c.b16 %v6088, %v6084
        %v7581 = vpack.c.b16 %v6093, %v6089
        %v7582 = vpack.c.b16 %v6094, %v6090
        %v7583 = vpack.c.b16 %v6095, %v6091
        %v7584 = vpack.c.b16 %v6096, %v6092
        %v7585 = vpack.c.b16 %v6101, %v6097
        %v7586 = vpack.c.b16 %v6102, %v6098
        %v7587 = vpack.c.b16 %v6103, %v6099
        %v7588 = vpack.c.b16 %v6104, %v6100
        %v7589 = vpack.c.b16 %v6109, %v6105
        %v7590 = vpack.c.b16 %v6110, %v6106
        %v7591 = vpack.c.b16 %v6111, %v6107
        %v7592 = vpack.c.b16 %v6112, %v6108
        %v7593 = vpack.c.b16 %v6117, %v6113
        %v7594 = vpack.c.b16 %v6118, %v6114
        %v7595 = vpack.c.b16 %v6119, %v6115
        %v7596 = vpack.c.b16 %v6120, %v6116
        %v7597 = vpack.c.b16 %v6125, %v6121
        %v7598 = vpack.c.b16 %v6126, %v6122
        %v7599 = vpack.c.b16 %v6127, %v6123
        %v7600 = vpack.c.b16 %v6128, %v6124
        %v7601 = vpack.c.b16 %v6133, %v6129
        %v7602 = vpack.c.b16 %v6134, %v6130
        %v7603 = vpack.c.b16 %v6135, %v6131
        %v7604 = vpack.c.b16 %v6136, %v6132
        %v7605 = vpack.c.b16 %v6141, %v6137
        %v7606 = vpack.c.b16 %v6142, %v6138
        %v7607 = vpack.c.b16 %v6143, %v6139
        %v7608 = vpack.c.b16 %v6144, %v6140
        %v7609 = vpack.c.b16 %v6149, %v6145
        %v7610 = vpack.c.b16 %v6150, %v6146
        %v7611 = vpack.c.b16 %v6151, %v6147
        %v7612 = vpack.c.b16 %v6152, %v6148
        %v7613 = vpack.c.b16 %v6157, %v6153
        %v7614 = vpack.c.b16 %v6158, %v6154
        %v7615 = vpack.c.b16 %v6159, %v6155
        %v7616 = vpack.c.b16 %v6160, %v6156
        %v7617 = vpack.c.b16 %v6165, %v6161
        %v7618 = vpack.c.b16 %v6166, %v6162
        %v7619 = vpack.c.b16 %v6167, %v6163
        %v7620 = vpack.c.b16 %v6168, %v6164
        %v7621 = vpack.c.b16 %v6173, %v6169
        %v7622 = vpack.c.b16 %v6174, %v6170
        %v7623 = vpack.c.b16 %v6175, %v6171
        %v7624 = vpack.c.b16 %v6176, %v6172
        %v7625 = vpack.c.b16 %v6181, %v6177
        %v7626 = vpack.c.b16 %v6182, %v6178
        %v7627 = vpack.c.b16 %v6183, %v6179
        %v7628 = vpack.c.b16 %v6184, %v6180
        %v7629 = vpack.c.b16 %v6189, %v6185
        %v7630 = vpack.c.b16 %v6190, %v6186
        %v7631 = vpack.c.b16 %v6191, %v6187
        %v7632 = vpack.c.b16 %v6192, %v6188
        %v7633 = vpack.c.b16 %v6197, %v6193
        %v7634 = vpack.c.b16 %v6198, %v6194
        %v7635 = vpack.c.b16 %v6199, %v6195
        %v7636 = vpack.c.b16 %v6200, %v6196
        %v7637 = vpack.c.b16 %v6205, %v6201
        %v7638 = vpack.c.b16 %v6206, %v6202
        %v7639 = vpack.c.b16 %v6207, %v6203
        %v7640 = vpack.c.b16 %v6208, %v6204
        %v7641 = vpack.c.b16 %v6213, %v6209
        %v7642 = vpack.c.b16 %v6214, %v6210
        %v7643 = vpack.c.b16 %v6215, %v6211
        %v7644 = vpack.c.b16 %v6216, %v6212
        %v7645 = vpack.c.b16 %v6221, %v6217
        %v7646 = vpack.c.b16 %v6222, %v6218
        %v7647 = vpack.c.b16 %v6223, %v6219
        %v7648 = vpack.c.b16 %v6224, %v6220
        %v7649 = vpack.c.b16 %v6229, %v6225
        %v7650 = vpack.c.b16 %v6230, %v6226
        %v7651 = vpack.c.b16 %v6231, %v6227
        %v7652 = vpack.c.b16 %v6232, %v6228
        %v7653 = vpack.c.b16 %v6237, %v6233
        %v7654 = vpack.c.b16 %v6238, %v6234
        %v7655 = vpack.c.b16 %v6239, %v6235
        %v7656 = vpack.c.b16 %v6240, %v6236
        %v7657 = vpack.c.b16 %v6245, %v6241
        %v7658 = vpack.c.b16 %v6246, %v6242
        %v7659 = vpack.c.b16 %v6247, %v6243
        %v7660 = vpack.c.b16 %v6248, %v6244
        %v7661 = vpack.c.b16 %v6253, %v6249
        %v7662 = vpack.c.b16 %v6254, %v6250
        %v7663 = vpack.c.b16 %v6255, %v6251
        %v7664 = vpack.c.b16 %v6256, %v6252
        %9073 = vmatprep.subr.bf16.mxu0 %v6258
        %9074 = vmatpush1.bf16.msra.mxu0 %v6257
        %9075 = vmatprep.subr.bf16.mxu0 %v6262
        %9076 = vmatpush1.bf16.msra.mxu0 %v6261
        %9077 = vmatprep.subr.bf16.mxu0 %v6266
        %9078 = vmatpush1.bf16.msra.mxu0 %v6265
        %9079 = vmatprep.subr.bf16.mxu0 %v6270
        %9080 = vmatpush1.bf16.msra.mxu0 %v6269
        %9081 = vmatprep.subr.bf16.mxu0 %v6274
        %9082 = vmatpush1.bf16.msra.mxu0 %v6273
        %9083 = vmatprep.subr.bf16.mxu0 %v6278
        %9084 = vmatpush1.bf16.msra.mxu0 %v6277
        %9085 = vmatprep.subr.bf16.mxu0 %v6282
        %9086 = vmatpush1.bf16.msra.mxu0 %v6281
        %9087 = vmatprep.subr.bf16.mxu0 %v6286
        %9088 = vmatpush1.bf16.msra.mxu0 %v6285
        %9089 = vmatprep.subr.bf16.mxu0 %v6290
        %9090 = vmatpush1.bf16.msra.mxu0 %v6289
        %9091 = vmatprep.subr.bf16.mxu0 %v6294
        %9092 = vmatpush1.bf16.msra.mxu0 %v6293
        %9093 = vmatprep.subr.bf16.mxu0 %v6298
        %9094 = vmatpush1.bf16.msra.mxu0 %v6297
        %9095 = vmatprep.subr.bf16.mxu0 %v6302
        %9096 = vmatpush1.bf16.msra.mxu0 %v6301
        %9097 = vmatprep.subr.bf16.mxu0 %v6306
        %9098 = vmatpush1.bf16.msra.mxu0 %v6305
        %9099 = vmatprep.subr.bf16.mxu0 %v6310
        %9100 = vmatpush1.bf16.msra.mxu0 %v6309
        %9101 = vmatprep.subr.bf16.mxu0 %v6314
        %9102 = vmatpush1.bf16.msra.mxu0 %v6313
        %9103 = vmatprep.subr.bf16.mxu0 %v6318
        %9104 = vmatpush1.bf16.msra.mxu0 %v6317
        %9105 = vmatprep.mubr.bf16.mxu0 %v1757
        %9106 = vmatmul.mubr.bf16.gmra.mrb[0].mxu0 %v1743
        %v9107 = vpop.f32.mrb[0].mxu0
        %v9108 = vadd.f32 %v1697, %v9107
        %v9109 = vpop.f32.mrb[0].mxu0
        %v9110 = vadd.f32 %v1701, %v9109
        %v9111 = vpop.f32.mrb[0].mxu0
        %v9112 = vpop.f32.mrb[0].mxu0
        %9113 = vdwg.mxu0
        %9114 = vmatprep.subr.bf16.mxu0 %v6322
        %9115 = vmatpush1.bf16.msra.mxu0 %v6321
        %9116 = vmatprep.subr.bf16.mxu0 %v6326
        %9117 = vmatpush1.bf16.msra.mxu0 %v6325
        %9118 = vmatprep.subr.bf16.mxu0 %v6330
        %9119 = vmatpush1.bf16.msra.mxu0 %v6329
        %9120 = vmatprep.subr.bf16.mxu0 %v6334
        %9121 = vmatpush1.bf16.msra.mxu0 %v6333
        %9122 = vmatprep.subr.bf16.mxu0 %v6338
        %9123 = vmatpush1.bf16.msra.mxu0 %v6337
        %9124 = vmatprep.subr.bf16.mxu0 %v6342
        %9125 = vmatpush1.bf16.msra.mxu0 %v6341
        %9126 = vmatprep.subr.bf16.mxu0 %v6346
        %9127 = vmatpush1.bf16.msra.mxu0 %v6345
        %9128 = vmatprep.subr.bf16.mxu0 %v6350
        %9129 = vmatpush1.bf16.msra.mxu0 %v6349
        %9130 = vmatprep.subr.bf16.mxu0 %v6354
        %9131 = vmatpush1.bf16.msra.mxu0 %v6353
        %9132 = vmatprep.subr.bf16.mxu0 %v6358
        %9133 = vmatpush1.bf16.msra.mxu0 %v6357
        %9134 = vmatprep.subr.bf16.mxu0 %v6362
        %9135 = vmatpush1.bf16.msra.mxu0 %v6361
        %9136 = vmatprep.subr.bf16.mxu0 %v6366
        %9137 = vmatpush1.bf16.msra.mxu0 %v6365
        %9138 = vmatprep.subr.bf16.mxu0 %v6370
        %9139 = vmatpush1.bf16.msra.mxu0 %v6369
        %9140 = vmatprep.subr.bf16.mxu0 %v6374
        %9141 = vmatpush1.bf16.msra.mxu0 %v6373
        %9142 = vmatprep.subr.bf16.mxu0 %v6378
        %9143 = vmatpush1.bf16.msra.mxu0 %v6377
        %9144 = vmatprep.subr.bf16.mxu0 %v6382
        %9145 = vmatpush1.bf16.msra.mxu0 %v6381
        %9146 = vmatprep.mubr.bf16.mxu0 %v1767
        %9147 = vmatmul.mubr.bf16.gmra.mrb[0].mxu0 %v1765
        %v9148 = vpop.f32.mrb[0].mxu0
        %v9149 = vadd.f32 %v9108, %v9148
        %v9150 = vpop.f32.mrb[0].mxu0
        %v9151 = vadd.f32 %v9110, %v9150
        %v9152 = vpop.f32.mrb[0].mxu0
        %v9153 = vpop.f32.mrb[0].mxu0
        %9154 = vdwg.mxu0
        %9155 = vmatprep.subr.bf16.mxu0 %v6386
        %9156 = vmatpush1.bf16.msra.mxu0 %v6385
        %9157 = vmatprep.subr.bf16.mxu0 %v6390
        %9158 = vmatpush1.bf16.msra.mxu0 %v6389
        %9159 = vmatprep.subr.bf16.mxu0 %v6394
        %9160 = vmatpush1.bf16.msra.mxu0 %v6393
        %9161 = vmatprep.subr.bf16.mxu0 %v6398
        %9162 = vmatpush1.bf16.msra.mxu0 %v6397
        %9163 = vmatprep.subr.bf16.mxu0 %v6402
        %9164 = vmatpush1.bf16.msra.mxu0 %v6401
        %9165 = vmatprep.subr.bf16.mxu0 %v6406
        %9166 = vmatpush1.bf16.msra.mxu0 %v6405
        %9167 = vmatprep.subr.bf16.mxu0 %v6410
        %9168 = vmatpush1.bf16.msra.mxu0 %v6409
        %9169 = vmatprep.subr.bf16.mxu0 %v6414
        %9170 = vmatpush1.bf16.msra.mxu0 %v6413
        %9171 = vmatprep.subr.bf16.mxu0 %v6418
        %9172 = vmatpush1.bf16.msra.mxu0 %v6417
        %9173 = vmatprep.subr.bf16.mxu0 %v6422
        %9174 = vmatpush1.bf16.msra.mxu0 %v6421
        %9175 = vmatprep.subr.bf16.mxu0 %v6426
        %9176 = vmatpush1.bf16.msra.mxu0 %v6425
        %9177 = vmatprep.subr.bf16.mxu0 %v6430
        %9178 = vmatpush1.bf16.msra.mxu0 %v6429
        %9179 = vmatprep.subr.bf16.mxu0 %v6434
        %9180 = vmatpush1.bf16.msra.mxu0 %v6433
        %9181 = vmatprep.subr.bf16.mxu0 %v6438
        %9182 = vmatpush1.bf16.msra.mxu0 %v6437
        %9183 = vmatprep.subr.bf16.mxu0 %v6442
        %9184 = vmatpush1.bf16.msra.mxu0 %v6441
        %9185 = vmatprep.subr.bf16.mxu0 %v6446
        %9186 = vmatpush1.bf16.msra.mxu0 %v6445
        %9187 = vmatprep.mubr.bf16.mxu0 %v1764
        %9188 = vmatmul.mubr.bf16.gmra.mrb[0].mxu0 %v1750
        %v9189 = vpop.f32.mrb[0].mxu0
        %v9190 = vadd.f32 %v9149, %v9189
        %v9191 = vpop.f32.mrb[0].mxu0
        %v9192 = vadd.f32 %v9151, %v9191
        %v9193 = vpop.f32.mrb[0].mxu0
        %v9194 = vpop.f32.mrb[0].mxu0
        %9195 = vdwg.mxu0
        %9196 = vmatprep.subr.bf16.mxu0 %v6450
        %9197 = vmatpush1.bf16.msra.mxu0 %v6449
        %9198 = vmatprep.subr.bf16.mxu0 %v6454
        %9199 = vmatpush1.bf16.msra.mxu0 %v6453
        %9200 = vmatprep.subr.bf16.mxu0 %v6458
        %9201 = vmatpush1.bf16.msra.mxu0 %v6457
        %9202 = vmatprep.subr.bf16.mxu0 %v6462
        %9203 = vmatpush1.bf16.msra.mxu0 %v6461
        %9204 = vmatprep.subr.bf16.mxu0 %v6466
        %9205 = vmatpush1.bf16.msra.mxu0 %v6465
        %9206 = vmatprep.subr.bf16.mxu0 %v6470
        %9207 = vmatpush1.bf16.msra.mxu0 %v6469
        %9208 = vmatprep.subr.bf16.mxu0 %v6474
        %9209 = vmatpush1.bf16.msra.mxu0 %v6473
        %9210 = vmatprep.subr.bf16.mxu0 %v6478
        %9211 = vmatpush1.bf16.msra.mxu0 %v6477
        %9212 = vmatprep.subr.bf16.mxu0 %v6482
        %9213 = vmatpush1.bf16.msra.mxu0 %v6481
        %9214 = vmatprep.subr.bf16.mxu0 %v6486
        %9215 = vmatpush1.bf16.msra.mxu0 %v6485
        %9216 = vmatprep.subr.bf16.mxu0 %v6490
        %9217 = vmatpush1.bf16.msra.mxu0 %v6489
        %9218 = vmatprep.subr.bf16.mxu0 %v6494
        %9219 = vmatpush1.bf16.msra.mxu0 %v6493
        %9220 = vmatprep.subr.bf16.mxu0 %v6498
        %9221 = vmatpush1.bf16.msra.mxu0 %v6497
        %9222 = vmatprep.subr.bf16.mxu0 %v6502
        %9223 = vmatpush1.bf16.msra.mxu0 %v6501
        %9224 = vmatprep.subr.bf16.mxu0 %v6506
        %9225 = vmatpush1.bf16.msra.mxu0 %v6505
        %9226 = vmatprep.subr.bf16.mxu0 %v6510
        %9227 = vmatpush1.bf16.msra.mxu0 %v6509
        %9228 = vmatprep.mubr.bf16.mxu0 %v1768
        %9229 = vmatmul.mubr.bf16.gmra.mrb[0].mxu0 %v1766
        %v9230 = vpop.f32.mrb[0].mxu0
        %v9231 = vadd.f32 %v9190, %v9230
        %v9232 = vpop.f32.mrb[0].mxu0
        %v9233 = vadd.f32 %v9192, %v9232
        %v9234 = vpop.f32.mrb[0].mxu0
        %v9235 = vpop.f32.mrb[0].mxu0
        %9236 = vdwg.mxu0
        %9237 = vmatprep.subr.bf16.mxu0 %v6514
        %9238 = vmatpush1.bf16.msra.mxu0 %v6513
        %9239 = vmatprep.subr.bf16.mxu0 %v6518
        %9240 = vmatpush1.bf16.msra.mxu0 %v6517
        %9241 = vmatprep.subr.bf16.mxu0 %v6522
        %9242 = vmatpush1.bf16.msra.mxu0 %v6521
        %9243 = vmatprep.subr.bf16.mxu0 %v6526
        %9244 = vmatpush1.bf16.msra.mxu0 %v6525
        %9245 = vmatprep.subr.bf16.mxu0 %v6530
        %9246 = vmatpush1.bf16.msra.mxu0 %v6529
        %9247 = vmatprep.subr.bf16.mxu0 %v6534
        %9248 = vmatpush1.bf16.msra.mxu0 %v6533
        %9249 = vmatprep.subr.bf16.mxu0 %v6538
        %9250 = vmatpush1.bf16.msra.mxu0 %v6537
        %9251 = vmatprep.subr.bf16.mxu0 %v6542
        %9252 = vmatpush1.bf16.msra.mxu0 %v6541
        %9253 = vmatprep.subr.bf16.mxu0 %v6546
        %9254 = vmatpush1.bf16.msra.mxu0 %v6545
        %9255 = vmatprep.subr.bf16.mxu0 %v6550
        %9256 = vmatpush1.bf16.msra.mxu0 %v6549
        %9257 = vmatprep.subr.bf16.mxu0 %v6554
        %9258 = vmatpush1.bf16.msra.mxu0 %v6553
        %9259 = vmatprep.subr.bf16.mxu0 %v6558
        %9260 = vmatpush1.bf16.msra.mxu0 %v6557
        %9261 = vmatprep.subr.bf16.mxu0 %v6562
        %9262 = vmatpush1.bf16.msra.mxu0 %v6561
        %9263 = vmatprep.subr.bf16.mxu0 %v6566
        %9264 = vmatpush1.bf16.msra.mxu0 %v6565
        %9265 = vmatprep.subr.bf16.mxu0 %v6570
        %9266 = vmatpush1.bf16.msra.mxu0 %v6569
        %9267 = vmatprep.subr.bf16.mxu0 %v6574
        %9268 = vmatpush1.bf16.msra.mxu0 %v6573
        %9269 = vmatprep.mubr.bf16.mxu0 %v1806
        %9270 = vmatmul.mubr.bf16.gmra.mrb[0].mxu0 %v1792
        %v9271 = vpop.f32.mrb[0].mxu0
        %v9272 = vadd.f32 %v9231, %v9271
        %v9273 = vpop.f32.mrb[0].mxu0
        %v9274 = vadd.f32 %v9233, %v9273
        %v9275 = vpop.f32.mrb[0].mxu0
        %v9276 = vpop.f32.mrb[0].mxu0
        %9277 = vdwg.mxu0
        %9278 = vmatprep.subr.bf16.mxu0 %v6578
        %9279 = vmatpush1.bf16.msra.mxu0 %v6577
        %9280 = vmatprep.subr.bf16.mxu0 %v6582
        %9281 = vmatpush1.bf16.msra.mxu0 %v6581
        %9282 = vmatprep.subr.bf16.mxu0 %v6586
        %9283 = vmatpush1.bf16.msra.mxu0 %v6585
        %9284 = vmatprep.subr.bf16.mxu0 %v6590
        %9285 = vmatpush1.bf16.msra.mxu0 %v6589
        %9286 = vmatprep.subr.bf16.mxu0 %v6594
        %9287 = vmatpush1.bf16.msra.mxu0 %v6593
        %9288 = vmatprep.subr.bf16.mxu0 %v6598
        %9289 = vmatpush1.bf16.msra.mxu0 %v6597
        %9290 = vmatprep.subr.bf16.mxu0 %v6602
        %9291 = vmatpush1.bf16.msra.mxu0 %v6601
        %9292 = vmatprep.subr.bf16.mxu0 %v6606
        %9293 = vmatpush1.bf16.msra.mxu0 %v6605
        %9294 = vmatprep.subr.bf16.mxu0 %v6610
        %9295 = vmatpush1.bf16.msra.mxu0 %v6609
        %9296 = vmatprep.subr.bf16.mxu0 %v6614
        %9297 = vmatpush1.bf16.msra.mxu0 %v6613
        %9298 = vmatprep.subr.bf16.mxu0 %v6618
        %9299 = vmatpush1.bf16.msra.mxu0 %v6617
        %9300 = vmatprep.subr.bf16.mxu0 %v6622
        %9301 = vmatpush1.bf16.msra.mxu0 %v6621
        %9302 = vmatprep.subr.bf16.mxu0 %v6626
        %9303 = vmatpush1.bf16.msra.mxu0 %v6625
        %9304 = vmatprep.subr.bf16.mxu0 %v6630
        %9305 = vmatpush1.bf16.msra.mxu0 %v6629
        %9306 = vmatprep.subr.bf16.mxu0 %v6634
        %9307 = vmatpush1.bf16.msra.mxu0 %v6633
        %9308 = vmatprep.subr.bf16.mxu0 %v6638
        %9309 = vmatpush1.bf16.msra.mxu0 %v6637
        %9310 = vmatprep.mubr.bf16.mxu0 %v1816
        %9311 = vmatmul.mubr.bf16.gmra.mrb[0].mxu0 %v1814
        %v9312 = vpop.f32.mrb[0].mxu0
        %v9313 = vadd.f32 %v9272, %v9312
        %v9314 = vpop.f32.mrb[0].mxu0
        %v9315 = vadd.f32 %v9274, %v9314
        %v9316 = vpop.f32.mrb[0].mxu0
        %v9317 = vpop.f32.mrb[0].mxu0
        %9318 = vdwg.mxu0
        %9319 = vmatprep.subr.bf16.mxu0 %v6642
        %9320 = vmatpush1.bf16.msra.mxu0 %v6641
        %9321 = vmatprep.subr.bf16.mxu0 %v6646
        %9322 = vmatpush1.bf16.msra.mxu0 %v6645
        %9323 = vmatprep.subr.bf16.mxu0 %v6650
        %9324 = vmatpush1.bf16.msra.mxu0 %v6649
        %9325 = vmatprep.subr.bf16.mxu0 %v6654
        %9326 = vmatpush1.bf16.msra.mxu0 %v6653
        %9327 = vmatprep.subr.bf16.mxu0 %v6658
        %9328 = vmatpush1.bf16.msra.mxu0 %v6657
        %9329 = vmatprep.subr.bf16.mxu0 %v6662
        %9330 = vmatpush1.bf16.msra.mxu0 %v6661
        %9331 = vmatprep.subr.bf16.mxu0 %v6666
        %9332 = vmatpush1.bf16.msra.mxu0 %v6665
        %9333 = vmatprep.subr.bf16.mxu0 %v6670
        %9334 = vmatpush1.bf16.msra.mxu0 %v6669
        %9335 = vmatprep.subr.bf16.mxu0 %v6674
        %9336 = vmatpush1.bf16.msra.mxu0 %v6673
        %9337 = vmatprep.subr.bf16.mxu0 %v6678
        %9338 = vmatpush1.bf16.msra.mxu0 %v6677
        %9339 = vmatprep.subr.bf16.mxu0 %v6682
        %9340 = vmatpush1.bf16.msra.mxu0 %v6681
        %9341 = vmatprep.subr.bf16.mxu0 %v6686
        %9342 = vmatpush1.bf16.msra.mxu0 %v6685
        %9343 = vmatprep.subr.bf16.mxu0 %v6690
        %9344 = vmatpush1.bf16.msra.mxu0 %v6689
        %9345 = vmatprep.subr.bf16.mxu0 %v6694
        %9346 = vmatpush1.bf16.msra.mxu0 %v6693
        %9347 = vmatprep.subr.bf16.mxu0 %v6698
        %9348 = vmatpush1.bf16.msra.mxu0 %v6697
        %9349 = vmatprep.subr.bf16.mxu0 %v6702
        %9350 = vmatpush1.bf16.msra.mxu0 %v6701
        %9351 = vmatprep.mubr.bf16.mxu0 %v1813
        %9352 = vmatmul.mubr.bf16.gmra.mrb[0].mxu0 %v1799
        %v9353 = vpop.f32.mrb[0].mxu0
        %v9354 = vadd.f32 %v9313, %v9353
        %v9355 = vpop.f32.mrb[0].mxu0
        %v9356 = vadd.f32 %v9315, %v9355
        %v9357 = vpop.f32.mrb[0].mxu0
        %v9358 = vpop.f32.mrb[0].mxu0
        %9359 = vdwg.mxu0
        %9360 = vmatprep.subr.bf16.mxu0 %v6706
        %9361 = vmatpush1.bf16.msra.mxu0 %v6705
        %9362 = vmatprep.subr.bf16.mxu0 %v6710
        %9363 = vmatpush1.bf16.msra.mxu0 %v6709
        %9364 = vmatprep.subr.bf16.mxu0 %v6714
        %9365 = vmatpush1.bf16.msra.mxu0 %v6713
        %9366 = vmatprep.subr.bf16.mxu0 %v6718
        %9367 = vmatpush1.bf16.msra.mxu0 %v6717
        %9368 = vmatprep.subr.bf16.mxu0 %v6722
        %9369 = vmatpush1.bf16.msra.mxu0 %v6721
        %9370 = vmatprep.subr.bf16.mxu0 %v6726
        %9371 = vmatpush1.bf16.msra.mxu0 %v6725
        %9372 = vmatprep.subr.bf16.mxu0 %v6730
        %9373 = vmatpush1.bf16.msra.mxu0 %v6729
        %9374 = vmatprep.subr.bf16.mxu0 %v6734
        %9375 = vmatpush1.bf16.msra.mxu0 %v6733
        %9376 = vmatprep.subr.bf16.mxu0 %v6738
        %9377 = vmatpush1.bf16.msra.mxu0 %v6737
        %9378 = vmatprep.subr.bf16.mxu0 %v6742
        %9379 = vmatpush1.bf16.msra.mxu0 %v6741
        %9380 = vmatprep.subr.bf16.mxu0 %v6746
        %9381 = vmatpush1.bf16.msra.mxu0 %v6745
        %9382 = vmatprep.subr.bf16.mxu0 %v6750
        %9383 = vmatpush1.bf16.msra.mxu0 %v6749
        %9384 = vmatprep.subr.bf16.mxu0 %v6754
        %9385 = vmatpush1.bf16.msra.mxu0 %v6753
        %9386 = vmatprep.subr.bf16.mxu0 %v6758
        %9387 = vmatpush1.bf16.msra.mxu0 %v6757
        %9388 = vmatprep.subr.bf16.mxu0 %v6762
        %9389 = vmatpush1.bf16.msra.mxu0 %v6761
        %9390 = vmatprep.subr.bf16.mxu0 %v6766
        %9391 = vmatpush1.bf16.msra.mxu0 %v6765
        %9392 = vmatprep.mubr.bf16.mxu0 %v1817
        %9393 = vmatmul.mubr.bf16.gmra.mrb[0].mxu0 %v1815
        %v9394 = vpop.f32.mrb[0].mxu0
        %v9395 = vadd.f32 %v9354, %v9394
        %v9396 = vpop.f32.mrb[0].mxu0
        %v9397 = vadd.f32 %v9356, %v9396
        %v9398 = vpop.f32.mrb[0].mxu0
        %v9399 = vpop.f32.mrb[0].mxu0
        %9400 = vdwg.mxu0
        %9401 = vmatprep.subr.bf16.mxu0 %v6770
        %9402 = vmatpush1.bf16.msra.mxu0 %v6769
        %9403 = vmatprep.subr.bf16.mxu0 %v6774
        %9404 = vmatpush1.bf16.msra.mxu0 %v6773
        %9405 = vmatprep.subr.bf16.mxu0 %v6778
        %9406 = vmatpush1.bf16.msra.mxu0 %v6777
        %9407 = vmatprep.subr.bf16.mxu0 %v6782
        %9408 = vmatpush1.bf16.msra.mxu0 %v6781
        %9409 = vmatprep.subr.bf16.mxu0 %v6786
        %9410 = vmatpush1.bf16.msra.mxu0 %v6785
        %9411 = vmatprep.subr.bf16.mxu0 %v6790
        %9412 = vmatpush1.bf16.msra.mxu0 %v6789
        %9413 = vmatprep.subr.bf16.mxu0 %v6794
        %9414 = vmatpush1.bf16.msra.mxu0 %v6793
        %9415 = vmatprep.subr.bf16.mxu0 %v6798
        %9416 = vmatpush1.bf16.msra.mxu0 %v6797
        %9417 = vmatprep.subr.bf16.mxu0 %v6802
        %9418 = vmatpush1.bf16.msra.mxu0 %v6801
        %9419 = vmatprep.subr.bf16.mxu0 %v6806
        %9420 = vmatpush1.bf16.msra.mxu0 %v6805
        %9421 = vmatprep.subr.bf16.mxu0 %v6810
        %9422 = vmatpush1.bf16.msra.mxu0 %v6809
        %9423 = vmatprep.subr.bf16.mxu0 %v6814
        %9424 = vmatpush1.bf16.msra.mxu0 %v6813
        %9425 = vmatprep.subr.bf16.mxu0 %v6818
        %9426 = vmatpush1.bf16.msra.mxu0 %v6817
        %9427 = vmatprep.subr.bf16.mxu0 %v6822
        %9428 = vmatpush1.bf16.msra.mxu0 %v6821
        %9429 = vmatprep.subr.bf16.mxu0 %v6826
        %9430 = vmatpush1.bf16.msra.mxu0 %v6825
        %9431 = vmatprep.subr.bf16.mxu0 %v6830
        %9432 = vmatpush1.bf16.msra.mxu0 %v6829
        %9433 = vmatprep.mubr.bf16.mxu0 %v1855
        %9434 = vmatmul.mubr.bf16.gmra.mrb[0].mxu0 %v1841
        %v9435 = vpop.f32.mrb[0].mxu0
        %v9436 = vadd.f32 %v9395, %v9435
        %v9437 = vpop.f32.mrb[0].mxu0
        %v9438 = vadd.f32 %v9397, %v9437
        %v9439 = vpop.f32.mrb[0].mxu0
        %v9440 = vpop.f32.mrb[0].mxu0
        %9441 = vdwg.mxu0
        %9442 = vmatprep.subr.bf16.mxu0 %v6834
        %9443 = vmatpush1.bf16.msra.mxu0 %v6833
        %9444 = vmatprep.subr.bf16.mxu0 %v6838
        %9445 = vmatpush1.bf16.msra.mxu0 %v6837
        %9446 = vmatprep.subr.bf16.mxu0 %v6842
        %9447 = vmatpush1.bf16.msra.mxu0 %v6841
        %9448 = vmatprep.subr.bf16.mxu0 %v6846
        %9449 = vmatpush1.bf16.msra.mxu0 %v6845
        %9450 = vmatprep.subr.bf16.mxu0 %v6850
        %9451 = vmatpush1.bf16.msra.mxu0 %v6849
        %9452 = vmatprep.subr.bf16.mxu0 %v6854
        %9453 = vmatpush1.bf16.msra.mxu0 %v6853
        %9454 = vmatprep.subr.bf16.mxu0 %v6858
        %9455 = vmatpush1.bf16.msra.mxu0 %v6857
        %9456 = vmatprep.subr.bf16.mxu0 %v6862
        %9457 = vmatpush1.bf16.msra.mxu0 %v6861
        %9458 = vmatprep.subr.bf16.mxu0 %v6866
        %9459 = vmatpush1.bf16.msra.mxu0 %v6865
        %9460 = vmatprep.subr.bf16.mxu0 %v6870
        %9461 = vmatpush1.bf16.msra.mxu0 %v6869
        %9462 = vmatprep.subr.bf16.mxu0 %v6874
        %9463 = vmatpush1.bf16.msra.mxu0 %v6873
        %9464 = vmatprep.subr.bf16.mxu0 %v6878
        %9465 = vmatpush1.bf16.msra.mxu0 %v6877
        %9466 = vmatprep.subr.bf16.mxu0 %v6882
        %9467 = vmatpush1.bf16.msra.mxu0 %v6881
        %9468 = vmatprep.subr.bf16.mxu0 %v6886
        %9469 = vmatpush1.bf16.msra.mxu0 %v6885
        %9470 = vmatprep.subr.bf16.mxu0 %v6890
        %9471 = vmatpush1.bf16.msra.mxu0 %v6889
        %9472 = vmatprep.subr.bf16.mxu0 %v6894
        %9473 = vmatpush1.bf16.msra.mxu0 %v6893
        %9474 = vmatprep.mubr.bf16.mxu0 %v1865
        %9475 = vmatmul.mubr.bf16.gmra.mrb[0].mxu0 %v1863
        %v9476 = vpop.f32.mrb[0].mxu0
        %v9477 = vadd.f32 %v9436, %v9476
        %v9478 = vpop.f32.mrb[0].mxu0
        %v9479 = vadd.f32 %v9438, %v9478
        %v9480 = vpop.f32.mrb[0].mxu0
        %v9481 = vpop.f32.mrb[0].mxu0
        %9482 = vdwg.mxu0
        %9483 = vmatprep.subr.bf16.mxu0 %v6898
        %9484 = vmatpush1.bf16.msra.mxu0 %v6897
        %9485 = vmatprep.subr.bf16.mxu0 %v6902
        %9486 = vmatpush1.bf16.msra.mxu0 %v6901
        %9487 = vmatprep.subr.bf16.mxu0 %v6906
        %9488 = vmatpush1.bf16.msra.mxu0 %v6905
        %9489 = vmatprep.subr.bf16.mxu0 %v6910
        %9490 = vmatpush1.bf16.msra.mxu0 %v6909
        %9491 = vmatprep.subr.bf16.mxu0 %v6914
        %9492 = vmatpush1.bf16.msra.mxu0 %v6913
        %9493 = vmatprep.subr.bf16.mxu0 %v6918
        %9494 = vmatpush1.bf16.msra.mxu0 %v6917
        %9495 = vmatprep.subr.bf16.mxu0 %v6922
        %9496 = vmatpush1.bf16.msra.mxu0 %v6921
        %9497 = vmatprep.subr.bf16.mxu0 %v6926
        %9498 = vmatpush1.bf16.msra.mxu0 %v6925
        %9499 = vmatprep.subr.bf16.mxu0 %v6930
        %9500 = vmatpush1.bf16.msra.mxu0 %v6929
        %9501 = vmatprep.subr.bf16.mxu0 %v6934
        %9502 = vmatpush1.bf16.msra.mxu0 %v6933
        %9503 = vmatprep.subr.bf16.mxu0 %v6938
        %9504 = vmatpush1.bf16.msra.mxu0 %v6937
        %9505 = vmatprep.subr.bf16.mxu0 %v6942
        %9506 = vmatpush1.bf16.msra.mxu0 %v6941
        %9507 = vmatprep.subr.bf16.mxu0 %v6946
        %9508 = vmatpush1.bf16.msra.mxu0 %v6945
        %9509 = vmatprep.subr.bf16.mxu0 %v6950
        %9510 = vmatpush1.bf16.msra.mxu0 %v6949
        %9511 = vmatprep.subr.bf16.mxu0 %v6954
        %9512 = vmatpush1.bf16.msra.mxu0 %v6953
        %9513 = vmatprep.subr.bf16.mxu0 %v6958
        %9514 = vmatpush1.bf16.msra.mxu0 %v6957
        %9515 = vmatprep.mubr.bf16.mxu0 %v1862
        %9516 = vmatmul.mubr.bf16.gmra.mrb[0].mxu0 %v1848
        %v9517 = vpop.f32.mrb[0].mxu0
        %v9518 = vadd.f32 %v9477, %v9517
        %v9519 = vpop.f32.mrb[0].mxu0
        %v9520 = vadd.f32 %v9479, %v9519
        %v9521 = vpop.f32.mrb[0].mxu0
        %v9522 = vpop.f32.mrb[0].mxu0
        %9523 = vdwg.mxu0
        %9524 = vmatprep.subr.bf16.mxu0 %v6962
        %9525 = vmatpush1.bf16.msra.mxu0 %v6961
        %9526 = vmatprep.subr.bf16.mxu0 %v6966
        %9527 = vmatpush1.bf16.msra.mxu0 %v6965
        %9528 = vmatprep.subr.bf16.mxu0 %v6970
        %9529 = vmatpush1.bf16.msra.mxu0 %v6969
        %9530 = vmatprep.subr.bf16.mxu0 %v6974
        %9531 = vmatpush1.bf16.msra.mxu0 %v6973
        %9532 = vmatprep.subr.bf16.mxu0 %v6978
        %9533 = vmatpush1.bf16.msra.mxu0 %v6977
        %9534 = vmatprep.subr.bf16.mxu0 %v6982
        %9535 = vmatpush1.bf16.msra.mxu0 %v6981
        %9536 = vmatprep.subr.bf16.mxu0 %v6986
        %9537 = vmatpush1.bf16.msra.mxu0 %v6985
        %9538 = vmatprep.subr.bf16.mxu0 %v6990
        %9539 = vmatpush1.bf16.msra.mxu0 %v6989
        %9540 = vmatprep.subr.bf16.mxu0 %v6994
        %9541 = vmatpush1.bf16.msra.mxu0 %v6993
        %9542 = vmatprep.subr.bf16.mxu0 %v6998
        %9543 = vmatpush1.bf16.msra.mxu0 %v6997
        %9544 = vmatprep.subr.bf16.mxu0 %v7002
        %9545 = vmatpush1.bf16.msra.mxu0 %v7001
        %9546 = vmatprep.subr.bf16.mxu0 %v7006
        %9547 = vmatpush1.bf16.msra.mxu0 %v7005
        %9548 = vmatprep.subr.bf16.mxu0 %v7010
        %9549 = vmatpush1.bf16.msra.mxu0 %v7009
        %9550 = vmatprep.subr.bf16.mxu0 %v7014
        %9551 = vmatpush1.bf16.msra.mxu0 %v7013
        %9552 = vmatprep.subr.bf16.mxu0 %v7018
        %9553 = vmatpush1.bf16.msra.mxu0 %v7017
        %9554 = vmatprep.subr.bf16.mxu0 %v7022
        %9555 = vmatpush1.bf16.msra.mxu0 %v7021
        %9556 = vmatprep.mubr.bf16.mxu0 %v1866
        %9557 = vmatmul.mubr.bf16.gmra.mrb[0].mxu0 %v1864
        %v9558 = vpop.f32.mrb[0].mxu0
        %v9559 = vadd.f32 %v9518, %v9558
        %v9560 = vpop.f32.mrb[0].mxu0
        %v9561 = vadd.f32 %v9520, %v9560
        %v9562 = vpop.f32.mrb[0].mxu0
        %v9563 = vpop.f32.mrb[0].mxu0
        %9564 = vdwg.mxu0
        %9565 = vmatprep.subr.bf16.mxu0 %v7026
        %9566 = vmatpush1.bf16.msra.mxu0 %v7025
        %9567 = vmatprep.subr.bf16.mxu0 %v7030
        %9568 = vmatpush1.bf16.msra.mxu0 %v7029
        %9569 = vmatprep.subr.bf16.mxu0 %v7034
        %9570 = vmatpush1.bf16.msra.mxu0 %v7033
        %9571 = vmatprep.subr.bf16.mxu0 %v7038
        %9572 = vmatpush1.bf16.msra.mxu0 %v7037
        %9573 = vmatprep.subr.bf16.mxu0 %v7042
        %9574 = vmatpush1.bf16.msra.mxu0 %v7041
        %9575 = vmatprep.subr.bf16.mxu0 %v7046
        %9576 = vmatpush1.bf16.msra.mxu0 %v7045
        %9577 = vmatprep.subr.bf16.mxu0 %v7050
        %9578 = vmatpush1.bf16.msra.mxu0 %v7049
        %9579 = vmatprep.subr.bf16.mxu0 %v7054
        %9580 = vmatpush1.bf16.msra.mxu0 %v7053
        %9581 = vmatprep.subr.bf16.mxu0 %v7058
        %9582 = vmatpush1.bf16.msra.mxu0 %v7057
        %9583 = vmatprep.subr.bf16.mxu0 %v7062
        %9584 = vmatpush1.bf16.msra.mxu0 %v7061
        %9585 = vmatprep.subr.bf16.mxu0 %v7066
        %9586 = vmatpush1.bf16.msra.mxu0 %v7065
        %9587 = vmatprep.subr.bf16.mxu0 %v7070
        %9588 = vmatpush1.bf16.msra.mxu0 %v7069
        %9589 = vmatprep.subr.bf16.mxu0 %v7074
        %9590 = vmatpush1.bf16.msra.mxu0 %v7073
        %9591 = vmatprep.subr.bf16.mxu0 %v7078
        %9592 = vmatpush1.bf16.msra.mxu0 %v7077
        %9593 = vmatprep.subr.bf16.mxu0 %v7082
        %9594 = vmatpush1.bf16.msra.mxu0 %v7081
        %9595 = vmatprep.subr.bf16.mxu0 %v7086
        %9596 = vmatpush1.bf16.msra.mxu0 %v7085
        %9597 = vmatprep.mubr.bf16.mxu0 %v1904
        %9598 = vmatmul.mubr.bf16.gmra.mrb[0].mxu0 %v1890
        %v9599 = vpop.f32.mrb[0].mxu0
        %v9600 = vadd.f32 %v9559, %v9599
        %v9601 = vpop.f32.mrb[0].mxu0
        %v9602 = vadd.f32 %v9561, %v9601
        %v9603 = vpop.f32.mrb[0].mxu0
        %v9604 = vpop.f32.mrb[0].mxu0
        %9605 = vdwg.mxu0
        %9606 = vmatprep.subr.bf16.mxu0 %v7090
        %9607 = vmatpush1.bf16.msra.mxu0 %v7089
        %9608 = vmatprep.subr.bf16.mxu0 %v7094
        %9609 = vmatpush1.bf16.msra.mxu0 %v7093
        %9610 = vmatprep.subr.bf16.mxu0 %v7098
        %9611 = vmatpush1.bf16.msra.mxu0 %v7097
        %9612 = vmatprep.subr.bf16.mxu0 %v7102
        %9613 = vmatpush1.bf16.msra.mxu0 %v7101
        %9614 = vmatprep.subr.bf16.mxu0 %v7106
        %9615 = vmatpush1.bf16.msra.mxu0 %v7105
        %9616 = vmatprep.subr.bf16.mxu0 %v7110
        %9617 = vmatpush1.bf16.msra.mxu0 %v7109
        %9618 = vmatprep.subr.bf16.mxu0 %v7114
        %9619 = vmatpush1.bf16.msra.mxu0 %v7113
        %9620 = vmatprep.subr.bf16.mxu0 %v7118
        %9621 = vmatpush1.bf16.msra.mxu0 %v7117
        %9622 = vmatprep.subr.bf16.mxu0 %v7122
        %9623 = vmatpush1.bf16.msra.mxu0 %v7121
        %9624 = vmatprep.subr.bf16.mxu0 %v7126
        %9625 = vmatpush1.bf16.msra.mxu0 %v7125
        %9626 = vmatprep.subr.bf16.mxu0 %v7130
        %9627 = vmatpush1.bf16.msra.mxu0 %v7129
        %9628 = vmatprep.subr.bf16.mxu0 %v7134
        %9629 = vmatpush1.bf16.msra.mxu0 %v7133
        %9630 = vmatprep.subr.bf16.mxu0 %v7138
        %9631 = vmatpush1.bf16.msra.mxu0 %v7137
        %9632 = vmatprep.subr.bf16.mxu0 %v7142
        %9633 = vmatpush1.bf16.msra.mxu0 %v7141
        %9634 = vmatprep.subr.bf16.mxu0 %v7146
        %9635 = vmatpush1.bf16.msra.mxu0 %v7145
        %9636 = vmatprep.subr.bf16.mxu0 %v7150
        %9637 = vmatpush1.bf16.msra.mxu0 %v7149
        %9638 = vmatprep.mubr.bf16.mxu0 %v1914
        %9639 = vmatmul.mubr.bf16.gmra.mrb[0].mxu0 %v1912
        %v9640 = vpop.f32.mrb[0].mxu0
        %v9641 = vadd.f32 %v9600, %v9640
        %v9642 = vpop.f32.mrb[0].mxu0
        %v9643 = vadd.f32 %v9602, %v9642
        %v9644 = vpop.f32.mrb[0].mxu0
        %v9645 = vpop.f32.mrb[0].mxu0
        %9646 = vdwg.mxu0
        %9647 = vmatprep.subr.bf16.mxu0 %v7154
        %9648 = vmatpush1.bf16.msra.mxu0 %v7153
        %9649 = vmatprep.subr.bf16.mxu0 %v7158
        %9650 = vmatpush1.bf16.msra.mxu0 %v7157
        %9651 = vmatprep.subr.bf16.mxu0 %v7162
        %9652 = vmatpush1.bf16.msra.mxu0 %v7161
        %9653 = vmatprep.subr.bf16.mxu0 %v7166
        %9654 = vmatpush1.bf16.msra.mxu0 %v7165
        %9655 = vmatprep.subr.bf16.mxu0 %v7170
        %9656 = vmatpush1.bf16.msra.mxu0 %v7169
        %9657 = vmatprep.subr.bf16.mxu0 %v7174
        %9658 = vmatpush1.bf16.msra.mxu0 %v7173
        %9659 = vmatprep.subr.bf16.mxu0 %v7178
        %9660 = vmatpush1.bf16.msra.mxu0 %v7177
        %9661 = vmatprep.subr.bf16.mxu0 %v7182
        %9662 = vmatpush1.bf16.msra.mxu0 %v7181
        %9663 = vmatprep.subr.bf16.mxu0 %v7186
        %9664 = vmatpush1.bf16.msra.mxu0 %v7185
        %9665 = vmatprep.subr.bf16.mxu0 %v7190
        %9666 = vmatpush1.bf16.msra.mxu0 %v7189
        %9667 = vmatprep.subr.bf16.mxu0 %v7194
        %9668 = vmatpush1.bf16.msra.mxu0 %v7193
        %9669 = vmatprep.subr.bf16.mxu0 %v7198
        %9670 = vmatpush1.bf16.msra.mxu0 %v7197
        %9671 = vmatprep.subr.bf16.mxu0 %v7202
        %9672 = vmatpush1.bf16.msra.mxu0 %v7201
        %9673 = vmatprep.subr.bf16.mxu0 %v7206
        %9674 = vmatpush1.bf16.msra.mxu0 %v7205
        %9675 = vmatprep.subr.bf16.mxu0 %v7210
        %9676 = vmatpush1.bf16.msra.mxu0 %v7209
        %9677 = vmatprep.subr.bf16.mxu0 %v7214
        %9678 = vmatpush1.bf16.msra.mxu0 %v7213
        %9679 = vmatprep.mubr.bf16.mxu0 %v1911
        %9680 = vmatmul.mubr.bf16.gmra.mrb[0].mxu0 %v1897
        %v9681 = vpop.f32.mrb[0].mxu0
        %v9682 = vadd.f32 %v9641, %v9681
        %v9683 = vpop.f32.mrb[0].mxu0
        %v9684 = vadd.f32 %v9643, %v9683
        %v9685 = vpop.f32.mrb[0].mxu0
        %v9686 = vpop.f32.mrb[0].mxu0
        %9687 = vdwg.mxu0
        %9688 = vmatprep.subr.bf16.mxu0 %v7218
        %9689 = vmatpush1.bf16.msra.mxu0 %v7217
        %9690 = vmatprep.subr.bf16.mxu0 %v7222
        %9691 = vmatpush1.bf16.msra.mxu0 %v7221
        %9692 = vmatprep.subr.bf16.mxu0 %v7226
        %9693 = vmatpush1.bf16.msra.mxu0 %v7225
        %9694 = vmatprep.subr.bf16.mxu0 %v7230
        %9695 = vmatpush1.bf16.msra.mxu0 %v7229
        %9696 = vmatprep.subr.bf16.mxu0 %v7234
        %9697 = vmatpush1.bf16.msra.mxu0 %v7233
        %9698 = vmatprep.subr.bf16.mxu0 %v7238
        %9699 = vmatpush1.bf16.msra.mxu0 %v7237
        %9700 = vmatprep.subr.bf16.mxu0 %v7242
        %9701 = vmatpush1.bf16.msra.mxu0 %v7241
        %9702 = vmatprep.subr.bf16.mxu0 %v7246
        %9703 = vmatpush1.bf16.msra.mxu0 %v7245
        %9704 = vmatprep.subr.bf16.mxu0 %v7250
        %9705 = vmatpush1.bf16.msra.mxu0 %v7249
        %9706 = vmatprep.subr.bf16.mxu0 %v7254
        %9707 = vmatpush1.bf16.msra.mxu0 %v7253
        %9708 = vmatprep.subr.bf16.mxu0 %v7258
        %9709 = vmatpush1.bf16.msra.mxu0 %v7257
        %9710 = vmatprep.subr.bf16.mxu0 %v7262
        %9711 = vmatpush1.bf16.msra.mxu0 %v7261
        %9712 = vmatprep.subr.bf16.mxu0 %v7266
        %9713 = vmatpush1.bf16.msra.mxu0 %v7265
        %9714 = vmatprep.subr.bf16.mxu0 %v7270
        %9715 = vmatpush1.bf16.msra.mxu0 %v7269
        %9716 = vmatprep.subr.bf16.mxu0 %v7274
        %9717 = vmatpush1.bf16.msra.mxu0 %v7273
        %9718 = vmatprep.subr.bf16.mxu0 %v7278
        %9719 = vmatpush1.bf16.msra.mxu0 %v7277
        %9720 = vmatprep.mubr.bf16.mxu0 %v1915
        %9721 = vmatmul.mubr.bf16.gmra.mrb[0].mxu0 %v1913
        %v9722 = vpop.f32.mrb[0].mxu0
        %v9723 = vadd.f32 %v9682, %v9722
        %v9724 = vpop.f32.mrb[0].mxu0
        %v9725 = vadd.f32 %v9684, %v9724
        %v9726 = vpop.f32.mrb[0].mxu0
        %v9727 = vpop.f32.mrb[0].mxu0
        %9728 = vdwg.mxu0
        %9729 = vmatprep.subr.bf16.mxu0 %v7282
        %9730 = vmatpush1.bf16.msra.mxu0 %v7281
        %9731 = vmatprep.subr.bf16.mxu0 %v7286
        %9732 = vmatpush1.bf16.msra.mxu0 %v7285
        %9733 = vmatprep.subr.bf16.mxu0 %v7290
        %9734 = vmatpush1.bf16.msra.mxu0 %v7289
        %9735 = vmatprep.subr.bf16.mxu0 %v7294
        %9736 = vmatpush1.bf16.msra.mxu0 %v7293
        %9737 = vmatprep.subr.bf16.mxu0 %v7298
        %9738 = vmatpush1.bf16.msra.mxu0 %v7297
        %9739 = vmatprep.subr.bf16.mxu0 %v7302
        %9740 = vmatpush1.bf16.msra.mxu0 %v7301
        %9741 = vmatprep.subr.bf16.mxu0 %v7306
        %9742 = vmatpush1.bf16.msra.mxu0 %v7305
        %9743 = vmatprep.subr.bf16.mxu0 %v7310
        %9744 = vmatpush1.bf16.msra.mxu0 %v7309
        %9745 = vmatprep.subr.bf16.mxu0 %v7314
        %9746 = vmatpush1.bf16.msra.mxu0 %v7313
        %9747 = vmatprep.subr.bf16.mxu0 %v7318
        %9748 = vmatpush1.bf16.msra.mxu0 %v7317
        %9749 = vmatprep.subr.bf16.mxu0 %v7322
        %9750 = vmatpush1.bf16.msra.mxu0 %v7321
        %9751 = vmatprep.subr.bf16.mxu0 %v7326
        %9752 = vmatpush1.bf16.msra.mxu0 %v7325
        %9753 = vmatprep.subr.bf16.mxu0 %v7330
        %9754 = vmatpush1.bf16.msra.mxu0 %v7329
        %9755 = vmatprep.subr.bf16.mxu0 %v7334
        %9756 = vmatpush1.bf16.msra.mxu0 %v7333
        %9757 = vmatprep.subr.bf16.mxu0 %v7338
        %9758 = vmatpush1.bf16.msra.mxu0 %v7337
        %9759 = vmatprep.subr.bf16.mxu0 %v7342
        %9760 = vmatpush1.bf16.msra.mxu0 %v7341
        %9761 = vmatprep.mubr.bf16.mxu0 %v1953
        %9762 = vmatmul.mubr.bf16.gmra.mrb[0].mxu0 %v1939
        %v9763 = vpop.f32.mrb[0].mxu0
        %v9764 = vadd.f32 %v9723, %v9763
        %v9765 = vpop.f32.mrb[0].mxu0
        %v9766 = vadd.f32 %v9725, %v9765
        %v9767 = vpop.f32.mrb[0].mxu0
        %v9768 = vpop.f32.mrb[0].mxu0
        %9769 = vdwg.mxu0
        %9770 = vmatprep.subr.bf16.mxu0 %v7346
        %9771 = vmatpush1.bf16.msra.mxu0 %v7345
        %9772 = vmatprep.subr.bf16.mxu0 %v7350
        %9773 = vmatpush1.bf16.msra.mxu0 %v7349
        %9774 = vmatprep.subr.bf16.mxu0 %v7354
        %9775 = vmatpush1.bf16.msra.mxu0 %v7353
        %9776 = vmatprep.subr.bf16.mxu0 %v7358
        %9777 = vmatpush1.bf16.msra.mxu0 %v7357
        %9778 = vmatprep.subr.bf16.mxu0 %v7362
        %9779 = vmatpush1.bf16.msra.mxu0 %v7361
        %9780 = vmatprep.subr.bf16.mxu0 %v7366
        %9781 = vmatpush1.bf16.msra.mxu0 %v7365
        %9782 = vmatprep.subr.bf16.mxu0 %v7370
        %9783 = vmatpush1.bf16.msra.mxu0 %v7369
        %9784 = vmatprep.subr.bf16.mxu0 %v7374
        %9785 = vmatpush1.bf16.msra.mxu0 %v7373
        %9786 = vmatprep.subr.bf16.mxu0 %v7378
        %9787 = vmatpush1.bf16.msra.mxu0 %v7377
        %9788 = vmatprep.subr.bf16.mxu0 %v7382
        %9789 = vmatpush1.bf16.msra.mxu0 %v7381
        %9790 = vmatprep.subr.bf16.mxu0 %v7386
        %9791 = vmatpush1.bf16.msra.mxu0 %v7385
        %9792 = vmatprep.subr.bf16.mxu0 %v7390
        %9793 = vmatpush1.bf16.msra.mxu0 %v7389
        %9794 = vmatprep.subr.bf16.mxu0 %v7394
        %9795 = vmatpush1.bf16.msra.mxu0 %v7393
        %9796 = vmatprep.subr.bf16.mxu0 %v7398
        %9797 = vmatpush1.bf16.msra.mxu0 %v7397
        %9798 = vmatprep.subr.bf16.mxu0 %v7402
        %9799 = vmatpush1.bf16.msra.mxu0 %v7401
        %9800 = vmatprep.subr.bf16.mxu0 %v7406
        %9801 = vmatpush1.bf16.msra.mxu0 %v7405
        %9802 = vmatprep.mubr.bf16.mxu0 %v1963
        %9803 = vmatmul.mubr.bf16.gmra.mrb[0].mxu0 %v1961
        %v9804 = vpop.f32.mrb[0].mxu0
        %v9805 = vadd.f32 %v9764, %v9804
        %v9806 = vpop.f32.mrb[0].mxu0
        %v9807 = vadd.f32 %v9766, %v9806
        %v9808 = vpop.f32.mrb[0].mxu0
        %v9809 = vpop.f32.mrb[0].mxu0
        %9810 = vdwg.mxu0
        %9811 = vmatprep.subr.bf16.mxu0 %v7410
        %9812 = vmatpush1.bf16.msra.mxu0 %v7409
        %9813 = vmatprep.subr.bf16.mxu0 %v7414
        %9814 = vmatpush1.bf16.msra.mxu0 %v7413
        %9815 = vmatprep.subr.bf16.mxu0 %v7418
        %9816 = vmatpush1.bf16.msra.mxu0 %v7417
        %9817 = vmatprep.subr.bf16.mxu0 %v7422
        %9818 = vmatpush1.bf16.msra.mxu0 %v7421
        %9819 = vmatprep.subr.bf16.mxu0 %v7426
        %9820 = vmatpush1.bf16.msra.mxu0 %v7425
        %9821 = vmatprep.subr.bf16.mxu0 %v7430
        %9822 = vmatpush1.bf16.msra.mxu0 %v7429
        %9823 = vmatprep.subr.bf16.mxu0 %v7434
        %9824 = vmatpush1.bf16.msra.mxu0 %v7433
        %9825 = vmatprep.subr.bf16.mxu0 %v7438
        %9826 = vmatpush1.bf16.msra.mxu0 %v7437
        %9827 = vmatprep.subr.bf16.mxu0 %v7442
        %9828 = vmatpush1.bf16.msra.mxu0 %v7441
        %9829 = vmatprep.subr.bf16.mxu0 %v7446
        %9830 = vmatpush1.bf16.msra.mxu0 %v7445
        %9831 = vmatprep.subr.bf16.mxu0 %v7450
        %9832 = vmatpush1.bf16.msra.mxu0 %v7449
        %9833 = vmatprep.subr.bf16.mxu0 %v7454
        %9834 = vmatpush1.bf16.msra.mxu0 %v7453
        %9835 = vmatprep.subr.bf16.mxu0 %v7458
        %9836 = vmatpush1.bf16.msra.mxu0 %v7457
        %9837 = vmatprep.subr.bf16.mxu0 %v7462
        %9838 = vmatpush1.bf16.msra.mxu0 %v7461
        %9839 = vmatprep.subr.bf16.mxu0 %v7466
        %9840 = vmatpush1.bf16.msra.mxu0 %v7465
        %9841 = vmatprep.subr.bf16.mxu0 %v7470
        %9842 = vmatpush1.bf16.msra.mxu0 %v7469
        %9843 = vmatprep.mubr.bf16.mxu0 %v1960
        %9844 = vmatmul.mubr.bf16.gmra.mrb[0].mxu0 %v1946
        %v9845 = vpop.f32.mrb[0].mxu0
        %v9846 = vadd.f32 %v9805, %v9845
        %v9847 = vpop.f32.mrb[0].mxu0
        %v9848 = vadd.f32 %v9807, %v9847
        %v9849 = vpop.f32.mrb[0].mxu0
        %v9850 = vpop.f32.mrb[0].mxu0
        %9851 = vdwg.mxu0
        %9852 = vmatprep.subr.bf16.mxu0 %v7474
        %9853 = vmatpush1.bf16.msra.mxu0 %v7473
        %9854 = vmatprep.subr.bf16.mxu0 %v7478
        %9855 = vmatpush1.bf16.msra.mxu0 %v7477
        %9856 = vmatprep.subr.bf16.mxu0 %v7482
        %9857 = vmatpush1.bf16.msra.mxu0 %v7481
        %9858 = vmatprep.subr.bf16.mxu0 %v7486
        %9859 = vmatpush1.bf16.msra.mxu0 %v7485
        %9860 = vmatprep.subr.bf16.mxu0 %v7490
        %9861 = vmatpush1.bf16.msra.mxu0 %v7489
        %9862 = vmatprep.subr.bf16.mxu0 %v7494
        %9863 = vmatpush1.bf16.msra.mxu0 %v7493
        %9864 = vmatprep.subr.bf16.mxu0 %v7498
        %9865 = vmatpush1.bf16.msra.mxu0 %v7497
        %9866 = vmatprep.subr.bf16.mxu0 %v7502
        %9867 = vmatpush1.bf16.msra.mxu0 %v7501
        %9868 = vmatprep.subr.bf16.mxu0 %v7506
        %9869 = vmatpush1.bf16.msra.mxu0 %v7505
        %9870 = vmatprep.subr.bf16.mxu0 %v7510
        %9871 = vmatpush1.bf16.msra.mxu0 %v7509
        %9872 = vmatprep.subr.bf16.mxu0 %v7514
        %9873 = vmatpush1.bf16.msra.mxu0 %v7513
        %9874 = vmatprep.subr.bf16.mxu0 %v7518
        %9875 = vmatpush1.bf16.msra.mxu0 %v7517
        %9876 = vmatprep.subr.bf16.mxu0 %v7522
        %9877 = vmatpush1.bf16.msra.mxu0 %v7521
        %9878 = vmatprep.subr.bf16.mxu0 %v7526
        %9879 = vmatpush1.bf16.msra.mxu0 %v7525
        %9880 = vmatprep.subr.bf16.mxu0 %v7530
        %9881 = vmatpush1.bf16.msra.mxu0 %v7529
        %9882 = vmatprep.subr.bf16.mxu0 %v7534
        %9883 = vmatpush1.bf16.msra.mxu0 %v7533
        %9884 = vmatprep.mubr.bf16.mxu0 %v1964
        %9885 = vmatmul.mubr.bf16.gmra.mrb[0].mxu0 %v1962
        %v9886 = vpop.f32.mrb[0].mxu0
        %v9887 = vadd.f32 %v9846, %v9886
        %v9888 = vpop.f32.mrb[0].mxu0
        %v9889 = vadd.f32 %v9848, %v9888
        %v9890 = vpop.f32.mrb[0].mxu0
        %v9891 = vpop.f32.mrb[0].mxu0
        %9892 = vdwg.mxu0
        %9893 = vmatprep.subr.bf16.mxu0 %v7538
        %9894 = vmatpush1.bf16.msra.mxu0 %v7537
        %9895 = vmatprep.subr.bf16.mxu0 %v7542
        %9896 = vmatpush1.bf16.msra.mxu0 %v7541
        %9897 = vmatprep.subr.bf16.mxu0 %v7546
        %9898 = vmatpush1.bf16.msra.mxu0 %v7545
        %9899 = vmatprep.subr.bf16.mxu0 %v7550
        %9900 = vmatpush1.bf16.msra.mxu0 %v7549
        %9901 = vmatprep.subr.bf16.mxu0 %v7554
        %9902 = vmatpush1.bf16.msra.mxu0 %v7553
        %9903 = vmatprep.subr.bf16.mxu0 %v7558
        %9904 = vmatpush1.bf16.msra.mxu0 %v7557
        %9905 = vmatprep.subr.bf16.mxu0 %v7562
        %9906 = vmatpush1.bf16.msra.mxu0 %v7561
        %9907 = vmatprep.subr.bf16.mxu0 %v7566
        %9908 = vmatpush1.bf16.msra.mxu0 %v7565
        %9909 = vmatprep.subr.bf16.mxu0 %v7570
        %9910 = vmatpush1.bf16.msra.mxu0 %v7569
        %9911 = vmatprep.subr.bf16.mxu0 %v7574
        %9912 = vmatpush1.bf16.msra.mxu0 %v7573
        %9913 = vmatprep.subr.bf16.mxu0 %v7578
        %9914 = vmatpush1.bf16.msra.mxu0 %v7577
        %9915 = vmatprep.subr.bf16.mxu0 %v7582
        %9916 = vmatpush1.bf16.msra.mxu0 %v7581
        %9917 = vmatprep.subr.bf16.mxu0 %v7586
        %9918 = vmatpush1.bf16.msra.mxu0 %v7585
        %9919 = vmatprep.subr.bf16.mxu0 %v7590
        %9920 = vmatpush1.bf16.msra.mxu0 %v7589
        %9921 = vmatprep.subr.bf16.mxu0 %v7594
        %9922 = vmatpush1.bf16.msra.mxu0 %v7593
        %9923 = vmatprep.subr.bf16.mxu0 %v7598
        %9924 = vmatpush1.bf16.msra.mxu0 %v7597
        %9925 = vmatprep.mubr.bf16.mxu0 %v1986
        %9926 = vmatmul.mubr.bf16.gmra.mrb[0].mxu0 %v1979
        %v9927 = vpop.f32.mrb[0].mxu0
        %v9928 = vadd.f32 %v9887, %v9927
        %v9929 = vpop.f32.mrb[0].mxu0
        %v9930 = vadd.f32 %v9889, %v9929
        %v9931 = vpop.f32.mrb[0].mxu0
        %v9932 = vpop.f32.mrb[0].mxu0
        %9933 = vdwg.mxu0
        %9934 = vmatprep.subr.bf16.mxu0 %v7602
        %9935 = vmatpush1.bf16.msra.mxu0 %v7601
        %9936 = vmatprep.subr.bf16.mxu0 %v7606
        %9937 = vmatpush1.bf16.msra.mxu0 %v7605
        %9938 = vmatprep.subr.bf16.mxu0 %v7610
        %9939 = vmatpush1.bf16.msra.mxu0 %v7609
        %9940 = vmatprep.subr.bf16.mxu0 %v7614
        %9941 = vmatpush1.bf16.msra.mxu0 %v7613
        %9942 = vmatprep.subr.bf16.mxu0 %v7618
        %9943 = vmatpush1.bf16.msra.mxu0 %v7617
        %9944 = vmatprep.subr.bf16.mxu0 %v7622
        %9945 = vmatpush1.bf16.msra.mxu0 %v7621
        %9946 = vmatprep.subr.bf16.mxu0 %v7626
        %9947 = vmatpush1.bf16.msra.mxu0 %v7625
        %9948 = vmatprep.subr.bf16.mxu0 %v7630
        %9949 = vmatpush1.bf16.msra.mxu0 %v7629
        %9950 = vmatprep.subr.bf16.mxu0 %v7634
        %9951 = vmatpush1.bf16.msra.mxu0 %v7633
        %9952 = vmatprep.subr.bf16.mxu0 %v7638
        %9953 = vmatpush1.bf16.msra.mxu0 %v7637
        %9954 = vmatprep.subr.bf16.mxu0 %v7642
        %9955 = vmatpush1.bf16.msra.mxu0 %v7641
        %9956 = vmatprep.subr.bf16.mxu0 %v7646
        %9957 = vmatpush1.bf16.msra.mxu0 %v7645
        %9958 = vmatprep.subr.bf16.mxu0 %v7650
        %9959 = vmatpush1.bf16.msra.mxu0 %v7649
        %9960 = vmatprep.subr.bf16.mxu0 %v7654
        %9961 = vmatpush1.bf16.msra.mxu0 %v7653
        %9962 = vmatprep.subr.bf16.mxu0 %v7658
        %9963 = vmatpush1.bf16.msra.mxu0 %v7657
        %9964 = vmatprep.subr.bf16.mxu0 %v7662
        %9965 = vmatpush1.bf16.msra.mxu0 %v7661
        %9966 = vmatprep.mubr.bf16.mxu0 %v1988
        %9967 = vmatmul.mubr.bf16.gmra.mrb[0].mxu0 %v1987
        %v9968 = vpop.f32.mrb[0].mxu0
        %v9969 = vadd.f32 %v9928, %v9968
        %v9970 = vpop.f32.mrb[0].mxu0
        %v9971 = vadd.f32 %v9930, %v9970
        %v9972 = vpop.f32.mrb[0].mxu0
        %v9973 = vpop.f32.mrb[0].mxu0
        %9974 = vdwg.mxu0
        %9975 = vmatprep.subr.bf16.mxu0 %v6260
        %9976 = vmatpush1.bf16.msra.mxu0 %v6259
        %9977 = vmatprep.subr.bf16.mxu0 %v6264
        %9978 = vmatpush1.bf16.msra.mxu0 %v6263
        %9979 = vmatprep.subr.bf16.mxu0 %v6268
        %9980 = vmatpush1.bf16.msra.mxu0 %v6267
        %9981 = vmatprep.subr.bf16.mxu0 %v6272
        %9982 = vmatpush1.bf16.msra.mxu0 %v6271
        %9983 = vmatprep.subr.bf16.mxu0 %v6276
        %9984 = vmatpush1.bf16.msra.mxu0 %v6275
        %9985 = vmatprep.subr.bf16.mxu0 %v6280
        %9986 = vmatpush1.bf16.msra.mxu0 %v6279
        %9987 = vmatprep.subr.bf16.mxu0 %v6284
        %9988 = vmatpush1.bf16.msra.mxu0 %v6283
        %9989 = vmatprep.subr.bf16.mxu0 %v6288
        %9990 = vmatpush1.bf16.msra.mxu0 %v6287
        %9991 = vmatprep.subr.bf16.mxu0 %v6292
        %9992 = vmatpush1.bf16.msra.mxu0 %v6291
        %9993 = vmatprep.subr.bf16.mxu0 %v6296
        %9994 = vmatpush1.bf16.msra.mxu0 %v6295
        %9995 = vmatprep.subr.bf16.mxu0 %v6300
        %9996 = vmatpush1.bf16.msra.mxu0 %v6299
        %9997 = vmatprep.subr.bf16.mxu0 %v6304
        %9998 = vmatpush1.bf16.msra.mxu0 %v6303
        %9999 = vmatprep.subr.bf16.mxu0 %v6308
        %10000 = vmatpush1.bf16.msra.mxu0 %v6307
        %10001 = vmatprep.subr.bf16.mxu0 %v6312
        %10002 = vmatpush1.bf16.msra.mxu0 %v6311
        %10003 = vmatprep.subr.bf16.mxu0 %v6316
        %10004 = vmatpush1.bf16.msra.mxu0 %v6315
        %10005 = vmatprep.subr.bf16.mxu0 %v6320
        %10006 = vmatpush1.bf16.msra.mxu0 %v6319
        %10007 = vmatprep.mubr.bf16.mxu0 %v1757
        %10008 = vmatmul.mubr.bf16.gmra.mrb[0].mxu0 %v1743
        %v10009 = vpop.f32.mrb[0].mxu0
        %v10010 = vadd.f32 %v1705, %v10009
        %v10011 = vpop.f32.mrb[0].mxu0
        %v10012 = vadd.f32 %v1709, %v10011
        %v10013 = vpop.f32.mrb[0].mxu0
        %v10014 = vpop.f32.mrb[0].mxu0
        %10015 = vdwg.mxu0
        %10016 = vmatprep.subr.bf16.mxu0 %v6324
        %10017 = vmatpush1.bf16.msra.mxu0 %v6323
        %10018 = vmatprep.subr.bf16.mxu0 %v6328
        %10019 = vmatpush1.bf16.msra.mxu0 %v6327
        %10020 = vmatprep.subr.bf16.mxu0 %v6332
        %10021 = vmatpush1.bf16.msra.mxu0 %v6331
        %10022 = vmatprep.subr.bf16.mxu0 %v6336
        %10023 = vmatpush1.bf16.msra.mxu0 %v6335
        %10024 = vmatprep.subr.bf16.mxu0 %v6340
        %10025 = vmatpush1.bf16.msra.mxu0 %v6339
        %10026 = vmatprep.subr.bf16.mxu0 %v6344
        %10027 = vmatpush1.bf16.msra.mxu0 %v6343
        %10028 = vmatprep.subr.bf16.mxu0 %v6348
        %10029 = vmatpush1.bf16.msra.mxu0 %v6347
        %10030 = vmatprep.subr.bf16.mxu0 %v6352
        %10031 = vmatpush1.bf16.msra.mxu0 %v6351
        %10032 = vmatprep.subr.bf16.mxu0 %v6356
        %10033 = vmatpush1.bf16.msra.mxu0 %v6355
        %10034 = vmatprep.subr.bf16.mxu0 %v6360
        %10035 = vmatpush1.bf16.msra.mxu0 %v6359
        %10036 = vmatprep.subr.bf16.mxu0 %v6364
        %10037 = vmatpush1.bf16.msra.mxu0 %v6363
        %10038 = vmatprep.subr.bf16.mxu0 %v6368
        %10039 = vmatpush1.bf16.msra.mxu0 %v6367
        %10040 = vmatprep.subr.bf16.mxu0 %v6372
        %10041 = vmatpush1.bf16.msra.mxu0 %v6371
        %10042 = vmatprep.subr.bf16.mxu0 %v6376
        %10043 = vmatpush1.bf16.msra.mxu0 %v6375
        %10044 = vmatprep.subr.bf16.mxu0 %v6380
        %10045 = vmatpush1.bf16.msra.mxu0 %v6379
        %10046 = vmatprep.subr.bf16.mxu0 %v6384
        %10047 = vmatpush1.bf16.msra.mxu0 %v6383
        %10048 = vmatprep.mubr.bf16.mxu0 %v1767
        %10049 = vmatmul.mubr.bf16.gmra.mrb[0].mxu0 %v1765
        %v10050 = vpop.f32.mrb[0].mxu0
        %v10051 = vadd.f32 %v10010, %v10050
        %v10052 = vpop.f32.mrb[0].mxu0
        %v10053 = vadd.f32 %v10012, %v10052
        %v10054 = vpop.f32.mrb[0].mxu0
        %v10055 = vpop.f32.mrb[0].mxu0
        %10056 = vdwg.mxu0
        %10057 = vmatprep.subr.bf16.mxu0 %v6388
        %10058 = vmatpush1.bf16.msra.mxu0 %v6387
        %10059 = vmatprep.subr.bf16.mxu0 %v6392
        %10060 = vmatpush1.bf16.msra.mxu0 %v6391
        %10061 = vmatprep.subr.bf16.mxu0 %v6396
        %10062 = vmatpush1.bf16.msra.mxu0 %v6395
        %10063 = vmatprep.subr.bf16.mxu0 %v6400
        %10064 = vmatpush1.bf16.msra.mxu0 %v6399
        %10065 = vmatprep.subr.bf16.mxu0 %v6404
        %10066 = vmatpush1.bf16.msra.mxu0 %v6403
        %10067 = vmatprep.subr.bf16.mxu0 %v6408
        %10068 = vmatpush1.bf16.msra.mxu0 %v6407
        %10069 = vmatprep.subr.bf16.mxu0 %v6412
        %10070 = vmatpush1.bf16.msra.mxu0 %v6411
        %10071 = vmatprep.subr.bf16.mxu0 %v6416
        %10072 = vmatpush1.bf16.msra.mxu0 %v6415
        %10073 = vmatprep.subr.bf16.mxu0 %v6420
        %10074 = vmatpush1.bf16.msra.mxu0 %v6419
        %10075 = vmatprep.subr.bf16.mxu0 %v6424
        %10076 = vmatpush1.bf16.msra.mxu0 %v6423
        %10077 = vmatprep.subr.bf16.mxu0 %v6428
        %10078 = vmatpush1.bf16.msra.mxu0 %v6427
        %10079 = vmatprep.subr.bf16.mxu0 %v6432
        %10080 = vmatpush1.bf16.msra.mxu0 %v6431
        %10081 = vmatprep.subr.bf16.mxu0 %v6436
        %10082 = vmatpush1.bf16.msra.mxu0 %v6435
        %10083 = vmatprep.subr.bf16.mxu0 %v6440
        %10084 = vmatpush1.bf16.msra.mxu0 %v6439
        %10085 = vmatprep.subr.bf16.mxu0 %v6444
        %10086 = vmatpush1.bf16.msra.mxu0 %v6443
        %10087 = vmatprep.subr.bf16.mxu0 %v6448
        %10088 = vmatpush1.bf16.msra.mxu0 %v6447
        %10089 = vmatprep.mubr.bf16.mxu0 %v1764
        %10090 = vmatmul.mubr.bf16.gmra.mrb[0].mxu0 %v1750
        %v10091 = vpop.f32.mrb[0].mxu0
        %v10092 = vadd.f32 %v10051, %v10091
        %v10093 = vpop.f32.mrb[0].mxu0
        %v10094 = vadd.f32 %v10053, %v10093
        %v10095 = vpop.f32.mrb[0].mxu0
        %v10096 = vpop.f32.mrb[0].mxu0
        %10097 = vdwg.mxu0
        %10098 = vmatprep.subr.bf16.mxu0 %v6452
        %10099 = vmatpush1.bf16.msra.mxu0 %v6451
        %10100 = vmatprep.subr.bf16.mxu0 %v6456
        %10101 = vmatpush1.bf16.msra.mxu0 %v6455
        %10102 = vmatprep.subr.bf16.mxu0 %v6460
        %10103 = vmatpush1.bf16.msra.mxu0 %v6459
        %10104 = vmatprep.subr.bf16.mxu0 %v6464
        %10105 = vmatpush1.bf16.msra.mxu0 %v6463
        %10106 = vmatprep.subr.bf16.mxu0 %v6468
        %10107 = vmatpush1.bf16.msra.mxu0 %v6467
        %10108 = vmatprep.subr.bf16.mxu0 %v6472
        %10109 = vmatpush1.bf16.msra.mxu0 %v6471
        %10110 = vmatprep.subr.bf16.mxu0 %v6476
        %10111 = vmatpush1.bf16.msra.mxu0 %v6475
        %10112 = vmatprep.subr.bf16.mxu0 %v6480
        %10113 = vmatpush1.bf16.msra.mxu0 %v6479
        %10114 = vmatprep.subr.bf16.mxu0 %v6484
        %10115 = vmatpush1.bf16.msra.mxu0 %v6483
        %10116 = vmatprep.subr.bf16.mxu0 %v6488
        %10117 = vmatpush1.bf16.msra.mxu0 %v6487
        %10118 = vmatprep.subr.bf16.mxu0 %v6492
        %10119 = vmatpush1.bf16.msra.mxu0 %v6491
        %10120 = vmatprep.subr.bf16.mxu0 %v6496
        %10121 = vmatpush1.bf16.msra.mxu0 %v6495
        %10122 = vmatprep.subr.bf16.mxu0 %v6500
        %10123 = vmatpush1.bf16.msra.mxu0 %v6499
        %10124 = vmatprep.subr.bf16.mxu0 %v6504
        %10125 = vmatpush1.bf16.msra.mxu0 %v6503
        %10126 = vmatprep.subr.bf16.mxu0 %v6508
        %10127 = vmatpush1.bf16.msra.mxu0 %v6507
        %10128 = vmatprep.subr.bf16.mxu0 %v6512
        %10129 = vmatpush1.bf16.msra.mxu0 %v6511
        %10130 = vmatprep.mubr.bf16.mxu0 %v1768
        %10131 = vmatmul.mubr.bf16.gmra.mrb[0].mxu0 %v1766
        %v10132 = vpop.f32.mrb[0].mxu0
        %v10133 = vadd.f32 %v10092, %v10132
        %v10134 = vpop.f32.mrb[0].mxu0
        %v10135 = vadd.f32 %v10094, %v10134
        %v10136 = vpop.f32.mrb[0].mxu0
        %v10137 = vpop.f32.mrb[0].mxu0
        %10138 = vdwg.mxu0
        %10139 = vmatprep.subr.bf16.mxu0 %v6516
        %10140 = vmatpush1.bf16.msra.mxu0 %v6515
        %10141 = vmatprep.subr.bf16.mxu0 %v6520
        %10142 = vmatpush1.bf16.msra.mxu0 %v6519
        %10143 = vmatprep.subr.bf16.mxu0 %v6524
        %10144 = vmatpush1.bf16.msra.mxu0 %v6523
        %10145 = vmatprep.subr.bf16.mxu0 %v6528
        %10146 = vmatpush1.bf16.msra.mxu0 %v6527
        %10147 = vmatprep.subr.bf16.mxu0 %v6532
        %10148 = vmatpush1.bf16.msra.mxu0 %v6531
        %10149 = vmatprep.subr.bf16.mxu0 %v6536
        %10150 = vmatpush1.bf16.msra.mxu0 %v6535
        %10151 = vmatprep.subr.bf16.mxu0 %v6540
        %10152 = vmatpush1.bf16.msra.mxu0 %v6539
        %10153 = vmatprep.subr.bf16.mxu0 %v6544
        %10154 = vmatpush1.bf16.msra.mxu0 %v6543
        %10155 = vmatprep.subr.bf16.mxu0 %v6548
        %10156 = vmatpush1.bf16.msra.mxu0 %v6547
        %10157 = vmatprep.subr.bf16.mxu0 %v6552
        %10158 = vmatpush1.bf16.msra.mxu0 %v6551
        %10159 = vmatprep.subr.bf16.mxu0 %v6556
        %10160 = vmatpush1.bf16.msra.mxu0 %v6555
        %10161 = vmatprep.subr.bf16.mxu0 %v6560
        %10162 = vmatpush1.bf16.msra.mxu0 %v6559
        %10163 = vmatprep.subr.bf16.mxu0 %v6564
        %10164 = vmatpush1.bf16.msra.mxu0 %v6563
        %10165 = vmatprep.subr.bf16.mxu0 %v6568
        %10166 = vmatpush1.bf16.msra.mxu0 %v6567
        %10167 = vmatprep.subr.bf16.mxu0 %v6572
        %10168 = vmatpush1.bf16.msra.mxu0 %v6571
        %10169 = vmatprep.subr.bf16.mxu0 %v6576
        %10170 = vmatpush1.bf16.msra.mxu0 %v6575
        %10171 = vmatprep.mubr.bf16.mxu0 %v1806
        %10172 = vmatmul.mubr.bf16.gmra.mrb[0].mxu0 %v1792
        %v10173 = vpop.f32.mrb[0].mxu0
        %v10174 = vadd.f32 %v10133, %v10173
        %v10175 = vpop.f32.mrb[0].mxu0
        %v10176 = vadd.f32 %v10135, %v10175
        %v10177 = vpop.f32.mrb[0].mxu0
        %v10178 = vpop.f32.mrb[0].mxu0
        %10179 = vdwg.mxu0
        %10180 = vmatprep.subr.bf16.mxu0 %v6580
        %10181 = vmatpush1.bf16.msra.mxu0 %v6579
        %10182 = vmatprep.subr.bf16.mxu0 %v6584
        %10183 = vmatpush1.bf16.msra.mxu0 %v6583
        %10184 = vmatprep.subr.bf16.mxu0 %v6588
        %10185 = vmatpush1.bf16.msra.mxu0 %v6587
        %10186 = vmatprep.subr.bf16.mxu0 %v6592
        %10187 = vmatpush1.bf16.msra.mxu0 %v6591
        %10188 = vmatprep.subr.bf16.mxu0 %v6596
        %10189 = vmatpush1.bf16.msra.mxu0 %v6595
        %10190 = vmatprep.subr.bf16.mxu0 %v6600
        %10191 = vmatpush1.bf16.msra.mxu0 %v6599
        %10192 = vmatprep.subr.bf16.mxu0 %v6604
        %10193 = vmatpush1.bf16.msra.mxu0 %v6603
        %10194 = vmatprep.subr.bf16.mxu0 %v6608
        %10195 = vmatpush1.bf16.msra.mxu0 %v6607
        %10196 = vmatprep.subr.bf16.mxu0 %v6612
        %10197 = vmatpush1.bf16.msra.mxu0 %v6611
        %10198 = vmatprep.subr.bf16.mxu0 %v6616
        %10199 = vmatpush1.bf16.msra.mxu0 %v6615
        %10200 = vmatprep.subr.bf16.mxu0 %v6620
        %10201 = vmatpush1.bf16.msra.mxu0 %v6619
        %10202 = vmatprep.subr.bf16.mxu0 %v6624
        %10203 = vmatpush1.bf16.msra.mxu0 %v6623
        %10204 = vmatprep.subr.bf16.mxu0 %v6628
        %10205 = vmatpush1.bf16.msra.mxu0 %v6627
        %10206 = vmatprep.subr.bf16.mxu0 %v6632
        %10207 = vmatpush1.bf16.msra.mxu0 %v6631
        %10208 = vmatprep.subr.bf16.mxu0 %v6636
        %10209 = vmatpush1.bf16.msra.mxu0 %v6635
        %10210 = vmatprep.subr.bf16.mxu0 %v6640
        %10211 = vmatpush1.bf16.msra.mxu0 %v6639
        %10212 = vmatprep.mubr.bf16.mxu0 %v1816
        %10213 = vmatmul.mubr.bf16.gmra.mrb[0].mxu0 %v1814
        %v10214 = vpop.f32.mrb[0].mxu0
        %v10215 = vadd.f32 %v10174, %v10214
        %v10216 = vpop.f32.mrb[0].mxu0
        %v10217 = vadd.f32 %v10176, %v10216
        %v10218 = vpop.f32.mrb[0].mxu0
        %v10219 = vpop.f32.mrb[0].mxu0
        %10220 = vdwg.mxu0
        %10221 = vmatprep.subr.bf16.mxu0 %v6644
        %10222 = vmatpush1.bf16.msra.mxu0 %v6643
        %10223 = vmatprep.subr.bf16.mxu0 %v6648
        %10224 = vmatpush1.bf16.msra.mxu0 %v6647
        %10225 = vmatprep.subr.bf16.mxu0 %v6652
        %10226 = vmatpush1.bf16.msra.mxu0 %v6651
        %10227 = vmatprep.subr.bf16.mxu0 %v6656
        %10228 = vmatpush1.bf16.msra.mxu0 %v6655
        %10229 = vmatprep.subr.bf16.mxu0 %v6660
        %10230 = vmatpush1.bf16.msra.mxu0 %v6659
        %10231 = vmatprep.subr.bf16.mxu0 %v6664
        %10232 = vmatpush1.bf16.msra.mxu0 %v6663
        %10233 = vmatprep.subr.bf16.mxu0 %v6668
        %10234 = vmatpush1.bf16.msra.mxu0 %v6667
        %10235 = vmatprep.subr.bf16.mxu0 %v6672
        %10236 = vmatpush1.bf16.msra.mxu0 %v6671
        %10237 = vmatprep.subr.bf16.mxu0 %v6676
        %10238 = vmatpush1.bf16.msra.mxu0 %v6675
        %10239 = vmatprep.subr.bf16.mxu0 %v6680
        %10240 = vmatpush1.bf16.msra.mxu0 %v6679
        %10241 = vmatprep.subr.bf16.mxu0 %v6684
        %10242 = vmatpush1.bf16.msra.mxu0 %v6683
        %10243 = vmatprep.subr.bf16.mxu0 %v6688
        %10244 = vmatpush1.bf16.msra.mxu0 %v6687
        %10245 = vmatprep.subr.bf16.mxu0 %v6692
        %10246 = vmatpush1.bf16.msra.mxu0 %v6691
        %10247 = vmatprep.subr.bf16.mxu0 %v6696
        %10248 = vmatpush1.bf16.msra.mxu0 %v6695
        %10249 = vmatprep.subr.bf16.mxu0 %v6700
        %10250 = vmatpush1.bf16.msra.mxu0 %v6699
        %10251 = vmatprep.subr.bf16.mxu0 %v6704
        %10252 = vmatpush1.bf16.msra.mxu0 %v6703
        %10253 = vmatprep.mubr.bf16.mxu0 %v1813
        %10254 = vmatmul.mubr.bf16.gmra.mrb[0].mxu0 %v1799
        %v10255 = vpop.f32.mrb[0].mxu0
        %v10256 = vadd.f32 %v10215, %v10255
        %v10257 = vpop.f32.mrb[0].mxu0
        %v10258 = vadd.f32 %v10217, %v10257
        %v10259 = vpop.f32.mrb[0].mxu0
        %v10260 = vpop.f32.mrb[0].mxu0
        %10261 = vdwg.mxu0
        %10262 = vmatprep.subr.bf16.mxu0 %v6708
        %10263 = vmatpush1.bf16.msra.mxu0 %v6707
        %10264 = vmatprep.subr.bf16.mxu0 %v6712
        %10265 = vmatpush1.bf16.msra.mxu0 %v6711
        %10266 = vmatprep.subr.bf16.mxu0 %v6716
        %10267 = vmatpush1.bf16.msra.mxu0 %v6715
        %10268 = vmatprep.subr.bf16.mxu0 %v6720
        %10269 = vmatpush1.bf16.msra.mxu0 %v6719
        %10270 = vmatprep.subr.bf16.mxu0 %v6724
        %10271 = vmatpush1.bf16.msra.mxu0 %v6723
        %10272 = vmatprep.subr.bf16.mxu0 %v6728
        %10273 = vmatpush1.bf16.msra.mxu0 %v6727
        %10274 = vmatprep.subr.bf16.mxu0 %v6732
        %10275 = vmatpush1.bf16.msra.mxu0 %v6731
        %10276 = vmatprep.subr.bf16.mxu0 %v6736
        %10277 = vmatpush1.bf16.msra.mxu0 %v6735
        %10278 = vmatprep.subr.bf16.mxu0 %v6740
        %10279 = vmatpush1.bf16.msra.mxu0 %v6739
        %10280 = vmatprep.subr.bf16.mxu0 %v6744
        %10281 = vmatpush1.bf16.msra.mxu0 %v6743
        %10282 = vmatprep.subr.bf16.mxu0 %v6748
        %10283 = vmatpush1.bf16.msra.mxu0 %v6747
        %10284 = vmatprep.subr.bf16.mxu0 %v6752
        %10285 = vmatpush1.bf16.msra.mxu0 %v6751
        %10286 = vmatprep.subr.bf16.mxu0 %v6756
        %10287 = vmatpush1.bf16.msra.mxu0 %v6755
        %10288 = vmatprep.subr.bf16.mxu0 %v6760
        %10289 = vmatpush1.bf16.msra.mxu0 %v6759
        %10290 = vmatprep.subr.bf16.mxu0 %v6764
        %10291 = vmatpush1.bf16.msra.mxu0 %v6763
        %10292 = vmatprep.subr.bf16.mxu0 %v6768
        %10293 = vmatpush1.bf16.msra.mxu0 %v6767
        %10294 = vmatprep.mubr.bf16.mxu0 %v1817
        %10295 = vmatmul.mubr.bf16.gmra.mrb[0].mxu0 %v1815
        %v10296 = vpop.f32.mrb[0].mxu0
        %v10297 = vadd.f32 %v10256, %v10296
        %v10298 = vpop.f32.mrb[0].mxu0
        %v10299 = vadd.f32 %v10258, %v10298
        %v10300 = vpop.f32.mrb[0].mxu0
        %v10301 = vpop.f32.mrb[0].mxu0
        %10302 = vdwg.mxu0
        %10303 = vmatprep.subr.bf16.mxu0 %v6772
        %10304 = vmatpush1.bf16.msra.mxu0 %v6771
        %10305 = vmatprep.subr.bf16.mxu0 %v6776
        %10306 = vmatpush1.bf16.msra.mxu0 %v6775
        %10307 = vmatprep.subr.bf16.mxu0 %v6780
        %10308 = vmatpush1.bf16.msra.mxu0 %v6779
        %10309 = vmatprep.subr.bf16.mxu0 %v6784
        %10310 = vmatpush1.bf16.msra.mxu0 %v6783
        %10311 = vmatprep.subr.bf16.mxu0 %v6788
        %10312 = vmatpush1.bf16.msra.mxu0 %v6787
        %10313 = vmatprep.subr.bf16.mxu0 %v6792
        %10314 = vmatpush1.bf16.msra.mxu0 %v6791
        %10315 = vmatprep.subr.bf16.mxu0 %v6796
        %10316 = vmatpush1.bf16.msra.mxu0 %v6795
        %10317 = vmatprep.subr.bf16.mxu0 %v6800
        %10318 = vmatpush1.bf16.msra.mxu0 %v6799
        %10319 = vmatprep.subr.bf16.mxu0 %v6804
        %10320 = vmatpush1.bf16.msra.mxu0 %v6803
        %10321 = vmatprep.subr.bf16.mxu0 %v6808
        %10322 = vmatpush1.bf16.msra.mxu0 %v6807
        %10323 = vmatprep.subr.bf16.mxu0 %v6812
        %10324 = vmatpush1.bf16.msra.mxu0 %v6811
        %10325 = vmatprep.subr.bf16.mxu0 %v6816
        %10326 = vmatpush1.bf16.msra.mxu0 %v6815
        %10327 = vmatprep.subr.bf16.mxu0 %v6820
        %10328 = vmatpush1.bf16.msra.mxu0 %v6819
        %10329 = vmatprep.subr.bf16.mxu0 %v6824
        %10330 = vmatpush1.bf16.msra.mxu0 %v6823
        %10331 = vmatprep.subr.bf16.mxu0 %v6828
        %10332 = vmatpush1.bf16.msra.mxu0 %v6827
        %10333 = vmatprep.subr.bf16.mxu0 %v6832
        %10334 = vmatpush1.bf16.msra.mxu0 %v6831
        %10335 = vmatprep.mubr.bf16.mxu0 %v1855
        %10336 = vmatmul.mubr.bf16.gmra.mrb[0].mxu0 %v1841
        %v10337 = vpop.f32.mrb[0].mxu0
        %v10338 = vadd.f32 %v10297, %v10337
        %v10339 = vpop.f32.mrb[0].mxu0
        %v10340 = vadd.f32 %v10299, %v10339
        %v10341 = vpop.f32.mrb[0].mxu0
        %v10342 = vpop.f32.mrb[0].mxu0
        %10343 = vdwg.mxu0
        %10344 = vmatprep.subr.bf16.mxu0 %v6836
        %10345 = vmatpush1.bf16.msra.mxu0 %v6835
        %10346 = vmatprep.subr.bf16.mxu0 %v6840
        %10347 = vmatpush1.bf16.msra.mxu0 %v6839
        %10348 = vmatprep.subr.bf16.mxu0 %v6844
        %10349 = vmatpush1.bf16.msra.mxu0 %v6843
        %10350 = vmatprep.subr.bf16.mxu0 %v6848
        %10351 = vmatpush1.bf16.msra.mxu0 %v6847
        %10352 = vmatprep.subr.bf16.mxu0 %v6852
        %10353 = vmatpush1.bf16.msra.mxu0 %v6851
        %10354 = vmatprep.subr.bf16.mxu0 %v6856
        %10355 = vmatpush1.bf16.msra.mxu0 %v6855
        %10356 = vmatprep.subr.bf16.mxu0 %v6860
        %10357 = vmatpush1.bf16.msra.mxu0 %v6859
        %10358 = vmatprep.subr.bf16.mxu0 %v6864
        %10359 = vmatpush1.bf16.msra.mxu0 %v6863
        %10360 = vmatprep.subr.bf16.mxu0 %v6868
        %10361 = vmatpush1.bf16.msra.mxu0 %v6867
        %10362 = vmatprep.subr.bf16.mxu0 %v6872
        %10363 = vmatpush1.bf16.msra.mxu0 %v6871
        %10364 = vmatprep.subr.bf16.mxu0 %v6876
        %10365 = vmatpush1.bf16.msra.mxu0 %v6875
        %10366 = vmatprep.subr.bf16.mxu0 %v6880
        %10367 = vmatpush1.bf16.msra.mxu0 %v6879
        %10368 = vmatprep.subr.bf16.mxu0 %v6884
        %10369 = vmatpush1.bf16.msra.mxu0 %v6883
        %10370 = vmatprep.subr.bf16.mxu0 %v6888
        %10371 = vmatpush1.bf16.msra.mxu0 %v6887
        %10372 = vmatprep.subr.bf16.mxu0 %v6892
        %10373 = vmatpush1.bf16.msra.mxu0 %v6891
        %10374 = vmatprep.subr.bf16.mxu0 %v6896
        %10375 = vmatpush1.bf16.msra.mxu0 %v6895
        %10376 = vmatprep.mubr.bf16.mxu0 %v1865
        %10377 = vmatmul.mubr.bf16.gmra.mrb[0].mxu0 %v1863
        %v10378 = vpop.f32.mrb[0].mxu0
        %v10379 = vadd.f32 %v10338, %v10378
        %v10380 = vpop.f32.mrb[0].mxu0
        %v10381 = vadd.f32 %v10340, %v10380
        %v10382 = vpop.f32.mrb[0].mxu0
        %v10383 = vpop.f32.mrb[0].mxu0
        %10384 = vdwg.mxu0
        %10385 = vmatprep.subr.bf16.mxu0 %v6900
        %10386 = vmatpush1.bf16.msra.mxu0 %v6899
        %10387 = vmatprep.subr.bf16.mxu0 %v6904
        %10388 = vmatpush1.bf16.msra.mxu0 %v6903
        %10389 = vmatprep.subr.bf16.mxu0 %v6908
        %10390 = vmatpush1.bf16.msra.mxu0 %v6907
        %10391 = vmatprep.subr.bf16.mxu0 %v6912
        %10392 = vmatpush1.bf16.msra.mxu0 %v6911
        %10393 = vmatprep.subr.bf16.mxu0 %v6916
        %10394 = vmatpush1.bf16.msra.mxu0 %v6915
        %10395 = vmatprep.subr.bf16.mxu0 %v6920
        %10396 = vmatpush1.bf16.msra.mxu0 %v6919
        %10397 = vmatprep.subr.bf16.mxu0 %v6924
        %10398 = vmatpush1.bf16.msra.mxu0 %v6923
        %10399 = vmatprep.subr.bf16.mxu0 %v6928
        %10400 = vmatpush1.bf16.msra.mxu0 %v6927
        %10401 = vmatprep.subr.bf16.mxu0 %v6932
        %10402 = vmatpush1.bf16.msra.mxu0 %v6931
        %10403 = vmatprep.subr.bf16.mxu0 %v6936
        %10404 = vmatpush1.bf16.msra.mxu0 %v6935
        %10405 = vmatprep.subr.bf16.mxu0 %v6940
        %10406 = vmatpush1.bf16.msra.mxu0 %v6939
        %10407 = vmatprep.subr.bf16.mxu0 %v6944
        %10408 = vmatpush1.bf16.msra.mxu0 %v6943
        %10409 = vmatprep.subr.bf16.mxu0 %v6948
        %10410 = vmatpush1.bf16.msra.mxu0 %v6947
        %10411 = vmatprep.subr.bf16.mxu0 %v6952
        %10412 = vmatpush1.bf16.msra.mxu0 %v6951
        %10413 = vmatprep.subr.bf16.mxu0 %v6956
        %10414 = vmatpush1.bf16.msra.mxu0 %v6955
        %10415 = vmatprep.subr.bf16.mxu0 %v6960
        %10416 = vmatpush1.bf16.msra.mxu0 %v6959
        %10417 = vmatprep.mubr.bf16.mxu0 %v1862
        %10418 = vmatmul.mubr.bf16.gmra.mrb[0].mxu0 %v1848
        %v10419 = vpop.f32.mrb[0].mxu0
        %v10420 = vadd.f32 %v10379, %v10419
        %v10421 = vpop.f32.mrb[0].mxu0
        %v10422 = vadd.f32 %v10381, %v10421
        %v10423 = vpop.f32.mrb[0].mxu0
        %v10424 = vpop.f32.mrb[0].mxu0
        %10425 = vdwg.mxu0
        %10426 = vmatprep.subr.bf16.mxu0 %v6964
        %10427 = vmatpush1.bf16.msra.mxu0 %v6963
        %10428 = vmatprep.subr.bf16.mxu0 %v6968
        %10429 = vmatpush1.bf16.msra.mxu0 %v6967
        %10430 = vmatprep.subr.bf16.mxu0 %v6972
        %10431 = vmatpush1.bf16.msra.mxu0 %v6971
        %10432 = vmatprep.subr.bf16.mxu0 %v6976
        %10433 = vmatpush1.bf16.msra.mxu0 %v6975
        %10434 = vmatprep.subr.bf16.mxu0 %v6980
        %10435 = vmatpush1.bf16.msra.mxu0 %v6979
        %10436 = vmatprep.subr.bf16.mxu0 %v6984
        %10437 = vmatpush1.bf16.msra.mxu0 %v6983
        %10438 = vmatprep.subr.bf16.mxu0 %v6988
        %10439 = vmatpush1.bf16.msra.mxu0 %v6987
        %10440 = vmatprep.subr.bf16.mxu0 %v6992
        %10441 = vmatpush1.bf16.msra.mxu0 %v6991
        %10442 = vmatprep.subr.bf16.mxu0 %v6996
        %10443 = vmatpush1.bf16.msra.mxu0 %v6995
        %10444 = vmatprep.subr.bf16.mxu0 %v7000
        %10445 = vmatpush1.bf16.msra.mxu0 %v6999
        %10446 = vmatprep.subr.bf16.mxu0 %v7004
        %10447 = vmatpush1.bf16.msra.mxu0 %v7003
        %10448 = vmatprep.subr.bf16.mxu0 %v7008
        %10449 = vmatpush1.bf16.msra.mxu0 %v7007
        %10450 = vmatprep.subr.bf16.mxu0 %v7012
        %10451 = vmatpush1.bf16.msra.mxu0 %v7011
        %10452 = vmatprep.subr.bf16.mxu0 %v7016
        %10453 = vmatpush1.bf16.msra.mxu0 %v7015
        %10454 = vmatprep.subr.bf16.mxu0 %v7020
        %10455 = vmatpush1.bf16.msra.mxu0 %v7019
        %10456 = vmatprep.subr.bf16.mxu0 %v7024
        %10457 = vmatpush1.bf16.msra.mxu0 %v7023
        %10458 = vmatprep.mubr.bf16.mxu0 %v1866
        %10459 = vmatmul.mubr.bf16.gmra.mrb[0].mxu0 %v1864
        %v10460 = vpop.f32.mrb[0].mxu0
        %v10461 = vadd.f32 %v10420, %v10460
        %v10462 = vpop.f32.mrb[0].mxu0
        %v10463 = vadd.f32 %v10422, %v10462
        %v10464 = vpop.f32.mrb[0].mxu0
        %v10465 = vpop.f32.mrb[0].mxu0
        %10466 = vdwg.mxu0
        %10467 = vmatprep.subr.bf16.mxu0 %v7028
        %10468 = vmatpush1.bf16.msra.mxu0 %v7027
        %10469 = vmatprep.subr.bf16.mxu0 %v7032
        %10470 = vmatpush1.bf16.msra.mxu0 %v7031
        %10471 = vmatprep.subr.bf16.mxu0 %v7036
        %10472 = vmatpush1.bf16.msra.mxu0 %v7035
        %10473 = vmatprep.subr.bf16.mxu0 %v7040
        %10474 = vmatpush1.bf16.msra.mxu0 %v7039
        %10475 = vmatprep.subr.bf16.mxu0 %v7044
        %10476 = vmatpush1.bf16.msra.mxu0 %v7043
        %10477 = vmatprep.subr.bf16.mxu0 %v7048
        %10478 = vmatpush1.bf16.msra.mxu0 %v7047
        %10479 = vmatprep.subr.bf16.mxu0 %v7052
        %10480 = vmatpush1.bf16.msra.mxu0 %v7051
        %10481 = vmatprep.subr.bf16.mxu0 %v7056
        %10482 = vmatpush1.bf16.msra.mxu0 %v7055
        %10483 = vmatprep.subr.bf16.mxu0 %v7060
        %10484 = vmatpush1.bf16.msra.mxu0 %v7059
        %10485 = vmatprep.subr.bf16.mxu0 %v7064
        %10486 = vmatpush1.bf16.msra.mxu0 %v7063
        %10487 = vmatprep.subr.bf16.mxu0 %v7068
        %10488 = vmatpush1.bf16.msra.mxu0 %v7067
        %10489 = vmatprep.subr.bf16.mxu0 %v7072
        %10490 = vmatpush1.bf16.msra.mxu0 %v7071
        %10491 = vmatprep.subr.bf16.mxu0 %v7076
        %10492 = vmatpush1.bf16.msra.mxu0 %v7075
        %10493 = vmatprep.subr.bf16.mxu0 %v7080
        %10494 = vmatpush1.bf16.msra.mxu0 %v7079
        %10495 = vmatprep.subr.bf16.mxu0 %v7084
        %10496 = vmatpush1.bf16.msra.mxu0 %v7083
        %10497 = vmatprep.subr.bf16.mxu0 %v7088
        %10498 = vmatpush1.bf16.msra.mxu0 %v7087
        %10499 = vmatprep.mubr.bf16.mxu0 %v1904
        %10500 = vmatmul.mubr.bf16.gmra.mrb[0].mxu0 %v1890
        %v10501 = vpop.f32.mrb[0].mxu0
        %v10502 = vadd.f32 %v10461, %v10501
        %v10503 = vpop.f32.mrb[0].mxu0
        %v10504 = vadd.f32 %v10463, %v10503
        %v10505 = vpop.f32.mrb[0].mxu0
        %v10506 = vpop.f32.mrb[0].mxu0
        %10507 = vdwg.mxu0
        %10508 = vmatprep.subr.bf16.mxu0 %v7092
        %10509 = vmatpush1.bf16.msra.mxu0 %v7091
        %10510 = vmatprep.subr.bf16.mxu0 %v7096
        %10511 = vmatpush1.bf16.msra.mxu0 %v7095
        %10512 = vmatprep.subr.bf16.mxu0 %v7100
        %10513 = vmatpush1.bf16.msra.mxu0 %v7099
        %10514 = vmatprep.subr.bf16.mxu0 %v7104
        %10515 = vmatpush1.bf16.msra.mxu0 %v7103
        %10516 = vmatprep.subr.bf16.mxu0 %v7108
        %10517 = vmatpush1.bf16.msra.mxu0 %v7107
        %10518 = vmatprep.subr.bf16.mxu0 %v7112
        %10519 = vmatpush1.bf16.msra.mxu0 %v7111
        %10520 = vmatprep.subr.bf16.mxu0 %v7116
        %10521 = vmatpush1.bf16.msra.mxu0 %v7115
        %10522 = vmatprep.subr.bf16.mxu0 %v7120
        %10523 = vmatpush1.bf16.msra.mxu0 %v7119
        %10524 = vmatprep.subr.bf16.mxu0 %v7124
        %10525 = vmatpush1.bf16.msra.mxu0 %v7123
        %10526 = vmatprep.subr.bf16.mxu0 %v7128
        %10527 = vmatpush1.bf16.msra.mxu0 %v7127
        %10528 = vmatprep.subr.bf16.mxu0 %v7132
        %10529 = vmatpush1.bf16.msra.mxu0 %v7131
        %10530 = vmatprep.subr.bf16.mxu0 %v7136
        %10531 = vmatpush1.bf16.msra.mxu0 %v7135
        %10532 = vmatprep.subr.bf16.mxu0 %v7140
        %10533 = vmatpush1.bf16.msra.mxu0 %v7139
        %10534 = vmatprep.subr.bf16.mxu0 %v7144
        %10535 = vmatpush1.bf16.msra.mxu0 %v7143
        %10536 = vmatprep.subr.bf16.mxu0 %v7148
        %10537 = vmatpush1.bf16.msra.mxu0 %v7147
        %10538 = vmatprep.subr.bf16.mxu0 %v7152
        %10539 = vmatpush1.bf16.msra.mxu0 %v7151
        %10540 = vmatprep.mubr.bf16.mxu0 %v1914
        %10541 = vmatmul.mubr.bf16.gmra.mrb[0].mxu0 %v1912
        %v10542 = vpop.f32.mrb[0].mxu0
        %v10543 = vadd.f32 %v10502, %v10542
        %v10544 = vpop.f32.mrb[0].mxu0
        %v10545 = vadd.f32 %v10504, %v10544
        %v10546 = vpop.f32.mrb[0].mxu0
        %v10547 = vpop.f32.mrb[0].mxu0
        %10548 = vdwg.mxu0
        %10549 = vmatprep.subr.bf16.mxu0 %v7156
        %10550 = vmatpush1.bf16.msra.mxu0 %v7155
        %10551 = vmatprep.subr.bf16.mxu0 %v7160
        %10552 = vmatpush1.bf16.msra.mxu0 %v7159
        %10553 = vmatprep.subr.bf16.mxu0 %v7164
        %10554 = vmatpush1.bf16.msra.mxu0 %v7163
        %10555 = vmatprep.subr.bf16.mxu0 %v7168
        %10556 = vmatpush1.bf16.msra.mxu0 %v7167
        %10557 = vmatprep.subr.bf16.mxu0 %v7172
        %10558 = vmatpush1.bf16.msra.mxu0 %v7171
        %10559 = vmatprep.subr.bf16.mxu0 %v7176
        %10560 = vmatpush1.bf16.msra.mxu0 %v7175
        %10561 = vmatprep.subr.bf16.mxu0 %v7180
        %10562 = vmatpush1.bf16.msra.mxu0 %v7179
        %10563 = vmatprep.subr.bf16.mxu0 %v7184
        %10564 = vmatpush1.bf16.msra.mxu0 %v7183
        %10565 = vmatprep.subr.bf16.mxu0 %v7188
        %10566 = vmatpush1.bf16.msra.mxu0 %v7187
        %10567 = vmatprep.subr.bf16.mxu0 %v7192
        %10568 = vmatpush1.bf16.msra.mxu0 %v7191
        %10569 = vmatprep.subr.bf16.mxu0 %v7196
        %10570 = vmatpush1.bf16.msra.mxu0 %v7195
        %10571 = vmatprep.subr.bf16.mxu0 %v7200
        %10572 = vmatpush1.bf16.msra.mxu0 %v7199
        %10573 = vmatprep.subr.bf16.mxu0 %v7204
        %10574 = vmatpush1.bf16.msra.mxu0 %v7203
        %10575 = vmatprep.subr.bf16.mxu0 %v7208
        %10576 = vmatpush1.bf16.msra.mxu0 %v7207
        %10577 = vmatprep.subr.bf16.mxu0 %v7212
        %10578 = vmatpush1.bf16.msra.mxu0 %v7211
        %10579 = vmatprep.subr.bf16.mxu0 %v7216
        %10580 = vmatpush1.bf16.msra.mxu0 %v7215
        %10581 = vmatprep.mubr.bf16.mxu0 %v1911
        %10582 = vmatmul.mubr.bf16.gmra.mrb[0].mxu0 %v1897
        %v10583 = vpop.f32.mrb[0].mxu0
        %v10584 = vadd.f32 %v10543, %v10583
        %v10585 = vpop.f32.mrb[0].mxu0
        %v10586 = vadd.f32 %v10545, %v10585
        %v10587 = vpop.f32.mrb[0].mxu0
        %v10588 = vpop.f32.mrb[0].mxu0
        %10589 = vdwg.mxu0
        %10590 = vmatprep.subr.bf16.mxu0 %v7220
        %10591 = vmatpush1.bf16.msra.mxu0 %v7219
        %10592 = vmatprep.subr.bf16.mxu0 %v7224
        %10593 = vmatpush1.bf16.msra.mxu0 %v7223
        %10594 = vmatprep.subr.bf16.mxu0 %v7228
        %10595 = vmatpush1.bf16.msra.mxu0 %v7227
        %10596 = vmatprep.subr.bf16.mxu0 %v7232
        %10597 = vmatpush1.bf16.msra.mxu0 %v7231
        %10598 = vmatprep.subr.bf16.mxu0 %v7236
        %10599 = vmatpush1.bf16.msra.mxu0 %v7235
        %10600 = vmatprep.subr.bf16.mxu0 %v7240
        %10601 = vmatpush1.bf16.msra.mxu0 %v7239
        %10602 = vmatprep.subr.bf16.mxu0 %v7244
        %10603 = vmatpush1.bf16.msra.mxu0 %v7243
        %10604 = vmatprep.subr.bf16.mxu0 %v7248
        %10605 = vmatpush1.bf16.msra.mxu0 %v7247
        %10606 = vmatprep.subr.bf16.mxu0 %v7252
        %10607 = vmatpush1.bf16.msra.mxu0 %v7251
        %10608 = vmatprep.subr.bf16.mxu0 %v7256
        %10609 = vmatpush1.bf16.msra.mxu0 %v7255
        %10610 = vmatprep.subr.bf16.mxu0 %v7260
        %10611 = vmatpush1.bf16.msra.mxu0 %v7259
        %10612 = vmatprep.subr.bf16.mxu0 %v7264
        %10613 = vmatpush1.bf16.msra.mxu0 %v7263
        %10614 = vmatprep.subr.bf16.mxu0 %v7268
        %10615 = vmatpush1.bf16.msra.mxu0 %v7267
        %10616 = vmatprep.subr.bf16.mxu0 %v7272
        %10617 = vmatpush1.bf16.msra.mxu0 %v7271
        %10618 = vmatprep.subr.bf16.mxu0 %v7276
        %10619 = vmatpush1.bf16.msra.mxu0 %v7275
        %10620 = vmatprep.subr.bf16.mxu0 %v7280
        %10621 = vmatpush1.bf16.msra.mxu0 %v7279
        %10622 = vmatprep.mubr.bf16.mxu0 %v1915
        %10623 = vmatmul.mubr.bf16.gmra.mrb[0].mxu0 %v1913
        %v10624 = vpop.f32.mrb[0].mxu0
        %v10625 = vadd.f32 %v10584, %v10624
        %v10626 = vpop.f32.mrb[0].mxu0
        %v10627 = vadd.f32 %v10586, %v10626
        %v10628 = vpop.f32.mrb[0].mxu0
        %v10629 = vpop.f32.mrb[0].mxu0
        %10630 = vdwg.mxu0
        %10631 = vmatprep.subr.bf16.mxu0 %v7284
        %10632 = vmatpush1.bf16.msra.mxu0 %v7283
        %10633 = vmatprep.subr.bf16.mxu0 %v7288
        %10634 = vmatpush1.bf16.msra.mxu0 %v7287
        %10635 = vmatprep.subr.bf16.mxu0 %v7292
        %10636 = vmatpush1.bf16.msra.mxu0 %v7291
        %10637 = vmatprep.subr.bf16.mxu0 %v7296
        %10638 = vmatpush1.bf16.msra.mxu0 %v7295
        %10639 = vmatprep.subr.bf16.mxu0 %v7300
        %10640 = vmatpush1.bf16.msra.mxu0 %v7299
        %10641 = vmatprep.subr.bf16.mxu0 %v7304
        %10642 = vmatpush1.bf16.msra.mxu0 %v7303
        %10643 = vmatprep.subr.bf16.mxu0 %v7308
        %10644 = vmatpush1.bf16.msra.mxu0 %v7307
        %10645 = vmatprep.subr.bf16.mxu0 %v7312
        %10646 = vmatpush1.bf16.msra.mxu0 %v7311
        %10647 = vmatprep.subr.bf16.mxu0 %v7316
        %10648 = vmatpush1.bf16.msra.mxu0 %v7315
        %10649 = vmatprep.subr.bf16.mxu0 %v7320
        %10650 = vmatpush1.bf16.msra.mxu0 %v7319
        %10651 = vmatprep.subr.bf16.mxu0 %v7324
        %10652 = vmatpush1.bf16.msra.mxu0 %v7323
        %10653 = vmatprep.subr.bf16.mxu0 %v7328
        %10654 = vmatpush1.bf16.msra.mxu0 %v7327
        %10655 = vmatprep.subr.bf16.mxu0 %v7332
        %10656 = vmatpush1.bf16.msra.mxu0 %v7331
        %10657 = vmatprep.subr.bf16.mxu0 %v7336
        %10658 = vmatpush1.bf16.msra.mxu0 %v7335
        %10659 = vmatprep.subr.bf16.mxu0 %v7340
        %10660 = vmatpush1.bf16.msra.mxu0 %v7339
        %10661 = vmatprep.subr.bf16.mxu0 %v7344
        %10662 = vmatpush1.bf16.msra.mxu0 %v7343
        %10663 = vmatprep.mubr.bf16.mxu0 %v1953
        %10664 = vmatmul.mubr.bf16.gmra.mrb[0].mxu0 %v1939
        %v10665 = vpop.f32.mrb[0].mxu0
        %v10666 = vadd.f32 %v10625, %v10665
        %v10667 = vpop.f32.mrb[0].mxu0
        %v10668 = vadd.f32 %v10627, %v10667
        %v10669 = vpop.f32.mrb[0].mxu0
        %v10670 = vpop.f32.mrb[0].mxu0
        %10671 = vdwg.mxu0
        %10672 = vmatprep.subr.bf16.mxu0 %v7348
        %10673 = vmatpush1.bf16.msra.mxu0 %v7347
        %10674 = vmatprep.subr.bf16.mxu0 %v7352
        %10675 = vmatpush1.bf16.msra.mxu0 %v7351
        %10676 = vmatprep.subr.bf16.mxu0 %v7356
        %10677 = vmatpush1.bf16.msra.mxu0 %v7355
        %10678 = vmatprep.subr.bf16.mxu0 %v7360
        %10679 = vmatpush1.bf16.msra.mxu0 %v7359
        %10680 = vmatprep.subr.bf16.mxu0 %v7364
        %10681 = vmatpush1.bf16.msra.mxu0 %v7363
        %10682 = vmatprep.subr.bf16.mxu0 %v7368
        %10683 = vmatpush1.bf16.msra.mxu0 %v7367
        %10684 = vmatprep.subr.bf16.mxu0 %v7372
        %10685 = vmatpush1.bf16.msra.mxu0 %v7371
        %10686 = vmatprep.subr.bf16.mxu0 %v7376
        %10687 = vmatpush1.bf16.msra.mxu0 %v7375
        %10688 = vmatprep.subr.bf16.mxu0 %v7380
        %10689 = vmatpush1.bf16.msra.mxu0 %v7379
        %10690 = vmatprep.subr.bf16.mxu0 %v7384
        %10691 = vmatpush1.bf16.msra.mxu0 %v7383
        %10692 = vmatprep.subr.bf16.mxu0 %v7388
        %10693 = vmatpush1.bf16.msra.mxu0 %v7387
        %10694 = vmatprep.subr.bf16.mxu0 %v7392
        %10695 = vmatpush1.bf16.msra.mxu0 %v7391
        %10696 = vmatprep.subr.bf16.mxu0 %v7396
        %10697 = vmatpush1.bf16.msra.mxu0 %v7395
        %10698 = vmatprep.subr.bf16.mxu0 %v7400
        %10699 = vmatpush1.bf16.msra.mxu0 %v7399
        %10700 = vmatprep.subr.bf16.mxu0 %v7404
        %10701 = vmatpush1.bf16.msra.mxu0 %v7403
        %10702 = vmatprep.subr.bf16.mxu0 %v7408
        %10703 = vmatpush1.bf16.msra.mxu0 %v7407
        %10704 = vmatprep.mubr.bf16.mxu0 %v1963
        %10705 = vmatmul.mubr.bf16.gmra.mrb[0].mxu0 %v1961
        %v10706 = vpop.f32.mrb[0].mxu0
        %v10707 = vadd.f32 %v10666, %v10706
        %v10708 = vpop.f32.mrb[0].mxu0
        %v10709 = vadd.f32 %v10668, %v10708
        %v10710 = vpop.f32.mrb[0].mxu0
        %v10711 = vpop.f32.mrb[0].mxu0
        %10712 = vdwg.mxu0
        %10713 = vmatprep.subr.bf16.mxu0 %v7412
        %10714 = vmatpush1.bf16.msra.mxu0 %v7411
        %10715 = vmatprep.subr.bf16.mxu0 %v7416
        %10716 = vmatpush1.bf16.msra.mxu0 %v7415
        %10717 = vmatprep.subr.bf16.mxu0 %v7420
        %10718 = vmatpush1.bf16.msra.mxu0 %v7419
        %10719 = vmatprep.subr.bf16.mxu0 %v7424
        %10720 = vmatpush1.bf16.msra.mxu0 %v7423
        %10721 = vmatprep.subr.bf16.mxu0 %v7428
        %10722 = vmatpush1.bf16.msra.mxu0 %v7427
        %10723 = vmatprep.subr.bf16.mxu0 %v7432
        %10724 = vmatpush1.bf16.msra.mxu0 %v7431
        %10725 = vmatprep.subr.bf16.mxu0 %v7436
        %10726 = vmatpush1.bf16.msra.mxu0 %v7435
        %10727 = vmatprep.subr.bf16.mxu0 %v7440
        %10728 = vmatpush1.bf16.msra.mxu0 %v7439
        %10729 = vmatprep.subr.bf16.mxu0 %v7444
        %10730 = vmatpush1.bf16.msra.mxu0 %v7443
        %10731 = vmatprep.subr.bf16.mxu0 %v7448
        %10732 = vmatpush1.bf16.msra.mxu0 %v7447
        %10733 = vmatprep.subr.bf16.mxu0 %v7452
        %10734 = vmatpush1.bf16.msra.mxu0 %v7451
        %10735 = vmatprep.subr.bf16.mxu0 %v7456
        %10736 = vmatpush1.bf16.msra.mxu0 %v7455
        %10737 = vmatprep.subr.bf16.mxu0 %v7460
        %10738 = vmatpush1.bf16.msra.mxu0 %v7459
        %10739 = vmatprep.subr.bf16.mxu0 %v7464
        %10740 = vmatpush1.bf16.msra.mxu0 %v7463
        %10741 = vmatprep.subr.bf16.mxu0 %v7468
        %10742 = vmatpush1.bf16.msra.mxu0 %v7467
        %10743 = vmatprep.subr.bf16.mxu0 %v7472
        %10744 = vmatpush1.bf16.msra.mxu0 %v7471
        %10745 = vmatprep.mubr.bf16.mxu0 %v1960
        %10746 = vmatmul.mubr.bf16.gmra.mrb[0].mxu0 %v1946
        %v10747 = vpop.f32.mrb[0].mxu0
        %v10748 = vadd.f32 %v10707, %v10747
        %v10749 = vpop.f32.mrb[0].mxu0
        %v10750 = vadd.f32 %v10709, %v10749
        %v10751 = vpop.f32.mrb[0].mxu0
        %v10752 = vpop.f32.mrb[0].mxu0
        %10753 = vdwg.mxu0
        %10754 = vmatprep.subr.bf16.mxu0 %v7476
        %10755 = vmatpush1.bf16.msra.mxu0 %v7475
        %10756 = vmatprep.subr.bf16.mxu0 %v7480
        %10757 = vmatpush1.bf16.msra.mxu0 %v7479
        %10758 = vmatprep.subr.bf16.mxu0 %v7484
        %10759 = vmatpush1.bf16.msra.mxu0 %v7483
        %10760 = vmatprep.subr.bf16.mxu0 %v7488
        %10761 = vmatpush1.bf16.msra.mxu0 %v7487
        %10762 = vmatprep.subr.bf16.mxu0 %v7492
        %10763 = vmatpush1.bf16.msra.mxu0 %v7491
        %10764 = vmatprep.subr.bf16.mxu0 %v7496
        %10765 = vmatpush1.bf16.msra.mxu0 %v7495
        %10766 = vmatprep.subr.bf16.mxu0 %v7500
        %10767 = vmatpush1.bf16.msra.mxu0 %v7499
        %10768 = vmatprep.subr.bf16.mxu0 %v7504
        %10769 = vmatpush1.bf16.msra.mxu0 %v7503
        %10770 = vmatprep.subr.bf16.mxu0 %v7508
        %10771 = vmatpush1.bf16.msra.mxu0 %v7507
        %10772 = vmatprep.subr.bf16.mxu0 %v7512
        %10773 = vmatpush1.bf16.msra.mxu0 %v7511
        %10774 = vmatprep.subr.bf16.mxu0 %v7516
        %10775 = vmatpush1.bf16.msra.mxu0 %v7515
        %10776 = vmatprep.subr.bf16.mxu0 %v7520
        %10777 = vmatpush1.bf16.msra.mxu0 %v7519
        %10778 = vmatprep.subr.bf16.mxu0 %v7524
        %10779 = vmatpush1.bf16.msra.mxu0 %v7523
        %10780 = vmatprep.subr.bf16.mxu0 %v7528
        %10781 = vmatpush1.bf16.msra.mxu0 %v7527
        %10782 = vmatprep.subr.bf16.mxu0 %v7532
        %10783 = vmatpush1.bf16.msra.mxu0 %v7531
        %10784 = vmatprep.subr.bf16.mxu0 %v7536
        %10785 = vmatpush1.bf16.msra.mxu0 %v7535
        %10786 = vmatprep.mubr.bf16.mxu0 %v1964
        %10787 = vmatmul.mubr.bf16.gmra.mrb[0].mxu0 %v1962
        %v10788 = vpop.f32.mrb[0].mxu0
        %v10789 = vadd.f32 %v10748, %v10788
        %v10790 = vpop.f32.mrb[0].mxu0
        %v10791 = vadd.f32 %v10750, %v10790
        %v10792 = vpop.f32.mrb[0].mxu0
        %v10793 = vpop.f32.mrb[0].mxu0
        %10794 = vdwg.mxu0
        %10795 = vmatprep.subr.bf16.mxu0 %v7540
        %10796 = vmatpush1.bf16.msra.mxu0 %v7539
        %10797 = vmatprep.subr.bf16.mxu0 %v7544
        %10798 = vmatpush1.bf16.msra.mxu0 %v7543
        %10799 = vmatprep.subr.bf16.mxu0 %v7548
        %10800 = vmatpush1.bf16.msra.mxu0 %v7547
        %10801 = vmatprep.subr.bf16.mxu0 %v7552
        %10802 = vmatpush1.bf16.msra.mxu0 %v7551
        %10803 = vmatprep.subr.bf16.mxu0 %v7556
        %10804 = vmatpush1.bf16.msra.mxu0 %v7555
        %10805 = vmatprep.subr.bf16.mxu0 %v7560
        %10806 = vmatpush1.bf16.msra.mxu0 %v7559
        %10807 = vmatprep.subr.bf16.mxu0 %v7564
        %10808 = vmatpush1.bf16.msra.mxu0 %v7563
        %10809 = vmatprep.subr.bf16.mxu0 %v7568
        %10810 = vmatpush1.bf16.msra.mxu0 %v7567
        %10811 = vmatprep.subr.bf16.mxu0 %v7572
        %10812 = vmatpush1.bf16.msra.mxu0 %v7571
        %10813 = vmatprep.subr.bf16.mxu0 %v7576
        %10814 = vmatpush1.bf16.msra.mxu0 %v7575
        %10815 = vmatprep.subr.bf16.mxu0 %v7580
        %10816 = vmatpush1.bf16.msra.mxu0 %v7579
        %10817 = vmatprep.subr.bf16.mxu0 %v7584
        %10818 = vmatpush1.bf16.msra.mxu0 %v7583
        %10819 = vmatprep.subr.bf16.mxu0 %v7588
        %10820 = vmatpush1.bf16.msra.mxu0 %v7587
        %10821 = vmatprep.subr.bf16.mxu0 %v7592
        %10822 = vmatpush1.bf16.msra.mxu0 %v7591
        %10823 = vmatprep.subr.bf16.mxu0 %v7596
        %10824 = vmatpush1.bf16.msra.mxu0 %v7595
        %10825 = vmatprep.subr.bf16.mxu0 %v7600
        %10826 = vmatpush1.bf16.msra.mxu0 %v7599
        %10827 = vmatprep.mubr.bf16.mxu0 %v1986
        %10828 = vmatmul.mubr.bf16.gmra.mrb[0].mxu0 %v1979
        %v10829 = vpop.f32.mrb[0].mxu0
        %v10830 = vadd.f32 %v10789, %v10829
        %v10831 = vpop.f32.mrb[0].mxu0
        %v10832 = vadd.f32 %v10791, %v10831
        %v10833 = vpop.f32.mrb[0].mxu0
        %v10834 = vpop.f32.mrb[0].mxu0
        %10835 = vdwg.mxu0
        %10836 = vmatprep.subr.bf16.mxu0 %v7604
        %10837 = vmatpush1.bf16.msra.mxu0 %v7603
        %10838 = vmatprep.subr.bf16.mxu0 %v7608
        %10839 = vmatpush1.bf16.msra.mxu0 %v7607
        %10840 = vmatprep.subr.bf16.mxu0 %v7612
        %10841 = vmatpush1.bf16.msra.mxu0 %v7611
        %10842 = vmatprep.subr.bf16.mxu0 %v7616
        %10843 = vmatpush1.bf16.msra.mxu0 %v7615
        %10844 = vmatprep.subr.bf16.mxu0 %v7620
        %10845 = vmatpush1.bf16.msra.mxu0 %v7619
        %10846 = vmatprep.subr.bf16.mxu0 %v7624
        %10847 = vmatpush1.bf16.msra.mxu0 %v7623
        %10848 = vmatprep.subr.bf16.mxu0 %v7628
        %10849 = vmatpush1.bf16.msra.mxu0 %v7627
        %10850 = vmatprep.subr.bf16.mxu0 %v7632
        %10851 = vmatpush1.bf16.msra.mxu0 %v7631
        %10852 = vmatprep.subr.bf16.mxu0 %v7636
        %10853 = vmatpush1.bf16.msra.mxu0 %v7635
        %10854 = vmatprep.subr.bf16.mxu0 %v7640
        %10855 = vmatpush1.bf16.msra.mxu0 %v7639
        %10856 = vmatprep.subr.bf16.mxu0 %v7644
        %10857 = vmatpush1.bf16.msra.mxu0 %v7643
        %10858 = vmatprep.subr.bf16.mxu0 %v7648
        %10859 = vmatpush1.bf16.msra.mxu0 %v7647
        %10860 = vmatprep.subr.bf16.mxu0 %v7652
        %10861 = vmatpush1.bf16.msra.mxu0 %v7651
        %10862 = vmatprep.subr.bf16.mxu0 %v7656
        %10863 = vmatpush1.bf16.msra.mxu0 %v7655
        %10864 = vmatprep.subr.bf16.mxu0 %v7660
        %10865 = vmatpush1.bf16.msra.mxu0 %v7659
        %10866 = vmatprep.subr.bf16.mxu0 %v7664
        %10867 = vmatpush1.bf16.msra.mxu0 %v7663
        %10868 = vmatprep.mubr.bf16.mxu0 %v1988
        %10869 = vmatmul.mubr.bf16.gmra.mrb[0].mxu0 %v1987
        %v10870 = vpop.f32.mrb[0].mxu0
        %v10871 = vadd.f32 %v10830, %v10870
        %v10872 = vpop.f32.mrb[0].mxu0
        %v10873 = vadd.f32 %v10832, %v10872
        %v10874 = vpop.f32.mrb[0].mxu0
        %v10875 = vpop.f32.mrb[0].mxu0
        %10876 = vdwg.mxu0
        %v10877 = vmax.f32 %v9969, 0.0
        %v10878 = vmax.f32 %v9971, 0.0
        %v10879 = vmax.f32 %v10871, 0.0
        %v10880 = vmax.f32 %v10873, 0.0
        %v10881 = vld [vmem:[%s272] sm:$0xff]
        %v10882 = vld [vmem:[%s272 + $0x8] sm:$0xff]
        %v10883 = vld [vmem:[%s272 + $0x10] sm:$0xff]
        %v10884 = vld [vmem:[%s272 + $0x18] sm:$0xff]
        %v10885 = vld [vmem:[%s272 + $0x20] sm:$0xff]
        %v10886 = vld [vmem:[%s272 + $0x28] sm:$0xff]
        %v10887 = vld [vmem:[%s272 + $0x30] sm:$0xff]
        %v10888 = vld [vmem:[%s272 + $0x38] sm:$0xff]
        %v10889 = vld [vmem:[%s272 + $0x40] sm:$0xff]
        %v10890 = vld [vmem:[%s272 + $0x48] sm:$0xff]
        %v10891 = vld [vmem:[%s272 + $0x50] sm:$0xff]
        %v10892 = vld [vmem:[%s272 + $0x58] sm:$0xff]
        %v10893 = vld [vmem:[%s272 + $0x60] sm:$0xff]
        %v10894 = vld [vmem:[%s272 + $0x68] sm:$0xff]
        %v10895 = vld [vmem:[%s272 + $0x70] sm:$0xff]
        %v10896 = vld [vmem:[%s272 + $0x78] sm:$0xff]
        %v10897 = vld [vmem:[%s272 + $0x80] sm:$0xff]
        %v10898 = vld [vmem:[%s272 + $0x88] sm:$0xff]
        %v10899 = vld [vmem:[%s272 + $0x90] sm:$0xff]
        %v10900 = vld [vmem:[%s272 + $0x98] sm:$0xff]
        %v10901 = vld [vmem:[%s272 + $0xa0] sm:$0xff]
        %v10902 = vld [vmem:[%s272 + $0xa8] sm:$0xff]
        %v10903 = vld [vmem:[%s272 + $0xb0] sm:$0xff]
        %v10904 = vld [vmem:[%s272 + $0xb8] sm:$0xff]
        %v10905 = vld [vmem:[%s272 + $0xc0] sm:$0xff]
        %v10906 = vld [vmem:[%s272 + $0xc8] sm:$0xff]
        %v10907 = vld [vmem:[%s272 + $0xd0] sm:$0xff]
        %v10908 = vld [vmem:[%s272 + $0xd8] sm:$0xff]
        %v10909 = vld [vmem:[%s272 + $0xe0] sm:$0xff]
        %v10910 = vld [vmem:[%s272 + $0xe8] sm:$0xff]
        %v10911 = vld [vmem:[%s272 + $0xf0] sm:$0xff]
        %v10912 = vld [vmem:[%s272 + $0xf8] sm:$0xff]
        %v10913 = vld [vmem:[%s272 + $0x100] sm:$0xff]
        %v10914 = vld [vmem:[%s272 + $0x108] sm:$0xff]
        %v10915 = vld [vmem:[%s272 + $0x110] sm:$0xff]
        %v10916 = vld [vmem:[%s272 + $0x118] sm:$0xff]
        %v10917 = vld [vmem:[%s272 + $0x120] sm:$0xff]
        %v10918 = vld [vmem:[%s272 + $0x128] sm:$0xff]
        %v10919 = vld [vmem:[%s272 + $0x130] sm:$0xff]
        %v10920 = vld [vmem:[%s272 + $0x138] sm:$0xff]
        %v10921 = vld [vmem:[%s272 + $0x140] sm:$0xff]
        %v10922 = vld [vmem:[%s272 + $0x148] sm:$0xff]
        %v10923 = vld [vmem:[%s272 + $0x150] sm:$0xff]
        %v10924 = vld [vmem:[%s272 + $0x158] sm:$0xff]
        %v10925 = vld [vmem:[%s272 + $0x160] sm:$0xff]
        %v10926 = vld [vmem:[%s272 + $0x168] sm:$0xff]
        %v10927 = vld [vmem:[%s272 + $0x170] sm:$0xff]
        %v10928 = vld [vmem:[%s272 + $0x178] sm:$0xff]
        %v10929 = vld [vmem:[%s272 + $0x180] sm:$0xff]
        %v10930 = vld [vmem:[%s272 + $0x188] sm:$0xff]
        %v10931 = vld [vmem:[%s272 + $0x190] sm:$0xff]
        %v10932 = vld [vmem:[%s272 + $0x198] sm:$0xff]
        %v10933 = vld [vmem:[%s272 + $0x1a0] sm:$0xff]
        %v10934 = vld [vmem:[%s272 + $0x1a8] sm:$0xff]
        %v10935 = vld [vmem:[%s272 + $0x1b0] sm:$0xff]
        %v10936 = vld [vmem:[%s272 + $0x1b8] sm:$0xff]
        %v10937 = vld [vmem:[%s272 + $0x1c0] sm:$0xff]
        %v10938 = vld [vmem:[%s272 + $0x1c8] sm:$0xff]
        %v10939 = vld [vmem:[%s272 + $0x1d0] sm:$0xff]
        %v10940 = vld [vmem:[%s272 + $0x1d8] sm:$0xff]
        %v10941 = vld [vmem:[%s272 + $0x1e0] sm:$0xff]
        %v10942 = vld [vmem:[%s272 + $0x1e8] sm:$0xff]
        %v10943 = vld [vmem:[%s272 + $0x1f0] sm:$0xff]
        %v10944 = vld [vmem:[%s272 + $0x1f8] sm:$0xff]
        %10945 = vmatprep.subr.mxu0 0.0
        %10946 = vmatpush1.msra.mxu0 %v10881
        %10947 = vmatprep.subr.mxu0 0.0
        %10948 = vmatpush1.msra.mxu0 %v10882
        %10949 = vmatprep.subr.mxu0 0.0
        %10950 = vmatpush1.msra.mxu0 %v10883
        %10951 = vmatprep.subr.mxu0 0.0
        %10952 = vmatpush1.msra.mxu0 %v10884
        %10953 = vmatprep.subr.mxu0 0.0
        %10954 = vmatpush1.msra.mxu0 %v10885
        %10955 = vmatprep.subr.mxu0 0.0
        %10956 = vmatpush1.msra.mxu0 %v10886
        %10957 = vmatprep.subr.mxu0 0.0
        %10958 = vmatpush1.msra.mxu0 %v10887
        %10959 = vmatprep.subr.mxu0 0.0
        %10960 = vmatpush1.msra.mxu0 %v10888
        %10961 = vmatprep.subr.mxu0 0.0
        %10962 = vmatpush1.msra.mxu0 %v10889
        %10963 = vmatprep.subr.mxu0 0.0
        %10964 = vmatpush1.msra.mxu0 %v10890
        %10965 = vmatprep.subr.mxu0 0.0
        %10966 = vmatpush1.msra.mxu0 %v10891
        %10967 = vmatprep.subr.mxu0 0.0
        %10968 = vmatpush1.msra.mxu0 %v10892
        %10969 = vmatprep.subr.mxu0 0.0
        %10970 = vmatpush1.msra.mxu0 %v10893
        %10971 = vmatprep.subr.mxu0 0.0
        %10972 = vmatpush1.msra.mxu0 %v10894
        %10973 = vmatprep.subr.mxu0 0.0
        %10974 = vmatpush1.msra.mxu0 %v10895
        %10975 = vmatprep.subr.mxu0 0.0
        %10976 = vmatpush1.msra.mxu0 %v10896
        %10977 = vmatprep.subr.mxu0 0.0
        %10978 = vmatpush1.msra.mxu0 %v10897
        %10979 = vmatprep.subr.mxu0 0.0
        %10980 = vmatpush1.msra.mxu0 %v10898
        %10981 = vmatprep.subr.mxu0 0.0
        %10982 = vmatpush1.msra.mxu0 %v10899
        %10983 = vmatprep.subr.mxu0 0.0
        %10984 = vmatpush1.msra.mxu0 %v10900
        %10985 = vmatprep.subr.mxu0 0.0
        %10986 = vmatpush1.msra.mxu0 %v10901
        %10987 = vmatprep.subr.mxu0 0.0
        %10988 = vmatpush1.msra.mxu0 %v10902
        %10989 = vmatprep.subr.mxu0 0.0
        %10990 = vmatpush1.msra.mxu0 %v10903
        %10991 = vmatprep.subr.mxu0 0.0
        %10992 = vmatpush1.msra.mxu0 %v10904
        %10993 = vmatprep.subr.mxu0 0.0
        %10994 = vmatpush1.msra.mxu0 %v10905
        %10995 = vmatprep.subr.mxu0 0.0
        %10996 = vmatpush1.msra.mxu0 %v10906
        %10997 = vmatprep.subr.mxu0 0.0
        %10998 = vmatpush1.msra.mxu0 %v10907
        %10999 = vmatprep.subr.mxu0 0.0
        %11000 = vmatpush1.msra.mxu0 %v10908
        %11001 = vmatprep.subr.mxu0 0.0
        %11002 = vmatpush1.msra.mxu0 %v10909
        %11003 = vmatprep.subr.mxu0 0.0
        %11004 = vmatpush1.msra.mxu0 %v10910
        %11005 = vmatprep.subr.mxu0 0.0
        %11006 = vmatpush1.msra.mxu0 %v10911
        %11007 = vmatprep.subr.mxu0 0.0
        %11008 = vmatpush1.msra.mxu0 %v10912
        %11009 = vmatprep.mubr.f32.mxu0 %v10878
        %11010 = vmatmul.mubr.f32.gmra.mrb[0].mxu0 %v10877
        %v11011 = vpop.f32.mrb[0].mxu0
        %v11012 = vadd.f32 0.0, %v11011
        %v11013 = vpop.f32.mrb[0].mxu0
        %11014 = vdwg.mxu0
        %11015 = vmatprep.subr.mxu0 0.0
        %11016 = vmatpush1.msra.mxu0 %v10913
        %11017 = vmatprep.subr.mxu0 0.0
        %11018 = vmatpush1.msra.mxu0 %v10914
        %11019 = vmatprep.subr.mxu0 0.0
        %11020 = vmatpush1.msra.mxu0 %v10915
        %11021 = vmatprep.subr.mxu0 0.0
        %11022 = vmatpush1.msra.mxu0 %v10916
        %11023 = vmatprep.subr.mxu0 0.0
        %11024 = vmatpush1.msra.mxu0 %v10917
        %11025 = vmatprep.subr.mxu0 0.0
        %11026 = vmatpush1.msra.mxu0 %v10918
        %11027 = vmatprep.subr.mxu0 0.0
        %11028 = vmatpush1.msra.mxu0 %v10919
        %11029 = vmatprep.subr.mxu0 0.0
        %11030 = vmatpush1.msra.mxu0 %v10920
        %11031 = vmatprep.subr.mxu0 0.0
        %11032 = vmatpush1.msra.mxu0 %v10921
        %11033 = vmatprep.subr.mxu0 0.0
        %11034 = vmatpush1.msra.mxu0 %v10922
        %11035 = vmatprep.subr.mxu0 0.0
        %11036 = vmatpush1.msra.mxu0 %v10923
        %11037 = vmatprep.subr.mxu0 0.0
        %11038 = vmatpush1.msra.mxu0 %v10924
        %11039 = vmatprep.subr.mxu0 0.0
        %11040 = vmatpush1.msra.mxu0 %v10925
        %11041 = vmatprep.subr.mxu0 0.0
        %11042 = vmatpush1.msra.mxu0 %v10926
        %11043 = vmatprep.subr.mxu0 0.0
        %11044 = vmatpush1.msra.mxu0 %v10927
        %11045 = vmatprep.subr.mxu0 0.0
        %11046 = vmatpush1.msra.mxu0 %v10928
        %11047 = vmatprep.subr.mxu0 0.0
        %11048 = vmatpush1.msra.mxu0 %v10929
        %11049 = vmatprep.subr.mxu0 0.0
        %11050 = vmatpush1.msra.mxu0 %v10930
        %11051 = vmatprep.subr.mxu0 0.0
        %11052 = vmatpush1.msra.mxu0 %v10931
        %11053 = vmatprep.subr.mxu0 0.0
        %11054 = vmatpush1.msra.mxu0 %v10932
        %11055 = vmatprep.subr.mxu0 0.0
        %11056 = vmatpush1.msra.mxu0 %v10933
        %11057 = vmatprep.subr.mxu0 0.0
        %11058 = vmatpush1.msra.mxu0 %v10934
        %11059 = vmatprep.subr.mxu0 0.0
        %11060 = vmatpush1.msra.mxu0 %v10935
        %11061 = vmatprep.subr.mxu0 0.0
        %11062 = vmatpush1.msra.mxu0 %v10936
        %11063 = vmatprep.subr.mxu0 0.0
        %11064 = vmatpush1.msra.mxu0 %v10937
        %11065 = vmatprep.subr.mxu0 0.0
        %11066 = vmatpush1.msra.mxu0 %v10938
        %11067 = vmatprep.subr.mxu0 0.0
        %11068 = vmatpush1.msra.mxu0 %v10939
        %11069 = vmatprep.subr.mxu0 0.0
        %11070 = vmatpush1.msra.mxu0 %v10940
        %11071 = vmatprep.subr.mxu0 0.0
        %11072 = vmatpush1.msra.mxu0 %v10941
        %11073 = vmatprep.subr.mxu0 0.0
        %11074 = vmatpush1.msra.mxu0 %v10942
        %11075 = vmatprep.subr.mxu0 0.0
        %11076 = vmatpush1.msra.mxu0 %v10943
        %11077 = vmatprep.subr.mxu0 0.0
        %11078 = vmatpush1.msra.mxu0 %v10944
        %11079 = vmatprep.mubr.f32.mxu0 %v10880
        %11080 = vmatmul.mubr.f32.gmra.mrb[0].mxu0 %v10879
        %v11081 = vpop.f32.mrb[0].mxu0
        %v11082 = vadd.f32 %v11012, %v11081
        %v11083 = vpop.f32.mrb[0].mxu0
        %11084 = vdwg.mxu0
        %vm11085 = vcmask 58368
        %11086 = vst.msk [vmem:[%s277] sm:$0x3] %vm11085, %v11082
        %p11087 = scmp.lt.s32.totalorder %s21, 1
        %s11088 = scalar_select %p11087, %s21, 1
        %s11089 = smul.addr %s11088, 2
        %s11090 = scalar_lea.vmem %s4, %s11089
        // Predicated region
        $region45: #{value_net_forward.3} parent=35 // pred_check
          %p11091 = pneg %p138
        $region46: #{value_net_forward.3} parent=35 // pred_check_branch
          %11093 = sbr.rel (%p11091) target = $region48
        $region47: #{value_net_forward.3} parent=35 // pred_region
          _
        $region48: #{value_net_forward.3} parent=35 // pred_fallthru
          _
      $region36: #{value_net_forward.3} parent=5 // pred_fallthru
        _
      %p11094 = scmp.le.s32.totalorder 2, %s16
      // Predicated region
      $region49: #{value_net_forward.3} parent=5 // pred_check
        %p11095 = pneg %p11094
      $region50: #{value_net_forward.3} parent=5 // pred_check_branch
        %11097 = sbr.rel (%p11095) target = $region52
      $region51: #{value_net_forward.3} parent=5 // pred_region
        %s11098 = ssub.s32 %s16, 2
        // Predicated region
        $region53: #{value_net_forward.3} parent=51 // pred_check
          %p11099 = pneg %p144
        $region54: #{value_net_forward.3} parent=51 // pred_check_branch
          %11101 = sbr.rel (%p11099) target = $region56
        $region55: #{value_net_forward.3} parent=51 // pred_region
          %p11102 = scmp.lt.s32.totalorder %s22, 1
          %s11103 = scalar_select %p11102, %s22, 1
          %s11104 = smul.addr %s11103, 2
          %s11105 = scalar_lea.vmem %s4, %s11104
        $region56: #{value_net_forward.3} parent=51 // pred_fallthru
          _
      $region52: #{value_net_forward.3} parent=5 // pred_fallthru
        _
    $region6: #{value_net_forward.3} parent=1 // loop_footer
      %s20 = sadd.s32 1, %s16
    $region7: #{value_net_forward.3} parent=1 // loop_footer_branch
      %15 = sbr.rel target = $region3
    $region8: #{value_net_forward.3} parent=1 // loop_exit
      _
    %11106 = vsyncpa [#allocation3], 1
    %s11107 = scalar_lea.sflag [#allocation3], 1
    %11108 = vsyncpa %s11107, 1
    %11109 = vsyncpa [#allocation5], 1
    %s11110 = scalar_lea.sflag [#allocation5], 1
    %11111 = vsyncpa %s11110, 1

</llo_original>
